<compile_context>
chip_gen: v7x
topology: tpu7x:2x2x1
jax: 0.10.0
libtpu: 0.0.40
codegen_flags: <defaults>
</compile_context>

<pallas_src>
import functools

import jax
import jax.numpy as jnp
from jax import lax
from jax.experimental import pallas as pl
from jax.experimental.pallas import tpu as pltpu


def _round_up(x, m):
    return (x + m - 1) // m * m


# --------------------- Pallas matmul (+bias, optional ReLU) ---------------------
def _mm_bias_kernel(a_ref, b_ref, bias_ref, o_ref, *, relu):
    """Whole K in one VMEM tile: no accumulator scratch, no output revisits."""
    out = jnp.dot(a_ref[...], b_ref[...], preferred_element_type=jnp.float32)
    out = out + bias_ref[...]
    if relu:
        out = jnp.maximum(out, 0.0)
    o_ref[...] = out.astype(o_ref.dtype)


def matmul_bias(a, b_p, bias_p, *, relu, tm, tn, out_dtype=jnp.bfloat16):
    """a: (M, K) activations (K un-padded); b_p: (K, Np) bf16 weight, Np % 128 == 0;
    bias_p: (1, Np) f32.  Returns (max(M, 8), Np) in `out_dtype`."""
    a = a.astype(jnp.bfloat16)
    M, K = a.shape
    Kb, Np = b_p.shape
    assert Kb == K, (Kb, K)
    assert Np % tn == 0 and tn % 128 == 0, (Np, tn)
    assert tm % 8 == 0, tm
    if M < 8:  # FC layers at batch=2: pad rows to one sublane (tiny copy).
        a = jnp.pad(a, ((0, 8 - M), (0, 0)))
    Ma = a.shape[0]

    grid = (pl.cdiv(Ma, tm), Np // tn)
    return pl.pallas_call(
        functools.partial(_mm_bias_kernel, relu=relu),
        out_shape=jax.ShapeDtypeStruct((Ma, Np), out_dtype),
        grid_spec=pltpu.PrefetchScalarGridSpec(
            num_scalar_prefetch=0,
            grid=grid,
            in_specs=[
                pl.BlockSpec((tm, K), lambda i, j: (i, 0)),   # full (un-padded) K
                pl.BlockSpec((K, tn), lambda i, j: (0, j)),
                pl.BlockSpec((1, tn), lambda i, j: (0, j)),
            ],
            out_specs=pl.BlockSpec((tm, tn), lambda i, j: (i, j)),
        ),
        compiler_params=pltpu.CompilerParams(
            dimension_semantics=("parallel", "parallel"),
            vmem_limit_bytes=28 * 1024 * 1024),
    )(a, b_p, bias_p)


# ------------------------------ Conv2d via im2col ------------------------------
def conv2d_relu(x, w_p, bias_p, *, kh, kw, stride, pad, tm):
    """x: (B, H, W, Cin) NHWC bf16; w_p: (cin*kh*kw, Np) bf16 packed with
    (cin, kh, kw)-major K ordering (matches conv_general_dilated_patches).
    Returns (B, Ho, Wo, Np) bf16; padded output channels are exactly zero."""
    B = x.shape[0]
    patches = lax.conv_general_dilated_patches(
        x, (kh, kw), (stride, stride), ((pad, pad), (pad, pad)),
        dimension_numbers=("NHWC", "HWIO", "NHWC"))
    _, Ho, Wo, K = patches.shape
    a = patches.reshape(B * Ho * Wo, K)            # contiguous reshape (free)
    out = matmul_bias(a, w_p, bias_p, relu=True, tm=tm, tn=w_p.shape[1])
    return out.reshape(B, Ho, Wo, w_p.shape[1])


# ----------------------------- MaxPool2d(3, stride=2) ---------------------------
def _window_max_kernel(x_ref, o_ref):
    # x_ref block: (1, H, W, C) bf16; o_ref block: (1, H-2, W-2, C) bf16.
    _, Hm, Wm, _ = o_ref.shape
    # Pass 1: max over the 3 kw taps (sublane-offset reads of the input block).
    cm = jnp.maximum(x_ref[0, :, 0:Wm, :], x_ref[0, :, 1:Wm + 1, :])
    cm = jnp.maximum(cm, x_ref[0, :, 2:Wm + 2, :])
    # Pass 2: max over the 3 kh taps (cheap major-dim slices of the value).
    m = jnp.maximum(cm[0:Hm], cm[1:Hm + 1])
    m = jnp.maximum(m, cm[2:Hm + 2])
    o_ref[0] = m.astype(o_ref.dtype)


def maxpool3x3s2(x):
    """x: (B, H, W, C) NHWC bf16 -> (B, (H-3)//2+1, (W-3)//2+1, C) bf16."""
    B, H, W, C = x.shape
    Hm, Wm = H - 2, W - 2
    wm = pl.pallas_call(
        _window_max_kernel,
        out_shape=jax.ShapeDtypeStruct((B, Hm, Wm, C), x.dtype),
        grid_spec=pltpu.PrefetchScalarGridSpec(
            num_scalar_prefetch=0,
            grid=(B,),
            in_specs=[pl.BlockSpec((1, H, W, C), lambda b: (b, 0, 0, 0))],
            out_specs=pl.BlockSpec((1, Hm, Wm, C), lambda b: (b, 0, 0, 0)),
        ),
        compiler_params=pltpu.CompilerParams(
            dimension_semantics=("parallel",)),
    )(x)
    # Stride-2 subsample of the small bf16 window-max map (< 2 MB) stays in XLA.
    return wm[:, ::2, ::2, :]


# ----------------------------------- Params -------------------------------------
_CONV_CFG = {
    # Large M tiles: each conv matmul runs in exactly 2 grid steps (>= 2 parallel
    # M blocks so both v7x TensorCores get work); tn == full padded cout.
    "c1": dict(kh=11, kw=11, stride=4, pad=2, tm=3072),  # M=6050, K=363,  Np=128
    "c2": dict(kh=5,  kw=5,  stride=1, pad=2, tm=768),   # M=1458, K=1200, Np=128
    "c3": dict(kh=3,  kw=3,  stride=1, pad=1, tm=176),   # M=338,  K=1152, Np=256
    "c4": dict(kh=3,  kw=3,  stride=1, pad=1, tm=176),   # M=338,  K=1728, Np=256
    "c5": dict(kh=3,  kw=3,  stride=1, pad=1, tm=176),   # M=338,  K=1728, Np=128
}


def init_params(key, num_classes=10):
    """Raw parameters (conv weights HWIO, linear weights (in, out)), all f32."""
    ks = jax.random.split(key, 8)
    p = {}
    p["c1_w"] = 0.02 * jax.random.normal(ks[0], (11, 11, 3, 48), jnp.float32)
    p["c1_b"] = jnp.zeros((48,), jnp.float32)
    p["c2_w"] = 0.02 * jax.random.normal(ks[1], (5, 5, 48, 128), jnp.float32)
    p["c2_b"] = jnp.zeros((128,), jnp.float32)
    p["c3_w"] = 0.02 * jax.random.normal(ks[2], (3, 3, 128, 192), jnp.float32)
    p["c3_b"] = jnp.zeros((192,), jnp.float32)
    p["c4_w"] = 0.02 * jax.random.normal(ks[3], (3, 3, 192, 192), jnp.float32)
    p["c4_b"] = jnp.zeros((192,), jnp.float32)
    p["c5_w"] = 0.02 * jax.random.normal(ks[4], (3, 3, 192, 128), jnp.float32)
    p["c5_b"] = jnp.zeros((128,), jnp.float32)
    p["fc1_w"] = 0.01 * jax.random.normal(ks[5], (128 * 6 * 6, 2048), jnp.float32)
    p["fc1_b"] = jnp.zeros((2048,), jnp.float32)
    p["fc2_w"] = 0.01 * jax.random.normal(ks[6], (2048, 2048), jnp.float32)
    p["fc2_b"] = jnp.zeros((2048,), jnp.float32)
    p["fc3_w"] = 0.01 * jax.random.normal(ks[7], (2048, num_classes), jnp.float32)
    p["fc3_b"] = jnp.zeros((num_classes,), jnp.float32)
    return p


def _pack_matmul_weight(w2d):
    # K is kept exact (no padding -> no per-forward activation pad copy);
    # N is padded to a multiple of 128 with zero columns.
    K, N = w2d.shape
    Np = _round_up(N, 128)
    return jnp.pad(w2d, ((0, 0), (0, Np - N))).astype(jnp.bfloat16)


def _pack_bias(b):
    Np = _round_up(b.shape[0], 128)
    return jnp.pad(b, (0, Np - b.shape[0])).reshape(1, Np).astype(jnp.float32)


def prepare_params(p):
    """One-time packing: conv HWIO -> (cin*kh*kw, cout) channel-major, pad N to a
    multiple of 128, cast weights to bf16 (biases stay f32)."""
    q = {}
    for name in ("c1", "c2", "c3", "c4", "c5"):
        w = p[name + "_w"]                                   # (kh, kw, cin, cout)
        kh, kw, cin, cout = w.shape
        w2d = jnp.transpose(w, (2, 0, 1, 3)).reshape(cin * kh * kw, cout)
        q[name + "_w"] = _pack_matmul_weight(w2d)
        q[name + "_b"] = _pack_bias(p[name + "_b"])
    for name in ("fc1", "fc2", "fc3"):
        q[name + "_w"] = _pack_matmul_weight(p[name + "_w"])
        q[name + "_b"] = _pack_bias(p[name + "_b"])
    return q


# ------------------------------------ Model -------------------------------------
@functools.partial(jax.jit, static_argnames=("num_classes",))
def alexnet_forward(x_nchw, params, num_classes=10):
    B = x_nchw.shape[0]
    x = jnp.transpose(x_nchw, (0, 2, 3, 1)).astype(jnp.bfloat16)           # NHWC
    x = conv2d_relu(x, params["c1_w"], params["c1_b"], **_CONV_CFG["c1"])   # (B,55,55,128)
    x = maxpool3x3s2(x)                                                     # (B,27,27,128)
    x = conv2d_relu(x[..., :48], params["c2_w"], params["c2_b"],
                    **_CONV_CFG["c2"])                                      # (B,27,27,128)
    x = maxpool3x3s2(x)                                                     # (B,13,13,128)
    x = conv2d_relu(x, params["c3_w"], params["c3_b"], **_CONV_CFG["c3"])   # (B,13,13,256)
    x = conv2d_relu(x[..., :192], params["c4_w"], params["c4_b"],
                    **_CONV_CFG["c4"])                                      # (B,13,13,256)
    x = conv2d_relu(x[..., :192], params["c5_w"], params["c5_b"],
                    **_CONV_CFG["c5"])                                      # (B,13,13,128)
    x = maxpool3x3s2(x)                                                     # (B,6,6,128)

    # torch.flatten(x, start_dim=1) on an NCHW tensor -> (C, H, W) order.
    x = jnp.transpose(x, (0, 3, 1, 2)).reshape(B, 128 * 6 * 6)

    # The reference classifier is Dropout/Linear x3 with NO ReLU -> relu=False.
    # TODO(synk): nn.Dropout is identity at inference; training-mode dropout
    # (RNG masking) not implemented.
    x = matmul_bias(x, params["fc1_w"], params["fc1_b"], relu=False, tm=8, tn=1024)
    x = matmul_bias(x, params["fc2_w"], params["fc2_b"], relu=False, tm=8, tn=1024)
    x = matmul_bias(x, params["fc3_w"], params["fc3_b"], relu=False, tm=8, tn=128,
                    out_dtype=jnp.float32)
    return x[:B, :num_classes]


if __name__ == "__main__":
    key = jax.random.PRNGKey(0)
    k_x, k_p = jax.random.split(key)
    # The classifier's 128*6*6 flatten pins the spatial size to 224x224.
    x = jax.random.normal(k_x, (2, 3, 224, 224), jnp.float32)
    raw = init_params(k_p, num_classes=10)
    params = prepare_params(raw)

    # One-time numerical check (reviewer concern): the (cin, kh, kw)-major im2col
    # ordering must match the weight packing.  Compare Pallas conv1 against a
    # lax.conv reference on the same bf16 data; a mismatch gives O(1) errors.
    x_nhwc = jnp.transpose(x, (0, 2, 3, 1)).astype(jnp.bfloat16)
    got = conv2d_relu(x_nhwc, params["c1_w"], params["c1_b"],
                      **_CONV_CFG["c1"])[..., :48].astype(jnp.float32)
    ref = lax.conv_general_dilated(
        x_nhwc.astype(jnp.float32),
        raw["c1_w"].astype(jnp.bfloat16).astype(jnp.float32),
        (4, 4), ((2, 2), (2, 2)),
        dimension_numbers=("NHWC", "HWIO", "NHWC"))
    ref = jnp.maximum(ref + raw["c1_b"], 0.0)
    err = float(jnp.max(jnp.abs(got - ref)))
    assert err < 0.1, f"conv1 im2col/weight-packing mismatch: max|diff|={err}"

    logits = alexnet_forward(x, params, num_classes=10)
    logits = jax.block_until_ready(logits)
    assert logits.shape == (2, 10), logits.shape
    assert bool(jnp.all(jnp.isfinite(logits)))
    print("KERNEL_OK")
</pallas_src>

<mosaic_0001>
module attributes {stable_mosaic.version = 11 : i64} {
  func.func @_mm_bias_kernel(%arg0: i32, %arg1: i32, %arg2: memref<3072x363xbf16, #tpu.memory_space<vmem>>, %arg3: memref<363x128xbf16, #tpu.memory_space<vmem>>, %arg4: memref<1x128xf32, #tpu.memory_space<vmem>>, %arg5: memref<3072x128xbf16, #tpu.memory_space<vmem>>) attributes {dimension_semantics = [#tpu.dimension_semantics<parallel>, #tpu.dimension_semantics<parallel>], iteration_bounds = array<i64: 2, 1>, scalar_prefetch = 0 : i64, scratch_operands = 0 : i64, tpu.core_type = #tpu.core_type<tc>, window_params = [{transform_indices = @transform_0, window_bounds = array<i64: 3072, 363>}, {transform_indices = @transform_1, window_bounds = array<i64: 363, 128>}, {transform_indices = @transform_2, window_bounds = array<i64: 1, 128>}, {transform_indices = @transform_3, window_bounds = array<i64: 3072, 128>}]} {
    %c0 = arith.constant 0 : index
    %c0_0 = arith.constant 0 : index
    %0 = vector.load %arg2[%c0, %c0_0] : memref<3072x363xbf16, #tpu.memory_space<vmem>>, vector<3072x363xbf16>
    %c0_1 = arith.constant 0 : index
    %c0_2 = arith.constant 0 : index
    %1 = vector.load %arg3[%c0_1, %c0_2] : memref<363x128xbf16, #tpu.memory_space<vmem>>, vector<363x128xbf16>
    %cst = arith.constant dense<0.000000e+00> : vector<3072x128xf32>
    %2 = tpu.matmul %0, %1, %cst {dimension_numbers = #tpu.dot_dimension_numbers<[1], [0], [0], [1], [0, 0, 1, 1], [], []>} : vector<3072x363xbf16>, vector<363x128xbf16>, vector<3072x128xf32> -> vector<3072x128xf32>
    %c0_3 = arith.constant 0 : index
    %c0_4 = arith.constant 0 : index
    %3 = vector.load %arg4[%c0_3, %c0_4] : memref<1x128xf32, #tpu.memory_space<vmem>>, vector<1x128xf32>
    %4 = vector.broadcast %3 : vector<1x128xf32> to vector<3072x128xf32>
    %5 = arith.addf %2, %4 : vector<3072x128xf32>
    %cst_5 = arith.constant 0.000000e+00 : f32
    %6 = vector.broadcast %cst_5 : f32 to vector<3072x128xf32>
    %7 = arith.maximumf %5, %6 : vector<3072x128xf32>
    %8 = arith.truncf %7 : vector<3072x128xf32> to vector<3072x128xbf16>
    %c0_6 = arith.constant 0 : index
    %c0_7 = arith.constant 0 : index
    %9 = vector.load %arg5[%c0_6, %c0_7] : memref<3072x128xbf16, #tpu.memory_space<vmem>>, vector<3072x128xbf16>
    tpu.vector_store %arg5[%c0_6, %c0_7], %8 {strides = array<i32>} : memref<3072x128xbf16, #tpu.memory_space<vmem>>, vector<3072x128xbf16>,
    return
  }
  func.func @transform_0(%arg0: i32, %arg1: i32) -> (i32, i32) {
    %c0_i32 = arith.constant 0 : i32
    %c0_i32_0 = arith.constant 0 : i32
    return %arg0, %c0_i32 : i32, i32
  }
  func.func @transform_1(%arg0: i32, %arg1: i32) -> (i32, i32) {
    %c0_i32 = arith.constant 0 : i32
    %c0_i32_0 = arith.constant 0 : i32
    return %c0_i32, %arg1 : i32, i32
  }
  func.func @transform_2(%arg0: i32, %arg1: i32) -> (i32, i32) {
    %c0_i32 = arith.constant 0 : i32
    %c0_i32_0 = arith.constant 0 : i32
    return %c0_i32, %arg1 : i32, i32
  }
  func.func @transform_3(%arg0: i32, %arg1: i32) -> (i32, i32) {
    %c0_i32 = arith.constant 0 : i32
    return %arg0, %arg1 : i32, i32
  }
}

</mosaic_0001>

<llo_original>
// kernel: tpu_custom_call.1
$region0: #{tpu_custom_call.1}
  #allocation0 [shape = 'u32[]', space=smem, size = 0x4, offset = 0x4, fixed_abs, tag = 'smem constant byte address 0x4 - core index']
  #allocation1 [shape = 'u32[144,128]{1,0:T(1,128)}', space=vmem, size = 0x12000, scoped, tag = 'internal scratch']
  %s0 = inlined_call_operand.vmem [shape: bf16[6050,363], index: 0, kind: input, shape index: {}]
  %s1 = inlined_call_operand.vmem [shape: bf16[363,128], index: 1, kind: input, shape index: {}]
  %s2 = inlined_call_operand.vmem [shape: f32[1,128], index: 2, kind: input, shape index: {}]
  %s3 = inlined_call_operand.hbm [shape: bf16[6050,128], index: 3, kind: output, shape index: {}]
  %s4 = sld [smem:[#allocation0]]
  $region45: #{tpu_custom_call.1} parent=0
    _
  %s6 = ssub.s32 1, %s4
  %s7 = scalar_select 0, %s6, %s4
  $region1: #{tpu_custom_call.1} parent=0
    #allocation2 [shape = 'u8[1572864]{0}', space=vmem, size = 0x180000, scoped, tag = 'output window, operand 0']
    #allocation3 [shape = 's32[2]{0}', space=sflag, size = 0x8, scoped, tag = 'scoped memory for tpu_custom_call.1']
    %8 = vsyncpa [#allocation3], 0
    %s9 = scalar_lea.sflag [#allocation3], 1
    %10 = vsyncpa %s9, 0
    loop: start=0, step=1, limit=4
    $region2: #{tpu_custom_call.1} parent=1 // loop_pre_header
      _
    $region3: #{tpu_custom_call.1} parent=1 // loop_header
      %s12 = sphi 0, %s16
      %p13 = scmp.ge.s32.totalorder %s12, 4
      %s19 = sphi 0, %s31
      %s20 = sphi 0, %s27
      %s21 = sphi 0, %s19
      %s22 = sphi 0, %s20
      %s23 = sphi 0, %s21
      %s24 = sphi 0, %s22
      %s34 = sphi 0, %s36
      %s37 = sphi 0, %s34
      %s38 = sphi 0, %s37
      %s54 = sphi 0, %s38
      %s60 = sphi 0, %s62
      %s63 = sphi 0, %s60
      %s64 = sphi 0, %s63
      %s80 = sphi 0, %s64
      %s86 = sphi 0, %s88
      %s89 = sphi 0, %s86
      %s90 = sphi 0, %s89
      %s106 = sphi 0, %s90
      %s114 = sphi 0, %s116
      %s117 = sphi 0, %s114
      %s118 = sphi 0, %s117
      %s134 = sphi 0, %s118
    $region4: #{tpu_custom_call.1} parent=1 // loop_header_branch
      %15 = sbr.rel (%p13) target = $region8
    $region5: #{tpu_custom_call.1} parent=1 // loop_body
      %s17 = ssub.s32 %s12, 1
      %s18 = ssub.s32 %s12, 2
      %s25 = sadd.s32 1, %s20
      %p26 = scmp.ge.s32.totalorder %s25, 1
      %s27 = scalar_select %p26, 0, %s25
      %s28 = sadd.s32 1, %s19
      %s29 = scalar_select %p26, %s28, %s19
      %p30 = scmp.ge.s32.totalorder %s29, 2
      %s31 = scalar_select %p30, 0, %s29
      %s32 = ssub.s32 %s19, %s31
      %p33 = scmp.eq.s32.totalorder %s32, 0
      %s35 = sadd.s32 %s34, 1
      %s36 = scalar_select %p33, %s34, %s35
      %p39 = pneg %p33
      %p40 = scmp.eq.s32.totalorder %s12, 1
      %p41 = por %p39, %p40
      %p42 = scmp.ne.s32.totalorder %s34, %s37
      %p43 = scmp.eq.s32.totalorder %s12, 0
      %p44 = por %p42, %p43
      %p45 = scmp.ne.s32.totalorder %s34, %s37
      %p46 = scmp.eq.s32.totalorder %s17, 1
      %p47 = por %p45, %p46
      %p48 = scmp.ne.s32.totalorder %s37, %s38
      %p49 = scmp.eq.s32.totalorder %s17, 0
      %p50 = por %p48, %p49
      %p51 = scmp.ne.s32.totalorder %s37, %s38
      %p52 = scmp.eq.s32.totalorder %s18, 1
      %p53 = por %p51, %p52
      %p55 = scmp.ne.s32.totalorder %s38, %s54
      %p56 = scmp.eq.s32.totalorder %s18, 0
      %p57 = por %p55, %p56
      %s58 = ssub.s32 %s20, %s27
      %p59 = scmp.eq.s32.totalorder %s58, 0
      %s61 = sadd.s32 %s60, 1
      %s62 = scalar_select %p59, %s60, %s61
      %p65 = pneg %p59
      %p66 = scmp.eq.s32.totalorder %s12, 1
      %p67 = por %p65, %p66
      %p68 = scmp.ne.s32.totalorder %s60, %s63
      %p69 = scmp.eq.s32.totalorder %s12, 0
      %p70 = por %p68, %p69
      %p71 = scmp.ne.s32.totalorder %s60, %s63
      %p72 = scmp.eq.s32.totalorder %s17, 1
      %p73 = por %p71, %p72
      %p74 = scmp.ne.s32.totalorder %s63, %s64
      %p75 = scmp.eq.s32.totalorder %s17, 0
      %p76 = por %p74, %p75
      %p77 = scmp.ne.s32.totalorder %s63, %s64
      %p78 = scmp.eq.s32.totalorder %s18, 1
      %p79 = por %p77, %p78
      %p81 = scmp.ne.s32.totalorder %s64, %s80
      %p82 = scmp.eq.s32.totalorder %s18, 0
      %p83 = por %p81, %p82
      %s84 = ssub.s32 %s20, %s27
      %p85 = scmp.eq.s32.totalorder %s84, 0
      %s87 = sadd.s32 %s86, 1
      %s88 = scalar_select %p85, %s86, %s87
      %p91 = pneg %p85
      %p92 = scmp.eq.s32.totalorder %s12, 1
      %p93 = por %p91, %p92
      %p94 = scmp.ne.s32.totalorder %s86, %s89
      %p95 = scmp.eq.s32.totalorder %s12, 0
      %p96 = por %p94, %p95
      %p97 = scmp.ne.s32.totalorder %s86, %s89
      %p98 = scmp.eq.s32.totalorder %s17, 1
      %p99 = por %p97, %p98
      %p100 = scmp.ne.s32.totalorder %s89, %s90
      %p101 = scmp.eq.s32.totalorder %s17, 0
      %p102 = por %p100, %p101
      %p103 = scmp.ne.s32.totalorder %s89, %s90
      %p104 = scmp.eq.s32.totalorder %s18, 1
      %p105 = por %p103, %p104
      %p107 = scmp.ne.s32.totalorder %s90, %s106
      %p108 = scmp.eq.s32.totalorder %s18, 0
      %p109 = por %p107, %p108
      %s110 = ssub.s32 %s19, %s31
      %s111 = ssub.s32 %s20, %s27
      %s112 = sor.u32 %s110, %s111
      %p113 = scmp.eq.s32.totalorder %s112, 0
      %s115 = sadd.s32 %s114, 1
      %s116 = scalar_select %p113, %s114, %s115
      %p119 = pneg %p113
      %p120 = scmp.eq.s32.totalorder %s12, 1
      %p121 = por %p119, %p120
      %p122 = scmp.ne.s32.totalorder %s114, %s117
      %p123 = scmp.eq.s32.totalorder %s12, 0
      %p124 = por %p122, %p123
      %p125 = scmp.ne.s32.totalorder %s114, %s117
      %p126 = scmp.eq.s32.totalorder %s17, 1
      %p127 = por %p125, %p126
      %p128 = scmp.ne.s32.totalorder %s117, %s118
      %p129 = scmp.eq.s32.totalorder %s17, 0
      %p130 = por %p128, %p129
      %p131 = scmp.ne.s32.totalorder %s117, %s118
      %p132 = scmp.eq.s32.totalorder %s18, 1
      %p133 = por %p131, %p132
      %p135 = scmp.ne.s32.totalorder %s118, %s134
      %p136 = scmp.eq.s32.totalorder %s18, 0
      %p137 = por %p135, %p136
      %p138 = scmp.le.s32.totalorder 1, %s12
      %p139 = scmp.lt.s32.totalorder %s12, 3
      %p140 = pnand %p138, %p139
      %p141 = pneg %p140
      // Predicated region
      $region9: #{tpu_custom_call.1} parent=5 // pred_check
        _
      $region10: #{tpu_custom_call.1} parent=5 // pred_check_branch
        %143 = sbr.rel (%p140) target = $region12
      $region11: #{tpu_custom_call.1} parent=5 // pred_region
        %s144 = ssub.s32 %s12, 1
        // Predicated region
        $region13: #{tpu_custom_call.1} parent=11 // pred_check
          %p145 = pneg %p76
        $region14: #{tpu_custom_call.1} parent=11 // pred_check_branch
          %147 = sbr.rel (%p145) target = $region16
        $region15: #{tpu_custom_call.1} parent=11 // pred_region
          %p148 = scmp.lt.s32.totalorder %s22, 0
          %s149 = scalar_select %p148, %s22, 0
          %s150 = smul.addr %s149, 4
          %s151 = scalar_lea.vmem %s1, %s150
        $region16: #{tpu_custom_call.1} parent=11 // pred_fallthru
          _
        // Predicated region
        $region17: #{tpu_custom_call.1} parent=11 // pred_check
          %p152 = pneg %p102
        $region18: #{tpu_custom_call.1} parent=11 // pred_check_branch
          %154 = sbr.rel (%p152) target = $region20
        $region19: #{tpu_custom_call.1} parent=11 // pred_region
          %p155 = scmp.lt.s32.totalorder %s22, 0
          %s156 = scalar_select %p155, %s22, 0
          %s157 = scalar_lea.vmem %s2, %s156
        $region20: #{tpu_custom_call.1} parent=11 // pred_fallthru
          _
      $region12: #{tpu_custom_call.1} parent=5 // pred_fallthru
        _
      %p158 = scmp.lt.s32.totalorder %s12, 2
      // Predicated region
      $region21: #{tpu_custom_call.1} parent=5 // pred_check
        %p159 = pneg %p158
      $region22: #{tpu_custom_call.1} parent=5 // pred_check_branch
        %161 = sbr.rel (%p159) target = $region24
      $region23: #{tpu_custom_call.1} parent=5 // pred_region
        // Predicated region
        $region25: #{tpu_custom_call.1} parent=23 // pred_check
          %p162 = pneg %p44
        $region26: #{tpu_custom_call.1} parent=23 // pred_check_branch
          %164 = sbr.rel (%p162) target = $region28
        $region27: #{tpu_custom_call.1} parent=23 // pred_region
          %s165 = smul.u32 384, %s19
          %s166 = ssub.s32 757, %s165
          %p167 = scmp.lt.s32.totalorder %s166, 384
          %s168 = scalar_select %p167, %s166, 384
          %s169 = smul.u32 64, %s168
          %s170 = smul.u32 %s169, 3
          %p171 = scmp.lt.s32.totalorder %s165, 756
          %s172 = scalar_select %p171, %s165, 756
          %s173 = smul.addr %s172, 3
          %s174 = smul.addr %s173, 4
          %s175 = scalar_lea.vmem %s0, %s174
          %s176 = smul.u32 384, %s19
          %s177 = ssub.s32 757, %s176
          %p178 = scmp.lt.s32.totalorder %s177, 384
          %s179 = scalar_select %p178, %s177, 384
          %s180 = smul.u32 64, %s179
          %s181 = smul.u32 %s180, 3
        $region28: #{tpu_custom_call.1} parent=23 // pred_fallthru
          _
      $region24: #{tpu_custom_call.1} parent=5 // pred_fallthru
        _
      %p182 = scmp.le.s32.totalorder 1, %s12
      %p183 = scmp.lt.s32.totalorder %s12, 3
      %p184 = pnand %p182, %p183
      %p185 = pneg %p184
      // Predicated region
      $region29: #{tpu_custom_call.1} parent=5 // pred_check
        _
      $region30: #{tpu_custom_call.1} parent=5 // pred_check_branch
        %187 = sbr.rel (%p184) target = $region32
      $region31: #{tpu_custom_call.1} parent=5 // pred_region
        %s188 = ssub.s32 %s12, 1
        %s189 = smul.u32 384, %s21
        %s190 = ssub.s32 757, %s189
        %p191 = scmp.lt.s32.totalorder %s190, 384
        %s192 = scalar_select %p191, %s190, 384
        %s193 = smul.u32 64, %s192
        %s194 = smul.u32 %s193, 3
        %p195 = scmp.lt.s32.totalorder %s189, 756
        %s196 = scalar_select %p195, %s189, 756
        %s197 = smul.addr %s196, 3
        %s198 = smul.addr %s197, 4
        %s199 = scalar_lea.vmem %s0, %s198
        %p200 = pneg %p50
        %p201 = pneg %p47
        %p202 = scmp.lt.s32.totalorder %s22, 0
        %s203 = scalar_select %p202, %s22, 0
        %s204 = smul.addr %s203, 4
        %s205 = scalar_lea.vmem %s1, %s204
        %p206 = pneg %p76
        %p207 = pneg %p73
        %p208 = scmp.lt.s32.totalorder %s22, 0
        %s209 = scalar_select %p208, %s22, 0
        %s210 = scalar_lea.vmem %s2, %s209
        %p211 = pneg %p102
        %p212 = pneg %p99
        %p213 = pneg %p130
        %p214 = pneg %p127
        %s215 = sand.u32 %s117, 1
        %s216 = scalar_lea.sflag [#allocation3], %s215
        %s217 = sand.u32 %s117, 1
        %s218 = smul.addr %s217, 1536
        %s219 = scalar_lea.vmem [#allocation2], %s218
        %s220 = smul.u32 384, %s21
        %s221 = ssub.s32 757, %s220
        %p222 = scmp.lt.s32.totalorder %s221, 384
        %s223 = scalar_select %p222, %s221, 384
        %s224 = smul.u32 64, %s223
        %s225 = smul.u32 %s224, 3
        %p226 = scmp.lt.s32.totalorder %s220, 756
        %s227 = scalar_select %p226, %s220, 756
        %s228 = smul.addr %s227, 3
        %s229 = smul.addr %s228, 4
        %s230 = scalar_lea.vmem %s0, %s229
        %s231 = smul.u32 384, %s21
        %s232 = ssub.s32 757, %s231
        %p233 = scmp.lt.s32.totalorder %s232, 384
        %s234 = scalar_select %p233, %s232, 384
        %s235 = smul.u32 64, %s234
        %s236 = smul.u32 %s235, 3
        %p237 = scmp.lt.s32.totalorder %s22, 0
        %s238 = scalar_select %p237, %s22, 0
        %s239 = smul.addr %s238, 4
        %s240 = scalar_lea.vmem %s1, %s239
        %p241 = scmp.lt.s32.totalorder %s22, 0
        %s242 = scalar_select %p241, %s22, 0
        %s243 = scalar_lea.vmem %s2, %s242
        %s244 = smul.u32 384, %s21
        %s245 = ssub.s32 757, %s244
        %p246 = scmp.lt.s32.totalorder %s245, 384
        %s247 = scalar_select %p246, %s245, 384
        %s248 = smul.u32 64, %s247
        %v250 = vld [vmem:[%s230] sm:$0xff]
        %v251 = vld [vmem:[%s230 + $0x8] sm:$0xf]
        %v252 = vld [vmem:[%s230 + $0xc] sm:$0xff]
        %v253 = vld [vmem:[%s230 + $0x14] sm:$0xf]
        %v254 = vld [vmem:[%s230 + $0x18] sm:$0xff]
        %v255 = vld [vmem:[%s230 + $0x20] sm:$0xf]
        %v256 = vld [vmem:[%s230 + $0x24] sm:$0xff]
        %v257 = vld [vmem:[%s230 + $0x2c] sm:$0xf]
        %v258 = vld [vmem:[%s230 + $0x30] sm:$0xff]
        %v259 = vld [vmem:[%s230 + $0x38] sm:$0xf]
        %v260 = vld [vmem:[%s230 + $0x3c] sm:$0xff]
        %v261 = vld [vmem:[%s230 + $0x44] sm:$0xf]
        %v262 = vld [vmem:[%s230 + $0x48] sm:$0xff]
        %v263 = vld [vmem:[%s230 + $0x50] sm:$0xf]
        %v264 = vld [vmem:[%s230 + $0x54] sm:$0xff]
        %v265 = vld [vmem:[%s230 + $0x5c] sm:$0xf]
        %v266 = vld [vmem:[%s230 + $0x60] sm:$0xff]
        %v267 = vld [vmem:[%s230 + $0x68] sm:$0xf]
        %v268 = vld [vmem:[%s230 + $0x6c] sm:$0xff]
        %v269 = vld [vmem:[%s230 + $0x74] sm:$0xf]
        %v270 = vld [vmem:[%s230 + $0x78] sm:$0xff]
        %v271 = vld [vmem:[%s230 + $0x80] sm:$0xf]
        %v272 = vld [vmem:[%s230 + $0x84] sm:$0xff]
        %v273 = vld [vmem:[%s230 + $0x8c] sm:$0xf]
        %v274 = vld [vmem:[%s230 + $0x90] sm:$0xff]
        %v275 = vld [vmem:[%s230 + $0x98] sm:$0xf]
        %v276 = vld [vmem:[%s230 + $0x9c] sm:$0xff]
        %v277 = vld [vmem:[%s230 + $0xa4] sm:$0xf]
        %v278 = vld [vmem:[%s230 + $0xa8] sm:$0xff]
        %v279 = vld [vmem:[%s230 + $0xb0] sm:$0xf]
        %v280 = vld [vmem:[%s230 + $0xb4] sm:$0xff]
        %v281 = vld [vmem:[%s230 + $0xbc] sm:$0xf]
        %v282 = vld [vmem:[%s230 + $0xc0] sm:$0xff]
        %v283 = vld [vmem:[%s230 + $0xc8] sm:$0xf]
        %v284 = vld [vmem:[%s230 + $0xcc] sm:$0xff]
        %v285 = vld [vmem:[%s230 + $0xd4] sm:$0xf]
        %v286 = vld [vmem:[%s230 + $0xd8] sm:$0xff]
        %v287 = vld [vmem:[%s230 + $0xe0] sm:$0xf]
        %v288 = vld [vmem:[%s230 + $0xe4] sm:$0xff]
        %v289 = vld [vmem:[%s230 + $0xec] sm:$0xf]
        %v290 = vld [vmem:[%s230 + $0xf0] sm:$0xff]
        %v291 = vld [vmem:[%s230 + $0xf8] sm:$0xf]
        %v292 = vld [vmem:[%s230 + $0xfc] sm:$0xff]
        %v293 = vld [vmem:[%s230 + $0x104] sm:$0xf]
        %v294 = vld [vmem:[%s230 + $0x108] sm:$0xff]
        %v295 = vld [vmem:[%s230 + $0x110] sm:$0xf]
        %v296 = vld [vmem:[%s230 + $0x114] sm:$0xff]
        %v297 = vld [vmem:[%s230 + $0x11c] sm:$0xf]
        %v298 = vld [vmem:[%s230 + $0x120] sm:$0xff]
        %v299 = vld [vmem:[%s230 + $0x128] sm:$0xf]
        %v300 = vld [vmem:[%s230 + $0x12c] sm:$0xff]
        %v301 = vld [vmem:[%s230 + $0x134] sm:$0xf]
        %v302 = vld [vmem:[%s230 + $0x138] sm:$0xff]
        %v303 = vld [vmem:[%s230 + $0x140] sm:$0xf]
        %v304 = vld [vmem:[%s230 + $0x144] sm:$0xff]
        %v305 = vld [vmem:[%s230 + $0x14c] sm:$0xf]
        %v306 = vld [vmem:[%s230 + $0x150] sm:$0xff]
        %v307 = vld [vmem:[%s230 + $0x158] sm:$0xf]
        %v308 = vld [vmem:[%s230 + $0x15c] sm:$0xff]
        %v309 = vld [vmem:[%s230 + $0x164] sm:$0xf]
        %v310 = vld [vmem:[%s230 + $0x168] sm:$0xff]
        %v311 = vld [vmem:[%s230 + $0x170] sm:$0xf]
        %v312 = vld [vmem:[%s230 + $0x174] sm:$0xff]
        %v313 = vld [vmem:[%s230 + $0x17c] sm:$0xf]
        %v314 = vld [vmem:[%s230 + $0x180] sm:$0xff]
        %v315 = vld [vmem:[%s230 + $0x188] sm:$0xf]
        %v316 = vld [vmem:[%s230 + $0x18c] sm:$0xff]
        %v317 = vld [vmem:[%s230 + $0x194] sm:$0xf]
        %v318 = vld [vmem:[%s230 + $0x198] sm:$0xff]
        %v319 = vld [vmem:[%s230 + $0x1a0] sm:$0xf]
        %v320 = vld [vmem:[%s230 + $0x1a4] sm:$0xff]
        %v321 = vld [vmem:[%s230 + $0x1ac] sm:$0xf]
        %v322 = vld [vmem:[%s230 + $0x1b0] sm:$0xff]
        %v323 = vld [vmem:[%s230 + $0x1b8] sm:$0xf]
        %v324 = vld [vmem:[%s230 + $0x1bc] sm:$0xff]
        %v325 = vld [vmem:[%s230 + $0x1c4] sm:$0xf]
        %v326 = vld [vmem:[%s230 + $0x1c8] sm:$0xff]
        %v327 = vld [vmem:[%s230 + $0x1d0] sm:$0xf]
        %v328 = vld [vmem:[%s230 + $0x1d4] sm:$0xff]
        %v329 = vld [vmem:[%s230 + $0x1dc] sm:$0xf]
        %v330 = vld [vmem:[%s230 + $0x1e0] sm:$0xff]
        %v331 = vld [vmem:[%s230 + $0x1e8] sm:$0xf]
        %v332 = vld [vmem:[%s230 + $0x1ec] sm:$0xff]
        %v333 = vld [vmem:[%s230 + $0x1f4] sm:$0xf]
        %v334 = vld [vmem:[%s230 + $0x1f8] sm:$0xff]
        %v335 = vld [vmem:[%s230 + $0x200] sm:$0xf]
        %v336 = vld [vmem:[%s230 + $0x204] sm:$0xff]
        %v337 = vld [vmem:[%s230 + $0x20c] sm:$0xf]
        %v338 = vld [vmem:[%s230 + $0x210] sm:$0xff]
        %v339 = vld [vmem:[%s230 + $0x218] sm:$0xf]
        %v340 = vld [vmem:[%s230 + $0x21c] sm:$0xff]
        %v341 = vld [vmem:[%s230 + $0x224] sm:$0xf]
        %v342 = vld [vmem:[%s230 + $0x228] sm:$0xff]
        %v343 = vld [vmem:[%s230 + $0x230] sm:$0xf]
        %v344 = vld [vmem:[%s230 + $0x234] sm:$0xff]
        %v345 = vld [vmem:[%s230 + $0x23c] sm:$0xf]
        %v346 = vld [vmem:[%s230 + $0x240] sm:$0xff]
        %v347 = vld [vmem:[%s230 + $0x248] sm:$0xf]
        %v348 = vld [vmem:[%s230 + $0x24c] sm:$0xff]
        %v349 = vld [vmem:[%s230 + $0x254] sm:$0xf]
        %v350 = vld [vmem:[%s230 + $0x258] sm:$0xff]
        %v351 = vld [vmem:[%s230 + $0x260] sm:$0xf]
        %v352 = vld [vmem:[%s230 + $0x264] sm:$0xff]
        %v353 = vld [vmem:[%s230 + $0x26c] sm:$0xf]
        %v354 = vld [vmem:[%s230 + $0x270] sm:$0xff]
        %v355 = vld [vmem:[%s230 + $0x278] sm:$0xf]
        %v356 = vld [vmem:[%s230 + $0x27c] sm:$0xff]
        %v357 = vld [vmem:[%s230 + $0x284] sm:$0xf]
        %v358 = vld [vmem:[%s230 + $0x288] sm:$0xff]
        %v359 = vld [vmem:[%s230 + $0x290] sm:$0xf]
        %v360 = vld [vmem:[%s230 + $0x294] sm:$0xff]
        %v361 = vld [vmem:[%s230 + $0x29c] sm:$0xf]
        %v362 = vld [vmem:[%s230 + $0x2a0] sm:$0xff]
        %v363 = vld [vmem:[%s230 + $0x2a8] sm:$0xf]
        %v364 = vld [vmem:[%s230 + $0x2ac] sm:$0xff]
        %v365 = vld [vmem:[%s230 + $0x2b4] sm:$0xf]
        %v366 = vld [vmem:[%s230 + $0x2b8] sm:$0xff]
        %v367 = vld [vmem:[%s230 + $0x2c0] sm:$0xf]
        %v368 = vld [vmem:[%s230 + $0x2c4] sm:$0xff]
        %v369 = vld [vmem:[%s230 + $0x2cc] sm:$0xf]
        %v370 = vld [vmem:[%s230 + $0x2d0] sm:$0xff]
        %v371 = vld [vmem:[%s230 + $0x2d8] sm:$0xf]
        %v372 = vld [vmem:[%s230 + $0x2dc] sm:$0xff]
        %v373 = vld [vmem:[%s230 + $0x2e4] sm:$0xf]
        %v374 = vld [vmem:[%s230 + $0x2e8] sm:$0xff]
        %v375 = vld [vmem:[%s230 + $0x2f0] sm:$0xf]
        %v376 = vld [vmem:[%s230 + $0x2f4] sm:$0xff]
        %v377 = vld [vmem:[%s230 + $0x2fc] sm:$0xf]
        %v378 = vld [vmem:[%s230 + $0x300] sm:$0xff]
        %v379 = vld [vmem:[%s230 + $0x308] sm:$0xf]
        %v380 = vld [vmem:[%s230 + $0x30c] sm:$0xff]
        %v381 = vld [vmem:[%s230 + $0x314] sm:$0xf]
        %v382 = vld [vmem:[%s230 + $0x318] sm:$0xff]
        %v383 = vld [vmem:[%s230 + $0x320] sm:$0xf]
        %v384 = vld [vmem:[%s230 + $0x324] sm:$0xff]
        %v385 = vld [vmem:[%s230 + $0x32c] sm:$0xf]
        %v386 = vld [vmem:[%s230 + $0x330] sm:$0xff]
        %v387 = vld [vmem:[%s230 + $0x338] sm:$0xf]
        %v388 = vld [vmem:[%s230 + $0x33c] sm:$0xff]
        %v389 = vld [vmem:[%s230 + $0x344] sm:$0xf]
        %v390 = vld [vmem:[%s230 + $0x348] sm:$0xff]
        %v391 = vld [vmem:[%s230 + $0x350] sm:$0xf]
        %v392 = vld [vmem:[%s230 + $0x354] sm:$0xff]
        %v393 = vld [vmem:[%s230 + $0x35c] sm:$0xf]
        %v394 = vld [vmem:[%s230 + $0x360] sm:$0xff]
        %v395 = vld [vmem:[%s230 + $0x368] sm:$0xf]
        %v396 = vld [vmem:[%s230 + $0x36c] sm:$0xff]
        %v397 = vld [vmem:[%s230 + $0x374] sm:$0xf]
        %v398 = vld [vmem:[%s230 + $0x378] sm:$0xff]
        %v399 = vld [vmem:[%s230 + $0x380] sm:$0xf]
        %v400 = vld [vmem:[%s230 + $0x384] sm:$0xff]
        %v401 = vld [vmem:[%s230 + $0x38c] sm:$0xf]
        %v402 = vld [vmem:[%s230 + $0x390] sm:$0xff]
        %v403 = vld [vmem:[%s230 + $0x398] sm:$0xf]
        %v404 = vld [vmem:[%s230 + $0x39c] sm:$0xff]
        %v405 = vld [vmem:[%s230 + $0x3a4] sm:$0xf]
        %v406 = vld [vmem:[%s230 + $0x3a8] sm:$0xff]
        %v407 = vld [vmem:[%s230 + $0x3b0] sm:$0xf]
        %v408 = vld [vmem:[%s230 + $0x3b4] sm:$0xff]
        %v409 = vld [vmem:[%s230 + $0x3bc] sm:$0xf]
        %v410 = vld [vmem:[%s230 + $0x3c0] sm:$0xff]
        %v411 = vld [vmem:[%s230 + $0x3c8] sm:$0xf]
        %v412 = vld [vmem:[%s230 + $0x3cc] sm:$0xff]
        %v413 = vld [vmem:[%s230 + $0x3d4] sm:$0xf]
        %v414 = vld [vmem:[%s230 + $0x3d8] sm:$0xff]
        %v415 = vld [vmem:[%s230 + $0x3e0] sm:$0xf]
        %v416 = vld [vmem:[%s230 + $0x3e4] sm:$0xff]
        %v417 = vld [vmem:[%s230 + $0x3ec] sm:$0xf]
        %v418 = vld [vmem:[%s230 + $0x3f0] sm:$0xff]
        %v419 = vld [vmem:[%s230 + $0x3f8] sm:$0xf]
        %v420 = vld [vmem:[%s230 + $0x3fc] sm:$0xff]
        %v421 = vld [vmem:[%s230 + $0x404] sm:$0xf]
        %v422 = vld [vmem:[%s230 + $0x408] sm:$0xff]
        %v423 = vld [vmem:[%s230 + $0x410] sm:$0xf]
        %v424 = vld [vmem:[%s230 + $0x414] sm:$0xff]
        %v425 = vld [vmem:[%s230 + $0x41c] sm:$0xf]
        %v426 = vld [vmem:[%s230 + $0x420] sm:$0xff]
        %v427 = vld [vmem:[%s230 + $0x428] sm:$0xf]
        %v428 = vld [vmem:[%s230 + $0x42c] sm:$0xff]
        %v429 = vld [vmem:[%s230 + $0x434] sm:$0xf]
        %v430 = vld [vmem:[%s230 + $0x438] sm:$0xff]
        %v431 = vld [vmem:[%s230 + $0x440] sm:$0xf]
        %v432 = vld [vmem:[%s230 + $0x444] sm:$0xff]
        %v433 = vld [vmem:[%s230 + $0x44c] sm:$0xf]
        %v434 = vld [vmem:[%s230 + $0x450] sm:$0xff]
        %v435 = vld [vmem:[%s230 + $0x458] sm:$0xf]
        %v436 = vld [vmem:[%s230 + $0x45c] sm:$0xff]
        %v437 = vld [vmem:[%s230 + $0x464] sm:$0xf]
        %v438 = vld [vmem:[%s230 + $0x468] sm:$0xff]
        %v439 = vld [vmem:[%s230 + $0x470] sm:$0xf]
        %v440 = vld [vmem:[%s230 + $0x474] sm:$0xff]
        %v441 = vld [vmem:[%s230 + $0x47c] sm:$0xf]
        %v442 = vld [vmem:[%s230 + $0x480] sm:$0xff]
        %v443 = vld [vmem:[%s230 + $0x488] sm:$0xf]
        %v444 = vld [vmem:[%s230 + $0x48c] sm:$0xff]
        %v445 = vld [vmem:[%s230 + $0x494] sm:$0xf]
        %v446 = vld [vmem:[%s230 + $0x498] sm:$0xff]
        %v447 = vld [vmem:[%s230 + $0x4a0] sm:$0xf]
        %v448 = vld [vmem:[%s230 + $0x4a4] sm:$0xff]
        %v449 = vld [vmem:[%s230 + $0x4ac] sm:$0xf]
        %v450 = vld [vmem:[%s230 + $0x4b0] sm:$0xff]
        %v451 = vld [vmem:[%s230 + $0x4b8] sm:$0xf]
        %v452 = vld [vmem:[%s230 + $0x4bc] sm:$0xff]
        %v453 = vld [vmem:[%s230 + $0x4c4] sm:$0xf]
        %v454 = vld [vmem:[%s230 + $0x4c8] sm:$0xff]
        %v455 = vld [vmem:[%s230 + $0x4d0] sm:$0xf]
        %v456 = vld [vmem:[%s230 + $0x4d4] sm:$0xff]
        %v457 = vld [vmem:[%s230 + $0x4dc] sm:$0xf]
        %v458 = vld [vmem:[%s230 + $0x4e0] sm:$0xff]
        %v459 = vld [vmem:[%s230 + $0x4e8] sm:$0xf]
        %v460 = vld [vmem:[%s230 + $0x4ec] sm:$0xff]
        %v461 = vld [vmem:[%s230 + $0x4f4] sm:$0xf]
        %v462 = vld [vmem:[%s230 + $0x4f8] sm:$0xff]
        %v463 = vld [vmem:[%s230 + $0x500] sm:$0xf]
        %v464 = vld [vmem:[%s230 + $0x504] sm:$0xff]
        %v465 = vld [vmem:[%s230 + $0x50c] sm:$0xf]
        %v466 = vld [vmem:[%s230 + $0x510] sm:$0xff]
        %v467 = vld [vmem:[%s230 + $0x518] sm:$0xf]
        %v468 = vld [vmem:[%s230 + $0x51c] sm:$0xff]
        %v469 = vld [vmem:[%s230 + $0x524] sm:$0xf]
        %v470 = vld [vmem:[%s230 + $0x528] sm:$0xff]
        %v471 = vld [vmem:[%s230 + $0x530] sm:$0xf]
        %v472 = vld [vmem:[%s230 + $0x534] sm:$0xff]
        %v473 = vld [vmem:[%s230 + $0x53c] sm:$0xf]
        %v474 = vld [vmem:[%s230 + $0x540] sm:$0xff]
        %v475 = vld [vmem:[%s230 + $0x548] sm:$0xf]
        %v476 = vld [vmem:[%s230 + $0x54c] sm:$0xff]
        %v477 = vld [vmem:[%s230 + $0x554] sm:$0xf]
        %v478 = vld [vmem:[%s230 + $0x558] sm:$0xff]
        %v479 = vld [vmem:[%s230 + $0x560] sm:$0xf]
        %v480 = vld [vmem:[%s230 + $0x564] sm:$0xff]
        %v481 = vld [vmem:[%s230 + $0x56c] sm:$0xf]
        %v482 = vld [vmem:[%s230 + $0x570] sm:$0xff]
        %v483 = vld [vmem:[%s230 + $0x578] sm:$0xf]
        %v484 = vld [vmem:[%s230 + $0x57c] sm:$0xff]
        %v485 = vld [vmem:[%s230 + $0x584] sm:$0xf]
        %v486 = vld [vmem:[%s230 + $0x588] sm:$0xff]
        %v487 = vld [vmem:[%s230 + $0x590] sm:$0xf]
        %v488 = vld [vmem:[%s230 + $0x594] sm:$0xff]
        %v489 = vld [vmem:[%s230 + $0x59c] sm:$0xf]
        %v490 = vld [vmem:[%s230 + $0x5a0] sm:$0xff]
        %v491 = vld [vmem:[%s230 + $0x5a8] sm:$0xf]
        %v492 = vld [vmem:[%s230 + $0x5ac] sm:$0xff]
        %v493 = vld [vmem:[%s230 + $0x5b4] sm:$0xf]
        %v494 = vld [vmem:[%s230 + $0x5b8] sm:$0xff]
        %v495 = vld [vmem:[%s230 + $0x5c0] sm:$0xf]
        %v496 = vld [vmem:[%s230 + $0x5c4] sm:$0xff]
        %v497 = vld [vmem:[%s230 + $0x5cc] sm:$0xf]
        %v498 = vld [vmem:[%s230 + $0x5d0] sm:$0xff]
        %v499 = vld [vmem:[%s230 + $0x5d8] sm:$0xf]
        %v500 = vld [vmem:[%s230 + $0x5dc] sm:$0xff]
        %v501 = vld [vmem:[%s230 + $0x5e4] sm:$0xf]
        %v502 = vld [vmem:[%s230 + $0x5e8] sm:$0xff]
        %v503 = vld [vmem:[%s230 + $0x5f0] sm:$0xf]
        %v504 = vld [vmem:[%s230 + $0x5f4] sm:$0xff]
        %v505 = vld [vmem:[%s230 + $0x5fc] sm:$0xf]
        %v506 = vld [vmem:[%s230 + $0x600] sm:$0xff]
        %v507 = vld [vmem:[%s230 + $0x608] sm:$0xf]
        %v508 = vld [vmem:[%s230 + $0x60c] sm:$0xff]
        %v509 = vld [vmem:[%s230 + $0x614] sm:$0xf]
        %v510 = vld [vmem:[%s230 + $0x618] sm:$0xff]
        %v511 = vld [vmem:[%s230 + $0x620] sm:$0xf]
        %v512 = vld [vmem:[%s230 + $0x624] sm:$0xff]
        %v513 = vld [vmem:[%s230 + $0x62c] sm:$0xf]
        %v514 = vld [vmem:[%s230 + $0x630] sm:$0xff]
        %v515 = vld [vmem:[%s230 + $0x638] sm:$0xf]
        %v516 = vld [vmem:[%s230 + $0x63c] sm:$0xff]
        %v517 = vld [vmem:[%s230 + $0x644] sm:$0xf]
        %v518 = vld [vmem:[%s230 + $0x648] sm:$0xff]
        %v519 = vld [vmem:[%s230 + $0x650] sm:$0xf]
        %v520 = vld [vmem:[%s230 + $0x654] sm:$0xff]
        %v521 = vld [vmem:[%s230 + $0x65c] sm:$0xf]
        %v522 = vld [vmem:[%s230 + $0x660] sm:$0xff]
        %v523 = vld [vmem:[%s230 + $0x668] sm:$0xf]
        %v524 = vld [vmem:[%s230 + $0x66c] sm:$0xff]
        %v525 = vld [vmem:[%s230 + $0x674] sm:$0xf]
        %v526 = vld [vmem:[%s230 + $0x678] sm:$0xff]
        %v527 = vld [vmem:[%s230 + $0x680] sm:$0xf]
        %v528 = vld [vmem:[%s230 + $0x684] sm:$0xff]
        %v529 = vld [vmem:[%s230 + $0x68c] sm:$0xf]
        %v530 = vld [vmem:[%s230 + $0x690] sm:$0xff]
        %v531 = vld [vmem:[%s230 + $0x698] sm:$0xf]
        %v532 = vld [vmem:[%s230 + $0x69c] sm:$0xff]
        %v533 = vld [vmem:[%s230 + $0x6a4] sm:$0xf]
        %v534 = vld [vmem:[%s230 + $0x6a8] sm:$0xff]
        %v535 = vld [vmem:[%s230 + $0x6b0] sm:$0xf]
        %v536 = vld [vmem:[%s230 + $0x6b4] sm:$0xff]
        %v537 = vld [vmem:[%s230 + $0x6bc] sm:$0xf]
        %v538 = vld [vmem:[%s230 + $0x6c0] sm:$0xff]
        %v539 = vld [vmem:[%s230 + $0x6c8] sm:$0xf]
        %v540 = vld [vmem:[%s230 + $0x6cc] sm:$0xff]
        %v541 = vld [vmem:[%s230 + $0x6d4] sm:$0xf]
        %v542 = vld [vmem:[%s230 + $0x6d8] sm:$0xff]
        %v543 = vld [vmem:[%s230 + $0x6e0] sm:$0xf]
        %v544 = vld [vmem:[%s230 + $0x6e4] sm:$0xff]
        %v545 = vld [vmem:[%s230 + $0x6ec] sm:$0xf]
        %v546 = vld [vmem:[%s230 + $0x6f0] sm:$0xff]
        %v547 = vld [vmem:[%s230 + $0x6f8] sm:$0xf]
        %v548 = vld [vmem:[%s230 + $0x6fc] sm:$0xff]
        %v549 = vld [vmem:[%s230 + $0x704] sm:$0xf]
        %v550 = vld [vmem:[%s230 + $0x708] sm:$0xff]
        %v551 = vld [vmem:[%s230 + $0x710] sm:$0xf]
        %v552 = vld [vmem:[%s230 + $0x714] sm:$0xff]
        %v553 = vld [vmem:[%s230 + $0x71c] sm:$0xf]
        %v554 = vld [vmem:[%s230 + $0x720] sm:$0xff]
        %v555 = vld [vmem:[%s230 + $0x728] sm:$0xf]
        %v556 = vld [vmem:[%s230 + $0x72c] sm:$0xff]
        %v557 = vld [vmem:[%s230 + $0x734] sm:$0xf]
        %v558 = vld [vmem:[%s230 + $0x738] sm:$0xff]
        %v559 = vld [vmem:[%s230 + $0x740] sm:$0xf]
        %v560 = vld [vmem:[%s230 + $0x744] sm:$0xff]
        %v561 = vld [vmem:[%s230 + $0x74c] sm:$0xf]
        %v562 = vld [vmem:[%s230 + $0x750] sm:$0xff]
        %v563 = vld [vmem:[%s230 + $0x758] sm:$0xf]
        %v564 = vld [vmem:[%s230 + $0x75c] sm:$0xff]
        %v565 = vld [vmem:[%s230 + $0x764] sm:$0xf]
        %v566 = vld [vmem:[%s230 + $0x768] sm:$0xff]
        %v567 = vld [vmem:[%s230 + $0x770] sm:$0xf]
        %v568 = vld [vmem:[%s230 + $0x774] sm:$0xff]
        %v569 = vld [vmem:[%s230 + $0x77c] sm:$0xf]
        %v570 = vld [vmem:[%s230 + $0x780] sm:$0xff]
        %v571 = vld [vmem:[%s230 + $0x788] sm:$0xf]
        %v572 = vld [vmem:[%s230 + $0x78c] sm:$0xff]
        %v573 = vld [vmem:[%s230 + $0x794] sm:$0xf]
        %v574 = vld [vmem:[%s230 + $0x798] sm:$0xff]
        %v575 = vld [vmem:[%s230 + $0x7a0] sm:$0xf]
        %v576 = vld [vmem:[%s230 + $0x7a4] sm:$0xff]
        %v577 = vld [vmem:[%s230 + $0x7ac] sm:$0xf]
        %v578 = vld [vmem:[%s230 + $0x7b0] sm:$0xff]
        %v579 = vld [vmem:[%s230 + $0x7b8] sm:$0xf]
        %v580 = vld [vmem:[%s230 + $0x7bc] sm:$0xff]
        %v581 = vld [vmem:[%s230 + $0x7c4] sm:$0xf]
        %v582 = vld [vmem:[%s230 + $0x7c8] sm:$0xff]
        %v583 = vld [vmem:[%s230 + $0x7d0] sm:$0xf]
        %v584 = vld [vmem:[%s230 + $0x7d4] sm:$0xff]
        %v585 = vld [vmem:[%s230 + $0x7dc] sm:$0xf]
        %v586 = vld [vmem:[%s230 + $0x7e0] sm:$0xff]
        %v587 = vld [vmem:[%s230 + $0x7e8] sm:$0xf]
        %v588 = vld [vmem:[%s230 + $0x7ec] sm:$0xff]
        %v589 = vld [vmem:[%s230 + $0x7f4] sm:$0xf]
        %v590 = vld [vmem:[%s230 + $0x7f8] sm:$0xff]
        %v591 = vld [vmem:[%s230 + $0x800] sm:$0xf]
        %v592 = vld [vmem:[%s230 + $0x804] sm:$0xff]
        %v593 = vld [vmem:[%s230 + $0x80c] sm:$0xf]
        %v594 = vld [vmem:[%s230 + $0x810] sm:$0xff]
        %v595 = vld [vmem:[%s230 + $0x818] sm:$0xf]
        %v596 = vld [vmem:[%s230 + $0x81c] sm:$0xff]
        %v597 = vld [vmem:[%s230 + $0x824] sm:$0xf]
        %v598 = vld [vmem:[%s230 + $0x828] sm:$0xff]
        %v599 = vld [vmem:[%s230 + $0x830] sm:$0xf]
        %v600 = vld [vmem:[%s230 + $0x834] sm:$0xff]
        %v601 = vld [vmem:[%s230 + $0x83c] sm:$0xf]
        %v602 = vld [vmem:[%s230 + $0x840] sm:$0xff]
        %v603 = vld [vmem:[%s230 + $0x848] sm:$0xf]
        %v604 = vld [vmem:[%s230 + $0x84c] sm:$0xff]
        %v605 = vld [vmem:[%s230 + $0x854] sm:$0xf]
        %v606 = vld [vmem:[%s230 + $0x858] sm:$0xff]
        %v607 = vld [vmem:[%s230 + $0x860] sm:$0xf]
        %v608 = vld [vmem:[%s230 + $0x864] sm:$0xff]
        %v609 = vld [vmem:[%s230 + $0x86c] sm:$0xf]
        %v610 = vld [vmem:[%s230 + $0x870] sm:$0xff]
        %v611 = vld [vmem:[%s230 + $0x878] sm:$0xf]
        %v612 = vld [vmem:[%s230 + $0x87c] sm:$0xff]
        %v613 = vld [vmem:[%s230 + $0x884] sm:$0xf]
        %v614 = vld [vmem:[%s230 + $0x888] sm:$0xff]
        %v615 = vld [vmem:[%s230 + $0x890] sm:$0xf]
        %v616 = vld [vmem:[%s230 + $0x894] sm:$0xff]
        %v617 = vld [vmem:[%s230 + $0x89c] sm:$0xf]
        %v618 = vld [vmem:[%s230 + $0x8a0] sm:$0xff]
        %v619 = vld [vmem:[%s230 + $0x8a8] sm:$0xf]
        %v620 = vld [vmem:[%s230 + $0x8ac] sm:$0xff]
        %v621 = vld [vmem:[%s230 + $0x8b4] sm:$0xf]
        %v622 = vld [vmem:[%s230 + $0x8b8] sm:$0xff]
        %v623 = vld [vmem:[%s230 + $0x8c0] sm:$0xf]
        %v624 = vld [vmem:[%s230 + $0x8c4] sm:$0xff]
        %v625 = vld [vmem:[%s230 + $0x8cc] sm:$0xf]
        %v626 = vld [vmem:[%s230 + $0x8d0] sm:$0xff]
        %v627 = vld [vmem:[%s230 + $0x8d8] sm:$0xf]
        %v628 = vld [vmem:[%s230 + $0x8dc] sm:$0xff]
        %v629 = vld [vmem:[%s230 + $0x8e4] sm:$0xf]
        %v630 = vld [vmem:[%s230 + $0x8e8] sm:$0xff]
        %v631 = vld [vmem:[%s230 + $0x8f0] sm:$0xf]
        %v632 = vld [vmem:[%s230 + $0x8f4] sm:$0xff]
        %v633 = vld [vmem:[%s230 + $0x8fc] sm:$0xf]
        %v634 = vld [vmem:[%s230 + $0x900] sm:$0xff]
        %v635 = vld [vmem:[%s230 + $0x908] sm:$0xf]
        %v636 = vld [vmem:[%s230 + $0x90c] sm:$0xff]
        %v637 = vld [vmem:[%s230 + $0x914] sm:$0xf]
        %v638 = vld [vmem:[%s230 + $0x918] sm:$0xff]
        %v639 = vld [vmem:[%s230 + $0x920] sm:$0xf]
        %v640 = vld [vmem:[%s230 + $0x924] sm:$0xff]
        %v641 = vld [vmem:[%s230 + $0x92c] sm:$0xf]
        %v642 = vld [vmem:[%s230 + $0x930] sm:$0xff]
        %v643 = vld [vmem:[%s230 + $0x938] sm:$0xf]
        %v644 = vld [vmem:[%s230 + $0x93c] sm:$0xff]
        %v645 = vld [vmem:[%s230 + $0x944] sm:$0xf]
        %v646 = vld [vmem:[%s230 + $0x948] sm:$0xff]
        %v647 = vld [vmem:[%s230 + $0x950] sm:$0xf]
        %v648 = vld [vmem:[%s230 + $0x954] sm:$0xff]
        %v649 = vld [vmem:[%s230 + $0x95c] sm:$0xf]
        %v650 = vld [vmem:[%s230 + $0x960] sm:$0xff]
        %v651 = vld [vmem:[%s230 + $0x968] sm:$0xf]
        %v652 = vld [vmem:[%s230 + $0x96c] sm:$0xff]
        %v653 = vld [vmem:[%s230 + $0x974] sm:$0xf]
        %v654 = vld [vmem:[%s230 + $0x978] sm:$0xff]
        %v655 = vld [vmem:[%s230 + $0x980] sm:$0xf]
        %v656 = vld [vmem:[%s230 + $0x984] sm:$0xff]
        %v657 = vld [vmem:[%s230 + $0x98c] sm:$0xf]
        %v658 = vld [vmem:[%s230 + $0x990] sm:$0xff]
        %v659 = vld [vmem:[%s230 + $0x998] sm:$0xf]
        %v660 = vld [vmem:[%s230 + $0x99c] sm:$0xff]
        %v661 = vld [vmem:[%s230 + $0x9a4] sm:$0xf]
        %v662 = vld [vmem:[%s230 + $0x9a8] sm:$0xff]
        %v663 = vld [vmem:[%s230 + $0x9b0] sm:$0xf]
        %v664 = vld [vmem:[%s230 + $0x9b4] sm:$0xff]
        %v665 = vld [vmem:[%s230 + $0x9bc] sm:$0xf]
        %v666 = vld [vmem:[%s230 + $0x9c0] sm:$0xff]
        %v667 = vld [vmem:[%s230 + $0x9c8] sm:$0xf]
        %v668 = vld [vmem:[%s230 + $0x9cc] sm:$0xff]
        %v669 = vld [vmem:[%s230 + $0x9d4] sm:$0xf]
        %v670 = vld [vmem:[%s230 + $0x9d8] sm:$0xff]
        %v671 = vld [vmem:[%s230 + $0x9e0] sm:$0xf]
        %v672 = vld [vmem:[%s230 + $0x9e4] sm:$0xff]
        %v673 = vld [vmem:[%s230 + $0x9ec] sm:$0xf]
        %v674 = vld [vmem:[%s230 + $0x9f0] sm:$0xff]
        %v675 = vld [vmem:[%s230 + $0x9f8] sm:$0xf]
        %v676 = vld [vmem:[%s230 + $0x9fc] sm:$0xff]
        %v677 = vld [vmem:[%s230 + $0xa04] sm:$0xf]
        %v678 = vld [vmem:[%s230 + $0xa08] sm:$0xff]
        %v679 = vld [vmem:[%s230 + $0xa10] sm:$0xf]
        %v680 = vld [vmem:[%s230 + $0xa14] sm:$0xff]
        %v681 = vld [vmem:[%s230 + $0xa1c] sm:$0xf]
        %v682 = vld [vmem:[%s230 + $0xa20] sm:$0xff]
        %v683 = vld [vmem:[%s230 + $0xa28] sm:$0xf]
        %v684 = vld [vmem:[%s230 + $0xa2c] sm:$0xff]
        %v685 = vld [vmem:[%s230 + $0xa34] sm:$0xf]
        %v686 = vld [vmem:[%s230 + $0xa38] sm:$0xff]
        %v687 = vld [vmem:[%s230 + $0xa40] sm:$0xf]
        %v688 = vld [vmem:[%s230 + $0xa44] sm:$0xff]
        %v689 = vld [vmem:[%s230 + $0xa4c] sm:$0xf]
        %v690 = vld [vmem:[%s230 + $0xa50] sm:$0xff]
        %v691 = vld [vmem:[%s230 + $0xa58] sm:$0xf]
        %v692 = vld [vmem:[%s230 + $0xa5c] sm:$0xff]
        %v693 = vld [vmem:[%s230 + $0xa64] sm:$0xf]
        %v694 = vld [vmem:[%s230 + $0xa68] sm:$0xff]
        %v695 = vld [vmem:[%s230 + $0xa70] sm:$0xf]
        %v696 = vld [vmem:[%s230 + $0xa74] sm:$0xff]
        %v697 = vld [vmem:[%s230 + $0xa7c] sm:$0xf]
        %v698 = vld [vmem:[%s230 + $0xa80] sm:$0xff]
        %v699 = vld [vmem:[%s230 + $0xa88] sm:$0xf]
        %v700 = vld [vmem:[%s230 + $0xa8c] sm:$0xff]
        %v701 = vld [vmem:[%s230 + $0xa94] sm:$0xf]
        %v702 = vld [vmem:[%s230 + $0xa98] sm:$0xff]
        %v703 = vld [vmem:[%s230 + $0xaa0] sm:$0xf]
        %v704 = vld [vmem:[%s230 + $0xaa4] sm:$0xff]
        %v705 = vld [vmem:[%s230 + $0xaac] sm:$0xf]
        %v706 = vld [vmem:[%s230 + $0xab0] sm:$0xff]
        %v707 = vld [vmem:[%s230 + $0xab8] sm:$0xf]
        %v708 = vld [vmem:[%s230 + $0xabc] sm:$0xff]
        %v709 = vld [vmem:[%s230 + $0xac4] sm:$0xf]
        %v710 = vld [vmem:[%s230 + $0xac8] sm:$0xff]
        %v711 = vld [vmem:[%s230 + $0xad0] sm:$0xf]
        %v712 = vld [vmem:[%s230 + $0xad4] sm:$0xff]
        %v713 = vld [vmem:[%s230 + $0xadc] sm:$0xf]
        %v714 = vld [vmem:[%s230 + $0xae0] sm:$0xff]
        %v715 = vld [vmem:[%s230 + $0xae8] sm:$0xf]
        %v716 = vld [vmem:[%s230 + $0xaec] sm:$0xff]
        %v717 = vld [vmem:[%s230 + $0xaf4] sm:$0xf]
        %v718 = vld [vmem:[%s230 + $0xaf8] sm:$0xff]
        %v719 = vld [vmem:[%s230 + $0xb00] sm:$0xf]
        %v720 = vld [vmem:[%s230 + $0xb04] sm:$0xff]
        %v721 = vld [vmem:[%s230 + $0xb0c] sm:$0xf]
        %v722 = vld [vmem:[%s230 + $0xb10] sm:$0xff]
        %v723 = vld [vmem:[%s230 + $0xb18] sm:$0xf]
        %v724 = vld [vmem:[%s230 + $0xb1c] sm:$0xff]
        %v725 = vld [vmem:[%s230 + $0xb24] sm:$0xf]
        %v726 = vld [vmem:[%s230 + $0xb28] sm:$0xff]
        %v727 = vld [vmem:[%s230 + $0xb30] sm:$0xf]
        %v728 = vld [vmem:[%s230 + $0xb34] sm:$0xff]
        %v729 = vld [vmem:[%s230 + $0xb3c] sm:$0xf]
        %v730 = vld [vmem:[%s230 + $0xb40] sm:$0xff]
        %v731 = vld [vmem:[%s230 + $0xb48] sm:$0xf]
        %v732 = vld [vmem:[%s230 + $0xb4c] sm:$0xff]
        %v733 = vld [vmem:[%s230 + $0xb54] sm:$0xf]
        %v734 = vld [vmem:[%s230 + $0xb58] sm:$0xff]
        %v735 = vld [vmem:[%s230 + $0xb60] sm:$0xf]
        %v736 = vld [vmem:[%s230 + $0xb64] sm:$0xff]
        %v737 = vld [vmem:[%s230 + $0xb6c] sm:$0xf]
        %v738 = vld [vmem:[%s230 + $0xb70] sm:$0xff]
        %v739 = vld [vmem:[%s230 + $0xb78] sm:$0xf]
        %v740 = vld [vmem:[%s230 + $0xb7c] sm:$0xff]
        %v741 = vld [vmem:[%s230 + $0xb84] sm:$0xf]
        %v742 = vld [vmem:[%s230 + $0xb88] sm:$0xff]
        %v743 = vld [vmem:[%s230 + $0xb90] sm:$0xf]
        %v744 = vld [vmem:[%s230 + $0xb94] sm:$0xff]
        %v745 = vld [vmem:[%s230 + $0xb9c] sm:$0xf]
        %v746 = vld [vmem:[%s230 + $0xba0] sm:$0xff]
        %v747 = vld [vmem:[%s230 + $0xba8] sm:$0xf]
        %v748 = vld [vmem:[%s230 + $0xbac] sm:$0xff]
        %v749 = vld [vmem:[%s230 + $0xbb4] sm:$0xf]
        %v750 = vld [vmem:[%s230 + $0xbb8] sm:$0xff]
        %v751 = vld [vmem:[%s230 + $0xbc0] sm:$0xf]
        %v752 = vld [vmem:[%s230 + $0xbc4] sm:$0xff]
        %v753 = vld [vmem:[%s230 + $0xbcc] sm:$0xf]
        %v754 = vld [vmem:[%s230 + $0xbd0] sm:$0xff]
        %v755 = vld [vmem:[%s230 + $0xbd8] sm:$0xf]
        %v756 = vld [vmem:[%s230 + $0xbdc] sm:$0xff]
        %v757 = vld [vmem:[%s230 + $0xbe4] sm:$0xf]
        %v758 = vld [vmem:[%s230 + $0xbe8] sm:$0xff]
        %v759 = vld [vmem:[%s230 + $0xbf0] sm:$0xf]
        %v760 = vld [vmem:[%s230 + $0xbf4] sm:$0xff]
        %v761 = vld [vmem:[%s230 + $0xbfc] sm:$0xf]
        %v762 = vld [vmem:[%s230 + $0xc00] sm:$0xff]
        %v763 = vld [vmem:[%s230 + $0xc08] sm:$0xf]
        %v764 = vld [vmem:[%s230 + $0xc0c] sm:$0xff]
        %v765 = vld [vmem:[%s230 + $0xc14] sm:$0xf]
        %v766 = vld [vmem:[%s230 + $0xc18] sm:$0xff]
        %v767 = vld [vmem:[%s230 + $0xc20] sm:$0xf]
        %v768 = vld [vmem:[%s230 + $0xc24] sm:$0xff]
        %v769 = vld [vmem:[%s230 + $0xc2c] sm:$0xf]
        %v770 = vld [vmem:[%s230 + $0xc30] sm:$0xff]
        %v771 = vld [vmem:[%s230 + $0xc38] sm:$0xf]
        %v772 = vld [vmem:[%s230 + $0xc3c] sm:$0xff]
        %v773 = vld [vmem:[%s230 + $0xc44] sm:$0xf]
        %v774 = vld [vmem:[%s230 + $0xc48] sm:$0xff]
        %v775 = vld [vmem:[%s230 + $0xc50] sm:$0xf]
        %v776 = vld [vmem:[%s230 + $0xc54] sm:$0xff]
        %v777 = vld [vmem:[%s230 + $0xc5c] sm:$0xf]
        %v778 = vld [vmem:[%s230 + $0xc60] sm:$0xff]
        %v779 = vld [vmem:[%s230 + $0xc68] sm:$0xf]
        %v780 = vld [vmem:[%s230 + $0xc6c] sm:$0xff]
        %v781 = vld [vmem:[%s230 + $0xc74] sm:$0xf]
        %v782 = vld [vmem:[%s230 + $0xc78] sm:$0xff]
        %v783 = vld [vmem:[%s230 + $0xc80] sm:$0xf]
        %v784 = vld [vmem:[%s230 + $0xc84] sm:$0xff]
        %v785 = vld [vmem:[%s230 + $0xc8c] sm:$0xf]
        %v786 = vld [vmem:[%s230 + $0xc90] sm:$0xff]
        %v787 = vld [vmem:[%s230 + $0xc98] sm:$0xf]
        %v788 = vld [vmem:[%s230 + $0xc9c] sm:$0xff]
        %v789 = vld [vmem:[%s230 + $0xca4] sm:$0xf]
        %v790 = vld [vmem:[%s230 + $0xca8] sm:$0xff]
        %v791 = vld [vmem:[%s230 + $0xcb0] sm:$0xf]
        %v792 = vld [vmem:[%s230 + $0xcb4] sm:$0xff]
        %v793 = vld [vmem:[%s230 + $0xcbc] sm:$0xf]
        %v794 = vld [vmem:[%s230 + $0xcc0] sm:$0xff]
        %v795 = vld [vmem:[%s230 + $0xcc8] sm:$0xf]
        %v796 = vld [vmem:[%s230 + $0xccc] sm:$0xff]
        %v797 = vld [vmem:[%s230 + $0xcd4] sm:$0xf]
        %v798 = vld [vmem:[%s230 + $0xcd8] sm:$0xff]
        %v799 = vld [vmem:[%s230 + $0xce0] sm:$0xf]
        %v800 = vld [vmem:[%s230 + $0xce4] sm:$0xff]
        %v801 = vld [vmem:[%s230 + $0xcec] sm:$0xf]
        %v802 = vld [vmem:[%s230 + $0xcf0] sm:$0xff]
        %v803 = vld [vmem:[%s230 + $0xcf8] sm:$0xf]
        %v804 = vld [vmem:[%s230 + $0xcfc] sm:$0xff]
        %v805 = vld [vmem:[%s230 + $0xd04] sm:$0xf]
        %v806 = vld [vmem:[%s230 + $0xd08] sm:$0xff]
        %v807 = vld [vmem:[%s230 + $0xd10] sm:$0xf]
        %v808 = vld [vmem:[%s230 + $0xd14] sm:$0xff]
        %v809 = vld [vmem:[%s230 + $0xd1c] sm:$0xf]
        %v810 = vld [vmem:[%s230 + $0xd20] sm:$0xff]
        %v811 = vld [vmem:[%s230 + $0xd28] sm:$0xf]
        %v812 = vld [vmem:[%s230 + $0xd2c] sm:$0xff]
        %v813 = vld [vmem:[%s230 + $0xd34] sm:$0xf]
        %v814 = vld [vmem:[%s230 + $0xd38] sm:$0xff]
        %v815 = vld [vmem:[%s230 + $0xd40] sm:$0xf]
        %v816 = vld [vmem:[%s230 + $0xd44] sm:$0xff]
        %v817 = vld [vmem:[%s230 + $0xd4c] sm:$0xf]
        %v818 = vld [vmem:[%s230 + $0xd50] sm:$0xff]
        %v819 = vld [vmem:[%s230 + $0xd58] sm:$0xf]
        %v820 = vld [vmem:[%s230 + $0xd5c] sm:$0xff]
        %v821 = vld [vmem:[%s230 + $0xd64] sm:$0xf]
        %v822 = vld [vmem:[%s230 + $0xd68] sm:$0xff]
        %v823 = vld [vmem:[%s230 + $0xd70] sm:$0xf]
        %v824 = vld [vmem:[%s230 + $0xd74] sm:$0xff]
        %v825 = vld [vmem:[%s230 + $0xd7c] sm:$0xf]
        %v826 = vld [vmem:[%s230 + $0xd80] sm:$0xff]
        %v827 = vld [vmem:[%s230 + $0xd88] sm:$0xf]
        %v828 = vld [vmem:[%s230 + $0xd8c] sm:$0xff]
        %v829 = vld [vmem:[%s230 + $0xd94] sm:$0xf]
        %v830 = vld [vmem:[%s230 + $0xd98] sm:$0xff]
        %v831 = vld [vmem:[%s230 + $0xda0] sm:$0xf]
        %v832 = vld [vmem:[%s230 + $0xda4] sm:$0xff]
        %v833 = vld [vmem:[%s230 + $0xdac] sm:$0xf]
        %v834 = vld [vmem:[%s230 + $0xdb0] sm:$0xff]
        %v835 = vld [vmem:[%s230 + $0xdb8] sm:$0xf]
        %v836 = vld [vmem:[%s230 + $0xdbc] sm:$0xff]
        %v837 = vld [vmem:[%s230 + $0xdc4] sm:$0xf]
        %v838 = vld [vmem:[%s230 + $0xdc8] sm:$0xff]
        %v839 = vld [vmem:[%s230 + $0xdd0] sm:$0xf]
        %v840 = vld [vmem:[%s230 + $0xdd4] sm:$0xff]
        %v841 = vld [vmem:[%s230 + $0xddc] sm:$0xf]
        %v842 = vld [vmem:[%s230 + $0xde0] sm:$0xff]
        %v843 = vld [vmem:[%s230 + $0xde8] sm:$0xf]
        %v844 = vld [vmem:[%s230 + $0xdec] sm:$0xff]
        %v845 = vld [vmem:[%s230 + $0xdf4] sm:$0xf]
        %v846 = vld [vmem:[%s230 + $0xdf8] sm:$0xff]
        %v847 = vld [vmem:[%s230 + $0xe00] sm:$0xf]
        %v848 = vld [vmem:[%s230 + $0xe04] sm:$0xff]
        %v849 = vld [vmem:[%s230 + $0xe0c] sm:$0xf]
        %v850 = vld [vmem:[%s230 + $0xe10] sm:$0xff]
        %v851 = vld [vmem:[%s230 + $0xe18] sm:$0xf]
        %v852 = vld [vmem:[%s230 + $0xe1c] sm:$0xff]
        %v853 = vld [vmem:[%s230 + $0xe24] sm:$0xf]
        %v854 = vld [vmem:[%s230 + $0xe28] sm:$0xff]
        %v855 = vld [vmem:[%s230 + $0xe30] sm:$0xf]
        %v856 = vld [vmem:[%s230 + $0xe34] sm:$0xff]
        %v857 = vld [vmem:[%s230 + $0xe3c] sm:$0xf]
        %v858 = vld [vmem:[%s230 + $0xe40] sm:$0xff]
        %v859 = vld [vmem:[%s230 + $0xe48] sm:$0xf]
        %v860 = vld [vmem:[%s230 + $0xe4c] sm:$0xff]
        %v861 = vld [vmem:[%s230 + $0xe54] sm:$0xf]
        %v862 = vld [vmem:[%s230 + $0xe58] sm:$0xff]
        %v863 = vld [vmem:[%s230 + $0xe60] sm:$0xf]
        %v864 = vld [vmem:[%s230 + $0xe64] sm:$0xff]
        %v865 = vld [vmem:[%s230 + $0xe6c] sm:$0xf]
        %v866 = vld [vmem:[%s230 + $0xe70] sm:$0xff]
        %v867 = vld [vmem:[%s230 + $0xe78] sm:$0xf]
        %v868 = vld [vmem:[%s230 + $0xe7c] sm:$0xff]
        %v869 = vld [vmem:[%s230 + $0xe84] sm:$0xf]
        %v870 = vld [vmem:[%s230 + $0xe88] sm:$0xff]
        %v871 = vld [vmem:[%s230 + $0xe90] sm:$0xf]
        %v872 = vld [vmem:[%s230 + $0xe94] sm:$0xff]
        %v873 = vld [vmem:[%s230 + $0xe9c] sm:$0xf]
        %v874 = vld [vmem:[%s230 + $0xea0] sm:$0xff]
        %v875 = vld [vmem:[%s230 + $0xea8] sm:$0xf]
        %v876 = vld [vmem:[%s230 + $0xeac] sm:$0xff]
        %v877 = vld [vmem:[%s230 + $0xeb4] sm:$0xf]
        %v878 = vld [vmem:[%s230 + $0xeb8] sm:$0xff]
        %v879 = vld [vmem:[%s230 + $0xec0] sm:$0xf]
        %v880 = vld [vmem:[%s230 + $0xec4] sm:$0xff]
        %v881 = vld [vmem:[%s230 + $0xecc] sm:$0xf]
        %v882 = vld [vmem:[%s230 + $0xed0] sm:$0xff]
        %v883 = vld [vmem:[%s230 + $0xed8] sm:$0xf]
        %v884 = vld [vmem:[%s230 + $0xedc] sm:$0xff]
        %v885 = vld [vmem:[%s230 + $0xee4] sm:$0xf]
        %v886 = vld [vmem:[%s230 + $0xee8] sm:$0xff]
        %v887 = vld [vmem:[%s230 + $0xef0] sm:$0xf]
        %v888 = vld [vmem:[%s230 + $0xef4] sm:$0xff]
        %v889 = vld [vmem:[%s230 + $0xefc] sm:$0xf]
        %v890 = vld [vmem:[%s230 + $0xf00] sm:$0xff]
        %v891 = vld [vmem:[%s230 + $0xf08] sm:$0xf]
        %v892 = vld [vmem:[%s230 + $0xf0c] sm:$0xff]
        %v893 = vld [vmem:[%s230 + $0xf14] sm:$0xf]
        %v894 = vld [vmem:[%s230 + $0xf18] sm:$0xff]
        %v895 = vld [vmem:[%s230 + $0xf20] sm:$0xf]
        %v896 = vld [vmem:[%s230 + $0xf24] sm:$0xff]
        %v897 = vld [vmem:[%s230 + $0xf2c] sm:$0xf]
        %v898 = vld [vmem:[%s230 + $0xf30] sm:$0xff]
        %v899 = vld [vmem:[%s230 + $0xf38] sm:$0xf]
        %v900 = vld [vmem:[%s230 + $0xf3c] sm:$0xff]
        %v901 = vld [vmem:[%s230 + $0xf44] sm:$0xf]
        %v902 = vld [vmem:[%s230 + $0xf48] sm:$0xff]
        %v903 = vld [vmem:[%s230 + $0xf50] sm:$0xf]
        %v904 = vld [vmem:[%s230 + $0xf54] sm:$0xff]
        %v905 = vld [vmem:[%s230 + $0xf5c] sm:$0xf]
        %v906 = vld [vmem:[%s230 + $0xf60] sm:$0xff]
        %v907 = vld [vmem:[%s230 + $0xf68] sm:$0xf]
        %v908 = vld [vmem:[%s230 + $0xf6c] sm:$0xff]
        %v909 = vld [vmem:[%s230 + $0xf74] sm:$0xf]
        %v910 = vld [vmem:[%s230 + $0xf78] sm:$0xff]
        %v911 = vld [vmem:[%s230 + $0xf80] sm:$0xf]
        %v912 = vld [vmem:[%s230 + $0xf84] sm:$0xff]
        %v913 = vld [vmem:[%s230 + $0xf8c] sm:$0xf]
        %v914 = vld [vmem:[%s230 + $0xf90] sm:$0xff]
        %v915 = vld [vmem:[%s230 + $0xf98] sm:$0xf]
        %v916 = vld [vmem:[%s230 + $0xf9c] sm:$0xff]
        %v917 = vld [vmem:[%s230 + $0xfa4] sm:$0xf]
        %v918 = vld [vmem:[%s230 + $0xfa8] sm:$0xff]
        %v919 = vld [vmem:[%s230 + $0xfb0] sm:$0xf]
        %v920 = vld [vmem:[%s230 + $0xfb4] sm:$0xff]
        %v921 = vld [vmem:[%s230 + $0xfbc] sm:$0xf]
        %v922 = vld [vmem:[%s230 + $0xfc0] sm:$0xff]
        %v923 = vld [vmem:[%s230 + $0xfc8] sm:$0xf]
        %v924 = vld [vmem:[%s230 + $0xfcc] sm:$0xff]
        %v925 = vld [vmem:[%s230 + $0xfd4] sm:$0xf]
        %v926 = vld [vmem:[%s230 + $0xfd8] sm:$0xff]
        %v927 = vld [vmem:[%s230 + $0xfe0] sm:$0xf]
        %v928 = vld [vmem:[%s230 + $0xfe4] sm:$0xff]
        %v929 = vld [vmem:[%s230 + $0xfec] sm:$0xf]
        %v930 = vld [vmem:[%s230 + $0xff0] sm:$0xff]
        %v931 = vld [vmem:[%s230 + $0xff8] sm:$0xf]
        %v932 = vld [vmem:[%s230 + $0xffc] sm:$0xff]
        %v933 = vld [vmem:[%s230 + $0x1004] sm:$0xf]
        %v934 = vld [vmem:[%s230 + $0x1008] sm:$0xff]
        %v935 = vld [vmem:[%s230 + $0x1010] sm:$0xf]
        %v936 = vld [vmem:[%s230 + $0x1014] sm:$0xff]
        %v937 = vld [vmem:[%s230 + $0x101c] sm:$0xf]
        %v938 = vld [vmem:[%s230 + $0x1020] sm:$0xff]
        %v939 = vld [vmem:[%s230 + $0x1028] sm:$0xf]
        %v940 = vld [vmem:[%s230 + $0x102c] sm:$0xff]
        %v941 = vld [vmem:[%s230 + $0x1034] sm:$0xf]
        %v942 = vld [vmem:[%s230 + $0x1038] sm:$0xff]
        %v943 = vld [vmem:[%s230 + $0x1040] sm:$0xf]
        %v944 = vld [vmem:[%s230 + $0x1044] sm:$0xff]
        %v945 = vld [vmem:[%s230 + $0x104c] sm:$0xf]
        %v946 = vld [vmem:[%s230 + $0x1050] sm:$0xff]
        %v947 = vld [vmem:[%s230 + $0x1058] sm:$0xf]
        %v948 = vld [vmem:[%s230 + $0x105c] sm:$0xff]
        %v949 = vld [vmem:[%s230 + $0x1064] sm:$0xf]
        %v950 = vld [vmem:[%s230 + $0x1068] sm:$0xff]
        %v951 = vld [vmem:[%s230 + $0x1070] sm:$0xf]
        %v952 = vld [vmem:[%s230 + $0x1074] sm:$0xff]
        %v953 = vld [vmem:[%s230 + $0x107c] sm:$0xf]
        %v954 = vld [vmem:[%s230 + $0x1080] sm:$0xff]
        %v955 = vld [vmem:[%s230 + $0x1088] sm:$0xf]
        %v956 = vld [vmem:[%s230 + $0x108c] sm:$0xff]
        %v957 = vld [vmem:[%s230 + $0x1094] sm:$0xf]
        %v958 = vld [vmem:[%s230 + $0x1098] sm:$0xff]
        %v959 = vld [vmem:[%s230 + $0x10a0] sm:$0xf]
        %v960 = vld [vmem:[%s230 + $0x10a4] sm:$0xff]
        %v961 = vld [vmem:[%s230 + $0x10ac] sm:$0xf]
        %v962 = vld [vmem:[%s230 + $0x10b0] sm:$0xff]
        %v963 = vld [vmem:[%s230 + $0x10b8] sm:$0xf]
        %v964 = vld [vmem:[%s230 + $0x10bc] sm:$0xff]
        %v965 = vld [vmem:[%s230 + $0x10c4] sm:$0xf]
        %v966 = vld [vmem:[%s230 + $0x10c8] sm:$0xff]
        %v967 = vld [vmem:[%s230 + $0x10d0] sm:$0xf]
        %v968 = vld [vmem:[%s230 + $0x10d4] sm:$0xff]
        %v969 = vld [vmem:[%s230 + $0x10dc] sm:$0xf]
        %v970 = vld [vmem:[%s230 + $0x10e0] sm:$0xff]
        %v971 = vld [vmem:[%s230 + $0x10e8] sm:$0xf]
        %v972 = vld [vmem:[%s230 + $0x10ec] sm:$0xff]
        %v973 = vld [vmem:[%s230 + $0x10f4] sm:$0xf]
        %v974 = vld [vmem:[%s230 + $0x10f8] sm:$0xff]
        %v975 = vld [vmem:[%s230 + $0x1100] sm:$0xf]
        %v976 = vld [vmem:[%s230 + $0x1104] sm:$0xff]
        %v977 = vld [vmem:[%s230 + $0x110c] sm:$0xf]
        %v978 = vld [vmem:[%s230 + $0x1110] sm:$0xff]
        %v979 = vld [vmem:[%s230 + $0x1118] sm:$0xf]
        %v980 = vld [vmem:[%s230 + $0x111c] sm:$0xff]
        %v981 = vld [vmem:[%s230 + $0x1124] sm:$0xf]
        %v982 = vld [vmem:[%s230 + $0x1128] sm:$0xff]
        %v983 = vld [vmem:[%s230 + $0x1130] sm:$0xf]
        %v984 = vld [vmem:[%s230 + $0x1134] sm:$0xff]
        %v985 = vld [vmem:[%s230 + $0x113c] sm:$0xf]
        %v986 = vld [vmem:[%s230 + $0x1140] sm:$0xff]
        %v987 = vld [vmem:[%s230 + $0x1148] sm:$0xf]
        %v988 = vld [vmem:[%s230 + $0x114c] sm:$0xff]
        %v989 = vld [vmem:[%s230 + $0x1154] sm:$0xf]
        %v990 = vld [vmem:[%s230 + $0x1158] sm:$0xff]
        %v991 = vld [vmem:[%s230 + $0x1160] sm:$0xf]
        %v992 = vld [vmem:[%s230 + $0x1164] sm:$0xff]
        %v993 = vld [vmem:[%s230 + $0x116c] sm:$0xf]
        %v994 = vld [vmem:[%s230 + $0x1170] sm:$0xff]
        %v995 = vld [vmem:[%s230 + $0x1178] sm:$0xf]
        %v996 = vld [vmem:[%s230 + $0x117c] sm:$0xff]
        %v997 = vld [vmem:[%s230 + $0x1184] sm:$0xf]
        %v998 = vld [vmem:[%s230 + $0x1188] sm:$0xff]
        %v999 = vld [vmem:[%s230 + $0x1190] sm:$0xf]
        %v1000 = vld [vmem:[%s230 + $0x1194] sm:$0xff]
        %v1001 = vld [vmem:[%s230 + $0x119c] sm:$0xf]
        %v1002 = vld [vmem:[%s230 + $0x11a0] sm:$0xff]
        %v1003 = vld [vmem:[%s230 + $0x11a8] sm:$0xf]
        %v1004 = vld [vmem:[%s230 + $0x11ac] sm:$0xff]
        %v1005 = vld [vmem:[%s230 + $0x11b4] sm:$0xf]
        %v1006 = vld [vmem:[%s230 + $0x11b8] sm:$0xff]
        %v1007 = vld [vmem:[%s230 + $0x11c0] sm:$0xf]
        %v1008 = vld [vmem:[%s230 + $0x11c4] sm:$0xff]
        %v1009 = vld [vmem:[%s230 + $0x11cc] sm:$0xf]
        %v1010 = vld [vmem:[%s230 + $0x11d0] sm:$0xff]
        %v1011 = vld [vmem:[%s230 + $0x11d8] sm:$0xf]
        %v1012 = vld [vmem:[%s230 + $0x11dc] sm:$0xff]
        %v1013 = vld [vmem:[%s230 + $0x11e4] sm:$0xf]
        %v1014 = vld [vmem:[%s230 + $0x11e8] sm:$0xff]
        %v1015 = vld [vmem:[%s230 + $0x11f0] sm:$0xf]
        %v1016 = vld [vmem:[%s230 + $0x11f4] sm:$0xff]
        %v1017 = vld [vmem:[%s230 + $0x11fc] sm:$0xf]
        %v1018 = vld [vmem:[%s240] sm:$0xf]
        %v1019 = vld [vmem:[%s240 + $0x4] sm:$0xf]
        %v1020 = vld [vmem:[%s240 + $0x8] sm:$0xf]
        %v1021 = vld [vmem:[%s240 + $0xc] sm:$0xf]
        %v1022 = vld [vmem:[%s240 + $0x10] sm:$0xf]
        %v1023 = vld [vmem:[%s240 + $0x14] sm:$0xf]
        %v1024 = vld [vmem:[%s240 + $0x18] sm:$0xf]
        %v1025 = vld [vmem:[%s240 + $0x1c] sm:$0xf]
        %v1026 = vld [vmem:[%s240 + $0x20] sm:$0xf]
        %v1027 = vld [vmem:[%s240 + $0x24] sm:$0xf]
        %v1028 = vld [vmem:[%s240 + $0x28] sm:$0xf]
        %v1029 = vld [vmem:[%s240 + $0x2c] sm:$0xf]
        %v1030 = vld [vmem:[%s240 + $0x30] sm:$0xf]
        %v1031 = vld [vmem:[%s240 + $0x34] sm:$0xf]
        %v1032 = vld [vmem:[%s240 + $0x38] sm:$0xf]
        %v1033 = vld [vmem:[%s240 + $0x3c] sm:$0xf]
        %v1034 = vld [vmem:[%s240 + $0x40] sm:$0xf]
        %v1035 = vld [vmem:[%s240 + $0x44] sm:$0xf]
        %v1036 = vld [vmem:[%s240 + $0x48] sm:$0xf]
        %v1037 = vld [vmem:[%s240 + $0x4c] sm:$0xf]
        %v1038 = vld [vmem:[%s240 + $0x50] sm:$0xf]
        %v1039 = vld [vmem:[%s240 + $0x54] sm:$0xf]
        %v1040 = vld [vmem:[%s240 + $0x58] sm:$0xf]
        %v1041 = vld [vmem:[%s240 + $0x5c] sm:$0xf]
        %v1042 = vld [vmem:[%s240 + $0x60] sm:$0xf]
        %v1043 = vld [vmem:[%s240 + $0x64] sm:$0xf]
        %v1044 = vld [vmem:[%s240 + $0x68] sm:$0xf]
        %v1045 = vld [vmem:[%s240 + $0x6c] sm:$0xf]
        %v1046 = vld [vmem:[%s240 + $0x70] sm:$0xf]
        %v1047 = vld [vmem:[%s240 + $0x74] sm:$0xf]
        %v1048 = vld [vmem:[%s240 + $0x78] sm:$0xf]
        %v1049 = vld [vmem:[%s240 + $0x7c] sm:$0xf]
        %v1050 = vld [vmem:[%s240 + $0x80] sm:$0xf]
        %v1051 = vld [vmem:[%s240 + $0x84] sm:$0xf]
        %v1052 = vld [vmem:[%s240 + $0x88] sm:$0xf]
        %v1053 = vld [vmem:[%s240 + $0x8c] sm:$0xf]
        %v1054 = vld [vmem:[%s240 + $0x90] sm:$0xf]
        %v1055 = vld [vmem:[%s240 + $0x94] sm:$0xf]
        %v1056 = vld [vmem:[%s240 + $0x98] sm:$0xf]
        %v1057 = vld [vmem:[%s240 + $0x9c] sm:$0xf]
        %v1058 = vld [vmem:[%s240 + $0xa0] sm:$0xf]
        %v1059 = vld [vmem:[%s240 + $0xa4] sm:$0xf]
        %v1060 = vld [vmem:[%s240 + $0xa8] sm:$0xf]
        %v1061 = vld [vmem:[%s240 + $0xac] sm:$0xf]
        %v1062 = vld [vmem:[%s240 + $0xb0] sm:$0xf]
        %v1063 = vld [vmem:[%s240 + $0xb4] sm:$0x3]
        %v1064 = vld [vmem:[%s243] sm:$0x1]
        %v1066 = vlaneseq
        %v1067 = vshrl.u32 %v1066, 7
        %v1068 = vsub.s32 0, %v1067
        %v1069 = vrot.slane %v1064, %v1068
        %v1839 = vunpack.c.l.b16 %v250
        %v1840 = vunpack.c.h.b16 %v250
        %v1841 = vunpack.c.l.b16 %v251
        %v1842 = vunpack.c.l.b16 %v252
        %v1843 = vunpack.c.h.b16 %v252
        %v1844 = vunpack.c.l.b16 %v253
        %v1845 = vunpack.c.l.b16 %v254
        %v1846 = vunpack.c.h.b16 %v254
        %v1847 = vunpack.c.l.b16 %v255
        %v1848 = vunpack.c.l.b16 %v256
        %v1849 = vunpack.c.h.b16 %v256
        %v1850 = vunpack.c.l.b16 %v257
        %v1851 = vunpack.c.l.b16 %v258
        %v1852 = vunpack.c.h.b16 %v258
        %v1853 = vunpack.c.l.b16 %v259
        %v1854 = vunpack.c.l.b16 %v260
        %v1855 = vunpack.c.h.b16 %v260
        %v1856 = vunpack.c.l.b16 %v261
        %v1857 = vunpack.c.l.b16 %v262
        %v1858 = vunpack.c.h.b16 %v262
        %v1859 = vunpack.c.l.b16 %v263
        %v1860 = vunpack.c.l.b16 %v264
        %v1861 = vunpack.c.h.b16 %v264
        %v1862 = vunpack.c.l.b16 %v265
        %v1863 = vunpack.c.l.b16 %v266
        %v1864 = vunpack.c.h.b16 %v266
        %v1865 = vunpack.c.l.b16 %v267
        %v1866 = vunpack.c.l.b16 %v268
        %v1867 = vunpack.c.h.b16 %v268
        %v1868 = vunpack.c.l.b16 %v269
        %v1869 = vunpack.c.l.b16 %v270
        %v1870 = vunpack.c.h.b16 %v270
        %v1871 = vunpack.c.l.b16 %v271
        %v1872 = vunpack.c.l.b16 %v272
        %v1873 = vunpack.c.h.b16 %v272
        %v1874 = vunpack.c.l.b16 %v273
        %v1875 = vunpack.c.l.b16 %v274
        %v1876 = vunpack.c.h.b16 %v274
        %v1877 = vunpack.c.l.b16 %v275
        %v1878 = vunpack.c.l.b16 %v276
        %v1879 = vunpack.c.h.b16 %v276
        %v1880 = vunpack.c.l.b16 %v277
        %v1881 = vunpack.c.l.b16 %v278
        %v1882 = vunpack.c.h.b16 %v278
        %v1883 = vunpack.c.l.b16 %v279
        %v1884 = vunpack.c.l.b16 %v280
        %v1885 = vunpack.c.h.b16 %v280
        %v1886 = vunpack.c.l.b16 %v281
        %v1887 = vunpack.c.l.b16 %v282
        %v1888 = vunpack.c.h.b16 %v282
        %v1889 = vunpack.c.l.b16 %v283
        %v1890 = vunpack.c.l.b16 %v284
        %v1891 = vunpack.c.h.b16 %v284
        %v1892 = vunpack.c.l.b16 %v285
        %v1893 = vunpack.c.l.b16 %v286
        %v1894 = vunpack.c.h.b16 %v286
        %v1895 = vunpack.c.l.b16 %v287
        %v1896 = vunpack.c.l.b16 %v288
        %v1897 = vunpack.c.h.b16 %v288
        %v1898 = vunpack.c.l.b16 %v289
        %v1899 = vunpack.c.l.b16 %v290
        %v1900 = vunpack.c.h.b16 %v290
        %v1901 = vunpack.c.l.b16 %v291
        %v1902 = vunpack.c.l.b16 %v292
        %v1903 = vunpack.c.h.b16 %v292
        %v1904 = vunpack.c.l.b16 %v293
        %v1905 = vunpack.c.l.b16 %v294
        %v1906 = vunpack.c.h.b16 %v294
        %v1907 = vunpack.c.l.b16 %v295
        %v1908 = vunpack.c.l.b16 %v296
        %v1909 = vunpack.c.h.b16 %v296
        %v1910 = vunpack.c.l.b16 %v297
        %v1911 = vunpack.c.l.b16 %v298
        %v1912 = vunpack.c.h.b16 %v298
        %v1913 = vunpack.c.l.b16 %v299
        %v1914 = vunpack.c.l.b16 %v300
        %v1915 = vunpack.c.h.b16 %v300
        %v1916 = vunpack.c.l.b16 %v301
        %v1917 = vunpack.c.l.b16 %v302
        %v1918 = vunpack.c.h.b16 %v302
        %v1919 = vunpack.c.l.b16 %v303
        %v1920 = vunpack.c.l.b16 %v304
        %v1921 = vunpack.c.h.b16 %v304
        %v1922 = vunpack.c.l.b16 %v305
        %v1923 = vunpack.c.l.b16 %v306
        %v1924 = vunpack.c.h.b16 %v306
        %v1925 = vunpack.c.l.b16 %v307
        %v1926 = vunpack.c.l.b16 %v308
        %v1927 = vunpack.c.h.b16 %v308
        %v1928 = vunpack.c.l.b16 %v309
        %v1929 = vunpack.c.l.b16 %v310
        %v1930 = vunpack.c.h.b16 %v310
        %v1931 = vunpack.c.l.b16 %v311
        %v1932 = vunpack.c.l.b16 %v312
        %v1933 = vunpack.c.h.b16 %v312
        %v1934 = vunpack.c.l.b16 %v313
        %v1935 = vunpack.c.l.b16 %v314
        %v1936 = vunpack.c.h.b16 %v314
        %v1937 = vunpack.c.l.b16 %v315
        %v1938 = vunpack.c.l.b16 %v316
        %v1939 = vunpack.c.h.b16 %v316
        %v1940 = vunpack.c.l.b16 %v317
        %v1941 = vunpack.c.l.b16 %v318
        %v1942 = vunpack.c.h.b16 %v318
        %v1943 = vunpack.c.l.b16 %v319
        %v1944 = vunpack.c.l.b16 %v320
        %v1945 = vunpack.c.h.b16 %v320
        %v1946 = vunpack.c.l.b16 %v321
        %v1947 = vunpack.c.l.b16 %v322
        %v1948 = vunpack.c.h.b16 %v322
        %v1949 = vunpack.c.l.b16 %v323
        %v1950 = vunpack.c.l.b16 %v324
        %v1951 = vunpack.c.h.b16 %v324
        %v1952 = vunpack.c.l.b16 %v325
        %v1953 = vunpack.c.l.b16 %v326
        %v1954 = vunpack.c.h.b16 %v326
        %v1955 = vunpack.c.l.b16 %v327
        %v1956 = vunpack.c.l.b16 %v328
        %v1957 = vunpack.c.h.b16 %v328
        %v1958 = vunpack.c.l.b16 %v329
        %v1959 = vunpack.c.l.b16 %v330
        %v1960 = vunpack.c.h.b16 %v330
        %v1961 = vunpack.c.l.b16 %v331
        %v1962 = vunpack.c.l.b16 %v332
        %v1963 = vunpack.c.h.b16 %v332
        %v1964 = vunpack.c.l.b16 %v333
        %v1965 = vunpack.c.l.b16 %v334
        %v1966 = vunpack.c.h.b16 %v334
        %v1967 = vunpack.c.l.b16 %v335
        %v1968 = vunpack.c.l.b16 %v336
        %v1969 = vunpack.c.h.b16 %v336
        %v1970 = vunpack.c.l.b16 %v337
        %v1971 = vunpack.c.l.b16 %v338
        %v1972 = vunpack.c.h.b16 %v338
        %v1973 = vunpack.c.l.b16 %v339
        %v1974 = vunpack.c.l.b16 %v340
        %v1975 = vunpack.c.h.b16 %v340
        %v1976 = vunpack.c.l.b16 %v341
        %v1977 = vunpack.c.l.b16 %v342
        %v1978 = vunpack.c.h.b16 %v342
        %v1979 = vunpack.c.l.b16 %v343
        %v1980 = vunpack.c.l.b16 %v344
        %v1981 = vunpack.c.h.b16 %v344
        %v1982 = vunpack.c.l.b16 %v345
        %v1983 = vunpack.c.l.b16 %v346
        %v1984 = vunpack.c.h.b16 %v346
        %v1985 = vunpack.c.l.b16 %v347
        %v1986 = vunpack.c.l.b16 %v348
        %v1987 = vunpack.c.h.b16 %v348
        %v1988 = vunpack.c.l.b16 %v349
        %v1989 = vunpack.c.l.b16 %v350
        %v1990 = vunpack.c.h.b16 %v350
        %v1991 = vunpack.c.l.b16 %v351
        %v1992 = vunpack.c.l.b16 %v352
        %v1993 = vunpack.c.h.b16 %v352
        %v1994 = vunpack.c.l.b16 %v353
        %v1995 = vunpack.c.l.b16 %v354
        %v1996 = vunpack.c.h.b16 %v354
        %v1997 = vunpack.c.l.b16 %v355
        %v1998 = vunpack.c.l.b16 %v356
        %v1999 = vunpack.c.h.b16 %v356
        %v2000 = vunpack.c.l.b16 %v357
        %v2001 = vunpack.c.l.b16 %v358
        %v2002 = vunpack.c.h.b16 %v358
        %v2003 = vunpack.c.l.b16 %v359
        %v2004 = vunpack.c.l.b16 %v360
        %v2005 = vunpack.c.h.b16 %v360
        %v2006 = vunpack.c.l.b16 %v361
        %v2007 = vunpack.c.l.b16 %v362
        %v2008 = vunpack.c.h.b16 %v362
        %v2009 = vunpack.c.l.b16 %v363
        %v2010 = vunpack.c.l.b16 %v364
        %v2011 = vunpack.c.h.b16 %v364
        %v2012 = vunpack.c.l.b16 %v365
        %v2013 = vunpack.c.l.b16 %v366
        %v2014 = vunpack.c.h.b16 %v366
        %v2015 = vunpack.c.l.b16 %v367
        %v2016 = vunpack.c.l.b16 %v368
        %v2017 = vunpack.c.h.b16 %v368
        %v2018 = vunpack.c.l.b16 %v369
        %v2019 = vunpack.c.l.b16 %v370
        %v2020 = vunpack.c.h.b16 %v370
        %v2021 = vunpack.c.l.b16 %v371
        %v2022 = vunpack.c.l.b16 %v372
        %v2023 = vunpack.c.h.b16 %v372
        %v2024 = vunpack.c.l.b16 %v373
        %v2025 = vunpack.c.l.b16 %v374
        %v2026 = vunpack.c.h.b16 %v374
        %v2027 = vunpack.c.l.b16 %v375
        %v2028 = vunpack.c.l.b16 %v376
        %v2029 = vunpack.c.h.b16 %v376
        %v2030 = vunpack.c.l.b16 %v377
        %v2031 = vunpack.c.l.b16 %v378
        %v2032 = vunpack.c.h.b16 %v378
        %v2033 = vunpack.c.l.b16 %v379
        %v2034 = vunpack.c.l.b16 %v380
        %v2035 = vunpack.c.h.b16 %v380
        %v2036 = vunpack.c.l.b16 %v381
        %v2037 = vunpack.c.l.b16 %v382
        %v2038 = vunpack.c.h.b16 %v382
        %v2039 = vunpack.c.l.b16 %v383
        %v2040 = vunpack.c.l.b16 %v384
        %v2041 = vunpack.c.h.b16 %v384
        %v2042 = vunpack.c.l.b16 %v385
        %v2043 = vunpack.c.l.b16 %v386
        %v2044 = vunpack.c.h.b16 %v386
        %v2045 = vunpack.c.l.b16 %v387
        %v2046 = vunpack.c.l.b16 %v388
        %v2047 = vunpack.c.h.b16 %v388
        %v2048 = vunpack.c.l.b16 %v389
        %v2049 = vunpack.c.l.b16 %v390
        %v2050 = vunpack.c.h.b16 %v390
        %v2051 = vunpack.c.l.b16 %v391
        %v2052 = vunpack.c.l.b16 %v392
        %v2053 = vunpack.c.h.b16 %v392
        %v2054 = vunpack.c.l.b16 %v393
        %v2055 = vunpack.c.l.b16 %v394
        %v2056 = vunpack.c.h.b16 %v394
        %v2057 = vunpack.c.l.b16 %v395
        %v2058 = vunpack.c.l.b16 %v396
        %v2059 = vunpack.c.h.b16 %v396
        %v2060 = vunpack.c.l.b16 %v397
        %v2061 = vunpack.c.l.b16 %v398
        %v2062 = vunpack.c.h.b16 %v398
        %v2063 = vunpack.c.l.b16 %v399
        %v2064 = vunpack.c.l.b16 %v400
        %v2065 = vunpack.c.h.b16 %v400
        %v2066 = vunpack.c.l.b16 %v401
        %v2067 = vunpack.c.l.b16 %v402
        %v2068 = vunpack.c.h.b16 %v402
        %v2069 = vunpack.c.l.b16 %v403
        %v2070 = vunpack.c.l.b16 %v404
        %v2071 = vunpack.c.h.b16 %v404
        %v2072 = vunpack.c.l.b16 %v405
        %v2073 = vunpack.c.l.b16 %v406
        %v2074 = vunpack.c.h.b16 %v406
        %v2075 = vunpack.c.l.b16 %v407
        %v2076 = vunpack.c.l.b16 %v408
        %v2077 = vunpack.c.h.b16 %v408
        %v2078 = vunpack.c.l.b16 %v409
        %v2079 = vunpack.c.l.b16 %v410
        %v2080 = vunpack.c.h.b16 %v410
        %v2081 = vunpack.c.l.b16 %v411
        %v2082 = vunpack.c.l.b16 %v412
        %v2083 = vunpack.c.h.b16 %v412
        %v2084 = vunpack.c.l.b16 %v413
        %v2085 = vunpack.c.l.b16 %v414
        %v2086 = vunpack.c.h.b16 %v414
        %v2087 = vunpack.c.l.b16 %v415
        %v2088 = vunpack.c.l.b16 %v416
        %v2089 = vunpack.c.h.b16 %v416
        %v2090 = vunpack.c.l.b16 %v417
        %v2091 = vunpack.c.l.b16 %v418
        %v2092 = vunpack.c.h.b16 %v418
        %v2093 = vunpack.c.l.b16 %v419
        %v2094 = vunpack.c.l.b16 %v420
        %v2095 = vunpack.c.h.b16 %v420
        %v2096 = vunpack.c.l.b16 %v421
        %v2097 = vunpack.c.l.b16 %v422
        %v2098 = vunpack.c.h.b16 %v422
        %v2099 = vunpack.c.l.b16 %v423
        %v2100 = vunpack.c.l.b16 %v424
        %v2101 = vunpack.c.h.b16 %v424
        %v2102 = vunpack.c.l.b16 %v425
        %v2103 = vunpack.c.l.b16 %v426
        %v2104 = vunpack.c.h.b16 %v426
        %v2105 = vunpack.c.l.b16 %v427
        %v2106 = vunpack.c.l.b16 %v428
        %v2107 = vunpack.c.h.b16 %v428
        %v2108 = vunpack.c.l.b16 %v429
        %v2109 = vunpack.c.l.b16 %v430
        %v2110 = vunpack.c.h.b16 %v430
        %v2111 = vunpack.c.l.b16 %v431
        %v2112 = vunpack.c.l.b16 %v432
        %v2113 = vunpack.c.h.b16 %v432
        %v2114 = vunpack.c.l.b16 %v433
        %v2115 = vunpack.c.l.b16 %v434
        %v2116 = vunpack.c.h.b16 %v434
        %v2117 = vunpack.c.l.b16 %v435
        %v2118 = vunpack.c.l.b16 %v436
        %v2119 = vunpack.c.h.b16 %v436
        %v2120 = vunpack.c.l.b16 %v437
        %v2121 = vunpack.c.l.b16 %v438
        %v2122 = vunpack.c.h.b16 %v438
        %v2123 = vunpack.c.l.b16 %v439
        %v2124 = vunpack.c.l.b16 %v440
        %v2125 = vunpack.c.h.b16 %v440
        %v2126 = vunpack.c.l.b16 %v441
        %v2127 = vunpack.c.l.b16 %v442
        %v2128 = vunpack.c.h.b16 %v442
        %v2129 = vunpack.c.l.b16 %v443
        %v2130 = vunpack.c.l.b16 %v444
        %v2131 = vunpack.c.h.b16 %v444
        %v2132 = vunpack.c.l.b16 %v445
        %v2133 = vunpack.c.l.b16 %v446
        %v2134 = vunpack.c.h.b16 %v446
        %v2135 = vunpack.c.l.b16 %v447
        %v2136 = vunpack.c.l.b16 %v448
        %v2137 = vunpack.c.h.b16 %v448
        %v2138 = vunpack.c.l.b16 %v449
        %v2139 = vunpack.c.l.b16 %v450
        %v2140 = vunpack.c.h.b16 %v450
        %v2141 = vunpack.c.l.b16 %v451
        %v2142 = vunpack.c.l.b16 %v452
        %v2143 = vunpack.c.h.b16 %v452
        %v2144 = vunpack.c.l.b16 %v453
        %v2145 = vunpack.c.l.b16 %v454
        %v2146 = vunpack.c.h.b16 %v454
        %v2147 = vunpack.c.l.b16 %v455
        %v2148 = vunpack.c.l.b16 %v456
        %v2149 = vunpack.c.h.b16 %v456
        %v2150 = vunpack.c.l.b16 %v457
        %v2151 = vunpack.c.l.b16 %v458
        %v2152 = vunpack.c.h.b16 %v458
        %v2153 = vunpack.c.l.b16 %v459
        %v2154 = vunpack.c.l.b16 %v460
        %v2155 = vunpack.c.h.b16 %v460
        %v2156 = vunpack.c.l.b16 %v461
        %v2157 = vunpack.c.l.b16 %v462
        %v2158 = vunpack.c.h.b16 %v462
        %v2159 = vunpack.c.l.b16 %v463
        %v2160 = vunpack.c.l.b16 %v464
        %v2161 = vunpack.c.h.b16 %v464
        %v2162 = vunpack.c.l.b16 %v465
        %v2163 = vunpack.c.l.b16 %v466
        %v2164 = vunpack.c.h.b16 %v466
        %v2165 = vunpack.c.l.b16 %v467
        %v2166 = vunpack.c.l.b16 %v468
        %v2167 = vunpack.c.h.b16 %v468
        %v2168 = vunpack.c.l.b16 %v469
        %v2169 = vunpack.c.l.b16 %v470
        %v2170 = vunpack.c.h.b16 %v470
        %v2171 = vunpack.c.l.b16 %v471
        %v2172 = vunpack.c.l.b16 %v472
        %v2173 = vunpack.c.h.b16 %v472
        %v2174 = vunpack.c.l.b16 %v473
        %v2175 = vunpack.c.l.b16 %v474
        %v2176 = vunpack.c.h.b16 %v474
        %v2177 = vunpack.c.l.b16 %v475
        %v2178 = vunpack.c.l.b16 %v476
        %v2179 = vunpack.c.h.b16 %v476
        %v2180 = vunpack.c.l.b16 %v477
        %v2181 = vunpack.c.l.b16 %v478
        %v2182 = vunpack.c.h.b16 %v478
        %v2183 = vunpack.c.l.b16 %v479
        %v2184 = vunpack.c.l.b16 %v480
        %v2185 = vunpack.c.h.b16 %v480
        %v2186 = vunpack.c.l.b16 %v481
        %v2187 = vunpack.c.l.b16 %v482
        %v2188 = vunpack.c.h.b16 %v482
        %v2189 = vunpack.c.l.b16 %v483
        %v2190 = vunpack.c.l.b16 %v484
        %v2191 = vunpack.c.h.b16 %v484
        %v2192 = vunpack.c.l.b16 %v485
        %v2193 = vunpack.c.l.b16 %v486
        %v2194 = vunpack.c.h.b16 %v486
        %v2195 = vunpack.c.l.b16 %v487
        %v2196 = vunpack.c.l.b16 %v488
        %v2197 = vunpack.c.h.b16 %v488
        %v2198 = vunpack.c.l.b16 %v489
        %v2199 = vunpack.c.l.b16 %v490
        %v2200 = vunpack.c.h.b16 %v490
        %v2201 = vunpack.c.l.b16 %v491
        %v2202 = vunpack.c.l.b16 %v492
        %v2203 = vunpack.c.h.b16 %v492
        %v2204 = vunpack.c.l.b16 %v493
        %v2205 = vunpack.c.l.b16 %v494
        %v2206 = vunpack.c.h.b16 %v494
        %v2207 = vunpack.c.l.b16 %v495
        %v2208 = vunpack.c.l.b16 %v496
        %v2209 = vunpack.c.h.b16 %v496
        %v2210 = vunpack.c.l.b16 %v497
        %v2211 = vunpack.c.l.b16 %v498
        %v2212 = vunpack.c.h.b16 %v498
        %v2213 = vunpack.c.l.b16 %v499
        %v2214 = vunpack.c.l.b16 %v500
        %v2215 = vunpack.c.h.b16 %v500
        %v2216 = vunpack.c.l.b16 %v501
        %v2217 = vunpack.c.l.b16 %v502
        %v2218 = vunpack.c.h.b16 %v502
        %v2219 = vunpack.c.l.b16 %v503
        %v2220 = vunpack.c.l.b16 %v504
        %v2221 = vunpack.c.h.b16 %v504
        %v2222 = vunpack.c.l.b16 %v505
        %v2223 = vunpack.c.l.b16 %v506
        %v2224 = vunpack.c.h.b16 %v506
        %v2225 = vunpack.c.l.b16 %v507
        %v2226 = vunpack.c.l.b16 %v508
        %v2227 = vunpack.c.h.b16 %v508
        %v2228 = vunpack.c.l.b16 %v509
        %v2229 = vunpack.c.l.b16 %v510
        %v2230 = vunpack.c.h.b16 %v510
        %v2231 = vunpack.c.l.b16 %v511
        %v2232 = vunpack.c.l.b16 %v512
        %v2233 = vunpack.c.h.b16 %v512
        %v2234 = vunpack.c.l.b16 %v513
        %v2235 = vunpack.c.l.b16 %v514
        %v2236 = vunpack.c.h.b16 %v514
        %v2237 = vunpack.c.l.b16 %v515
        %v2238 = vunpack.c.l.b16 %v516
        %v2239 = vunpack.c.h.b16 %v516
        %v2240 = vunpack.c.l.b16 %v517
        %v2241 = vunpack.c.l.b16 %v518
        %v2242 = vunpack.c.h.b16 %v518
        %v2243 = vunpack.c.l.b16 %v519
        %v2244 = vunpack.c.l.b16 %v520
        %v2245 = vunpack.c.h.b16 %v520
        %v2246 = vunpack.c.l.b16 %v521
        %v2247 = vunpack.c.l.b16 %v522
        %v2248 = vunpack.c.h.b16 %v522
        %v2249 = vunpack.c.l.b16 %v523
        %v2250 = vunpack.c.l.b16 %v524
        %v2251 = vunpack.c.h.b16 %v524
        %v2252 = vunpack.c.l.b16 %v525
        %v2253 = vunpack.c.l.b16 %v526
        %v2254 = vunpack.c.h.b16 %v526
        %v2255 = vunpack.c.l.b16 %v527
        %v2256 = vunpack.c.l.b16 %v528
        %v2257 = vunpack.c.h.b16 %v528
        %v2258 = vunpack.c.l.b16 %v529
        %v2259 = vunpack.c.l.b16 %v530
        %v2260 = vunpack.c.h.b16 %v530
        %v2261 = vunpack.c.l.b16 %v531
        %v2262 = vunpack.c.l.b16 %v532
        %v2263 = vunpack.c.h.b16 %v532
        %v2264 = vunpack.c.l.b16 %v533
        %v2265 = vunpack.c.l.b16 %v534
        %v2266 = vunpack.c.h.b16 %v534
        %v2267 = vunpack.c.l.b16 %v535
        %v2268 = vunpack.c.l.b16 %v536
        %v2269 = vunpack.c.h.b16 %v536
        %v2270 = vunpack.c.l.b16 %v537
        %v2271 = vunpack.c.l.b16 %v538
        %v2272 = vunpack.c.h.b16 %v538
        %v2273 = vunpack.c.l.b16 %v539
        %v2274 = vunpack.c.l.b16 %v540
        %v2275 = vunpack.c.h.b16 %v540
        %v2276 = vunpack.c.l.b16 %v541
        %v2277 = vunpack.c.l.b16 %v542
        %v2278 = vunpack.c.h.b16 %v542
        %v2279 = vunpack.c.l.b16 %v543
        %v2280 = vunpack.c.l.b16 %v544
        %v2281 = vunpack.c.h.b16 %v544
        %v2282 = vunpack.c.l.b16 %v545
        %v2283 = vunpack.c.l.b16 %v546
        %v2284 = vunpack.c.h.b16 %v546
        %v2285 = vunpack.c.l.b16 %v547
        %v2286 = vunpack.c.l.b16 %v548
        %v2287 = vunpack.c.h.b16 %v548
        %v2288 = vunpack.c.l.b16 %v549
        %v2289 = vunpack.c.l.b16 %v550
        %v2290 = vunpack.c.h.b16 %v550
        %v2291 = vunpack.c.l.b16 %v551
        %v2292 = vunpack.c.l.b16 %v552
        %v2293 = vunpack.c.h.b16 %v552
        %v2294 = vunpack.c.l.b16 %v553
        %v2295 = vunpack.c.l.b16 %v554
        %v2296 = vunpack.c.h.b16 %v554
        %v2297 = vunpack.c.l.b16 %v555
        %v2298 = vunpack.c.l.b16 %v556
        %v2299 = vunpack.c.h.b16 %v556
        %v2300 = vunpack.c.l.b16 %v557
        %v2301 = vunpack.c.l.b16 %v558
        %v2302 = vunpack.c.h.b16 %v558
        %v2303 = vunpack.c.l.b16 %v559
        %v2304 = vunpack.c.l.b16 %v560
        %v2305 = vunpack.c.h.b16 %v560
        %v2306 = vunpack.c.l.b16 %v561
        %v2307 = vunpack.c.l.b16 %v562
        %v2308 = vunpack.c.h.b16 %v562
        %v2309 = vunpack.c.l.b16 %v563
        %v2310 = vunpack.c.l.b16 %v564
        %v2311 = vunpack.c.h.b16 %v564
        %v2312 = vunpack.c.l.b16 %v565
        %v2313 = vunpack.c.l.b16 %v566
        %v2314 = vunpack.c.h.b16 %v566
        %v2315 = vunpack.c.l.b16 %v567
        %v2316 = vunpack.c.l.b16 %v568
        %v2317 = vunpack.c.h.b16 %v568
        %v2318 = vunpack.c.l.b16 %v569
        %v2319 = vunpack.c.l.b16 %v570
        %v2320 = vunpack.c.h.b16 %v570
        %v2321 = vunpack.c.l.b16 %v571
        %v2322 = vunpack.c.l.b16 %v572
        %v2323 = vunpack.c.h.b16 %v572
        %v2324 = vunpack.c.l.b16 %v573
        %v2325 = vunpack.c.l.b16 %v574
        %v2326 = vunpack.c.h.b16 %v574
        %v2327 = vunpack.c.l.b16 %v575
        %v2328 = vunpack.c.l.b16 %v576
        %v2329 = vunpack.c.h.b16 %v576
        %v2330 = vunpack.c.l.b16 %v577
        %v2331 = vunpack.c.l.b16 %v578
        %v2332 = vunpack.c.h.b16 %v578
        %v2333 = vunpack.c.l.b16 %v579
        %v2334 = vunpack.c.l.b16 %v580
        %v2335 = vunpack.c.h.b16 %v580
        %v2336 = vunpack.c.l.b16 %v581
        %v2337 = vunpack.c.l.b16 %v582
        %v2338 = vunpack.c.h.b16 %v582
        %v2339 = vunpack.c.l.b16 %v583
        %v2340 = vunpack.c.l.b16 %v584
        %v2341 = vunpack.c.h.b16 %v584
        %v2342 = vunpack.c.l.b16 %v585
        %v2343 = vunpack.c.l.b16 %v586
        %v2344 = vunpack.c.h.b16 %v586
        %v2345 = vunpack.c.l.b16 %v587
        %v2346 = vunpack.c.l.b16 %v588
        %v2347 = vunpack.c.h.b16 %v588
        %v2348 = vunpack.c.l.b16 %v589
        %v2349 = vunpack.c.l.b16 %v590
        %v2350 = vunpack.c.h.b16 %v590
        %v2351 = vunpack.c.l.b16 %v591
        %v2352 = vunpack.c.l.b16 %v592
        %v2353 = vunpack.c.h.b16 %v592
        %v2354 = vunpack.c.l.b16 %v593
        %v2355 = vunpack.c.l.b16 %v594
        %v2356 = vunpack.c.h.b16 %v594
        %v2357 = vunpack.c.l.b16 %v595
        %v2358 = vunpack.c.l.b16 %v596
        %v2359 = vunpack.c.h.b16 %v596
        %v2360 = vunpack.c.l.b16 %v597
        %v2361 = vunpack.c.l.b16 %v598
        %v2362 = vunpack.c.h.b16 %v598
        %v2363 = vunpack.c.l.b16 %v599
        %v2364 = vunpack.c.l.b16 %v600
        %v2365 = vunpack.c.h.b16 %v600
        %v2366 = vunpack.c.l.b16 %v601
        %v2367 = vunpack.c.l.b16 %v602
        %v2368 = vunpack.c.h.b16 %v602
        %v2369 = vunpack.c.l.b16 %v603
        %v2370 = vunpack.c.l.b16 %v604
        %v2371 = vunpack.c.h.b16 %v604
        %v2372 = vunpack.c.l.b16 %v605
        %v2373 = vunpack.c.l.b16 %v606
        %v2374 = vunpack.c.h.b16 %v606
        %v2375 = vunpack.c.l.b16 %v607
        %v2376 = vunpack.c.l.b16 %v608
        %v2377 = vunpack.c.h.b16 %v608
        %v2378 = vunpack.c.l.b16 %v609
        %v2379 = vunpack.c.l.b16 %v610
        %v2380 = vunpack.c.h.b16 %v610
        %v2381 = vunpack.c.l.b16 %v611
        %v2382 = vunpack.c.l.b16 %v612
        %v2383 = vunpack.c.h.b16 %v612
        %v2384 = vunpack.c.l.b16 %v613
        %v2385 = vunpack.c.l.b16 %v614
        %v2386 = vunpack.c.h.b16 %v614
        %v2387 = vunpack.c.l.b16 %v615
        %v2388 = vunpack.c.l.b16 %v616
        %v2389 = vunpack.c.h.b16 %v616
        %v2390 = vunpack.c.l.b16 %v617
        %v2391 = vunpack.c.l.b16 %v618
        %v2392 = vunpack.c.h.b16 %v618
        %v2393 = vunpack.c.l.b16 %v619
        %v2394 = vunpack.c.l.b16 %v620
        %v2395 = vunpack.c.h.b16 %v620
        %v2396 = vunpack.c.l.b16 %v621
        %v2397 = vunpack.c.l.b16 %v622
        %v2398 = vunpack.c.h.b16 %v622
        %v2399 = vunpack.c.l.b16 %v623
        %v2400 = vunpack.c.l.b16 %v624
        %v2401 = vunpack.c.h.b16 %v624
        %v2402 = vunpack.c.l.b16 %v625
        %v2403 = vunpack.c.l.b16 %v626
        %v2404 = vunpack.c.h.b16 %v626
        %v2405 = vunpack.c.l.b16 %v627
        %v2406 = vunpack.c.l.b16 %v628
        %v2407 = vunpack.c.h.b16 %v628
        %v2408 = vunpack.c.l.b16 %v629
        %v2409 = vunpack.c.l.b16 %v630
        %v2410 = vunpack.c.h.b16 %v630
        %v2411 = vunpack.c.l.b16 %v631
        %v2412 = vunpack.c.l.b16 %v632
        %v2413 = vunpack.c.h.b16 %v632
        %v2414 = vunpack.c.l.b16 %v633
        %v2415 = vunpack.c.l.b16 %v634
        %v2416 = vunpack.c.h.b16 %v634
        %v2417 = vunpack.c.l.b16 %v635
        %v2418 = vunpack.c.l.b16 %v636
        %v2419 = vunpack.c.h.b16 %v636
        %v2420 = vunpack.c.l.b16 %v637
        %v2421 = vunpack.c.l.b16 %v638
        %v2422 = vunpack.c.h.b16 %v638
        %v2423 = vunpack.c.l.b16 %v639
        %v2424 = vunpack.c.l.b16 %v640
        %v2425 = vunpack.c.h.b16 %v640
        %v2426 = vunpack.c.l.b16 %v641
        %v2427 = vunpack.c.l.b16 %v642
        %v2428 = vunpack.c.h.b16 %v642
        %v2429 = vunpack.c.l.b16 %v643
        %v2430 = vunpack.c.l.b16 %v644
        %v2431 = vunpack.c.h.b16 %v644
        %v2432 = vunpack.c.l.b16 %v645
        %v2433 = vunpack.c.l.b16 %v646
        %v2434 = vunpack.c.h.b16 %v646
        %v2435 = vunpack.c.l.b16 %v647
        %v2436 = vunpack.c.l.b16 %v648
        %v2437 = vunpack.c.h.b16 %v648
        %v2438 = vunpack.c.l.b16 %v649
        %v2439 = vunpack.c.l.b16 %v650
        %v2440 = vunpack.c.h.b16 %v650
        %v2441 = vunpack.c.l.b16 %v651
        %v2442 = vunpack.c.l.b16 %v652
        %v2443 = vunpack.c.h.b16 %v652
        %v2444 = vunpack.c.l.b16 %v653
        %v2445 = vunpack.c.l.b16 %v654
        %v2446 = vunpack.c.h.b16 %v654
        %v2447 = vunpack.c.l.b16 %v655
        %v2448 = vunpack.c.l.b16 %v656
        %v2449 = vunpack.c.h.b16 %v656
        %v2450 = vunpack.c.l.b16 %v657
        %v2451 = vunpack.c.l.b16 %v658
        %v2452 = vunpack.c.h.b16 %v658
        %v2453 = vunpack.c.l.b16 %v659
        %v2454 = vunpack.c.l.b16 %v660
        %v2455 = vunpack.c.h.b16 %v660
        %v2456 = vunpack.c.l.b16 %v661
        %v2457 = vunpack.c.l.b16 %v662
        %v2458 = vunpack.c.h.b16 %v662
        %v2459 = vunpack.c.l.b16 %v663
        %v2460 = vunpack.c.l.b16 %v664
        %v2461 = vunpack.c.h.b16 %v664
        %v2462 = vunpack.c.l.b16 %v665
        %v2463 = vunpack.c.l.b16 %v666
        %v2464 = vunpack.c.h.b16 %v666
        %v2465 = vunpack.c.l.b16 %v667
        %v2466 = vunpack.c.l.b16 %v668
        %v2467 = vunpack.c.h.b16 %v668
        %v2468 = vunpack.c.l.b16 %v669
        %v2469 = vunpack.c.l.b16 %v670
        %v2470 = vunpack.c.h.b16 %v670
        %v2471 = vunpack.c.l.b16 %v671
        %v2472 = vunpack.c.l.b16 %v672
        %v2473 = vunpack.c.h.b16 %v672
        %v2474 = vunpack.c.l.b16 %v673
        %v2475 = vunpack.c.l.b16 %v674
        %v2476 = vunpack.c.h.b16 %v674
        %v2477 = vunpack.c.l.b16 %v675
        %v2478 = vunpack.c.l.b16 %v676
        %v2479 = vunpack.c.h.b16 %v676
        %v2480 = vunpack.c.l.b16 %v677
        %v2481 = vunpack.c.l.b16 %v678
        %v2482 = vunpack.c.h.b16 %v678
        %v2483 = vunpack.c.l.b16 %v679
        %v2484 = vunpack.c.l.b16 %v680
        %v2485 = vunpack.c.h.b16 %v680
        %v2486 = vunpack.c.l.b16 %v681
        %v2487 = vunpack.c.l.b16 %v682
        %v2488 = vunpack.c.h.b16 %v682
        %v2489 = vunpack.c.l.b16 %v683
        %v2490 = vunpack.c.l.b16 %v684
        %v2491 = vunpack.c.h.b16 %v684
        %v2492 = vunpack.c.l.b16 %v685
        %v2493 = vunpack.c.l.b16 %v686
        %v2494 = vunpack.c.h.b16 %v686
        %v2495 = vunpack.c.l.b16 %v687
        %v2496 = vunpack.c.l.b16 %v688
        %v2497 = vunpack.c.h.b16 %v688
        %v2498 = vunpack.c.l.b16 %v689
        %v2499 = vunpack.c.l.b16 %v690
        %v2500 = vunpack.c.h.b16 %v690
        %v2501 = vunpack.c.l.b16 %v691
        %v2502 = vunpack.c.l.b16 %v692
        %v2503 = vunpack.c.h.b16 %v692
        %v2504 = vunpack.c.l.b16 %v693
        %v2505 = vunpack.c.l.b16 %v694
        %v2506 = vunpack.c.h.b16 %v694
        %v2507 = vunpack.c.l.b16 %v695
        %v2508 = vunpack.c.l.b16 %v696
        %v2509 = vunpack.c.h.b16 %v696
        %v2510 = vunpack.c.l.b16 %v697
        %v2511 = vunpack.c.l.b16 %v698
        %v2512 = vunpack.c.h.b16 %v698
        %v2513 = vunpack.c.l.b16 %v699
        %v2514 = vunpack.c.l.b16 %v700
        %v2515 = vunpack.c.h.b16 %v700
        %v2516 = vunpack.c.l.b16 %v701
        %v2517 = vunpack.c.l.b16 %v702
        %v2518 = vunpack.c.h.b16 %v702
        %v2519 = vunpack.c.l.b16 %v703
        %v2520 = vunpack.c.l.b16 %v704
        %v2521 = vunpack.c.h.b16 %v704
        %v2522 = vunpack.c.l.b16 %v705
        %v2523 = vunpack.c.l.b16 %v706
        %v2524 = vunpack.c.h.b16 %v706
        %v2525 = vunpack.c.l.b16 %v707
        %v2526 = vunpack.c.l.b16 %v708
        %v2527 = vunpack.c.h.b16 %v708
        %v2528 = vunpack.c.l.b16 %v709
        %v2529 = vunpack.c.l.b16 %v710
        %v2530 = vunpack.c.h.b16 %v710
        %v2531 = vunpack.c.l.b16 %v711
        %v2532 = vunpack.c.l.b16 %v712
        %v2533 = vunpack.c.h.b16 %v712
        %v2534 = vunpack.c.l.b16 %v713
        %v2535 = vunpack.c.l.b16 %v714
        %v2536 = vunpack.c.h.b16 %v714
        %v2537 = vunpack.c.l.b16 %v715
        %v2538 = vunpack.c.l.b16 %v716
        %v2539 = vunpack.c.h.b16 %v716
        %v2540 = vunpack.c.l.b16 %v717
        %v2541 = vunpack.c.l.b16 %v718
        %v2542 = vunpack.c.h.b16 %v718
        %v2543 = vunpack.c.l.b16 %v719
        %v2544 = vunpack.c.l.b16 %v720
        %v2545 = vunpack.c.h.b16 %v720
        %v2546 = vunpack.c.l.b16 %v721
        %v2547 = vunpack.c.l.b16 %v722
        %v2548 = vunpack.c.h.b16 %v722
        %v2549 = vunpack.c.l.b16 %v723
        %v2550 = vunpack.c.l.b16 %v724
        %v2551 = vunpack.c.h.b16 %v724
        %v2552 = vunpack.c.l.b16 %v725
        %v2553 = vunpack.c.l.b16 %v726
        %v2554 = vunpack.c.h.b16 %v726
        %v2555 = vunpack.c.l.b16 %v727
        %v2556 = vunpack.c.l.b16 %v728
        %v2557 = vunpack.c.h.b16 %v728
        %v2558 = vunpack.c.l.b16 %v729
        %v2559 = vunpack.c.l.b16 %v730
        %v2560 = vunpack.c.h.b16 %v730
        %v2561 = vunpack.c.l.b16 %v731
        %v2562 = vunpack.c.l.b16 %v732
        %v2563 = vunpack.c.h.b16 %v732
        %v2564 = vunpack.c.l.b16 %v733
        %v2565 = vunpack.c.l.b16 %v734
        %v2566 = vunpack.c.h.b16 %v734
        %v2567 = vunpack.c.l.b16 %v735
        %v2568 = vunpack.c.l.b16 %v736
        %v2569 = vunpack.c.h.b16 %v736
        %v2570 = vunpack.c.l.b16 %v737
        %v2571 = vunpack.c.l.b16 %v738
        %v2572 = vunpack.c.h.b16 %v738
        %v2573 = vunpack.c.l.b16 %v739
        %v2574 = vunpack.c.l.b16 %v740
        %v2575 = vunpack.c.h.b16 %v740
        %v2576 = vunpack.c.l.b16 %v741
        %v2577 = vunpack.c.l.b16 %v742
        %v2578 = vunpack.c.h.b16 %v742
        %v2579 = vunpack.c.l.b16 %v743
        %v2580 = vunpack.c.l.b16 %v744
        %v2581 = vunpack.c.h.b16 %v744
        %v2582 = vunpack.c.l.b16 %v745
        %v2583 = vunpack.c.l.b16 %v746
        %v2584 = vunpack.c.h.b16 %v746
        %v2585 = vunpack.c.l.b16 %v747
        %v2586 = vunpack.c.l.b16 %v748
        %v2587 = vunpack.c.h.b16 %v748
        %v2588 = vunpack.c.l.b16 %v749
        %v2589 = vunpack.c.l.b16 %v750
        %v2590 = vunpack.c.h.b16 %v750
        %v2591 = vunpack.c.l.b16 %v751
        %v2592 = vunpack.c.l.b16 %v752
        %v2593 = vunpack.c.h.b16 %v752
        %v2594 = vunpack.c.l.b16 %v753
        %v2595 = vunpack.c.l.b16 %v754
        %v2596 = vunpack.c.h.b16 %v754
        %v2597 = vunpack.c.l.b16 %v755
        %v2598 = vunpack.c.l.b16 %v756
        %v2599 = vunpack.c.h.b16 %v756
        %v2600 = vunpack.c.l.b16 %v757
        %v2601 = vunpack.c.l.b16 %v758
        %v2602 = vunpack.c.h.b16 %v758
        %v2603 = vunpack.c.l.b16 %v759
        %v2604 = vunpack.c.l.b16 %v760
        %v2605 = vunpack.c.h.b16 %v760
        %v2606 = vunpack.c.l.b16 %v761
        %v2607 = vunpack.c.l.b16 %v762
        %v2608 = vunpack.c.h.b16 %v762
        %v2609 = vunpack.c.l.b16 %v763
        %v2610 = vunpack.c.l.b16 %v764
        %v2611 = vunpack.c.h.b16 %v764
        %v2612 = vunpack.c.l.b16 %v765
        %v2613 = vunpack.c.l.b16 %v766
        %v2614 = vunpack.c.h.b16 %v766
        %v2615 = vunpack.c.l.b16 %v767
        %v2616 = vunpack.c.l.b16 %v768
        %v2617 = vunpack.c.h.b16 %v768
        %v2618 = vunpack.c.l.b16 %v769
        %v2619 = vunpack.c.l.b16 %v770
        %v2620 = vunpack.c.h.b16 %v770
        %v2621 = vunpack.c.l.b16 %v771
        %v2622 = vunpack.c.l.b16 %v772
        %v2623 = vunpack.c.h.b16 %v772
        %v2624 = vunpack.c.l.b16 %v773
        %v2625 = vunpack.c.l.b16 %v774
        %v2626 = vunpack.c.h.b16 %v774
        %v2627 = vunpack.c.l.b16 %v775
        %v2628 = vunpack.c.l.b16 %v776
        %v2629 = vunpack.c.h.b16 %v776
        %v2630 = vunpack.c.l.b16 %v777
        %v2631 = vunpack.c.l.b16 %v778
        %v2632 = vunpack.c.h.b16 %v778
        %v2633 = vunpack.c.l.b16 %v779
        %v2634 = vunpack.c.l.b16 %v780
        %v2635 = vunpack.c.h.b16 %v780
        %v2636 = vunpack.c.l.b16 %v781
        %v2637 = vunpack.c.l.b16 %v782
        %v2638 = vunpack.c.h.b16 %v782
        %v2639 = vunpack.c.l.b16 %v783
        %v2640 = vunpack.c.l.b16 %v784
        %v2641 = vunpack.c.h.b16 %v784
        %v2642 = vunpack.c.l.b16 %v785
        %v2643 = vunpack.c.l.b16 %v786
        %v2644 = vunpack.c.h.b16 %v786
        %v2645 = vunpack.c.l.b16 %v787
        %v2646 = vunpack.c.l.b16 %v788
        %v2647 = vunpack.c.h.b16 %v788
        %v2648 = vunpack.c.l.b16 %v789
        %v2649 = vunpack.c.l.b16 %v790
        %v2650 = vunpack.c.h.b16 %v790
        %v2651 = vunpack.c.l.b16 %v791
        %v2652 = vunpack.c.l.b16 %v792
        %v2653 = vunpack.c.h.b16 %v792
        %v2654 = vunpack.c.l.b16 %v793
        %v2655 = vunpack.c.l.b16 %v794
        %v2656 = vunpack.c.h.b16 %v794
        %v2657 = vunpack.c.l.b16 %v795
        %v2658 = vunpack.c.l.b16 %v796
        %v2659 = vunpack.c.h.b16 %v796
        %v2660 = vunpack.c.l.b16 %v797
        %v2661 = vunpack.c.l.b16 %v798
        %v2662 = vunpack.c.h.b16 %v798
        %v2663 = vunpack.c.l.b16 %v799
        %v2664 = vunpack.c.l.b16 %v800
        %v2665 = vunpack.c.h.b16 %v800
        %v2666 = vunpack.c.l.b16 %v801
        %v2667 = vunpack.c.l.b16 %v802
        %v2668 = vunpack.c.h.b16 %v802
        %v2669 = vunpack.c.l.b16 %v803
        %v2670 = vunpack.c.l.b16 %v804
        %v2671 = vunpack.c.h.b16 %v804
        %v2672 = vunpack.c.l.b16 %v805
        %v2673 = vunpack.c.l.b16 %v806
        %v2674 = vunpack.c.h.b16 %v806
        %v2675 = vunpack.c.l.b16 %v807
        %v2676 = vunpack.c.l.b16 %v808
        %v2677 = vunpack.c.h.b16 %v808
        %v2678 = vunpack.c.l.b16 %v809
        %v2679 = vunpack.c.l.b16 %v810
        %v2680 = vunpack.c.h.b16 %v810
        %v2681 = vunpack.c.l.b16 %v811
        %v2682 = vunpack.c.l.b16 %v812
        %v2683 = vunpack.c.h.b16 %v812
        %v2684 = vunpack.c.l.b16 %v813
        %v2685 = vunpack.c.l.b16 %v814
        %v2686 = vunpack.c.h.b16 %v814
        %v2687 = vunpack.c.l.b16 %v815
        %v2688 = vunpack.c.l.b16 %v816
        %v2689 = vunpack.c.h.b16 %v816
        %v2690 = vunpack.c.l.b16 %v817
        %v2691 = vunpack.c.l.b16 %v818
        %v2692 = vunpack.c.h.b16 %v818
        %v2693 = vunpack.c.l.b16 %v819
        %v2694 = vunpack.c.l.b16 %v820
        %v2695 = vunpack.c.h.b16 %v820
        %v2696 = vunpack.c.l.b16 %v821
        %v2697 = vunpack.c.l.b16 %v822
        %v2698 = vunpack.c.h.b16 %v822
        %v2699 = vunpack.c.l.b16 %v823
        %v2700 = vunpack.c.l.b16 %v824
        %v2701 = vunpack.c.h.b16 %v824
        %v2702 = vunpack.c.l.b16 %v825
        %v2703 = vunpack.c.l.b16 %v826
        %v2704 = vunpack.c.h.b16 %v826
        %v2705 = vunpack.c.l.b16 %v827
        %v2706 = vunpack.c.l.b16 %v828
        %v2707 = vunpack.c.h.b16 %v828
        %v2708 = vunpack.c.l.b16 %v829
        %v2709 = vunpack.c.l.b16 %v830
        %v2710 = vunpack.c.h.b16 %v830
        %v2711 = vunpack.c.l.b16 %v831
        %v2712 = vunpack.c.l.b16 %v832
        %v2713 = vunpack.c.h.b16 %v832
        %v2714 = vunpack.c.l.b16 %v833
        %v2715 = vunpack.c.l.b16 %v834
        %v2716 = vunpack.c.h.b16 %v834
        %v2717 = vunpack.c.l.b16 %v835
        %v2718 = vunpack.c.l.b16 %v836
        %v2719 = vunpack.c.h.b16 %v836
        %v2720 = vunpack.c.l.b16 %v837
        %v2721 = vunpack.c.l.b16 %v838
        %v2722 = vunpack.c.h.b16 %v838
        %v2723 = vunpack.c.l.b16 %v839
        %v2724 = vunpack.c.l.b16 %v840
        %v2725 = vunpack.c.h.b16 %v840
        %v2726 = vunpack.c.l.b16 %v841
        %v2727 = vunpack.c.l.b16 %v842
        %v2728 = vunpack.c.h.b16 %v842
        %v2729 = vunpack.c.l.b16 %v843
        %v2730 = vunpack.c.l.b16 %v844
        %v2731 = vunpack.c.h.b16 %v844
        %v2732 = vunpack.c.l.b16 %v845
        %v2733 = vunpack.c.l.b16 %v846
        %v2734 = vunpack.c.h.b16 %v846
        %v2735 = vunpack.c.l.b16 %v847
        %v2736 = vunpack.c.l.b16 %v848
        %v2737 = vunpack.c.h.b16 %v848
        %v2738 = vunpack.c.l.b16 %v849
        %v2739 = vunpack.c.l.b16 %v850
        %v2740 = vunpack.c.h.b16 %v850
        %v2741 = vunpack.c.l.b16 %v851
        %v2742 = vunpack.c.l.b16 %v852
        %v2743 = vunpack.c.h.b16 %v852
        %v2744 = vunpack.c.l.b16 %v853
        %v2745 = vunpack.c.l.b16 %v854
        %v2746 = vunpack.c.h.b16 %v854
        %v2747 = vunpack.c.l.b16 %v855
        %v2748 = vunpack.c.l.b16 %v856
        %v2749 = vunpack.c.h.b16 %v856
        %v2750 = vunpack.c.l.b16 %v857
        %v2751 = vunpack.c.l.b16 %v858
        %v2752 = vunpack.c.h.b16 %v858
        %v2753 = vunpack.c.l.b16 %v859
        %v2754 = vunpack.c.l.b16 %v860
        %v2755 = vunpack.c.h.b16 %v860
        %v2756 = vunpack.c.l.b16 %v861
        %v2757 = vunpack.c.l.b16 %v862
        %v2758 = vunpack.c.h.b16 %v862
        %v2759 = vunpack.c.l.b16 %v863
        %v2760 = vunpack.c.l.b16 %v864
        %v2761 = vunpack.c.h.b16 %v864
        %v2762 = vunpack.c.l.b16 %v865
        %v2763 = vunpack.c.l.b16 %v866
        %v2764 = vunpack.c.h.b16 %v866
        %v2765 = vunpack.c.l.b16 %v867
        %v2766 = vunpack.c.l.b16 %v868
        %v2767 = vunpack.c.h.b16 %v868
        %v2768 = vunpack.c.l.b16 %v869
        %v2769 = vunpack.c.l.b16 %v870
        %v2770 = vunpack.c.h.b16 %v870
        %v2771 = vunpack.c.l.b16 %v871
        %v2772 = vunpack.c.l.b16 %v872
        %v2773 = vunpack.c.h.b16 %v872
        %v2774 = vunpack.c.l.b16 %v873
        %v2775 = vunpack.c.l.b16 %v874
        %v2776 = vunpack.c.h.b16 %v874
        %v2777 = vunpack.c.l.b16 %v875
        %v2778 = vunpack.c.l.b16 %v876
        %v2779 = vunpack.c.h.b16 %v876
        %v2780 = vunpack.c.l.b16 %v877
        %v2781 = vunpack.c.l.b16 %v878
        %v2782 = vunpack.c.h.b16 %v878
        %v2783 = vunpack.c.l.b16 %v879
        %v2784 = vunpack.c.l.b16 %v880
        %v2785 = vunpack.c.h.b16 %v880
        %v2786 = vunpack.c.l.b16 %v881
        %v2787 = vunpack.c.l.b16 %v882
        %v2788 = vunpack.c.h.b16 %v882
        %v2789 = vunpack.c.l.b16 %v883
        %v2790 = vunpack.c.l.b16 %v884
        %v2791 = vunpack.c.h.b16 %v884
        %v2792 = vunpack.c.l.b16 %v885
        %v2793 = vunpack.c.l.b16 %v886
        %v2794 = vunpack.c.h.b16 %v886
        %v2795 = vunpack.c.l.b16 %v887
        %v2796 = vunpack.c.l.b16 %v888
        %v2797 = vunpack.c.h.b16 %v888
        %v2798 = vunpack.c.l.b16 %v889
        %v2799 = vunpack.c.l.b16 %v890
        %v2800 = vunpack.c.h.b16 %v890
        %v2801 = vunpack.c.l.b16 %v891
        %v2802 = vunpack.c.l.b16 %v892
        %v2803 = vunpack.c.h.b16 %v892
        %v2804 = vunpack.c.l.b16 %v893
        %v2805 = vunpack.c.l.b16 %v894
        %v2806 = vunpack.c.h.b16 %v894
        %v2807 = vunpack.c.l.b16 %v895
        %v2808 = vunpack.c.l.b16 %v896
        %v2809 = vunpack.c.h.b16 %v896
        %v2810 = vunpack.c.l.b16 %v897
        %v2811 = vunpack.c.l.b16 %v898
        %v2812 = vunpack.c.h.b16 %v898
        %v2813 = vunpack.c.l.b16 %v899
        %v2814 = vunpack.c.l.b16 %v900
        %v2815 = vunpack.c.h.b16 %v900
        %v2816 = vunpack.c.l.b16 %v901
        %v2817 = vunpack.c.l.b16 %v902
        %v2818 = vunpack.c.h.b16 %v902
        %v2819 = vunpack.c.l.b16 %v903
        %v2820 = vunpack.c.l.b16 %v904
        %v2821 = vunpack.c.h.b16 %v904
        %v2822 = vunpack.c.l.b16 %v905
        %v2823 = vunpack.c.l.b16 %v906
        %v2824 = vunpack.c.h.b16 %v906
        %v2825 = vunpack.c.l.b16 %v907
        %v2826 = vunpack.c.l.b16 %v908
        %v2827 = vunpack.c.h.b16 %v908
        %v2828 = vunpack.c.l.b16 %v909
        %v2829 = vunpack.c.l.b16 %v910
        %v2830 = vunpack.c.h.b16 %v910
        %v2831 = vunpack.c.l.b16 %v911
        %v2832 = vunpack.c.l.b16 %v912
        %v2833 = vunpack.c.h.b16 %v912
        %v2834 = vunpack.c.l.b16 %v913
        %v2835 = vunpack.c.l.b16 %v914
        %v2836 = vunpack.c.h.b16 %v914
        %v2837 = vunpack.c.l.b16 %v915
        %v2838 = vunpack.c.l.b16 %v916
        %v2839 = vunpack.c.h.b16 %v916
        %v2840 = vunpack.c.l.b16 %v917
        %v2841 = vunpack.c.l.b16 %v918
        %v2842 = vunpack.c.h.b16 %v918
        %v2843 = vunpack.c.l.b16 %v919
        %v2844 = vunpack.c.l.b16 %v920
        %v2845 = vunpack.c.h.b16 %v920
        %v2846 = vunpack.c.l.b16 %v921
        %v2847 = vunpack.c.l.b16 %v922
        %v2848 = vunpack.c.h.b16 %v922
        %v2849 = vunpack.c.l.b16 %v923
        %v2850 = vunpack.c.l.b16 %v924
        %v2851 = vunpack.c.h.b16 %v924
        %v2852 = vunpack.c.l.b16 %v925
        %v2853 = vunpack.c.l.b16 %v926
        %v2854 = vunpack.c.h.b16 %v926
        %v2855 = vunpack.c.l.b16 %v927
        %v2856 = vunpack.c.l.b16 %v928
        %v2857 = vunpack.c.h.b16 %v928
        %v2858 = vunpack.c.l.b16 %v929
        %v2859 = vunpack.c.l.b16 %v930
        %v2860 = vunpack.c.h.b16 %v930
        %v2861 = vunpack.c.l.b16 %v931
        %v2862 = vunpack.c.l.b16 %v932
        %v2863 = vunpack.c.h.b16 %v932
        %v2864 = vunpack.c.l.b16 %v933
        %v2865 = vunpack.c.l.b16 %v934
        %v2866 = vunpack.c.h.b16 %v934
        %v2867 = vunpack.c.l.b16 %v935
        %v2868 = vunpack.c.l.b16 %v936
        %v2869 = vunpack.c.h.b16 %v936
        %v2870 = vunpack.c.l.b16 %v937
        %v2871 = vunpack.c.l.b16 %v938
        %v2872 = vunpack.c.h.b16 %v938
        %v2873 = vunpack.c.l.b16 %v939
        %v2874 = vunpack.c.l.b16 %v940
        %v2875 = vunpack.c.h.b16 %v940
        %v2876 = vunpack.c.l.b16 %v941
        %v2877 = vunpack.c.l.b16 %v942
        %v2878 = vunpack.c.h.b16 %v942
        %v2879 = vunpack.c.l.b16 %v943
        %v2880 = vunpack.c.l.b16 %v944
        %v2881 = vunpack.c.h.b16 %v944
        %v2882 = vunpack.c.l.b16 %v945
        %v2883 = vunpack.c.l.b16 %v946
        %v2884 = vunpack.c.h.b16 %v946
        %v2885 = vunpack.c.l.b16 %v947
        %v2886 = vunpack.c.l.b16 %v948
        %v2887 = vunpack.c.h.b16 %v948
        %v2888 = vunpack.c.l.b16 %v949
        %v2889 = vunpack.c.l.b16 %v950
        %v2890 = vunpack.c.h.b16 %v950
        %v2891 = vunpack.c.l.b16 %v951
        %v2892 = vunpack.c.l.b16 %v952
        %v2893 = vunpack.c.h.b16 %v952
        %v2894 = vunpack.c.l.b16 %v953
        %v2895 = vunpack.c.l.b16 %v954
        %v2896 = vunpack.c.h.b16 %v954
        %v2897 = vunpack.c.l.b16 %v955
        %v2898 = vunpack.c.l.b16 %v956
        %v2899 = vunpack.c.h.b16 %v956
        %v2900 = vunpack.c.l.b16 %v957
        %v2901 = vunpack.c.l.b16 %v958
        %v2902 = vunpack.c.h.b16 %v958
        %v2903 = vunpack.c.l.b16 %v959
        %v2904 = vunpack.c.l.b16 %v960
        %v2905 = vunpack.c.h.b16 %v960
        %v2906 = vunpack.c.l.b16 %v961
        %v2907 = vunpack.c.l.b16 %v962
        %v2908 = vunpack.c.h.b16 %v962
        %v2909 = vunpack.c.l.b16 %v963
        %v2910 = vunpack.c.l.b16 %v964
        %v2911 = vunpack.c.h.b16 %v964
        %v2912 = vunpack.c.l.b16 %v965
        %v2913 = vunpack.c.l.b16 %v966
        %v2914 = vunpack.c.h.b16 %v966
        %v2915 = vunpack.c.l.b16 %v967
        %v2916 = vunpack.c.l.b16 %v968
        %v2917 = vunpack.c.h.b16 %v968
        %v2918 = vunpack.c.l.b16 %v969
        %v2919 = vunpack.c.l.b16 %v970
        %v2920 = vunpack.c.h.b16 %v970
        %v2921 = vunpack.c.l.b16 %v971
        %v2922 = vunpack.c.l.b16 %v972
        %v2923 = vunpack.c.h.b16 %v972
        %v2924 = vunpack.c.l.b16 %v973
        %v2925 = vunpack.c.l.b16 %v974
        %v2926 = vunpack.c.h.b16 %v974
        %v2927 = vunpack.c.l.b16 %v975
        %v2928 = vunpack.c.l.b16 %v976
        %v2929 = vunpack.c.h.b16 %v976
        %v2930 = vunpack.c.l.b16 %v977
        %v2931 = vunpack.c.l.b16 %v978
        %v2932 = vunpack.c.h.b16 %v978
        %v2933 = vunpack.c.l.b16 %v979
        %v2934 = vunpack.c.l.b16 %v980
        %v2935 = vunpack.c.h.b16 %v980
        %v2936 = vunpack.c.l.b16 %v981
        %v2937 = vunpack.c.l.b16 %v982
        %v2938 = vunpack.c.h.b16 %v982
        %v2939 = vunpack.c.l.b16 %v983
        %v2940 = vunpack.c.l.b16 %v984
        %v2941 = vunpack.c.h.b16 %v984
        %v2942 = vunpack.c.l.b16 %v985
        %v2943 = vunpack.c.l.b16 %v986
        %v2944 = vunpack.c.h.b16 %v986
        %v2945 = vunpack.c.l.b16 %v987
        %v2946 = vunpack.c.l.b16 %v988
        %v2947 = vunpack.c.h.b16 %v988
        %v2948 = vunpack.c.l.b16 %v989
        %v2949 = vunpack.c.l.b16 %v990
        %v2950 = vunpack.c.h.b16 %v990
        %v2951 = vunpack.c.l.b16 %v991
        %v2952 = vunpack.c.l.b16 %v992
        %v2953 = vunpack.c.h.b16 %v992
        %v2954 = vunpack.c.l.b16 %v993
        %v2955 = vunpack.c.l.b16 %v994
        %v2956 = vunpack.c.h.b16 %v994
        %v2957 = vunpack.c.l.b16 %v995
        %v2958 = vunpack.c.l.b16 %v996
        %v2959 = vunpack.c.h.b16 %v996
        %v2960 = vunpack.c.l.b16 %v997
        %v2961 = vunpack.c.l.b16 %v998
        %v2962 = vunpack.c.h.b16 %v998
        %v2963 = vunpack.c.l.b16 %v999
        %v2964 = vunpack.c.l.b16 %v1000
        %v2965 = vunpack.c.h.b16 %v1000
        %v2966 = vunpack.c.l.b16 %v1001
        %v2967 = vunpack.c.l.b16 %v1002
        %v2968 = vunpack.c.h.b16 %v1002
        %v2969 = vunpack.c.l.b16 %v1003
        %v2970 = vunpack.c.l.b16 %v1004
        %v2971 = vunpack.c.h.b16 %v1004
        %v2972 = vunpack.c.l.b16 %v1005
        %v2973 = vunpack.c.l.b16 %v1006
        %v2974 = vunpack.c.h.b16 %v1006
        %v2975 = vunpack.c.l.b16 %v1007
        %v2976 = vunpack.c.l.b16 %v1008
        %v2977 = vunpack.c.h.b16 %v1008
        %v2978 = vunpack.c.l.b16 %v1009
        %v2979 = vunpack.c.l.b16 %v1010
        %v2980 = vunpack.c.h.b16 %v1010
        %v2981 = vunpack.c.l.b16 %v1011
        %v2982 = vunpack.c.l.b16 %v1012
        %v2983 = vunpack.c.h.b16 %v1012
        %v2984 = vunpack.c.l.b16 %v1013
        %v2985 = vunpack.c.l.b16 %v1014
        %v2986 = vunpack.c.h.b16 %v1014
        %v2987 = vunpack.c.l.b16 %v1015
        %v2988 = vunpack.c.l.b16 %v1016
        %v2989 = vunpack.c.h.b16 %v1016
        %v2990 = vunpack.c.l.b16 %v1017
        %v2991 = vpack.c.b16 %v1842, %v1839
        %v2992 = vpack.c.b16 %v1843, %v1840
        %v2993 = vpack.c.b16 %v1844, %v1841
        %v2994 = vpack.c.b16 %v1848, %v1845
        %v2995 = vpack.c.b16 %v1849, %v1846
        %v2996 = vpack.c.b16 %v1850, %v1847
        %v2997 = vpack.c.b16 %v1854, %v1851
        %v2998 = vpack.c.b16 %v1855, %v1852
        %v2999 = vpack.c.b16 %v1856, %v1853
        %v3000 = vpack.c.b16 %v1860, %v1857
        %v3001 = vpack.c.b16 %v1861, %v1858
        %v3002 = vpack.c.b16 %v1862, %v1859
        %v3003 = vpack.c.b16 %v1866, %v1863
        %v3004 = vpack.c.b16 %v1867, %v1864
        %v3005 = vpack.c.b16 %v1868, %v1865
        %v3006 = vpack.c.b16 %v1872, %v1869
        %v3007 = vpack.c.b16 %v1873, %v1870
        %v3008 = vpack.c.b16 %v1874, %v1871
        %v3009 = vpack.c.b16 %v1878, %v1875
        %v3010 = vpack.c.b16 %v1879, %v1876
        %v3011 = vpack.c.b16 %v1880, %v1877
        %v3012 = vpack.c.b16 %v1884, %v1881
        %v3013 = vpack.c.b16 %v1885, %v1882
        %v3014 = vpack.c.b16 %v1886, %v1883
        %v3015 = vpack.c.b16 %v1890, %v1887
        %v3016 = vpack.c.b16 %v1891, %v1888
        %v3017 = vpack.c.b16 %v1892, %v1889
        %v3018 = vpack.c.b16 %v1896, %v1893
        %v3019 = vpack.c.b16 %v1897, %v1894
        %v3020 = vpack.c.b16 %v1898, %v1895
        %v3021 = vpack.c.b16 %v1902, %v1899
        %v3022 = vpack.c.b16 %v1903, %v1900
        %v3023 = vpack.c.b16 %v1904, %v1901
        %v3024 = vpack.c.b16 %v1908, %v1905
        %v3025 = vpack.c.b16 %v1909, %v1906
        %v3026 = vpack.c.b16 %v1910, %v1907
        %v3027 = vpack.c.b16 %v1914, %v1911
        %v3028 = vpack.c.b16 %v1915, %v1912
        %v3029 = vpack.c.b16 %v1916, %v1913
        %v3030 = vpack.c.b16 %v1920, %v1917
        %v3031 = vpack.c.b16 %v1921, %v1918
        %v3032 = vpack.c.b16 %v1922, %v1919
        %v3033 = vpack.c.b16 %v1926, %v1923
        %v3034 = vpack.c.b16 %v1927, %v1924
        %v3035 = vpack.c.b16 %v1928, %v1925
        %v3036 = vpack.c.b16 %v1932, %v1929
        %v3037 = vpack.c.b16 %v1933, %v1930
        %v3038 = vpack.c.b16 %v1934, %v1931
        %v3039 = vpack.c.b16 %v1938, %v1935
        %v3040 = vpack.c.b16 %v1939, %v1936
        %v3041 = vpack.c.b16 %v1940, %v1937
        %v3042 = vpack.c.b16 %v1944, %v1941
        %v3043 = vpack.c.b16 %v1945, %v1942
        %v3044 = vpack.c.b16 %v1946, %v1943
        %v3045 = vpack.c.b16 %v1950, %v1947
        %v3046 = vpack.c.b16 %v1951, %v1948
        %v3047 = vpack.c.b16 %v1952, %v1949
        %v3048 = vpack.c.b16 %v1956, %v1953
        %v3049 = vpack.c.b16 %v1957, %v1954
        %v3050 = vpack.c.b16 %v1958, %v1955
        %v3051 = vpack.c.b16 %v1962, %v1959
        %v3052 = vpack.c.b16 %v1963, %v1960
        %v3053 = vpack.c.b16 %v1964, %v1961
        %v3054 = vpack.c.b16 %v1968, %v1965
        %v3055 = vpack.c.b16 %v1969, %v1966
        %v3056 = vpack.c.b16 %v1970, %v1967
        %v3057 = vpack.c.b16 %v1974, %v1971
        %v3058 = vpack.c.b16 %v1975, %v1972
        %v3059 = vpack.c.b16 %v1976, %v1973
        %v3060 = vpack.c.b16 %v1980, %v1977
        %v3061 = vpack.c.b16 %v1981, %v1978
        %v3062 = vpack.c.b16 %v1982, %v1979
        %v3063 = vpack.c.b16 %v1986, %v1983
        %v3064 = vpack.c.b16 %v1987, %v1984
        %v3065 = vpack.c.b16 %v1988, %v1985
        %v3066 = vpack.c.b16 %v1992, %v1989
        %v3067 = vpack.c.b16 %v1993, %v1990
        %v3068 = vpack.c.b16 %v1994, %v1991
        %v3069 = vpack.c.b16 %v1998, %v1995
        %v3070 = vpack.c.b16 %v1999, %v1996
        %v3071 = vpack.c.b16 %v2000, %v1997
        %v3072 = vpack.c.b16 %v2004, %v2001
        %v3073 = vpack.c.b16 %v2005, %v2002
        %v3074 = vpack.c.b16 %v2006, %v2003
        %v3075 = vpack.c.b16 %v2010, %v2007
        %v3076 = vpack.c.b16 %v2011, %v2008
        %v3077 = vpack.c.b16 %v2012, %v2009
        %v3078 = vpack.c.b16 %v2016, %v2013
        %v3079 = vpack.c.b16 %v2017, %v2014
        %v3080 = vpack.c.b16 %v2018, %v2015
        %v3081 = vpack.c.b16 %v2022, %v2019
        %v3082 = vpack.c.b16 %v2023, %v2020
        %v3083 = vpack.c.b16 %v2024, %v2021
        %v3084 = vpack.c.b16 %v2028, %v2025
        %v3085 = vpack.c.b16 %v2029, %v2026
        %v3086 = vpack.c.b16 %v2030, %v2027
        %v3087 = vpack.c.b16 %v2034, %v2031
        %v3088 = vpack.c.b16 %v2035, %v2032
        %v3089 = vpack.c.b16 %v2036, %v2033
        %v3090 = vpack.c.b16 %v2040, %v2037
        %v3091 = vpack.c.b16 %v2041, %v2038
        %v3092 = vpack.c.b16 %v2042, %v2039
        %v3093 = vpack.c.b16 %v2046, %v2043
        %v3094 = vpack.c.b16 %v2047, %v2044
        %v3095 = vpack.c.b16 %v2048, %v2045
        %v3096 = vpack.c.b16 %v2052, %v2049
        %v3097 = vpack.c.b16 %v2053, %v2050
        %v3098 = vpack.c.b16 %v2054, %v2051
        %v3099 = vpack.c.b16 %v2058, %v2055
        %v3100 = vpack.c.b16 %v2059, %v2056
        %v3101 = vpack.c.b16 %v2060, %v2057
        %v3102 = vpack.c.b16 %v2064, %v2061
        %v3103 = vpack.c.b16 %v2065, %v2062
        %v3104 = vpack.c.b16 %v2066, %v2063
        %v3105 = vpack.c.b16 %v2070, %v2067
        %v3106 = vpack.c.b16 %v2071, %v2068
        %v3107 = vpack.c.b16 %v2072, %v2069
        %v3108 = vpack.c.b16 %v2076, %v2073
        %v3109 = vpack.c.b16 %v2077, %v2074
        %v3110 = vpack.c.b16 %v2078, %v2075
        %v3111 = vpack.c.b16 %v2082, %v2079
        %v3112 = vpack.c.b16 %v2083, %v2080
        %v3113 = vpack.c.b16 %v2084, %v2081
        %v3114 = vpack.c.b16 %v2088, %v2085
        %v3115 = vpack.c.b16 %v2089, %v2086
        %v3116 = vpack.c.b16 %v2090, %v2087
        %v3117 = vpack.c.b16 %v2094, %v2091
        %v3118 = vpack.c.b16 %v2095, %v2092
        %v3119 = vpack.c.b16 %v2096, %v2093
        %v3120 = vpack.c.b16 %v2100, %v2097
        %v3121 = vpack.c.b16 %v2101, %v2098
        %v3122 = vpack.c.b16 %v2102, %v2099
        %v3123 = vpack.c.b16 %v2106, %v2103
        %v3124 = vpack.c.b16 %v2107, %v2104
        %v3125 = vpack.c.b16 %v2108, %v2105
        %v3126 = vpack.c.b16 %v2112, %v2109
        %v3127 = vpack.c.b16 %v2113, %v2110
        %v3128 = vpack.c.b16 %v2114, %v2111
        %v3129 = vpack.c.b16 %v2118, %v2115
        %v3130 = vpack.c.b16 %v2119, %v2116
        %v3131 = vpack.c.b16 %v2120, %v2117
        %v3132 = vpack.c.b16 %v2124, %v2121
        %v3133 = vpack.c.b16 %v2125, %v2122
        %v3134 = vpack.c.b16 %v2126, %v2123
        %v3135 = vpack.c.b16 %v2130, %v2127
        %v3136 = vpack.c.b16 %v2131, %v2128
        %v3137 = vpack.c.b16 %v2132, %v2129
        %v3138 = vpack.c.b16 %v2136, %v2133
        %v3139 = vpack.c.b16 %v2137, %v2134
        %v3140 = vpack.c.b16 %v2138, %v2135
        %v3141 = vpack.c.b16 %v2142, %v2139
        %v3142 = vpack.c.b16 %v2143, %v2140
        %v3143 = vpack.c.b16 %v2144, %v2141
        %v3144 = vpack.c.b16 %v2148, %v2145
        %v3145 = vpack.c.b16 %v2149, %v2146
        %v3146 = vpack.c.b16 %v2150, %v2147
        %v3147 = vpack.c.b16 %v2154, %v2151
        %v3148 = vpack.c.b16 %v2155, %v2152
        %v3149 = vpack.c.b16 %v2156, %v2153
        %v3150 = vpack.c.b16 %v2160, %v2157
        %v3151 = vpack.c.b16 %v2161, %v2158
        %v3152 = vpack.c.b16 %v2162, %v2159
        %v3153 = vpack.c.b16 %v2166, %v2163
        %v3154 = vpack.c.b16 %v2167, %v2164
        %v3155 = vpack.c.b16 %v2168, %v2165
        %v3156 = vpack.c.b16 %v2172, %v2169
        %v3157 = vpack.c.b16 %v2173, %v2170
        %v3158 = vpack.c.b16 %v2174, %v2171
        %v3159 = vpack.c.b16 %v2178, %v2175
        %v3160 = vpack.c.b16 %v2179, %v2176
        %v3161 = vpack.c.b16 %v2180, %v2177
        %v3162 = vpack.c.b16 %v2184, %v2181
        %v3163 = vpack.c.b16 %v2185, %v2182
        %v3164 = vpack.c.b16 %v2186, %v2183
        %v3165 = vpack.c.b16 %v2190, %v2187
        %v3166 = vpack.c.b16 %v2191, %v2188
        %v3167 = vpack.c.b16 %v2192, %v2189
        %v3168 = vpack.c.b16 %v2196, %v2193
        %v3169 = vpack.c.b16 %v2197, %v2194
        %v3170 = vpack.c.b16 %v2198, %v2195
        %v3171 = vpack.c.b16 %v2202, %v2199
        %v3172 = vpack.c.b16 %v2203, %v2200
        %v3173 = vpack.c.b16 %v2204, %v2201
        %v3174 = vpack.c.b16 %v2208, %v2205
        %v3175 = vpack.c.b16 %v2209, %v2206
        %v3176 = vpack.c.b16 %v2210, %v2207
        %v3177 = vpack.c.b16 %v2214, %v2211
        %v3178 = vpack.c.b16 %v2215, %v2212
        %v3179 = vpack.c.b16 %v2216, %v2213
        %v3180 = vpack.c.b16 %v2220, %v2217
        %v3181 = vpack.c.b16 %v2221, %v2218
        %v3182 = vpack.c.b16 %v2222, %v2219
        %v3183 = vpack.c.b16 %v2226, %v2223
        %v3184 = vpack.c.b16 %v2227, %v2224
        %v3185 = vpack.c.b16 %v2228, %v2225
        %v3186 = vpack.c.b16 %v2232, %v2229
        %v3187 = vpack.c.b16 %v2233, %v2230
        %v3188 = vpack.c.b16 %v2234, %v2231
        %v3189 = vpack.c.b16 %v2238, %v2235
        %v3190 = vpack.c.b16 %v2239, %v2236
        %v3191 = vpack.c.b16 %v2240, %v2237
        %v3192 = vpack.c.b16 %v2244, %v2241
        %v3193 = vpack.c.b16 %v2245, %v2242
        %v3194 = vpack.c.b16 %v2246, %v2243
        %v3195 = vpack.c.b16 %v2250, %v2247
        %v3196 = vpack.c.b16 %v2251, %v2248
        %v3197 = vpack.c.b16 %v2252, %v2249
        %v3198 = vpack.c.b16 %v2256, %v2253
        %v3199 = vpack.c.b16 %v2257, %v2254
        %v3200 = vpack.c.b16 %v2258, %v2255
        %v3201 = vpack.c.b16 %v2262, %v2259
        %v3202 = vpack.c.b16 %v2263, %v2260
        %v3203 = vpack.c.b16 %v2264, %v2261
        %v3204 = vpack.c.b16 %v2268, %v2265
        %v3205 = vpack.c.b16 %v2269, %v2266
        %v3206 = vpack.c.b16 %v2270, %v2267
        %v3207 = vpack.c.b16 %v2274, %v2271
        %v3208 = vpack.c.b16 %v2275, %v2272
        %v3209 = vpack.c.b16 %v2276, %v2273
        %v3210 = vpack.c.b16 %v2280, %v2277
        %v3211 = vpack.c.b16 %v2281, %v2278
        %v3212 = vpack.c.b16 %v2282, %v2279
        %v3213 = vpack.c.b16 %v2286, %v2283
        %v3214 = vpack.c.b16 %v2287, %v2284
        %v3215 = vpack.c.b16 %v2288, %v2285
        %v3216 = vpack.c.b16 %v2292, %v2289
        %v3217 = vpack.c.b16 %v2293, %v2290
        %v3218 = vpack.c.b16 %v2294, %v2291
        %v3219 = vpack.c.b16 %v2298, %v2295
        %v3220 = vpack.c.b16 %v2299, %v2296
        %v3221 = vpack.c.b16 %v2300, %v2297
        %v3222 = vpack.c.b16 %v2304, %v2301
        %v3223 = vpack.c.b16 %v2305, %v2302
        %v3224 = vpack.c.b16 %v2306, %v2303
        %v3225 = vpack.c.b16 %v2310, %v2307
        %v3226 = vpack.c.b16 %v2311, %v2308
        %v3227 = vpack.c.b16 %v2312, %v2309
        %v3228 = vpack.c.b16 %v2316, %v2313
        %v3229 = vpack.c.b16 %v2317, %v2314
        %v3230 = vpack.c.b16 %v2318, %v2315
        %v3231 = vpack.c.b16 %v2322, %v2319
        %v3232 = vpack.c.b16 %v2323, %v2320
        %v3233 = vpack.c.b16 %v2324, %v2321
        %v3234 = vpack.c.b16 %v2328, %v2325
        %v3235 = vpack.c.b16 %v2329, %v2326
        %v3236 = vpack.c.b16 %v2330, %v2327
        %v3237 = vpack.c.b16 %v2334, %v2331
        %v3238 = vpack.c.b16 %v2335, %v2332
        %v3239 = vpack.c.b16 %v2336, %v2333
        %v3240 = vpack.c.b16 %v2340, %v2337
        %v3241 = vpack.c.b16 %v2341, %v2338
        %v3242 = vpack.c.b16 %v2342, %v2339
        %v3243 = vpack.c.b16 %v2346, %v2343
        %v3244 = vpack.c.b16 %v2347, %v2344
        %v3245 = vpack.c.b16 %v2348, %v2345
        %v3246 = vpack.c.b16 %v2352, %v2349
        %v3247 = vpack.c.b16 %v2353, %v2350
        %v3248 = vpack.c.b16 %v2354, %v2351
        %v3249 = vpack.c.b16 %v2358, %v2355
        %v3250 = vpack.c.b16 %v2359, %v2356
        %v3251 = vpack.c.b16 %v2360, %v2357
        %v3252 = vpack.c.b16 %v2364, %v2361
        %v3253 = vpack.c.b16 %v2365, %v2362
        %v3254 = vpack.c.b16 %v2366, %v2363
        %v3255 = vpack.c.b16 %v2370, %v2367
        %v3256 = vpack.c.b16 %v2371, %v2368
        %v3257 = vpack.c.b16 %v2372, %v2369
        %v3258 = vpack.c.b16 %v2376, %v2373
        %v3259 = vpack.c.b16 %v2377, %v2374
        %v3260 = vpack.c.b16 %v2378, %v2375
        %v3261 = vpack.c.b16 %v2382, %v2379
        %v3262 = vpack.c.b16 %v2383, %v2380
        %v3263 = vpack.c.b16 %v2384, %v2381
        %v3264 = vpack.c.b16 %v2388, %v2385
        %v3265 = vpack.c.b16 %v2389, %v2386
        %v3266 = vpack.c.b16 %v2390, %v2387
        %v3267 = vpack.c.b16 %v2394, %v2391
        %v3268 = vpack.c.b16 %v2395, %v2392
        %v3269 = vpack.c.b16 %v2396, %v2393
        %v3270 = vpack.c.b16 %v2400, %v2397
        %v3271 = vpack.c.b16 %v2401, %v2398
        %v3272 = vpack.c.b16 %v2402, %v2399
        %v3273 = vpack.c.b16 %v2406, %v2403
        %v3274 = vpack.c.b16 %v2407, %v2404
        %v3275 = vpack.c.b16 %v2408, %v2405
        %v3276 = vpack.c.b16 %v2412, %v2409
        %v3277 = vpack.c.b16 %v2413, %v2410
        %v3278 = vpack.c.b16 %v2414, %v2411
        %v3279 = vpack.c.b16 %v2418, %v2415
        %v3280 = vpack.c.b16 %v2419, %v2416
        %v3281 = vpack.c.b16 %v2420, %v2417
        %v3282 = vpack.c.b16 %v2424, %v2421
        %v3283 = vpack.c.b16 %v2425, %v2422
        %v3284 = vpack.c.b16 %v2426, %v2423
        %v3285 = vpack.c.b16 %v2430, %v2427
        %v3286 = vpack.c.b16 %v2431, %v2428
        %v3287 = vpack.c.b16 %v2432, %v2429
        %v3288 = vpack.c.b16 %v2436, %v2433
        %v3289 = vpack.c.b16 %v2437, %v2434
        %v3290 = vpack.c.b16 %v2438, %v2435
        %v3291 = vpack.c.b16 %v2442, %v2439
        %v3292 = vpack.c.b16 %v2443, %v2440
        %v3293 = vpack.c.b16 %v2444, %v2441
        %v3294 = vpack.c.b16 %v2448, %v2445
        %v3295 = vpack.c.b16 %v2449, %v2446
        %v3296 = vpack.c.b16 %v2450, %v2447
        %v3297 = vpack.c.b16 %v2454, %v2451
        %v3298 = vpack.c.b16 %v2455, %v2452
        %v3299 = vpack.c.b16 %v2456, %v2453
        %v3300 = vpack.c.b16 %v2460, %v2457
        %v3301 = vpack.c.b16 %v2461, %v2458
        %v3302 = vpack.c.b16 %v2462, %v2459
        %v3303 = vpack.c.b16 %v2466, %v2463
        %v3304 = vpack.c.b16 %v2467, %v2464
        %v3305 = vpack.c.b16 %v2468, %v2465
        %v3306 = vpack.c.b16 %v2472, %v2469
        %v3307 = vpack.c.b16 %v2473, %v2470
        %v3308 = vpack.c.b16 %v2474, %v2471
        %v3309 = vpack.c.b16 %v2478, %v2475
        %v3310 = vpack.c.b16 %v2479, %v2476
        %v3311 = vpack.c.b16 %v2480, %v2477
        %v3312 = vpack.c.b16 %v2484, %v2481
        %v3313 = vpack.c.b16 %v2485, %v2482
        %v3314 = vpack.c.b16 %v2486, %v2483
        %v3315 = vpack.c.b16 %v2490, %v2487
        %v3316 = vpack.c.b16 %v2491, %v2488
        %v3317 = vpack.c.b16 %v2492, %v2489
        %v3318 = vpack.c.b16 %v2496, %v2493
        %v3319 = vpack.c.b16 %v2497, %v2494
        %v3320 = vpack.c.b16 %v2498, %v2495
        %v3321 = vpack.c.b16 %v2502, %v2499
        %v3322 = vpack.c.b16 %v2503, %v2500
        %v3323 = vpack.c.b16 %v2504, %v2501
        %v3324 = vpack.c.b16 %v2508, %v2505
        %v3325 = vpack.c.b16 %v2509, %v2506
        %v3326 = vpack.c.b16 %v2510, %v2507
        %v3327 = vpack.c.b16 %v2514, %v2511
        %v3328 = vpack.c.b16 %v2515, %v2512
        %v3329 = vpack.c.b16 %v2516, %v2513
        %v3330 = vpack.c.b16 %v2520, %v2517
        %v3331 = vpack.c.b16 %v2521, %v2518
        %v3332 = vpack.c.b16 %v2522, %v2519
        %v3333 = vpack.c.b16 %v2526, %v2523
        %v3334 = vpack.c.b16 %v2527, %v2524
        %v3335 = vpack.c.b16 %v2528, %v2525
        %v3336 = vpack.c.b16 %v2532, %v2529
        %v3337 = vpack.c.b16 %v2533, %v2530
        %v3338 = vpack.c.b16 %v2534, %v2531
        %v3339 = vpack.c.b16 %v2538, %v2535
        %v3340 = vpack.c.b16 %v2539, %v2536
        %v3341 = vpack.c.b16 %v2540, %v2537
        %v3342 = vpack.c.b16 %v2544, %v2541
        %v3343 = vpack.c.b16 %v2545, %v2542
        %v3344 = vpack.c.b16 %v2546, %v2543
        %v3345 = vpack.c.b16 %v2550, %v2547
        %v3346 = vpack.c.b16 %v2551, %v2548
        %v3347 = vpack.c.b16 %v2552, %v2549
        %v3348 = vpack.c.b16 %v2556, %v2553
        %v3349 = vpack.c.b16 %v2557, %v2554
        %v3350 = vpack.c.b16 %v2558, %v2555
        %v3351 = vpack.c.b16 %v2562, %v2559
        %v3352 = vpack.c.b16 %v2563, %v2560
        %v3353 = vpack.c.b16 %v2564, %v2561
        %v3354 = vpack.c.b16 %v2568, %v2565
        %v3355 = vpack.c.b16 %v2569, %v2566
        %v3356 = vpack.c.b16 %v2570, %v2567
        %v3357 = vpack.c.b16 %v2574, %v2571
        %v3358 = vpack.c.b16 %v2575, %v2572
        %v3359 = vpack.c.b16 %v2576, %v2573
        %v3360 = vpack.c.b16 %v2580, %v2577
        %v3361 = vpack.c.b16 %v2581, %v2578
        %v3362 = vpack.c.b16 %v2582, %v2579
        %v3363 = vpack.c.b16 %v2586, %v2583
        %v3364 = vpack.c.b16 %v2587, %v2584
        %v3365 = vpack.c.b16 %v2588, %v2585
        %v3366 = vpack.c.b16 %v2592, %v2589
        %v3367 = vpack.c.b16 %v2593, %v2590
        %v3368 = vpack.c.b16 %v2594, %v2591
        %v3369 = vpack.c.b16 %v2598, %v2595
        %v3370 = vpack.c.b16 %v2599, %v2596
        %v3371 = vpack.c.b16 %v2600, %v2597
        %v3372 = vpack.c.b16 %v2604, %v2601
        %v3373 = vpack.c.b16 %v2605, %v2602
        %v3374 = vpack.c.b16 %v2606, %v2603
        %v3375 = vpack.c.b16 %v2610, %v2607
        %v3376 = vpack.c.b16 %v2611, %v2608
        %v3377 = vpack.c.b16 %v2612, %v2609
        %v3378 = vpack.c.b16 %v2616, %v2613
        %v3379 = vpack.c.b16 %v2617, %v2614
        %v3380 = vpack.c.b16 %v2618, %v2615
        %v3381 = vpack.c.b16 %v2622, %v2619
        %v3382 = vpack.c.b16 %v2623, %v2620
        %v3383 = vpack.c.b16 %v2624, %v2621
        %v3384 = vpack.c.b16 %v2628, %v2625
        %v3385 = vpack.c.b16 %v2629, %v2626
        %v3386 = vpack.c.b16 %v2630, %v2627
        %v3387 = vpack.c.b16 %v2634, %v2631
        %v3388 = vpack.c.b16 %v2635, %v2632
        %v3389 = vpack.c.b16 %v2636, %v2633
        %v3390 = vpack.c.b16 %v2640, %v2637
        %v3391 = vpack.c.b16 %v2641, %v2638
        %v3392 = vpack.c.b16 %v2642, %v2639
        %v3393 = vpack.c.b16 %v2646, %v2643
        %v3394 = vpack.c.b16 %v2647, %v2644
        %v3395 = vpack.c.b16 %v2648, %v2645
        %v3396 = vpack.c.b16 %v2652, %v2649
        %v3397 = vpack.c.b16 %v2653, %v2650
        %v3398 = vpack.c.b16 %v2654, %v2651
        %v3399 = vpack.c.b16 %v2658, %v2655
        %v3400 = vpack.c.b16 %v2659, %v2656
        %v3401 = vpack.c.b16 %v2660, %v2657
        %v3402 = vpack.c.b16 %v2664, %v2661
        %v3403 = vpack.c.b16 %v2665, %v2662
        %v3404 = vpack.c.b16 %v2666, %v2663
        %v3405 = vpack.c.b16 %v2670, %v2667
        %v3406 = vpack.c.b16 %v2671, %v2668
        %v3407 = vpack.c.b16 %v2672, %v2669
        %v3408 = vpack.c.b16 %v2676, %v2673
        %v3409 = vpack.c.b16 %v2677, %v2674
        %v3410 = vpack.c.b16 %v2678, %v2675
        %v3411 = vpack.c.b16 %v2682, %v2679
        %v3412 = vpack.c.b16 %v2683, %v2680
        %v3413 = vpack.c.b16 %v2684, %v2681
        %v3414 = vpack.c.b16 %v2688, %v2685
        %v3415 = vpack.c.b16 %v2689, %v2686
        %v3416 = vpack.c.b16 %v2690, %v2687
        %v3417 = vpack.c.b16 %v2694, %v2691
        %v3418 = vpack.c.b16 %v2695, %v2692
        %v3419 = vpack.c.b16 %v2696, %v2693
        %v3420 = vpack.c.b16 %v2700, %v2697
        %v3421 = vpack.c.b16 %v2701, %v2698
        %v3422 = vpack.c.b16 %v2702, %v2699
        %v3423 = vpack.c.b16 %v2706, %v2703
        %v3424 = vpack.c.b16 %v2707, %v2704
        %v3425 = vpack.c.b16 %v2708, %v2705
        %v3426 = vpack.c.b16 %v2712, %v2709
        %v3427 = vpack.c.b16 %v2713, %v2710
        %v3428 = vpack.c.b16 %v2714, %v2711
        %v3429 = vpack.c.b16 %v2718, %v2715
        %v3430 = vpack.c.b16 %v2719, %v2716
        %v3431 = vpack.c.b16 %v2720, %v2717
        %v3432 = vpack.c.b16 %v2724, %v2721
        %v3433 = vpack.c.b16 %v2725, %v2722
        %v3434 = vpack.c.b16 %v2726, %v2723
        %v3435 = vpack.c.b16 %v2730, %v2727
        %v3436 = vpack.c.b16 %v2731, %v2728
        %v3437 = vpack.c.b16 %v2732, %v2729
        %v3438 = vpack.c.b16 %v2736, %v2733
        %v3439 = vpack.c.b16 %v2737, %v2734
        %v3440 = vpack.c.b16 %v2738, %v2735
        %v3441 = vpack.c.b16 %v2742, %v2739
        %v3442 = vpack.c.b16 %v2743, %v2740
        %v3443 = vpack.c.b16 %v2744, %v2741
        %v3444 = vpack.c.b16 %v2748, %v2745
        %v3445 = vpack.c.b16 %v2749, %v2746
        %v3446 = vpack.c.b16 %v2750, %v2747
        %v3447 = vpack.c.b16 %v2754, %v2751
        %v3448 = vpack.c.b16 %v2755, %v2752
        %v3449 = vpack.c.b16 %v2756, %v2753
        %v3450 = vpack.c.b16 %v2760, %v2757
        %v3451 = vpack.c.b16 %v2761, %v2758
        %v3452 = vpack.c.b16 %v2762, %v2759
        %v3453 = vpack.c.b16 %v2766, %v2763
        %v3454 = vpack.c.b16 %v2767, %v2764
        %v3455 = vpack.c.b16 %v2768, %v2765
        %v3456 = vpack.c.b16 %v2772, %v2769
        %v3457 = vpack.c.b16 %v2773, %v2770
        %v3458 = vpack.c.b16 %v2774, %v2771
        %v3459 = vpack.c.b16 %v2778, %v2775
        %v3460 = vpack.c.b16 %v2779, %v2776
        %v3461 = vpack.c.b16 %v2780, %v2777
        %v3462 = vpack.c.b16 %v2784, %v2781
        %v3463 = vpack.c.b16 %v2785, %v2782
        %v3464 = vpack.c.b16 %v2786, %v2783
        %v3465 = vpack.c.b16 %v2790, %v2787
        %v3466 = vpack.c.b16 %v2791, %v2788
        %v3467 = vpack.c.b16 %v2792, %v2789
        %v3468 = vpack.c.b16 %v2796, %v2793
        %v3469 = vpack.c.b16 %v2797, %v2794
        %v3470 = vpack.c.b16 %v2798, %v2795
        %v3471 = vpack.c.b16 %v2802, %v2799
        %v3472 = vpack.c.b16 %v2803, %v2800
        %v3473 = vpack.c.b16 %v2804, %v2801
        %v3474 = vpack.c.b16 %v2808, %v2805
        %v3475 = vpack.c.b16 %v2809, %v2806
        %v3476 = vpack.c.b16 %v2810, %v2807
        %v3477 = vpack.c.b16 %v2814, %v2811
        %v3478 = vpack.c.b16 %v2815, %v2812
        %v3479 = vpack.c.b16 %v2816, %v2813
        %v3480 = vpack.c.b16 %v2820, %v2817
        %v3481 = vpack.c.b16 %v2821, %v2818
        %v3482 = vpack.c.b16 %v2822, %v2819
        %v3483 = vpack.c.b16 %v2826, %v2823
        %v3484 = vpack.c.b16 %v2827, %v2824
        %v3485 = vpack.c.b16 %v2828, %v2825
        %v3486 = vpack.c.b16 %v2832, %v2829
        %v3487 = vpack.c.b16 %v2833, %v2830
        %v3488 = vpack.c.b16 %v2834, %v2831
        %v3489 = vpack.c.b16 %v2838, %v2835
        %v3490 = vpack.c.b16 %v2839, %v2836
        %v3491 = vpack.c.b16 %v2840, %v2837
        %v3492 = vpack.c.b16 %v2844, %v2841
        %v3493 = vpack.c.b16 %v2845, %v2842
        %v3494 = vpack.c.b16 %v2846, %v2843
        %v3495 = vpack.c.b16 %v2850, %v2847
        %v3496 = vpack.c.b16 %v2851, %v2848
        %v3497 = vpack.c.b16 %v2852, %v2849
        %v3498 = vpack.c.b16 %v2856, %v2853
        %v3499 = vpack.c.b16 %v2857, %v2854
        %v3500 = vpack.c.b16 %v2858, %v2855
        %v3501 = vpack.c.b16 %v2862, %v2859
        %v3502 = vpack.c.b16 %v2863, %v2860
        %v3503 = vpack.c.b16 %v2864, %v2861
        %v3504 = vpack.c.b16 %v2868, %v2865
        %v3505 = vpack.c.b16 %v2869, %v2866
        %v3506 = vpack.c.b16 %v2870, %v2867
        %v3507 = vpack.c.b16 %v2874, %v2871
        %v3508 = vpack.c.b16 %v2875, %v2872
        %v3509 = vpack.c.b16 %v2876, %v2873
        %v3510 = vpack.c.b16 %v2880, %v2877
        %v3511 = vpack.c.b16 %v2881, %v2878
        %v3512 = vpack.c.b16 %v2882, %v2879
        %v3513 = vpack.c.b16 %v2886, %v2883
        %v3514 = vpack.c.b16 %v2887, %v2884
        %v3515 = vpack.c.b16 %v2888, %v2885
        %v3516 = vpack.c.b16 %v2892, %v2889
        %v3517 = vpack.c.b16 %v2893, %v2890
        %v3518 = vpack.c.b16 %v2894, %v2891
        %v3519 = vpack.c.b16 %v2898, %v2895
        %v3520 = vpack.c.b16 %v2899, %v2896
        %v3521 = vpack.c.b16 %v2900, %v2897
        %v3522 = vpack.c.b16 %v2904, %v2901
        %v3523 = vpack.c.b16 %v2905, %v2902
        %v3524 = vpack.c.b16 %v2906, %v2903
        %v3525 = vpack.c.b16 %v2910, %v2907
        %v3526 = vpack.c.b16 %v2911, %v2908
        %v3527 = vpack.c.b16 %v2912, %v2909
        %v3528 = vpack.c.b16 %v2916, %v2913
        %v3529 = vpack.c.b16 %v2917, %v2914
        %v3530 = vpack.c.b16 %v2918, %v2915
        %v3531 = vpack.c.b16 %v2922, %v2919
        %v3532 = vpack.c.b16 %v2923, %v2920
        %v3533 = vpack.c.b16 %v2924, %v2921
        %v3534 = vpack.c.b16 %v2928, %v2925
        %v3535 = vpack.c.b16 %v2929, %v2926
        %v3536 = vpack.c.b16 %v2930, %v2927
        %v3537 = vpack.c.b16 %v2934, %v2931
        %v3538 = vpack.c.b16 %v2935, %v2932
        %v3539 = vpack.c.b16 %v2936, %v2933
        %v3540 = vpack.c.b16 %v2940, %v2937
        %v3541 = vpack.c.b16 %v2941, %v2938
        %v3542 = vpack.c.b16 %v2942, %v2939
        %v3543 = vpack.c.b16 %v2946, %v2943
        %v3544 = vpack.c.b16 %v2947, %v2944
        %v3545 = vpack.c.b16 %v2948, %v2945
        %v3546 = vpack.c.b16 %v2952, %v2949
        %v3547 = vpack.c.b16 %v2953, %v2950
        %v3548 = vpack.c.b16 %v2954, %v2951
        %v3549 = vpack.c.b16 %v2958, %v2955
        %v3550 = vpack.c.b16 %v2959, %v2956
        %v3551 = vpack.c.b16 %v2960, %v2957
        %v3552 = vpack.c.b16 %v2964, %v2961
        %v3553 = vpack.c.b16 %v2965, %v2962
        %v3554 = vpack.c.b16 %v2966, %v2963
        %v3555 = vpack.c.b16 %v2970, %v2967
        %v3556 = vpack.c.b16 %v2971, %v2968
        %v3557 = vpack.c.b16 %v2972, %v2969
        %v3558 = vpack.c.b16 %v2976, %v2973
        %v3559 = vpack.c.b16 %v2977, %v2974
        %v3560 = vpack.c.b16 %v2978, %v2975
        %v3561 = vpack.c.b16 %v2982, %v2979
        %v3562 = vpack.c.b16 %v2983, %v2980
        %v3563 = vpack.c.b16 %v2984, %v2981
        %v3564 = vpack.c.b16 %v2988, %v2985
        %v3565 = vpack.c.b16 %v2989, %v2986
        %v3566 = vpack.c.b16 %v2990, %v2987
        %v3997 = vunpack.c.l.b16 %v1018
        %v3998 = vunpack.c.l.b16 %v1019
        %v3999 = vunpack.c.l.b16 %v1020
        %v4000 = vunpack.c.l.b16 %v1021
        %v4001 = vunpack.c.l.b16 %v1022
        %v4002 = vunpack.c.l.b16 %v1023
        %v4003 = vunpack.c.l.b16 %v1024
        %v4004 = vunpack.c.l.b16 %v1025
        %v4005 = vunpack.c.l.b16 %v1026
        %v4006 = vunpack.c.l.b16 %v1027
        %v4007 = vunpack.c.l.b16 %v1028
        %v4008 = vunpack.c.l.b16 %v1029
        %v4009 = vunpack.c.l.b16 %v1030
        %v4010 = vunpack.c.l.b16 %v1031
        %v4011 = vunpack.c.l.b16 %v1032
        %v4012 = vunpack.c.l.b16 %v1033
        %v4013 = vunpack.c.l.b16 %v1034
        %v4014 = vunpack.c.l.b16 %v1035
        %v4015 = vunpack.c.l.b16 %v1036
        %v4016 = vunpack.c.l.b16 %v1037
        %v4017 = vunpack.c.l.b16 %v1038
        %v4018 = vunpack.c.l.b16 %v1039
        %v4019 = vunpack.c.l.b16 %v1040
        %v4020 = vunpack.c.l.b16 %v1041
        %v4021 = vunpack.c.l.b16 %v1042
        %v4022 = vunpack.c.l.b16 %v1043
        %v4023 = vunpack.c.l.b16 %v1044
        %v4024 = vunpack.c.l.b16 %v1045
        %v4025 = vunpack.c.l.b16 %v1046
        %v4026 = vunpack.c.l.b16 %v1047
        %v4027 = vunpack.c.l.b16 %v1048
        %v4028 = vunpack.c.l.b16 %v1049
        %v4029 = vunpack.c.l.b16 %v1050
        %v4030 = vunpack.c.l.b16 %v1051
        %v4031 = vunpack.c.l.b16 %v1052
        %v4032 = vunpack.c.l.b16 %v1053
        %v4033 = vunpack.c.l.b16 %v1054
        %v4034 = vunpack.c.l.b16 %v1055
        %v4035 = vunpack.c.l.b16 %v1056
        %v4036 = vunpack.c.l.b16 %v1057
        %v4037 = vunpack.c.l.b16 %v1058
        %v4038 = vunpack.c.l.b16 %v1059
        %v4039 = vunpack.c.l.b16 %v1060
        %v4040 = vunpack.c.l.b16 %v1061
        %v4041 = vunpack.c.l.b16 %v1062
        %v4042 = vunpack.c.l.b16 %v1063
        %v4043 = vpack.c.b16 %v3998, %v3997
        %v4044 = vpack.c.b16 %v4000, %v3999
        %v4045 = vpack.c.b16 %v4002, %v4001
        %v4046 = vpack.c.b16 %v4004, %v4003
        %v4047 = vpack.c.b16 %v4006, %v4005
        %v4048 = vpack.c.b16 %v4008, %v4007
        %v4049 = vpack.c.b16 %v4010, %v4009
        %v4050 = vpack.c.b16 %v4012, %v4011
        %v4051 = vpack.c.b16 %v4014, %v4013
        %v4052 = vpack.c.b16 %v4016, %v4015
        %v4053 = vpack.c.b16 %v4018, %v4017
        %v4054 = vpack.c.b16 %v4020, %v4019
        %v4055 = vpack.c.b16 %v4022, %v4021
        %v4056 = vpack.c.b16 %v4024, %v4023
        %v4057 = vpack.c.b16 %v4026, %v4025
        %v4058 = vpack.c.b16 %v4028, %v4027
        %v4059 = vpack.c.b16 %v4030, %v4029
        %v4060 = vpack.c.b16 %v4032, %v4031
        %v4061 = vpack.c.b16 %v4034, %v4033
        %v4062 = vpack.c.b16 %v4036, %v4035
        %v4063 = vpack.c.b16 %v4038, %v4037
        %v4064 = vpack.c.b16 %v4040, %v4039
        %v4065 = vpack.c.b16 %v4042, %v4041
        %vm4088 = vcmask 875520
        %v4090 = vsel %vm4088, %v2993, 0
        %v4093 = vsel %vm4088, %v2996, 0
        %v4096 = vsel %vm4088, %v2999, 0
        %v4099 = vsel %vm4088, %v3002, 0
        %v4102 = vsel %vm4088, %v3005, 0
        %v4105 = vsel %vm4088, %v3008, 0
        %v4108 = vsel %vm4088, %v3011, 0
        %v4111 = vsel %vm4088, %v3014, 0
        %v4114 = vsel %vm4088, %v3017, 0
        %v4117 = vsel %vm4088, %v3020, 0
        %v4120 = vsel %vm4088, %v3023, 0
        %v4123 = vsel %vm4088, %v3026, 0
        %v4126 = vsel %vm4088, %v3029, 0
        %v4129 = vsel %vm4088, %v3032, 0
        %v4132 = vsel %vm4088, %v3035, 0
        %v4135 = vsel %vm4088, %v3038, 0
        %v4138 = vsel %vm4088, %v3041, 0
        %v4141 = vsel %vm4088, %v3044, 0
        %v4144 = vsel %vm4088, %v3047, 0
        %v4147 = vsel %vm4088, %v3050, 0
        %v4150 = vsel %vm4088, %v3053, 0
        %v4153 = vsel %vm4088, %v3056, 0
        %v4156 = vsel %vm4088, %v3059, 0
        %v4159 = vsel %vm4088, %v3062, 0
        %v4162 = vsel %vm4088, %v3065, 0
        %v4165 = vsel %vm4088, %v3068, 0
        %v4168 = vsel %vm4088, %v3071, 0
        %v4171 = vsel %vm4088, %v3074, 0
        %v4174 = vsel %vm4088, %v3077, 0
        %v4177 = vsel %vm4088, %v3080, 0
        %v4180 = vsel %vm4088, %v3083, 0
        %v4183 = vsel %vm4088, %v3086, 0
        %v4186 = vsel %vm4088, %v3089, 0
        %v4189 = vsel %vm4088, %v3092, 0
        %v4192 = vsel %vm4088, %v3095, 0
        %v4195 = vsel %vm4088, %v3098, 0
        %v4198 = vsel %vm4088, %v3101, 0
        %v4201 = vsel %vm4088, %v3104, 0
        %v4204 = vsel %vm4088, %v3107, 0
        %v4207 = vsel %vm4088, %v3110, 0
        %v4210 = vsel %vm4088, %v3113, 0
        %v4213 = vsel %vm4088, %v3116, 0
        %v4216 = vsel %vm4088, %v3119, 0
        %v4219 = vsel %vm4088, %v3122, 0
        %v4222 = vsel %vm4088, %v3125, 0
        %v4225 = vsel %vm4088, %v3128, 0
        %v4228 = vsel %vm4088, %v3131, 0
        %v4231 = vsel %vm4088, %v3134, 0
        %v4234 = vsel %vm4088, %v3137, 0
        %v4237 = vsel %vm4088, %v3140, 0
        %v4240 = vsel %vm4088, %v3143, 0
        %v4243 = vsel %vm4088, %v3146, 0
        %v4246 = vsel %vm4088, %v3149, 0
        %v4249 = vsel %vm4088, %v3152, 0
        %v4252 = vsel %vm4088, %v3155, 0
        %v4255 = vsel %vm4088, %v3158, 0
        %v4258 = vsel %vm4088, %v3161, 0
        %v4261 = vsel %vm4088, %v3164, 0
        %v4264 = vsel %vm4088, %v3167, 0
        %v4267 = vsel %vm4088, %v3170, 0
        %v4270 = vsel %vm4088, %v3173, 0
        %v4273 = vsel %vm4088, %v3176, 0
        %v4276 = vsel %vm4088, %v3179, 0
        %v4279 = vsel %vm4088, %v3182, 0
        %v4282 = vsel %vm4088, %v3185, 0
        %v4285 = vsel %vm4088, %v3188, 0
        %v4288 = vsel %vm4088, %v3191, 0
        %v4291 = vsel %vm4088, %v3194, 0
        %v4294 = vsel %vm4088, %v3197, 0
        %v4297 = vsel %vm4088, %v3200, 0
        %v4300 = vsel %vm4088, %v3203, 0
        %v4303 = vsel %vm4088, %v3206, 0
        %v4306 = vsel %vm4088, %v3209, 0
        %v4309 = vsel %vm4088, %v3212, 0
        %v4312 = vsel %vm4088, %v3215, 0
        %v4315 = vsel %vm4088, %v3218, 0
        %v4318 = vsel %vm4088, %v3221, 0
        %v4321 = vsel %vm4088, %v3224, 0
        %v4324 = vsel %vm4088, %v3227, 0
        %v4327 = vsel %vm4088, %v3230, 0
        %v4330 = vsel %vm4088, %v3233, 0
        %v4333 = vsel %vm4088, %v3236, 0
        %v4336 = vsel %vm4088, %v3239, 0
        %v4339 = vsel %vm4088, %v3242, 0
        %v4342 = vsel %vm4088, %v3245, 0
        %v4345 = vsel %vm4088, %v3248, 0
        %v4348 = vsel %vm4088, %v3251, 0
        %v4351 = vsel %vm4088, %v3254, 0
        %v4354 = vsel %vm4088, %v3257, 0
        %v4357 = vsel %vm4088, %v3260, 0
        %v4360 = vsel %vm4088, %v3263, 0
        %v4363 = vsel %vm4088, %v3266, 0
        %v4366 = vsel %vm4088, %v3269, 0
        %v4369 = vsel %vm4088, %v3272, 0
        %v4372 = vsel %vm4088, %v3275, 0
        %v4375 = vsel %vm4088, %v3278, 0
        %v4378 = vsel %vm4088, %v3281, 0
        %v4381 = vsel %vm4088, %v3284, 0
        %v4384 = vsel %vm4088, %v3287, 0
        %v4387 = vsel %vm4088, %v3290, 0
        %v4390 = vsel %vm4088, %v3293, 0
        %v4393 = vsel %vm4088, %v3296, 0
        %v4396 = vsel %vm4088, %v3299, 0
        %v4399 = vsel %vm4088, %v3302, 0
        %v4402 = vsel %vm4088, %v3305, 0
        %v4405 = vsel %vm4088, %v3308, 0
        %v4408 = vsel %vm4088, %v3311, 0
        %v4411 = vsel %vm4088, %v3314, 0
        %v4414 = vsel %vm4088, %v3317, 0
        %v4417 = vsel %vm4088, %v3320, 0
        %v4420 = vsel %vm4088, %v3323, 0
        %v4423 = vsel %vm4088, %v3326, 0
        %v4426 = vsel %vm4088, %v3329, 0
        %v4429 = vsel %vm4088, %v3332, 0
        %v4432 = vsel %vm4088, %v3335, 0
        %v4435 = vsel %vm4088, %v3338, 0
        %v4438 = vsel %vm4088, %v3341, 0
        %v4441 = vsel %vm4088, %v3344, 0
        %v4444 = vsel %vm4088, %v3347, 0
        %v4447 = vsel %vm4088, %v3350, 0
        %v4450 = vsel %vm4088, %v3353, 0
        %v4453 = vsel %vm4088, %v3356, 0
        %v4456 = vsel %vm4088, %v3359, 0
        %v4459 = vsel %vm4088, %v3362, 0
        %v4462 = vsel %vm4088, %v3365, 0
        %v4465 = vsel %vm4088, %v3368, 0
        %v4468 = vsel %vm4088, %v3371, 0
        %v4471 = vsel %vm4088, %v3374, 0
        %v4474 = vsel %vm4088, %v3377, 0
        %v4477 = vsel %vm4088, %v3380, 0
        %v4480 = vsel %vm4088, %v3383, 0
        %v4483 = vsel %vm4088, %v3386, 0
        %v4486 = vsel %vm4088, %v3389, 0
        %v4489 = vsel %vm4088, %v3392, 0
        %v4492 = vsel %vm4088, %v3395, 0
        %v4495 = vsel %vm4088, %v3398, 0
        %v4498 = vsel %vm4088, %v3401, 0
        %v4501 = vsel %vm4088, %v3404, 0
        %v4504 = vsel %vm4088, %v3407, 0
        %v4507 = vsel %vm4088, %v3410, 0
        %v4510 = vsel %vm4088, %v3413, 0
        %v4513 = vsel %vm4088, %v3416, 0
        %v4516 = vsel %vm4088, %v3419, 0
        %v4519 = vsel %vm4088, %v3422, 0
        %v4522 = vsel %vm4088, %v3425, 0
        %v4525 = vsel %vm4088, %v3428, 0
        %v4528 = vsel %vm4088, %v3431, 0
        %v4531 = vsel %vm4088, %v3434, 0
        %v4534 = vsel %vm4088, %v3437, 0
        %v4537 = vsel %vm4088, %v3440, 0
        %v4540 = vsel %vm4088, %v3443, 0
        %v4543 = vsel %vm4088, %v3446, 0
        %v4546 = vsel %vm4088, %v3449, 0
        %v4549 = vsel %vm4088, %v3452, 0
        %v4552 = vsel %vm4088, %v3455, 0
        %v4555 = vsel %vm4088, %v3458, 0
        %v4558 = vsel %vm4088, %v3461, 0
        %v4561 = vsel %vm4088, %v3464, 0
        %v4564 = vsel %vm4088, %v3467, 0
        %v4567 = vsel %vm4088, %v3470, 0
        %v4570 = vsel %vm4088, %v3473, 0
        %v4573 = vsel %vm4088, %v3476, 0
        %v4576 = vsel %vm4088, %v3479, 0
        %v4579 = vsel %vm4088, %v3482, 0
        %v4582 = vsel %vm4088, %v3485, 0
        %v4585 = vsel %vm4088, %v3488, 0
        %v4588 = vsel %vm4088, %v3491, 0
        %v4591 = vsel %vm4088, %v3494, 0
        %v4594 = vsel %vm4088, %v3497, 0
        %v4597 = vsel %vm4088, %v3500, 0
        %v4600 = vsel %vm4088, %v3503, 0
        %v4603 = vsel %vm4088, %v3506, 0
        %v4606 = vsel %vm4088, %v3509, 0
        %v4609 = vsel %vm4088, %v3512, 0
        %v4612 = vsel %vm4088, %v3515, 0
        %v4615 = vsel %vm4088, %v3518, 0
        %v4618 = vsel %vm4088, %v3521, 0
        %v4621 = vsel %vm4088, %v3524, 0
        %v4624 = vsel %vm4088, %v3527, 0
        %v4627 = vsel %vm4088, %v3530, 0
        %v4630 = vsel %vm4088, %v3533, 0
        %v4633 = vsel %vm4088, %v3536, 0
        %v4636 = vsel %vm4088, %v3539, 0
        %v4639 = vsel %vm4088, %v3542, 0
        %v4642 = vsel %vm4088, %v3545, 0
        %v4645 = vsel %vm4088, %v3548, 0
        %v4648 = vsel %vm4088, %v3551, 0
        %v4651 = vsel %vm4088, %v3554, 0
        %v4654 = vsel %vm4088, %v3557, 0
        %v4657 = vsel %vm4088, %v3560, 0
        %v4660 = vsel %vm4088, %v3563, 0
        %v4663 = vsel %vm4088, %v3566, 0
        %vm4665 = vcmask 1044480
        %vm4666 = vcmask 1045504
        %v4667 = vsel %vm4665, 4294967295, 65535
        %v4668 = vsel %vm4666, %v4667, 0
        %v4670 = vand.u32 %v4065, %v4668
        %4672 = vmatprep.subr.bf16.mxu0 0
        %4673 = vmatpush1.bf16.msra.mxu0 %v4043
        %4674 = vmatprep.subr.bf16.mxu0 0
        %4675 = vmatpush1.bf16.msra.mxu0 %v4044
        %4676 = vmatprep.subr.bf16.mxu0 0
        %4677 = vmatpush1.bf16.msra.mxu0 %v4045
        %4678 = vmatprep.subr.bf16.mxu0 0
        %4679 = vmatpush1.bf16.msra.mxu0 %v4046
        %4680 = vmatprep.subr.bf16.mxu0 0
        %4681 = vmatpush1.bf16.msra.mxu0 %v4047
        %4682 = vmatprep.subr.bf16.mxu0 0
        %4683 = vmatpush1.bf16.msra.mxu0 %v4048
        %4684 = vmatprep.subr.bf16.mxu0 0
        %4685 = vmatpush1.bf16.msra.mxu0 %v4049
        %4686 = vmatprep.subr.bf16.mxu0 0
        %4687 = vmatpush1.bf16.msra.mxu0 %v4050
        %4688 = vmatprep.subr.bf16.mxu0 0
        %4689 = vmatpush1.bf16.msra.mxu0 %v4051
        %4690 = vmatprep.subr.bf16.mxu0 0
        %4691 = vmatpush1.bf16.msra.mxu0 %v4052
        %4692 = vmatprep.subr.bf16.mxu0 0
        %4693 = vmatpush1.bf16.msra.mxu0 %v4053
        %4694 = vmatprep.subr.bf16.mxu0 0
        %4695 = vmatpush1.bf16.msra.mxu0 %v4054
        %4696 = vmatprep.subr.bf16.mxu0 0
        %4697 = vmatpush1.bf16.msra.mxu0 %v4055
        %4698 = vmatprep.subr.bf16.mxu0 0
        %4699 = vmatpush1.bf16.msra.mxu0 %v4056
        %4700 = vmatprep.subr.bf16.mxu0 0
        %4701 = vmatpush1.bf16.msra.mxu0 %v4057
        %4702 = vmatprep.subr.bf16.mxu0 0
        %4703 = vmatpush1.bf16.msra.mxu0 %v4058
        %4704 = vmatprep.mubr.bf16.mxu0 %v2992
        %4705 = vmatmul.mubr.bf16.gmra.mrb[0].mxu0 %v2991
        %v4706 = vpop.f32.mrb[0].mxu0
        %v4707 = vadd.f32 %v1069, %v4706
        %v4708 = vpop.f32.mrb[0].mxu0
        %v4709 = vpop.f32.mrb[0].mxu0
        %v4710 = vadd.f32 %v1069, %v4709
        %v4711 = vpop.f32.mrb[0].mxu0
        %4712 = vmatprep.mubr.bf16.mxu0 %v2995
        %4713 = vmatmul.mubr.bf16.gmra.mrb[0].mxu0 %v2994
        %v4714 = vpop.f32.mrb[0].mxu0
        %v4715 = vadd.f32 %v1069, %v4714
        %v4716 = vpop.f32.mrb[0].mxu0
        %v4717 = vpop.f32.mrb[0].mxu0
        %v4718 = vadd.f32 %v1069, %v4717
        %v4719 = vpop.f32.mrb[0].mxu0
        %4720 = vmatprep.mubr.bf16.mxu0 %v2998
        %4721 = vmatmul.mubr.bf16.gmra.mrb[0].mxu0 %v2997
        %v4722 = vpop.f32.mrb[0].mxu0
        %v4723 = vadd.f32 %v1069, %v4722
        %v4724 = vpop.f32.mrb[0].mxu0
        %v4725 = vpop.f32.mrb[0].mxu0
        %v4726 = vadd.f32 %v1069, %v4725
        %v4727 = vpop.f32.mrb[0].mxu0
        %4728 = vmatprep.mubr.bf16.mxu0 %v3001
        %4729 = vmatmul.mubr.bf16.gmra.mrb[0].mxu0 %v3000
        %v4730 = vpop.f32.mrb[0].mxu0
        %v4731 = vadd.f32 %v1069, %v4730
        %v4732 = vpop.f32.mrb[0].mxu0
        %v4733 = vpop.f32.mrb[0].mxu0
        %v4734 = vadd.f32 %v1069, %v4733
        %v4735 = vpop.f32.mrb[0].mxu0
        %4736 = vmatprep.mubr.bf16.mxu0 %v3004
        %4737 = vmatmul.mubr.bf16.gmra.mrb[0].mxu0 %v3003
        %v4738 = vpop.f32.mrb[0].mxu0
        %v4739 = vadd.f32 %v1069, %v4738
        %v4740 = vpop.f32.mrb[0].mxu0
        %v4741 = vpop.f32.mrb[0].mxu0
        %v4742 = vadd.f32 %v1069, %v4741
        %v4743 = vpop.f32.mrb[0].mxu0
        %4744 = vmatprep.mubr.bf16.mxu0 %v3007
        %4745 = vmatmul.mubr.bf16.gmra.mrb[0].mxu0 %v3006
        %v4746 = vpop.f32.mrb[0].mxu0
        %v4747 = vadd.f32 %v1069, %v4746
        %v4748 = vpop.f32.mrb[0].mxu0
        %v4749 = vpop.f32.mrb[0].mxu0
        %v4750 = vadd.f32 %v1069, %v4749
        %v4751 = vpop.f32.mrb[0].mxu0
        %4752 = vmatprep.mubr.bf16.mxu0 %v3010
        %4753 = vmatmul.mubr.bf16.gmra.mrb[0].mxu0 %v3009
        %v4754 = vpop.f32.mrb[0].mxu0
        %v4755 = vadd.f32 %v1069, %v4754
        %v4756 = vpop.f32.mrb[0].mxu0
        %v4757 = vpop.f32.mrb[0].mxu0
        %v4758 = vadd.f32 %v1069, %v4757
        %v4759 = vpop.f32.mrb[0].mxu0
        %4760 = vmatprep.mubr.bf16.mxu0 %v3013
        %4761 = vmatmul.mubr.bf16.gmra.mrb[0].mxu0 %v3012
        %v4762 = vpop.f32.mrb[0].mxu0
        %v4763 = vadd.f32 %v1069, %v4762
        %v4764 = vpop.f32.mrb[0].mxu0
        %v4765 = vpop.f32.mrb[0].mxu0
        %v4766 = vadd.f32 %v1069, %v4765
        %v4767 = vpop.f32.mrb[0].mxu0
        %4768 = vmatprep.mubr.bf16.mxu0 %v3016
        %4769 = vmatmul.mubr.bf16.gmra.mrb[0].mxu0 %v3015
        %v4770 = vpop.f32.mrb[0].mxu0
        %v4771 = vadd.f32 %v1069, %v4770
        %v4772 = vpop.f32.mrb[0].mxu0
        %v4773 = vpop.f32.mrb[0].mxu0
        %v4774 = vadd.f32 %v1069, %v4773
        %v4775 = vpop.f32.mrb[0].mxu0
        %4776 = vmatprep.mubr.bf16.mxu0 %v3019
        %4777 = vmatmul.mubr.bf16.gmra.mrb[0].mxu0 %v3018
        %v4778 = vpop.f32.mrb[0].mxu0
        %v4779 = vadd.f32 %v1069, %v4778
        %v4780 = vpop.f32.mrb[0].mxu0
        %v4781 = vpop.f32.mrb[0].mxu0
        %v4782 = vadd.f32 %v1069, %v4781
        %v4783 = vpop.f32.mrb[0].mxu0
        %4784 = vmatprep.mubr.bf16.mxu0 %v3022
        %4785 = vmatmul.mubr.bf16.gmra.mrb[0].mxu0 %v3021
        %v4786 = vpop.f32.mrb[0].mxu0
        %v4787 = vadd.f32 %v1069, %v4786
        %v4788 = vpop.f32.mrb[0].mxu0
        %v4789 = vpop.f32.mrb[0].mxu0
        %v4790 = vadd.f32 %v1069, %v4789
        %v4791 = vpop.f32.mrb[0].mxu0
        %4792 = vmatprep.mubr.bf16.mxu0 %v3025
        %4793 = vmatmul.mubr.bf16.gmra.mrb[0].mxu0 %v3024
        %v4794 = vpop.f32.mrb[0].mxu0
        %v4795 = vadd.f32 %v1069, %v4794
        %v4796 = vpop.f32.mrb[0].mxu0
        %v4797 = vpop.f32.mrb[0].mxu0
        %v4798 = vadd.f32 %v1069, %v4797
        %v4799 = vpop.f32.mrb[0].mxu0
        %4800 = vmatprep.mubr.bf16.mxu0 %v3028
        %4801 = vmatmul.mubr.bf16.gmra.mrb[0].mxu0 %v3027
        %v4802 = vpop.f32.mrb[0].mxu0
        %v4803 = vadd.f32 %v1069, %v4802
        %v4804 = vpop.f32.mrb[0].mxu0
        %v4805 = vpop.f32.mrb[0].mxu0
        %v4806 = vadd.f32 %v1069, %v4805
        %v4807 = vpop.f32.mrb[0].mxu0
        %4808 = vmatprep.mubr.bf16.mxu0 %v3031
        %4809 = vmatmul.mubr.bf16.gmra.mrb[0].mxu0 %v3030
        %v4810 = vpop.f32.mrb[0].mxu0
        %v4811 = vadd.f32 %v1069, %v4810
        %v4812 = vpop.f32.mrb[0].mxu0
        %v4813 = vpop.f32.mrb[0].mxu0
        %v4814 = vadd.f32 %v1069, %v4813
        %v4815 = vpop.f32.mrb[0].mxu0
        %4816 = vmatprep.mubr.bf16.mxu0 %v3034
        %4817 = vmatmul.mubr.bf16.gmra.mrb[0].mxu0 %v3033
        %v4818 = vpop.f32.mrb[0].mxu0
        %v4819 = vadd.f32 %v1069, %v4818
        %v4820 = vpop.f32.mrb[0].mxu0
        %v4821 = vpop.f32.mrb[0].mxu0
        %v4822 = vadd.f32 %v1069, %v4821
        %v4823 = vpop.f32.mrb[0].mxu0
        %4824 = vmatprep.mubr.bf16.mxu0 %v3037
        %4825 = vmatmul.mubr.bf16.gmra.mrb[0].mxu0 %v3036
        %v4826 = vpop.f32.mrb[0].mxu0
        %v4827 = vadd.f32 %v1069, %v4826
        %v4828 = vpop.f32.mrb[0].mxu0
        %v4829 = vpop.f32.mrb[0].mxu0
        %v4830 = vadd.f32 %v1069, %v4829
        %v4831 = vpop.f32.mrb[0].mxu0
        %4832 = vmatprep.mubr.bf16.mxu0 %v3040
        %4833 = vmatmul.mubr.bf16.gmra.mrb[0].mxu0 %v3039
        %v4834 = vpop.f32.mrb[0].mxu0
        %v4835 = vadd.f32 %v1069, %v4834
        %v4836 = vpop.f32.mrb[0].mxu0
        %v4837 = vpop.f32.mrb[0].mxu0
        %v4838 = vadd.f32 %v1069, %v4837
        %v4839 = vpop.f32.mrb[0].mxu0
        %4840 = vmatprep.mubr.bf16.mxu0 %v3043
        %4841 = vmatmul.mubr.bf16.gmra.mrb[0].mxu0 %v3042
        %v4842 = vpop.f32.mrb[0].mxu0
        %v4843 = vadd.f32 %v1069, %v4842
        %v4844 = vpop.f32.mrb[0].mxu0
        %v4845 = vpop.f32.mrb[0].mxu0
        %v4846 = vadd.f32 %v1069, %v4845
        %v4847 = vpop.f32.mrb[0].mxu0
        %4848 = vmatprep.mubr.bf16.mxu0 %v3046
        %4849 = vmatmul.mubr.bf16.gmra.mrb[0].mxu0 %v3045
        %v4850 = vpop.f32.mrb[0].mxu0
        %v4851 = vadd.f32 %v1069, %v4850
        %v4852 = vpop.f32.mrb[0].mxu0
        %v4853 = vpop.f32.mrb[0].mxu0
        %v4854 = vadd.f32 %v1069, %v4853
        %v4855 = vpop.f32.mrb[0].mxu0
        %4856 = vmatprep.mubr.bf16.mxu0 %v3049
        %4857 = vmatmul.mubr.bf16.gmra.mrb[0].mxu0 %v3048
        %v4858 = vpop.f32.mrb[0].mxu0
        %v4859 = vadd.f32 %v1069, %v4858
        %v4860 = vpop.f32.mrb[0].mxu0
        %v4861 = vpop.f32.mrb[0].mxu0
        %v4862 = vadd.f32 %v1069, %v4861
        %v4863 = vpop.f32.mrb[0].mxu0
        %4864 = vmatprep.mubr.bf16.mxu0 %v3052
        %4865 = vmatmul.mubr.bf16.gmra.mrb[0].mxu0 %v3051
        %v4866 = vpop.f32.mrb[0].mxu0
        %v4867 = vadd.f32 %v1069, %v4866
        %v4868 = vpop.f32.mrb[0].mxu0
        %v4869 = vpop.f32.mrb[0].mxu0
        %v4870 = vadd.f32 %v1069, %v4869
        %v4871 = vpop.f32.mrb[0].mxu0
        %4872 = vmatprep.mubr.bf16.mxu0 %v3055
        %4873 = vmatmul.mubr.bf16.gmra.mrb[0].mxu0 %v3054
        %v4874 = vpop.f32.mrb[0].mxu0
        %v4875 = vadd.f32 %v1069, %v4874
        %v4876 = vpop.f32.mrb[0].mxu0
        %v4877 = vpop.f32.mrb[0].mxu0
        %v4878 = vadd.f32 %v1069, %v4877
        %v4879 = vpop.f32.mrb[0].mxu0
        %4880 = vmatprep.mubr.bf16.mxu0 %v3058
        %4881 = vmatmul.mubr.bf16.gmra.mrb[0].mxu0 %v3057
        %v4882 = vpop.f32.mrb[0].mxu0
        %v4883 = vadd.f32 %v1069, %v4882
        %v4884 = vpop.f32.mrb[0].mxu0
        %v4885 = vpop.f32.mrb[0].mxu0
        %v4886 = vadd.f32 %v1069, %v4885
        %v4887 = vpop.f32.mrb[0].mxu0
        %4888 = vmatprep.mubr.bf16.mxu0 %v3061
        %4889 = vmatmul.mubr.bf16.gmra.mrb[0].mxu0 %v3060
        %v4890 = vpop.f32.mrb[0].mxu0
        %v4891 = vadd.f32 %v1069, %v4890
        %v4892 = vpop.f32.mrb[0].mxu0
        %v4893 = vpop.f32.mrb[0].mxu0
        %v4894 = vadd.f32 %v1069, %v4893
        %v4895 = vpop.f32.mrb[0].mxu0
        %4896 = vmatprep.mubr.bf16.mxu0 %v3064
        %4897 = vmatmul.mubr.bf16.gmra.mrb[0].mxu0 %v3063
        %v4898 = vpop.f32.mrb[0].mxu0
        %v4899 = vadd.f32 %v1069, %v4898
        %v4900 = vpop.f32.mrb[0].mxu0
        %v4901 = vpop.f32.mrb[0].mxu0
        %v4902 = vadd.f32 %v1069, %v4901
        %v4903 = vpop.f32.mrb[0].mxu0
        %4904 = vmatprep.mubr.bf16.mxu0 %v3067
        %4905 = vmatmul.mubr.bf16.gmra.mrb[0].mxu0 %v3066
        %v4906 = vpop.f32.mrb[0].mxu0
        %v4907 = vadd.f32 %v1069, %v4906
        %v4908 = vpop.f32.mrb[0].mxu0
        %v4909 = vpop.f32.mrb[0].mxu0
        %v4910 = vadd.f32 %v1069, %v4909
        %v4911 = vpop.f32.mrb[0].mxu0
        %4912 = vmatprep.mubr.bf16.mxu0 %v3070
        %4913 = vmatmul.mubr.bf16.gmra.mrb[0].mxu0 %v3069
        %v4914 = vpop.f32.mrb[0].mxu0
        %v4915 = vadd.f32 %v1069, %v4914
        %v4916 = vpop.f32.mrb[0].mxu0
        %v4917 = vpop.f32.mrb[0].mxu0
        %v4918 = vadd.f32 %v1069, %v4917
        %v4919 = vpop.f32.mrb[0].mxu0
        %4920 = vmatprep.mubr.bf16.mxu0 %v3073
        %4921 = vmatmul.mubr.bf16.gmra.mrb[0].mxu0 %v3072
        %v4922 = vpop.f32.mrb[0].mxu0
        %v4923 = vadd.f32 %v1069, %v4922
        %v4924 = vpop.f32.mrb[0].mxu0
        %v4925 = vpop.f32.mrb[0].mxu0
        %v4926 = vadd.f32 %v1069, %v4925
        %v4927 = vpop.f32.mrb[0].mxu0
        %4928 = vmatprep.mubr.bf16.mxu0 %v3076
        %4929 = vmatmul.mubr.bf16.gmra.mrb[0].mxu0 %v3075
        %v4930 = vpop.f32.mrb[0].mxu0
        %v4931 = vadd.f32 %v1069, %v4930
        %v4932 = vpop.f32.mrb[0].mxu0
        %v4933 = vpop.f32.mrb[0].mxu0
        %v4934 = vadd.f32 %v1069, %v4933
        %v4935 = vpop.f32.mrb[0].mxu0
        %4936 = vmatprep.mubr.bf16.mxu0 %v3079
        %4937 = vmatmul.mubr.bf16.gmra.mrb[0].mxu0 %v3078
        %v4938 = vpop.f32.mrb[0].mxu0
        %v4939 = vadd.f32 %v1069, %v4938
        %v4940 = vpop.f32.mrb[0].mxu0
        %v4941 = vpop.f32.mrb[0].mxu0
        %v4942 = vadd.f32 %v1069, %v4941
        %v4943 = vpop.f32.mrb[0].mxu0
        %4944 = vmatprep.mubr.bf16.mxu0 %v3082
        %4945 = vmatmul.mubr.bf16.gmra.mrb[0].mxu0 %v3081
        %v4946 = vpop.f32.mrb[0].mxu0
        %v4947 = vadd.f32 %v1069, %v4946
        %v4948 = vpop.f32.mrb[0].mxu0
        %v4949 = vpop.f32.mrb[0].mxu0
        %v4950 = vadd.f32 %v1069, %v4949
        %v4951 = vpop.f32.mrb[0].mxu0
        %4952 = vmatprep.mubr.bf16.mxu0 %v3085
        %4953 = vmatmul.mubr.bf16.gmra.mrb[0].mxu0 %v3084
        %v4954 = vpop.f32.mrb[0].mxu0
        %v4955 = vadd.f32 %v1069, %v4954
        %v4956 = vpop.f32.mrb[0].mxu0
        %v4957 = vpop.f32.mrb[0].mxu0
        %v4958 = vadd.f32 %v1069, %v4957
        %v4959 = vpop.f32.mrb[0].mxu0
        %4960 = vmatprep.mubr.bf16.mxu0 %v3088
        %4961 = vmatmul.mubr.bf16.gmra.mrb[0].mxu0 %v3087
        %v4962 = vpop.f32.mrb[0].mxu0
        %v4963 = vadd.f32 %v1069, %v4962
        %v4964 = vpop.f32.mrb[0].mxu0
        %v4965 = vpop.f32.mrb[0].mxu0
        %v4966 = vadd.f32 %v1069, %v4965
        %v4967 = vpop.f32.mrb[0].mxu0
        %4968 = vmatprep.mubr.bf16.mxu0 %v3091
        %4969 = vmatmul.mubr.bf16.gmra.mrb[0].mxu0 %v3090
        %v4970 = vpop.f32.mrb[0].mxu0
        %v4971 = vadd.f32 %v1069, %v4970
        %v4972 = vpop.f32.mrb[0].mxu0
        %v4973 = vpop.f32.mrb[0].mxu0
        %v4974 = vadd.f32 %v1069, %v4973
        %v4975 = vpop.f32.mrb[0].mxu0
        %4976 = vmatprep.mubr.bf16.mxu0 %v3094
        %4977 = vmatmul.mubr.bf16.gmra.mrb[0].mxu0 %v3093
        %v4978 = vpop.f32.mrb[0].mxu0
        %v4979 = vadd.f32 %v1069, %v4978
        %v4980 = vpop.f32.mrb[0].mxu0
        %v4981 = vpop.f32.mrb[0].mxu0
        %v4982 = vadd.f32 %v1069, %v4981
        %v4983 = vpop.f32.mrb[0].mxu0
        %4984 = vmatprep.mubr.bf16.mxu0 %v3097
        %4985 = vmatmul.mubr.bf16.gmra.mrb[0].mxu0 %v3096
        %v4986 = vpop.f32.mrb[0].mxu0
        %v4987 = vadd.f32 %v1069, %v4986
        %v4988 = vpop.f32.mrb[0].mxu0
        %v4989 = vpop.f32.mrb[0].mxu0
        %v4990 = vadd.f32 %v1069, %v4989
        %v4991 = vpop.f32.mrb[0].mxu0
        %4992 = vmatprep.mubr.bf16.mxu0 %v3100
        %4993 = vmatmul.mubr.bf16.gmra.mrb[0].mxu0 %v3099
        %v4994 = vpop.f32.mrb[0].mxu0
        %v4995 = vadd.f32 %v1069, %v4994
        %v4996 = vpop.f32.mrb[0].mxu0
        %v4997 = vpop.f32.mrb[0].mxu0
        %v4998 = vadd.f32 %v1069, %v4997
        %v4999 = vpop.f32.mrb[0].mxu0
        %5000 = vmatprep.mubr.bf16.mxu0 %v3103
        %5001 = vmatmul.mubr.bf16.gmra.mrb[0].mxu0 %v3102
        %v5002 = vpop.f32.mrb[0].mxu0
        %v5003 = vadd.f32 %v1069, %v5002
        %v5004 = vpop.f32.mrb[0].mxu0
        %v5005 = vpop.f32.mrb[0].mxu0
        %v5006 = vadd.f32 %v1069, %v5005
        %v5007 = vpop.f32.mrb[0].mxu0
        %5008 = vmatprep.mubr.bf16.mxu0 %v3106
        %5009 = vmatmul.mubr.bf16.gmra.mrb[0].mxu0 %v3105
        %v5010 = vpop.f32.mrb[0].mxu0
        %v5011 = vadd.f32 %v1069, %v5010
        %v5012 = vpop.f32.mrb[0].mxu0
        %v5013 = vpop.f32.mrb[0].mxu0
        %v5014 = vadd.f32 %v1069, %v5013
        %v5015 = vpop.f32.mrb[0].mxu0
        %5016 = vmatprep.mubr.bf16.mxu0 %v3109
        %5017 = vmatmul.mubr.bf16.gmra.mrb[0].mxu0 %v3108
        %v5018 = vpop.f32.mrb[0].mxu0
        %v5019 = vadd.f32 %v1069, %v5018
        %v5020 = vpop.f32.mrb[0].mxu0
        %v5021 = vpop.f32.mrb[0].mxu0
        %v5022 = vadd.f32 %v1069, %v5021
        %v5023 = vpop.f32.mrb[0].mxu0
        %5024 = vmatprep.mubr.bf16.mxu0 %v3112
        %5025 = vmatmul.mubr.bf16.gmra.mrb[0].mxu0 %v3111
        %v5026 = vpop.f32.mrb[0].mxu0
        %v5027 = vadd.f32 %v1069, %v5026
        %v5028 = vpop.f32.mrb[0].mxu0
        %v5029 = vpop.f32.mrb[0].mxu0
        %v5030 = vadd.f32 %v1069, %v5029
        %v5031 = vpop.f32.mrb[0].mxu0
        %5032 = vmatprep.mubr.bf16.mxu0 %v3115
        %5033 = vmatmul.mubr.bf16.gmra.mrb[0].mxu0 %v3114
        %v5034 = vpop.f32.mrb[0].mxu0
        %v5035 = vadd.f32 %v1069, %v5034
        %v5036 = vpop.f32.mrb[0].mxu0
        %v5037 = vpop.f32.mrb[0].mxu0
        %v5038 = vadd.f32 %v1069, %v5037
        %v5039 = vpop.f32.mrb[0].mxu0
        %5040 = vmatprep.mubr.bf16.mxu0 %v3118
        %5041 = vmatmul.mubr.bf16.gmra.mrb[0].mxu0 %v3117
        %v5042 = vpop.f32.mrb[0].mxu0
        %v5043 = vadd.f32 %v1069, %v5042
        %v5044 = vpop.f32.mrb[0].mxu0
        %v5045 = vpop.f32.mrb[0].mxu0
        %v5046 = vadd.f32 %v1069, %v5045
        %v5047 = vpop.f32.mrb[0].mxu0
        %5048 = vmatprep.mubr.bf16.mxu0 %v3121
        %5049 = vmatmul.mubr.bf16.gmra.mrb[0].mxu0 %v3120
        %v5050 = vpop.f32.mrb[0].mxu0
        %v5051 = vadd.f32 %v1069, %v5050
        %v5052 = vpop.f32.mrb[0].mxu0
        %v5053 = vpop.f32.mrb[0].mxu0
        %v5054 = vadd.f32 %v1069, %v5053
        %v5055 = vpop.f32.mrb[0].mxu0
        %5056 = vmatprep.mubr.bf16.mxu0 %v3124
        %5057 = vmatmul.mubr.bf16.gmra.mrb[0].mxu0 %v3123
        %v5058 = vpop.f32.mrb[0].mxu0
        %v5059 = vadd.f32 %v1069, %v5058
        %v5060 = vpop.f32.mrb[0].mxu0
        %v5061 = vpop.f32.mrb[0].mxu0
        %v5062 = vadd.f32 %v1069, %v5061
        %v5063 = vpop.f32.mrb[0].mxu0
        %5064 = vmatprep.mubr.bf16.mxu0 %v3127
        %5065 = vmatmul.mubr.bf16.gmra.mrb[0].mxu0 %v3126
        %v5066 = vpop.f32.mrb[0].mxu0
        %v5067 = vadd.f32 %v1069, %v5066
        %v5068 = vpop.f32.mrb[0].mxu0
        %v5069 = vpop.f32.mrb[0].mxu0
        %v5070 = vadd.f32 %v1069, %v5069
        %v5071 = vpop.f32.mrb[0].mxu0
        %5072 = vmatprep.mubr.bf16.mxu0 %v3130
        %5073 = vmatmul.mubr.bf16.gmra.mrb[0].mxu0 %v3129
        %v5074 = vpop.f32.mrb[0].mxu0
        %v5075 = vadd.f32 %v1069, %v5074
        %v5076 = vpop.f32.mrb[0].mxu0
        %v5077 = vpop.f32.mrb[0].mxu0
        %v5078 = vadd.f32 %v1069, %v5077
        %v5079 = vpop.f32.mrb[0].mxu0
        %5080 = vmatprep.mubr.bf16.mxu0 %v3133
        %5081 = vmatmul.mubr.bf16.gmra.mrb[0].mxu0 %v3132
        %v5082 = vpop.f32.mrb[0].mxu0
        %v5083 = vadd.f32 %v1069, %v5082
        %v5084 = vpop.f32.mrb[0].mxu0
        %v5085 = vpop.f32.mrb[0].mxu0
        %v5086 = vadd.f32 %v1069, %v5085
        %v5087 = vpop.f32.mrb[0].mxu0
        %5088 = vmatprep.mubr.bf16.mxu0 %v3136
        %5089 = vmatmul.mubr.bf16.gmra.mrb[0].mxu0 %v3135
        %v5090 = vpop.f32.mrb[0].mxu0
        %v5091 = vadd.f32 %v1069, %v5090
        %v5092 = vpop.f32.mrb[0].mxu0
        %v5093 = vpop.f32.mrb[0].mxu0
        %v5094 = vadd.f32 %v1069, %v5093
        %v5095 = vpop.f32.mrb[0].mxu0
        %5096 = vmatprep.mubr.bf16.mxu0 %v3139
        %5097 = vmatmul.mubr.bf16.gmra.mrb[0].mxu0 %v3138
        %v5098 = vpop.f32.mrb[0].mxu0
        %v5099 = vadd.f32 %v1069, %v5098
        %v5100 = vpop.f32.mrb[0].mxu0
        %v5101 = vpop.f32.mrb[0].mxu0
        %v5102 = vadd.f32 %v1069, %v5101
        %v5103 = vpop.f32.mrb[0].mxu0
        %5104 = vmatprep.mubr.bf16.mxu0 %v3142
        %5105 = vmatmul.mubr.bf16.gmra.mrb[0].mxu0 %v3141
        %v5106 = vpop.f32.mrb[0].mxu0
        %v5107 = vadd.f32 %v1069, %v5106
        %v5108 = vpop.f32.mrb[0].mxu0
        %v5109 = vpop.f32.mrb[0].mxu0
        %v5110 = vadd.f32 %v1069, %v5109
        %v5111 = vpop.f32.mrb[0].mxu0
        %5112 = vmatprep.mubr.bf16.mxu0 %v3145
        %5113 = vmatmul.mubr.bf16.gmra.mrb[0].mxu0 %v3144
        %v5114 = vpop.f32.mrb[0].mxu0
        %v5115 = vadd.f32 %v1069, %v5114
        %v5116 = vpop.f32.mrb[0].mxu0
        %v5117 = vpop.f32.mrb[0].mxu0
        %v5118 = vadd.f32 %v1069, %v5117
        %v5119 = vpop.f32.mrb[0].mxu0
        %5120 = vmatprep.mubr.bf16.mxu0 %v3148
        %5121 = vmatmul.mubr.bf16.gmra.mrb[0].mxu0 %v3147
        %v5122 = vpop.f32.mrb[0].mxu0
        %v5123 = vadd.f32 %v1069, %v5122
        %v5124 = vpop.f32.mrb[0].mxu0
        %v5125 = vpop.f32.mrb[0].mxu0
        %v5126 = vadd.f32 %v1069, %v5125
        %v5127 = vpop.f32.mrb[0].mxu0
        %5128 = vmatprep.mubr.bf16.mxu0 %v3151
        %5129 = vmatmul.mubr.bf16.gmra.mrb[0].mxu0 %v3150
        %v5130 = vpop.f32.mrb[0].mxu0
        %v5131 = vadd.f32 %v1069, %v5130
        %v5132 = vpop.f32.mrb[0].mxu0
        %v5133 = vpop.f32.mrb[0].mxu0
        %v5134 = vadd.f32 %v1069, %v5133
        %v5135 = vpop.f32.mrb[0].mxu0
        %5136 = vmatprep.mubr.bf16.mxu0 %v3154
        %5137 = vmatmul.mubr.bf16.gmra.mrb[0].mxu0 %v3153
        %v5138 = vpop.f32.mrb[0].mxu0
        %v5139 = vadd.f32 %v1069, %v5138
        %v5140 = vpop.f32.mrb[0].mxu0
        %v5141 = vpop.f32.mrb[0].mxu0
        %v5142 = vadd.f32 %v1069, %v5141
        %v5143 = vpop.f32.mrb[0].mxu0
        %5144 = vmatprep.mubr.bf16.mxu0 %v3157
        %5145 = vmatmul.mubr.bf16.gmra.mrb[0].mxu0 %v3156
        %v5146 = vpop.f32.mrb[0].mxu0
        %v5147 = vadd.f32 %v1069, %v5146
        %v5148 = vpop.f32.mrb[0].mxu0
        %v5149 = vpop.f32.mrb[0].mxu0
        %v5150 = vadd.f32 %v1069, %v5149
        %v5151 = vpop.f32.mrb[0].mxu0
        %5152 = vmatprep.mubr.bf16.mxu0 %v3160
        %5153 = vmatmul.mubr.bf16.gmra.mrb[0].mxu0 %v3159
        %v5154 = vpop.f32.mrb[0].mxu0
        %v5155 = vadd.f32 %v1069, %v5154
        %v5156 = vpop.f32.mrb[0].mxu0
        %v5157 = vpop.f32.mrb[0].mxu0
        %v5158 = vadd.f32 %v1069, %v5157
        %v5159 = vpop.f32.mrb[0].mxu0
        %5160 = vmatprep.mubr.bf16.mxu0 %v3163
        %5161 = vmatmul.mubr.bf16.gmra.mrb[0].mxu0 %v3162
        %v5162 = vpop.f32.mrb[0].mxu0
        %v5163 = vadd.f32 %v1069, %v5162
        %v5164 = vpop.f32.mrb[0].mxu0
        %v5165 = vpop.f32.mrb[0].mxu0
        %v5166 = vadd.f32 %v1069, %v5165
        %v5167 = vpop.f32.mrb[0].mxu0
        %5168 = vmatprep.mubr.bf16.mxu0 %v3166
        %5169 = vmatmul.mubr.bf16.gmra.mrb[0].mxu0 %v3165
        %v5170 = vpop.f32.mrb[0].mxu0
        %v5171 = vadd.f32 %v1069, %v5170
        %v5172 = vpop.f32.mrb[0].mxu0
        %v5173 = vpop.f32.mrb[0].mxu0
        %v5174 = vadd.f32 %v1069, %v5173
        %v5175 = vpop.f32.mrb[0].mxu0
        %5176 = vmatprep.mubr.bf16.mxu0 %v3169
        %5177 = vmatmul.mubr.bf16.gmra.mrb[0].mxu0 %v3168
        %v5178 = vpop.f32.mrb[0].mxu0
        %v5179 = vadd.f32 %v1069, %v5178
        %v5180 = vpop.f32.mrb[0].mxu0
        %v5181 = vpop.f32.mrb[0].mxu0
        %v5182 = vadd.f32 %v1069, %v5181
        %v5183 = vpop.f32.mrb[0].mxu0
        %5184 = vmatprep.mubr.bf16.mxu0 %v3172
        %5185 = vmatmul.mubr.bf16.gmra.mrb[0].mxu0 %v3171
        %v5186 = vpop.f32.mrb[0].mxu0
        %v5187 = vadd.f32 %v1069, %v5186
        %v5188 = vpop.f32.mrb[0].mxu0
        %v5189 = vpop.f32.mrb[0].mxu0
        %v5190 = vadd.f32 %v1069, %v5189
        %v5191 = vpop.f32.mrb[0].mxu0
        %5192 = vmatprep.mubr.bf16.mxu0 %v3175
        %5193 = vmatmul.mubr.bf16.gmra.mrb[0].mxu0 %v3174
        %v5194 = vpop.f32.mrb[0].mxu0
        %v5195 = vadd.f32 %v1069, %v5194
        %v5196 = vpop.f32.mrb[0].mxu0
        %v5197 = vpop.f32.mrb[0].mxu0
        %v5198 = vadd.f32 %v1069, %v5197
        %v5199 = vpop.f32.mrb[0].mxu0
        %5200 = vmatprep.mubr.bf16.mxu0 %v3178
        %5201 = vmatmul.mubr.bf16.gmra.mrb[0].mxu0 %v3177
        %v5202 = vpop.f32.mrb[0].mxu0
        %v5203 = vadd.f32 %v1069, %v5202
        %v5204 = vpop.f32.mrb[0].mxu0
        %v5205 = vpop.f32.mrb[0].mxu0
        %v5206 = vadd.f32 %v1069, %v5205
        %v5207 = vpop.f32.mrb[0].mxu0
        %5208 = vmatprep.mubr.bf16.mxu0 %v3181
        %5209 = vmatmul.mubr.bf16.gmra.mrb[0].mxu0 %v3180
        %v5210 = vpop.f32.mrb[0].mxu0
        %v5211 = vadd.f32 %v1069, %v5210
        %v5212 = vpop.f32.mrb[0].mxu0
        %v5213 = vpop.f32.mrb[0].mxu0
        %v5214 = vadd.f32 %v1069, %v5213
        %v5215 = vpop.f32.mrb[0].mxu0
        %5216 = vmatprep.mubr.bf16.mxu0 %v3184
        %5217 = vmatmul.mubr.bf16.gmra.mrb[0].mxu0 %v3183
        %v5218 = vpop.f32.mrb[0].mxu0
        %v5219 = vadd.f32 %v1069, %v5218
        %v5220 = vpop.f32.mrb[0].mxu0
        %v5221 = vpop.f32.mrb[0].mxu0
        %v5222 = vadd.f32 %v1069, %v5221
        %v5223 = vpop.f32.mrb[0].mxu0
        %5224 = vmatprep.mubr.bf16.mxu0 %v3187
        %5225 = vmatmul.mubr.bf16.gmra.mrb[0].mxu0 %v3186
        %v5226 = vpop.f32.mrb[0].mxu0
        %v5227 = vadd.f32 %v1069, %v5226
        %v5228 = vpop.f32.mrb[0].mxu0
        %v5229 = vpop.f32.mrb[0].mxu0
        %v5230 = vadd.f32 %v1069, %v5229
        %v5231 = vpop.f32.mrb[0].mxu0
        %5232 = vmatprep.mubr.bf16.mxu0 %v3190
        %5233 = vmatmul.mubr.bf16.gmra.mrb[0].mxu0 %v3189
        %v5234 = vpop.f32.mrb[0].mxu0
        %v5235 = vadd.f32 %v1069, %v5234
        %v5236 = vpop.f32.mrb[0].mxu0
        %v5237 = vpop.f32.mrb[0].mxu0
        %v5238 = vadd.f32 %v1069, %v5237
        %v5239 = vpop.f32.mrb[0].mxu0
        %5240 = vmatprep.mubr.bf16.mxu0 %v3193
        %5241 = vmatmul.mubr.bf16.gmra.mrb[0].mxu0 %v3192
        %v5242 = vpop.f32.mrb[0].mxu0
        %v5243 = vadd.f32 %v1069, %v5242
        %v5244 = vpop.f32.mrb[0].mxu0
        %v5245 = vpop.f32.mrb[0].mxu0
        %v5246 = vadd.f32 %v1069, %v5245
        %v5247 = vpop.f32.mrb[0].mxu0
        %5248 = vmatprep.mubr.bf16.mxu0 %v3196
        %5249 = vmatmul.mubr.bf16.gmra.mrb[0].mxu0 %v3195
        %v5250 = vpop.f32.mrb[0].mxu0
        %v5251 = vadd.f32 %v1069, %v5250
        %v5252 = vpop.f32.mrb[0].mxu0
        %v5253 = vpop.f32.mrb[0].mxu0
        %v5254 = vadd.f32 %v1069, %v5253
        %v5255 = vpop.f32.mrb[0].mxu0
        %5256 = vmatprep.mubr.bf16.mxu0 %v3199
        %5257 = vmatmul.mubr.bf16.gmra.mrb[0].mxu0 %v3198
        %v5258 = vpop.f32.mrb[0].mxu0
        %v5259 = vadd.f32 %v1069, %v5258
        %v5260 = vpop.f32.mrb[0].mxu0
        %v5261 = vpop.f32.mrb[0].mxu0
        %v5262 = vadd.f32 %v1069, %v5261
        %v5263 = vpop.f32.mrb[0].mxu0
        %5264 = vmatprep.mubr.bf16.mxu0 %v3202
        %5265 = vmatmul.mubr.bf16.gmra.mrb[0].mxu0 %v3201
        %v5266 = vpop.f32.mrb[0].mxu0
        %v5267 = vadd.f32 %v1069, %v5266
        %v5268 = vpop.f32.mrb[0].mxu0
        %v5269 = vpop.f32.mrb[0].mxu0
        %v5270 = vadd.f32 %v1069, %v5269
        %v5271 = vpop.f32.mrb[0].mxu0
        %5272 = vmatprep.mubr.bf16.mxu0 %v3205
        %5273 = vmatmul.mubr.bf16.gmra.mrb[0].mxu0 %v3204
        %v5274 = vpop.f32.mrb[0].mxu0
        %v5275 = vadd.f32 %v1069, %v5274
        %v5276 = vpop.f32.mrb[0].mxu0
        %v5277 = vpop.f32.mrb[0].mxu0
        %v5278 = vadd.f32 %v1069, %v5277
        %v5279 = vpop.f32.mrb[0].mxu0
        %5280 = vmatprep.mubr.bf16.mxu0 %v3208
        %5281 = vmatmul.mubr.bf16.gmra.mrb[0].mxu0 %v3207
        %v5282 = vpop.f32.mrb[0].mxu0
        %v5283 = vadd.f32 %v1069, %v5282
        %v5284 = vpop.f32.mrb[0].mxu0
        %v5285 = vpop.f32.mrb[0].mxu0
        %v5286 = vadd.f32 %v1069, %v5285
        %v5287 = vpop.f32.mrb[0].mxu0
        %5288 = vmatprep.mubr.bf16.mxu0 %v3211
        %5289 = vmatmul.mubr.bf16.gmra.mrb[0].mxu0 %v3210
        %v5290 = vpop.f32.mrb[0].mxu0
        %v5291 = vadd.f32 %v1069, %v5290
        %v5292 = vpop.f32.mrb[0].mxu0
        %v5293 = vpop.f32.mrb[0].mxu0
        %v5294 = vadd.f32 %v1069, %v5293
        %v5295 = vpop.f32.mrb[0].mxu0
        %5296 = vmatprep.mubr.bf16.mxu0 %v3214
        %5297 = vmatmul.mubr.bf16.gmra.mrb[0].mxu0 %v3213
        %v5298 = vpop.f32.mrb[0].mxu0
        %v5299 = vadd.f32 %v1069, %v5298
        %v5300 = vpop.f32.mrb[0].mxu0
        %v5301 = vpop.f32.mrb[0].mxu0
        %v5302 = vadd.f32 %v1069, %v5301
        %v5303 = vpop.f32.mrb[0].mxu0
        %5304 = vmatprep.mubr.bf16.mxu0 %v3217
        %5305 = vmatmul.mubr.bf16.gmra.mrb[0].mxu0 %v3216
        %v5306 = vpop.f32.mrb[0].mxu0
        %v5307 = vadd.f32 %v1069, %v5306
        %v5308 = vpop.f32.mrb[0].mxu0
        %v5309 = vpop.f32.mrb[0].mxu0
        %v5310 = vadd.f32 %v1069, %v5309
        %v5311 = vpop.f32.mrb[0].mxu0
        %5312 = vmatprep.mubr.bf16.mxu0 %v3220
        %5313 = vmatmul.mubr.bf16.gmra.mrb[0].mxu0 %v3219
        %v5314 = vpop.f32.mrb[0].mxu0
        %v5315 = vadd.f32 %v1069, %v5314
        %v5316 = vpop.f32.mrb[0].mxu0
        %v5317 = vpop.f32.mrb[0].mxu0
        %v5318 = vadd.f32 %v1069, %v5317
        %v5319 = vpop.f32.mrb[0].mxu0
        %5320 = vmatprep.mubr.bf16.mxu0 %v3223
        %5321 = vmatmul.mubr.bf16.gmra.mrb[0].mxu0 %v3222
        %v5322 = vpop.f32.mrb[0].mxu0
        %v5323 = vadd.f32 %v1069, %v5322
        %v5324 = vpop.f32.mrb[0].mxu0
        %v5325 = vpop.f32.mrb[0].mxu0
        %v5326 = vadd.f32 %v1069, %v5325
        %v5327 = vpop.f32.mrb[0].mxu0
        %5328 = vmatprep.mubr.bf16.mxu0 %v3226
        %5329 = vmatmul.mubr.bf16.gmra.mrb[0].mxu0 %v3225
        %v5330 = vpop.f32.mrb[0].mxu0
        %v5331 = vadd.f32 %v1069, %v5330
        %v5332 = vpop.f32.mrb[0].mxu0
        %v5333 = vpop.f32.mrb[0].mxu0
        %v5334 = vadd.f32 %v1069, %v5333
        %v5335 = vpop.f32.mrb[0].mxu0
        %5336 = vmatprep.mubr.bf16.mxu0 %v3229
        %5337 = vmatmul.mubr.bf16.gmra.mrb[0].mxu0 %v3228
        %v5338 = vpop.f32.mrb[0].mxu0
        %v5339 = vadd.f32 %v1069, %v5338
        %v5340 = vpop.f32.mrb[0].mxu0
        %v5341 = vpop.f32.mrb[0].mxu0
        %v5342 = vadd.f32 %v1069, %v5341
        %v5343 = vpop.f32.mrb[0].mxu0
        %5344 = vmatprep.mubr.bf16.mxu0 %v3232
        %5345 = vmatmul.mubr.bf16.gmra.mrb[0].mxu0 %v3231
        %v5346 = vpop.f32.mrb[0].mxu0
        %v5347 = vadd.f32 %v1069, %v5346
        %v5348 = vpop.f32.mrb[0].mxu0
        %v5349 = vpop.f32.mrb[0].mxu0
        %v5350 = vadd.f32 %v1069, %v5349
        %v5351 = vpop.f32.mrb[0].mxu0
        %5352 = vmatprep.mubr.bf16.mxu0 %v3235
        %5353 = vmatmul.mubr.bf16.gmra.mrb[0].mxu0 %v3234
        %v5354 = vpop.f32.mrb[0].mxu0
        %v5355 = vadd.f32 %v1069, %v5354
        %v5356 = vpop.f32.mrb[0].mxu0
        %v5357 = vpop.f32.mrb[0].mxu0
        %v5358 = vadd.f32 %v1069, %v5357
        %v5359 = vpop.f32.mrb[0].mxu0
        %5360 = vmatprep.mubr.bf16.mxu0 %v3238
        %5361 = vmatmul.mubr.bf16.gmra.mrb[0].mxu0 %v3237
        %v5362 = vpop.f32.mrb[0].mxu0
        %v5363 = vadd.f32 %v1069, %v5362
        %v5364 = vpop.f32.mrb[0].mxu0
        %v5365 = vpop.f32.mrb[0].mxu0
        %v5366 = vadd.f32 %v1069, %v5365
        %v5367 = vpop.f32.mrb[0].mxu0
        %5368 = vmatprep.mubr.bf16.mxu0 %v3241
        %5369 = vmatmul.mubr.bf16.gmra.mrb[0].mxu0 %v3240
        %v5370 = vpop.f32.mrb[0].mxu0
        %v5371 = vadd.f32 %v1069, %v5370
        %v5372 = vpop.f32.mrb[0].mxu0
        %v5373 = vpop.f32.mrb[0].mxu0
        %v5374 = vadd.f32 %v1069, %v5373
        %v5375 = vpop.f32.mrb[0].mxu0
        %5376 = vmatprep.mubr.bf16.mxu0 %v3244
        %5377 = vmatmul.mubr.bf16.gmra.mrb[0].mxu0 %v3243
        %v5378 = vpop.f32.mrb[0].mxu0
        %v5379 = vadd.f32 %v1069, %v5378
        %v5380 = vpop.f32.mrb[0].mxu0
        %v5381 = vpop.f32.mrb[0].mxu0
        %v5382 = vadd.f32 %v1069, %v5381
        %v5383 = vpop.f32.mrb[0].mxu0
        %5384 = vmatprep.mubr.bf16.mxu0 %v3247
        %5385 = vmatmul.mubr.bf16.gmra.mrb[0].mxu0 %v3246
        %v5386 = vpop.f32.mrb[0].mxu0
        %v5387 = vadd.f32 %v1069, %v5386
        %v5388 = vpop.f32.mrb[0].mxu0
        %v5389 = vpop.f32.mrb[0].mxu0
        %v5390 = vadd.f32 %v1069, %v5389
        %v5391 = vpop.f32.mrb[0].mxu0
        %5392 = vmatprep.mubr.bf16.mxu0 %v3250
        %5393 = vmatmul.mubr.bf16.gmra.mrb[0].mxu0 %v3249
        %v5394 = vpop.f32.mrb[0].mxu0
        %v5395 = vadd.f32 %v1069, %v5394
        %v5396 = vpop.f32.mrb[0].mxu0
        %v5397 = vpop.f32.mrb[0].mxu0
        %v5398 = vadd.f32 %v1069, %v5397
        %v5399 = vpop.f32.mrb[0].mxu0
        %5400 = vmatprep.mubr.bf16.mxu0 %v3253
        %5401 = vmatmul.mubr.bf16.gmra.mrb[0].mxu0 %v3252
        %v5402 = vpop.f32.mrb[0].mxu0
        %v5403 = vadd.f32 %v1069, %v5402
        %v5404 = vpop.f32.mrb[0].mxu0
        %v5405 = vpop.f32.mrb[0].mxu0
        %v5406 = vadd.f32 %v1069, %v5405
        %v5407 = vpop.f32.mrb[0].mxu0
        %5408 = vmatprep.mubr.bf16.mxu0 %v3256
        %5409 = vmatmul.mubr.bf16.gmra.mrb[0].mxu0 %v3255
        %v5410 = vpop.f32.mrb[0].mxu0
        %v5411 = vadd.f32 %v1069, %v5410
        %v5412 = vpop.f32.mrb[0].mxu0
        %v5413 = vpop.f32.mrb[0].mxu0
        %v5414 = vadd.f32 %v1069, %v5413
        %v5415 = vpop.f32.mrb[0].mxu0
        %5416 = vmatprep.mubr.bf16.mxu0 %v3259
        %5417 = vmatmul.mubr.bf16.gmra.mrb[0].mxu0 %v3258
        %v5418 = vpop.f32.mrb[0].mxu0
        %v5419 = vadd.f32 %v1069, %v5418
        %v5420 = vpop.f32.mrb[0].mxu0
        %v5421 = vpop.f32.mrb[0].mxu0
        %v5422 = vadd.f32 %v1069, %v5421
        %v5423 = vpop.f32.mrb[0].mxu0
        %5424 = vmatprep.mubr.bf16.mxu0 %v3262
        %5425 = vmatmul.mubr.bf16.gmra.mrb[0].mxu0 %v3261
        %v5426 = vpop.f32.mrb[0].mxu0
        %v5427 = vadd.f32 %v1069, %v5426
        %v5428 = vpop.f32.mrb[0].mxu0
        %v5429 = vpop.f32.mrb[0].mxu0
        %v5430 = vadd.f32 %v1069, %v5429
        %v5431 = vpop.f32.mrb[0].mxu0
        %5432 = vmatprep.mubr.bf16.mxu0 %v3265
        %5433 = vmatmul.mubr.bf16.gmra.mrb[0].mxu0 %v3264
        %v5434 = vpop.f32.mrb[0].mxu0
        %v5435 = vadd.f32 %v1069, %v5434
        %v5436 = vpop.f32.mrb[0].mxu0
        %v5437 = vpop.f32.mrb[0].mxu0
        %v5438 = vadd.f32 %v1069, %v5437
        %v5439 = vpop.f32.mrb[0].mxu0
        %5440 = vmatprep.mubr.bf16.mxu0 %v3268
        %5441 = vmatmul.mubr.bf16.gmra.mrb[0].mxu0 %v3267
        %v5442 = vpop.f32.mrb[0].mxu0
        %v5443 = vadd.f32 %v1069, %v5442
        %v5444 = vpop.f32.mrb[0].mxu0
        %v5445 = vpop.f32.mrb[0].mxu0
        %v5446 = vadd.f32 %v1069, %v5445
        %v5447 = vpop.f32.mrb[0].mxu0
        %5448 = vmatprep.mubr.bf16.mxu0 %v3271
        %5449 = vmatmul.mubr.bf16.gmra.mrb[0].mxu0 %v3270
        %v5450 = vpop.f32.mrb[0].mxu0
        %v5451 = vadd.f32 %v1069, %v5450
        %v5452 = vpop.f32.mrb[0].mxu0
        %v5453 = vpop.f32.mrb[0].mxu0
        %v5454 = vadd.f32 %v1069, %v5453
        %v5455 = vpop.f32.mrb[0].mxu0
        %5456 = vmatprep.mubr.bf16.mxu0 %v3274
        %5457 = vmatmul.mubr.bf16.gmra.mrb[0].mxu0 %v3273
        %v5458 = vpop.f32.mrb[0].mxu0
        %v5459 = vadd.f32 %v1069, %v5458
        %v5460 = vpop.f32.mrb[0].mxu0
        %v5461 = vpop.f32.mrb[0].mxu0
        %v5462 = vadd.f32 %v1069, %v5461
        %v5463 = vpop.f32.mrb[0].mxu0
        %5464 = vmatprep.mubr.bf16.mxu0 %v3277
        %5465 = vmatmul.mubr.bf16.gmra.mrb[0].mxu0 %v3276
        %v5466 = vpop.f32.mrb[0].mxu0
        %v5467 = vadd.f32 %v1069, %v5466
        %v5468 = vpop.f32.mrb[0].mxu0
        %v5469 = vpop.f32.mrb[0].mxu0
        %v5470 = vadd.f32 %v1069, %v5469
        %v5471 = vpop.f32.mrb[0].mxu0
        %5472 = vmatprep.mubr.bf16.mxu0 %v3280
        %5473 = vmatmul.mubr.bf16.gmra.mrb[0].mxu0 %v3279
        %v5474 = vpop.f32.mrb[0].mxu0
        %v5475 = vadd.f32 %v1069, %v5474
        %v5476 = vpop.f32.mrb[0].mxu0
        %v5477 = vpop.f32.mrb[0].mxu0
        %v5478 = vadd.f32 %v1069, %v5477
        %v5479 = vpop.f32.mrb[0].mxu0
        %5480 = vmatprep.mubr.bf16.mxu0 %v3283
        %5481 = vmatmul.mubr.bf16.gmra.mrb[0].mxu0 %v3282
        %v5482 = vpop.f32.mrb[0].mxu0
        %v5483 = vadd.f32 %v1069, %v5482
        %v5484 = vpop.f32.mrb[0].mxu0
        %v5485 = vpop.f32.mrb[0].mxu0
        %v5486 = vadd.f32 %v1069, %v5485
        %v5487 = vpop.f32.mrb[0].mxu0
        %5488 = vmatprep.mubr.bf16.mxu0 %v3286
        %5489 = vmatmul.mubr.bf16.gmra.mrb[0].mxu0 %v3285
        %v5490 = vpop.f32.mrb[0].mxu0
        %v5491 = vadd.f32 %v1069, %v5490
        %v5492 = vpop.f32.mrb[0].mxu0
        %v5493 = vpop.f32.mrb[0].mxu0
        %v5494 = vadd.f32 %v1069, %v5493
        %v5495 = vpop.f32.mrb[0].mxu0
        %5496 = vmatprep.mubr.bf16.mxu0 %v3289
        %5497 = vmatmul.mubr.bf16.gmra.mrb[0].mxu0 %v3288
        %v5498 = vpop.f32.mrb[0].mxu0
        %v5499 = vadd.f32 %v1069, %v5498
        %v5500 = vpop.f32.mrb[0].mxu0
        %v5501 = vpop.f32.mrb[0].mxu0
        %v5502 = vadd.f32 %v1069, %v5501
        %v5503 = vpop.f32.mrb[0].mxu0
        %5504 = vmatprep.mubr.bf16.mxu0 %v3292
        %5505 = vmatmul.mubr.bf16.gmra.mrb[0].mxu0 %v3291
        %v5506 = vpop.f32.mrb[0].mxu0
        %v5507 = vadd.f32 %v1069, %v5506
        %v5508 = vpop.f32.mrb[0].mxu0
        %v5509 = vpop.f32.mrb[0].mxu0
        %v5510 = vadd.f32 %v1069, %v5509
        %v5511 = vpop.f32.mrb[0].mxu0
        %5512 = vmatprep.mubr.bf16.mxu0 %v3295
        %5513 = vmatmul.mubr.bf16.gmra.mrb[0].mxu0 %v3294
        %v5514 = vpop.f32.mrb[0].mxu0
        %v5515 = vadd.f32 %v1069, %v5514
        %v5516 = vpop.f32.mrb[0].mxu0
        %v5517 = vpop.f32.mrb[0].mxu0
        %v5518 = vadd.f32 %v1069, %v5517
        %v5519 = vpop.f32.mrb[0].mxu0
        %5520 = vmatprep.mubr.bf16.mxu0 %v3298
        %5521 = vmatmul.mubr.bf16.gmra.mrb[0].mxu0 %v3297
        %v5522 = vpop.f32.mrb[0].mxu0
        %v5523 = vadd.f32 %v1069, %v5522
        %v5524 = vpop.f32.mrb[0].mxu0
        %v5525 = vpop.f32.mrb[0].mxu0
        %v5526 = vadd.f32 %v1069, %v5525
        %v5527 = vpop.f32.mrb[0].mxu0
        %5528 = vmatprep.mubr.bf16.mxu0 %v3301
        %5529 = vmatmul.mubr.bf16.gmra.mrb[0].mxu0 %v3300
        %v5530 = vpop.f32.mrb[0].mxu0
        %v5531 = vadd.f32 %v1069, %v5530
        %v5532 = vpop.f32.mrb[0].mxu0
        %v5533 = vpop.f32.mrb[0].mxu0
        %v5534 = vadd.f32 %v1069, %v5533
        %v5535 = vpop.f32.mrb[0].mxu0
        %5536 = vmatprep.mubr.bf16.mxu0 %v3304
        %5537 = vmatmul.mubr.bf16.gmra.mrb[0].mxu0 %v3303
        %v5538 = vpop.f32.mrb[0].mxu0
        %v5539 = vadd.f32 %v1069, %v5538
        %v5540 = vpop.f32.mrb[0].mxu0
        %v5541 = vpop.f32.mrb[0].mxu0
        %v5542 = vadd.f32 %v1069, %v5541
        %v5543 = vpop.f32.mrb[0].mxu0
        %5544 = vmatprep.mubr.bf16.mxu0 %v3307
        %5545 = vmatmul.mubr.bf16.gmra.mrb[0].mxu0 %v3306
        %v5546 = vpop.f32.mrb[0].mxu0
        %v5547 = vadd.f32 %v1069, %v5546
        %v5548 = vpop.f32.mrb[0].mxu0
        %v5549 = vpop.f32.mrb[0].mxu0
        %v5550 = vadd.f32 %v1069, %v5549
        %v5551 = vpop.f32.mrb[0].mxu0
        %5552 = vmatprep.mubr.bf16.mxu0 %v3310
        %5553 = vmatmul.mubr.bf16.gmra.mrb[0].mxu0 %v3309
        %v5554 = vpop.f32.mrb[0].mxu0
        %v5555 = vadd.f32 %v1069, %v5554
        %v5556 = vpop.f32.mrb[0].mxu0
        %v5557 = vpop.f32.mrb[0].mxu0
        %v5558 = vadd.f32 %v1069, %v5557
        %v5559 = vpop.f32.mrb[0].mxu0
        %5560 = vmatprep.mubr.bf16.mxu0 %v3313
        %5561 = vmatmul.mubr.bf16.gmra.mrb[0].mxu0 %v3312
        %v5562 = vpop.f32.mrb[0].mxu0
        %v5563 = vadd.f32 %v1069, %v5562
        %v5564 = vpop.f32.mrb[0].mxu0
        %v5565 = vpop.f32.mrb[0].mxu0
        %v5566 = vadd.f32 %v1069, %v5565
        %v5567 = vpop.f32.mrb[0].mxu0
        %5568 = vmatprep.mubr.bf16.mxu0 %v3316
        %5569 = vmatmul.mubr.bf16.gmra.mrb[0].mxu0 %v3315
        %v5570 = vpop.f32.mrb[0].mxu0
        %v5571 = vadd.f32 %v1069, %v5570
        %v5572 = vpop.f32.mrb[0].mxu0
        %v5573 = vpop.f32.mrb[0].mxu0
        %v5574 = vadd.f32 %v1069, %v5573
        %v5575 = vpop.f32.mrb[0].mxu0
        %5576 = vmatprep.mubr.bf16.mxu0 %v3319
        %5577 = vmatmul.mubr.bf16.gmra.mrb[0].mxu0 %v3318
        %v5578 = vpop.f32.mrb[0].mxu0
        %v5579 = vadd.f32 %v1069, %v5578
        %v5580 = vpop.f32.mrb[0].mxu0
        %v5581 = vpop.f32.mrb[0].mxu0
        %v5582 = vadd.f32 %v1069, %v5581
        %v5583 = vpop.f32.mrb[0].mxu0
        %5584 = vmatprep.mubr.bf16.mxu0 %v3322
        %5585 = vmatmul.mubr.bf16.gmra.mrb[0].mxu0 %v3321
        %v5586 = vpop.f32.mrb[0].mxu0
        %v5587 = vadd.f32 %v1069, %v5586
        %v5588 = vpop.f32.mrb[0].mxu0
        %v5589 = vpop.f32.mrb[0].mxu0
        %v5590 = vadd.f32 %v1069, %v5589
        %v5591 = vpop.f32.mrb[0].mxu0
        %5592 = vmatprep.mubr.bf16.mxu0 %v3325
        %5593 = vmatmul.mubr.bf16.gmra.mrb[0].mxu0 %v3324
        %v5594 = vpop.f32.mrb[0].mxu0
        %v5595 = vadd.f32 %v1069, %v5594
        %v5596 = vpop.f32.mrb[0].mxu0
        %v5597 = vpop.f32.mrb[0].mxu0
        %v5598 = vadd.f32 %v1069, %v5597
        %v5599 = vpop.f32.mrb[0].mxu0
        %5600 = vmatprep.mubr.bf16.mxu0 %v3328
        %5601 = vmatmul.mubr.bf16.gmra.mrb[0].mxu0 %v3327
        %v5602 = vpop.f32.mrb[0].mxu0
        %v5603 = vadd.f32 %v1069, %v5602
        %v5604 = vpop.f32.mrb[0].mxu0
        %v5605 = vpop.f32.mrb[0].mxu0
        %v5606 = vadd.f32 %v1069, %v5605
        %v5607 = vpop.f32.mrb[0].mxu0
        %5608 = vmatprep.mubr.bf16.mxu0 %v3331
        %5609 = vmatmul.mubr.bf16.gmra.mrb[0].mxu0 %v3330
        %v5610 = vpop.f32.mrb[0].mxu0
        %v5611 = vadd.f32 %v1069, %v5610
        %v5612 = vpop.f32.mrb[0].mxu0
        %v5613 = vpop.f32.mrb[0].mxu0
        %v5614 = vadd.f32 %v1069, %v5613
        %v5615 = vpop.f32.mrb[0].mxu0
        %5616 = vmatprep.mubr.bf16.mxu0 %v3334
        %5617 = vmatmul.mubr.bf16.gmra.mrb[0].mxu0 %v3333
        %v5618 = vpop.f32.mrb[0].mxu0
        %v5619 = vadd.f32 %v1069, %v5618
        %v5620 = vpop.f32.mrb[0].mxu0
        %v5621 = vpop.f32.mrb[0].mxu0
        %v5622 = vadd.f32 %v1069, %v5621
        %v5623 = vpop.f32.mrb[0].mxu0
        %5624 = vmatprep.mubr.bf16.mxu0 %v3337
        %5625 = vmatmul.mubr.bf16.gmra.mrb[0].mxu0 %v3336
        %v5626 = vpop.f32.mrb[0].mxu0
        %v5627 = vadd.f32 %v1069, %v5626
        %v5628 = vpop.f32.mrb[0].mxu0
        %v5629 = vpop.f32.mrb[0].mxu0
        %v5630 = vadd.f32 %v1069, %v5629
        %v5631 = vpop.f32.mrb[0].mxu0
        %5632 = vmatprep.mubr.bf16.mxu0 %v3340
        %5633 = vmatmul.mubr.bf16.gmra.mrb[0].mxu0 %v3339
        %v5634 = vpop.f32.mrb[0].mxu0
        %v5635 = vadd.f32 %v1069, %v5634
        %v5636 = vpop.f32.mrb[0].mxu0
        %v5637 = vpop.f32.mrb[0].mxu0
        %v5638 = vadd.f32 %v1069, %v5637
        %v5639 = vpop.f32.mrb[0].mxu0
        %5640 = vmatprep.mubr.bf16.mxu0 %v3343
        %5641 = vmatmul.mubr.bf16.gmra.mrb[0].mxu0 %v3342
        %v5642 = vpop.f32.mrb[0].mxu0
        %v5643 = vadd.f32 %v1069, %v5642
        %v5644 = vpop.f32.mrb[0].mxu0
        %v5645 = vpop.f32.mrb[0].mxu0
        %v5646 = vadd.f32 %v1069, %v5645
        %v5647 = vpop.f32.mrb[0].mxu0
        %5648 = vmatprep.mubr.bf16.mxu0 %v3346
        %5649 = vmatmul.mubr.bf16.gmra.mrb[0].mxu0 %v3345
        %v5650 = vpop.f32.mrb[0].mxu0
        %v5651 = vadd.f32 %v1069, %v5650
        %v5652 = vpop.f32.mrb[0].mxu0
        %v5653 = vpop.f32.mrb[0].mxu0
        %v5654 = vadd.f32 %v1069, %v5653
        %v5655 = vpop.f32.mrb[0].mxu0
        %5656 = vmatprep.mubr.bf16.mxu0 %v3349
        %5657 = vmatmul.mubr.bf16.gmra.mrb[0].mxu0 %v3348
        %v5658 = vpop.f32.mrb[0].mxu0
        %v5659 = vadd.f32 %v1069, %v5658
        %v5660 = vpop.f32.mrb[0].mxu0
        %v5661 = vpop.f32.mrb[0].mxu0
        %v5662 = vadd.f32 %v1069, %v5661
        %v5663 = vpop.f32.mrb[0].mxu0
        %5664 = vmatprep.mubr.bf16.mxu0 %v3352
        %5665 = vmatmul.mubr.bf16.gmra.mrb[0].mxu0 %v3351
        %v5666 = vpop.f32.mrb[0].mxu0
        %v5667 = vadd.f32 %v1069, %v5666
        %v5668 = vpop.f32.mrb[0].mxu0
        %v5669 = vpop.f32.mrb[0].mxu0
        %v5670 = vadd.f32 %v1069, %v5669
        %v5671 = vpop.f32.mrb[0].mxu0
        %5672 = vmatprep.mubr.bf16.mxu0 %v3355
        %5673 = vmatmul.mubr.bf16.gmra.mrb[0].mxu0 %v3354
        %v5674 = vpop.f32.mrb[0].mxu0
        %v5675 = vadd.f32 %v1069, %v5674
        %v5676 = vpop.f32.mrb[0].mxu0
        %v5677 = vpop.f32.mrb[0].mxu0
        %v5678 = vadd.f32 %v1069, %v5677
        %v5679 = vpop.f32.mrb[0].mxu0
        %5680 = vmatprep.mubr.bf16.mxu0 %v3358
        %5681 = vmatmul.mubr.bf16.gmra.mrb[0].mxu0 %v3357
        %v5682 = vpop.f32.mrb[0].mxu0
        %v5683 = vadd.f32 %v1069, %v5682
        %v5684 = vpop.f32.mrb[0].mxu0
        %v5685 = vpop.f32.mrb[0].mxu0
        %v5686 = vadd.f32 %v1069, %v5685
        %v5687 = vpop.f32.mrb[0].mxu0
        %5688 = vmatprep.mubr.bf16.mxu0 %v3361
        %5689 = vmatmul.mubr.bf16.gmra.mrb[0].mxu0 %v3360
        %v5690 = vpop.f32.mrb[0].mxu0
        %v5691 = vadd.f32 %v1069, %v5690
        %v5692 = vpop.f32.mrb[0].mxu0
        %v5693 = vpop.f32.mrb[0].mxu0
        %v5694 = vadd.f32 %v1069, %v5693
        %v5695 = vpop.f32.mrb[0].mxu0
        %5696 = vmatprep.mubr.bf16.mxu0 %v3364
        %5697 = vmatmul.mubr.bf16.gmra.mrb[0].mxu0 %v3363
        %v5698 = vpop.f32.mrb[0].mxu0
        %v5699 = vadd.f32 %v1069, %v5698
        %v5700 = vpop.f32.mrb[0].mxu0
        %v5701 = vpop.f32.mrb[0].mxu0
        %v5702 = vadd.f32 %v1069, %v5701
        %v5703 = vpop.f32.mrb[0].mxu0
        %5704 = vmatprep.mubr.bf16.mxu0 %v3367
        %5705 = vmatmul.mubr.bf16.gmra.mrb[0].mxu0 %v3366
        %v5706 = vpop.f32.mrb[0].mxu0
        %v5707 = vadd.f32 %v1069, %v5706
        %v5708 = vpop.f32.mrb[0].mxu0
        %v5709 = vpop.f32.mrb[0].mxu0
        %v5710 = vadd.f32 %v1069, %v5709
        %v5711 = vpop.f32.mrb[0].mxu0
        %5712 = vmatprep.mubr.bf16.mxu0 %v3370
        %5713 = vmatmul.mubr.bf16.gmra.mrb[0].mxu0 %v3369
        %v5714 = vpop.f32.mrb[0].mxu0
        %v5715 = vadd.f32 %v1069, %v5714
        %v5716 = vpop.f32.mrb[0].mxu0
        %v5717 = vpop.f32.mrb[0].mxu0
        %v5718 = vadd.f32 %v1069, %v5717
        %v5719 = vpop.f32.mrb[0].mxu0
        %5720 = vmatprep.mubr.bf16.mxu0 %v3373
        %5721 = vmatmul.mubr.bf16.gmra.mrb[0].mxu0 %v3372
        %v5722 = vpop.f32.mrb[0].mxu0
        %v5723 = vadd.f32 %v1069, %v5722
        %v5724 = vpop.f32.mrb[0].mxu0
        %v5725 = vpop.f32.mrb[0].mxu0
        %v5726 = vadd.f32 %v1069, %v5725
        %v5727 = vpop.f32.mrb[0].mxu0
        %5728 = vmatprep.mubr.bf16.mxu0 %v3376
        %5729 = vmatmul.mubr.bf16.gmra.mrb[0].mxu0 %v3375
        %v5730 = vpop.f32.mrb[0].mxu0
        %v5731 = vadd.f32 %v1069, %v5730
        %v5732 = vpop.f32.mrb[0].mxu0
        %v5733 = vpop.f32.mrb[0].mxu0
        %v5734 = vadd.f32 %v1069, %v5733
        %v5735 = vpop.f32.mrb[0].mxu0
        %5736 = vmatprep.mubr.bf16.mxu0 %v3379
        %5737 = vmatmul.mubr.bf16.gmra.mrb[0].mxu0 %v3378
        %v5738 = vpop.f32.mrb[0].mxu0
        %v5739 = vadd.f32 %v1069, %v5738
        %v5740 = vpop.f32.mrb[0].mxu0
        %v5741 = vpop.f32.mrb[0].mxu0
        %v5742 = vadd.f32 %v1069, %v5741
        %v5743 = vpop.f32.mrb[0].mxu0
        %5744 = vmatprep.mubr.bf16.mxu0 %v3382
        %5745 = vmatmul.mubr.bf16.gmra.mrb[0].mxu0 %v3381
        %v5746 = vpop.f32.mrb[0].mxu0
        %v5747 = vadd.f32 %v1069, %v5746
        %v5748 = vpop.f32.mrb[0].mxu0
        %v5749 = vpop.f32.mrb[0].mxu0
        %v5750 = vadd.f32 %v1069, %v5749
        %v5751 = vpop.f32.mrb[0].mxu0
        %5752 = vmatprep.mubr.bf16.mxu0 %v3385
        %5753 = vmatmul.mubr.bf16.gmra.mrb[0].mxu0 %v3384
        %v5754 = vpop.f32.mrb[0].mxu0
        %v5755 = vadd.f32 %v1069, %v5754
        %v5756 = vpop.f32.mrb[0].mxu0
        %v5757 = vpop.f32.mrb[0].mxu0
        %v5758 = vadd.f32 %v1069, %v5757
        %v5759 = vpop.f32.mrb[0].mxu0
        %5760 = vmatprep.mubr.bf16.mxu0 %v3388
        %5761 = vmatmul.mubr.bf16.gmra.mrb[0].mxu0 %v3387
        %v5762 = vpop.f32.mrb[0].mxu0
        %v5763 = vadd.f32 %v1069, %v5762
        %v5764 = vpop.f32.mrb[0].mxu0
        %v5765 = vpop.f32.mrb[0].mxu0
        %v5766 = vadd.f32 %v1069, %v5765
        %v5767 = vpop.f32.mrb[0].mxu0
        %5768 = vmatprep.mubr.bf16.mxu0 %v3391
        %5769 = vmatmul.mubr.bf16.gmra.mrb[0].mxu0 %v3390
        %v5770 = vpop.f32.mrb[0].mxu0
        %v5771 = vadd.f32 %v1069, %v5770
        %v5772 = vpop.f32.mrb[0].mxu0
        %v5773 = vpop.f32.mrb[0].mxu0
        %v5774 = vadd.f32 %v1069, %v5773
        %v5775 = vpop.f32.mrb[0].mxu0
        %5776 = vmatprep.mubr.bf16.mxu0 %v3394
        %5777 = vmatmul.mubr.bf16.gmra.mrb[0].mxu0 %v3393
        %v5778 = vpop.f32.mrb[0].mxu0
        %v5779 = vadd.f32 %v1069, %v5778
        %v5780 = vpop.f32.mrb[0].mxu0
        %v5781 = vpop.f32.mrb[0].mxu0
        %v5782 = vadd.f32 %v1069, %v5781
        %v5783 = vpop.f32.mrb[0].mxu0
        %5784 = vmatprep.mubr.bf16.mxu0 %v3397
        %5785 = vmatmul.mubr.bf16.gmra.mrb[0].mxu0 %v3396
        %v5786 = vpop.f32.mrb[0].mxu0
        %v5787 = vadd.f32 %v1069, %v5786
        %v5788 = vpop.f32.mrb[0].mxu0
        %v5789 = vpop.f32.mrb[0].mxu0
        %v5790 = vadd.f32 %v1069, %v5789
        %v5791 = vpop.f32.mrb[0].mxu0
        %5792 = vmatprep.mubr.bf16.mxu0 %v3400
        %5793 = vmatmul.mubr.bf16.gmra.mrb[0].mxu0 %v3399
        %v5794 = vpop.f32.mrb[0].mxu0
        %v5795 = vadd.f32 %v1069, %v5794
        %v5796 = vpop.f32.mrb[0].mxu0
        %v5797 = vpop.f32.mrb[0].mxu0
        %v5798 = vadd.f32 %v1069, %v5797
        %v5799 = vpop.f32.mrb[0].mxu0
        %5800 = vmatprep.mubr.bf16.mxu0 %v3403
        %5801 = vmatmul.mubr.bf16.gmra.mrb[0].mxu0 %v3402
        %v5802 = vpop.f32.mrb[0].mxu0
        %v5803 = vadd.f32 %v1069, %v5802
        %v5804 = vpop.f32.mrb[0].mxu0
        %v5805 = vpop.f32.mrb[0].mxu0
        %v5806 = vadd.f32 %v1069, %v5805
        %v5807 = vpop.f32.mrb[0].mxu0
        %5808 = vmatprep.mubr.bf16.mxu0 %v3406
        %5809 = vmatmul.mubr.bf16.gmra.mrb[0].mxu0 %v3405
        %v5810 = vpop.f32.mrb[0].mxu0
        %v5811 = vadd.f32 %v1069, %v5810
        %v5812 = vpop.f32.mrb[0].mxu0
        %v5813 = vpop.f32.mrb[0].mxu0
        %v5814 = vadd.f32 %v1069, %v5813
        %v5815 = vpop.f32.mrb[0].mxu0
        %5816 = vmatprep.mubr.bf16.mxu0 %v3409
        %5817 = vmatmul.mubr.bf16.gmra.mrb[0].mxu0 %v3408
        %v5818 = vpop.f32.mrb[0].mxu0
        %v5819 = vadd.f32 %v1069, %v5818
        %v5820 = vpop.f32.mrb[0].mxu0
        %v5821 = vpop.f32.mrb[0].mxu0
        %v5822 = vadd.f32 %v1069, %v5821
        %v5823 = vpop.f32.mrb[0].mxu0
        %5824 = vmatprep.mubr.bf16.mxu0 %v3412
        %5825 = vmatmul.mubr.bf16.gmra.mrb[0].mxu0 %v3411
        %v5826 = vpop.f32.mrb[0].mxu0
        %v5827 = vadd.f32 %v1069, %v5826
        %v5828 = vpop.f32.mrb[0].mxu0
        %v5829 = vpop.f32.mrb[0].mxu0
        %v5830 = vadd.f32 %v1069, %v5829
        %v5831 = vpop.f32.mrb[0].mxu0
        %5832 = vmatprep.mubr.bf16.mxu0 %v3415
        %5833 = vmatmul.mubr.bf16.gmra.mrb[0].mxu0 %v3414
        %v5834 = vpop.f32.mrb[0].mxu0
        %v5835 = vadd.f32 %v1069, %v5834
        %v5836 = vpop.f32.mrb[0].mxu0
        %v5837 = vpop.f32.mrb[0].mxu0
        %v5838 = vadd.f32 %v1069, %v5837
        %v5839 = vpop.f32.mrb[0].mxu0
        %5840 = vmatprep.mubr.bf16.mxu0 %v3418
        %5841 = vmatmul.mubr.bf16.gmra.mrb[0].mxu0 %v3417
        %v5842 = vpop.f32.mrb[0].mxu0
        %v5843 = vadd.f32 %v1069, %v5842
        %v5844 = vpop.f32.mrb[0].mxu0
        %v5845 = vpop.f32.mrb[0].mxu0
        %v5846 = vadd.f32 %v1069, %v5845
        %v5847 = vpop.f32.mrb[0].mxu0
        %5848 = vmatprep.mubr.bf16.mxu0 %v3421
        %5849 = vmatmul.mubr.bf16.gmra.mrb[0].mxu0 %v3420
        %v5850 = vpop.f32.mrb[0].mxu0
        %v5851 = vadd.f32 %v1069, %v5850
        %v5852 = vpop.f32.mrb[0].mxu0
        %v5853 = vpop.f32.mrb[0].mxu0
        %v5854 = vadd.f32 %v1069, %v5853
        %v5855 = vpop.f32.mrb[0].mxu0
        %5856 = vmatprep.mubr.bf16.mxu0 %v3424
        %5857 = vmatmul.mubr.bf16.gmra.mrb[0].mxu0 %v3423
        %v5858 = vpop.f32.mrb[0].mxu0
        %v5859 = vadd.f32 %v1069, %v5858
        %v5860 = vpop.f32.mrb[0].mxu0
        %v5861 = vpop.f32.mrb[0].mxu0
        %v5862 = vadd.f32 %v1069, %v5861
        %v5863 = vpop.f32.mrb[0].mxu0
        %5864 = vmatprep.mubr.bf16.mxu0 %v3427
        %5865 = vmatmul.mubr.bf16.gmra.mrb[0].mxu0 %v3426
        %v5866 = vpop.f32.mrb[0].mxu0
        %v5867 = vadd.f32 %v1069, %v5866
        %v5868 = vpop.f32.mrb[0].mxu0
        %v5869 = vpop.f32.mrb[0].mxu0
        %v5870 = vadd.f32 %v1069, %v5869
        %v5871 = vpop.f32.mrb[0].mxu0
        %5872 = vmatprep.mubr.bf16.mxu0 %v3430
        %5873 = vmatmul.mubr.bf16.gmra.mrb[0].mxu0 %v3429
        %v5874 = vpop.f32.mrb[0].mxu0
        %v5875 = vadd.f32 %v1069, %v5874
        %v5876 = vpop.f32.mrb[0].mxu0
        %v5877 = vpop.f32.mrb[0].mxu0
        %v5878 = vadd.f32 %v1069, %v5877
        %v5879 = vpop.f32.mrb[0].mxu0
        %5880 = vmatprep.mubr.bf16.mxu0 %v3433
        %5881 = vmatmul.mubr.bf16.gmra.mrb[0].mxu0 %v3432
        %v5882 = vpop.f32.mrb[0].mxu0
        %v5883 = vadd.f32 %v1069, %v5882
        %v5884 = vpop.f32.mrb[0].mxu0
        %v5885 = vpop.f32.mrb[0].mxu0
        %v5886 = vadd.f32 %v1069, %v5885
        %v5887 = vpop.f32.mrb[0].mxu0
        %5888 = vmatprep.mubr.bf16.mxu0 %v3436
        %5889 = vmatmul.mubr.bf16.gmra.mrb[0].mxu0 %v3435
        %v5890 = vpop.f32.mrb[0].mxu0
        %v5891 = vadd.f32 %v1069, %v5890
        %v5892 = vpop.f32.mrb[0].mxu0
        %v5893 = vpop.f32.mrb[0].mxu0
        %v5894 = vadd.f32 %v1069, %v5893
        %v5895 = vpop.f32.mrb[0].mxu0
        %5896 = vmatprep.mubr.bf16.mxu0 %v3439
        %5897 = vmatmul.mubr.bf16.gmra.mrb[0].mxu0 %v3438
        %v5898 = vpop.f32.mrb[0].mxu0
        %v5899 = vadd.f32 %v1069, %v5898
        %v5900 = vpop.f32.mrb[0].mxu0
        %v5901 = vpop.f32.mrb[0].mxu0
        %v5902 = vadd.f32 %v1069, %v5901
        %v5903 = vpop.f32.mrb[0].mxu0
        %5904 = vmatprep.mubr.bf16.mxu0 %v3442
        %5905 = vmatmul.mubr.bf16.gmra.mrb[0].mxu0 %v3441
        %v5906 = vpop.f32.mrb[0].mxu0
        %v5907 = vadd.f32 %v1069, %v5906
        %v5908 = vpop.f32.mrb[0].mxu0
        %v5909 = vpop.f32.mrb[0].mxu0
        %v5910 = vadd.f32 %v1069, %v5909
        %v5911 = vpop.f32.mrb[0].mxu0
        %5912 = vmatprep.mubr.bf16.mxu0 %v3445
        %5913 = vmatmul.mubr.bf16.gmra.mrb[0].mxu0 %v3444
        %v5914 = vpop.f32.mrb[0].mxu0
        %v5915 = vadd.f32 %v1069, %v5914
        %v5916 = vpop.f32.mrb[0].mxu0
        %v5917 = vpop.f32.mrb[0].mxu0
        %v5918 = vadd.f32 %v1069, %v5917
        %v5919 = vpop.f32.mrb[0].mxu0
        %5920 = vmatprep.mubr.bf16.mxu0 %v3448
        %5921 = vmatmul.mubr.bf16.gmra.mrb[0].mxu0 %v3447
        %v5922 = vpop.f32.mrb[0].mxu0
        %v5923 = vadd.f32 %v1069, %v5922
        %v5924 = vpop.f32.mrb[0].mxu0
        %v5925 = vpop.f32.mrb[0].mxu0
        %v5926 = vadd.f32 %v1069, %v5925
        %v5927 = vpop.f32.mrb[0].mxu0
        %5928 = vmatprep.mubr.bf16.mxu0 %v3451
        %5929 = vmatmul.mubr.bf16.gmra.mrb[0].mxu0 %v3450
        %v5930 = vpop.f32.mrb[0].mxu0
        %v5931 = vadd.f32 %v1069, %v5930
        %v5932 = vpop.f32.mrb[0].mxu0
        %v5933 = vpop.f32.mrb[0].mxu0
        %v5934 = vadd.f32 %v1069, %v5933
        %v5935 = vpop.f32.mrb[0].mxu0
        %5936 = vmatprep.mubr.bf16.mxu0 %v3454
        %5937 = vmatmul.mubr.bf16.gmra.mrb[0].mxu0 %v3453
        %v5938 = vpop.f32.mrb[0].mxu0
        %v5939 = vadd.f32 %v1069, %v5938
        %v5940 = vpop.f32.mrb[0].mxu0
        %v5941 = vpop.f32.mrb[0].mxu0
        %v5942 = vadd.f32 %v1069, %v5941
        %v5943 = vpop.f32.mrb[0].mxu0
        %5944 = vmatprep.mubr.bf16.mxu0 %v3457
        %5945 = vmatmul.mubr.bf16.gmra.mrb[0].mxu0 %v3456
        %v5946 = vpop.f32.mrb[0].mxu0
        %v5947 = vadd.f32 %v1069, %v5946
        %v5948 = vpop.f32.mrb[0].mxu0
        %v5949 = vpop.f32.mrb[0].mxu0
        %v5950 = vadd.f32 %v1069, %v5949
        %v5951 = vpop.f32.mrb[0].mxu0
        %5952 = vmatprep.mubr.bf16.mxu0 %v3460
        %5953 = vmatmul.mubr.bf16.gmra.mrb[0].mxu0 %v3459
        %v5954 = vpop.f32.mrb[0].mxu0
        %v5955 = vadd.f32 %v1069, %v5954
        %v5956 = vpop.f32.mrb[0].mxu0
        %v5957 = vpop.f32.mrb[0].mxu0
        %v5958 = vadd.f32 %v1069, %v5957
        %v5959 = vpop.f32.mrb[0].mxu0
        %5960 = vmatprep.mubr.bf16.mxu0 %v3463
        %5961 = vmatmul.mubr.bf16.gmra.mrb[0].mxu0 %v3462
        %v5962 = vpop.f32.mrb[0].mxu0
        %v5963 = vadd.f32 %v1069, %v5962
        %v5964 = vpop.f32.mrb[0].mxu0
        %v5965 = vpop.f32.mrb[0].mxu0
        %v5966 = vadd.f32 %v1069, %v5965
        %v5967 = vpop.f32.mrb[0].mxu0
        %5968 = vmatprep.mubr.bf16.mxu0 %v3466
        %5969 = vmatmul.mubr.bf16.gmra.mrb[0].mxu0 %v3465
        %v5970 = vpop.f32.mrb[0].mxu0
        %v5971 = vadd.f32 %v1069, %v5970
        %v5972 = vpop.f32.mrb[0].mxu0
        %v5973 = vpop.f32.mrb[0].mxu0
        %v5974 = vadd.f32 %v1069, %v5973
        %v5975 = vpop.f32.mrb[0].mxu0
        %5976 = vmatprep.mubr.bf16.mxu0 %v3469
        %5977 = vmatmul.mubr.bf16.gmra.mrb[0].mxu0 %v3468
        %v5978 = vpop.f32.mrb[0].mxu0
        %v5979 = vadd.f32 %v1069, %v5978
        %v5980 = vpop.f32.mrb[0].mxu0
        %v5981 = vpop.f32.mrb[0].mxu0
        %v5982 = vadd.f32 %v1069, %v5981
        %v5983 = vpop.f32.mrb[0].mxu0
        %5984 = vmatprep.mubr.bf16.mxu0 %v3472
        %5985 = vmatmul.mubr.bf16.gmra.mrb[0].mxu0 %v3471
        %v5986 = vpop.f32.mrb[0].mxu0
        %v5987 = vadd.f32 %v1069, %v5986
        %v5988 = vpop.f32.mrb[0].mxu0
        %v5989 = vpop.f32.mrb[0].mxu0
        %v5990 = vadd.f32 %v1069, %v5989
        %v5991 = vpop.f32.mrb[0].mxu0
        %5992 = vmatprep.mubr.bf16.mxu0 %v3475
        %5993 = vmatmul.mubr.bf16.gmra.mrb[0].mxu0 %v3474
        %v5994 = vpop.f32.mrb[0].mxu0
        %v5995 = vadd.f32 %v1069, %v5994
        %v5996 = vpop.f32.mrb[0].mxu0
        %v5997 = vpop.f32.mrb[0].mxu0
        %v5998 = vadd.f32 %v1069, %v5997
        %v5999 = vpop.f32.mrb[0].mxu0
        %6000 = vmatprep.mubr.bf16.mxu0 %v3478
        %6001 = vmatmul.mubr.bf16.gmra.mrb[0].mxu0 %v3477
        %v6002 = vpop.f32.mrb[0].mxu0
        %v6003 = vadd.f32 %v1069, %v6002
        %v6004 = vpop.f32.mrb[0].mxu0
        %v6005 = vpop.f32.mrb[0].mxu0
        %v6006 = vadd.f32 %v1069, %v6005
        %v6007 = vpop.f32.mrb[0].mxu0
        %6008 = vmatprep.mubr.bf16.mxu0 %v3481
        %6009 = vmatmul.mubr.bf16.gmra.mrb[0].mxu0 %v3480
        %v6010 = vpop.f32.mrb[0].mxu0
        %v6011 = vadd.f32 %v1069, %v6010
        %v6012 = vpop.f32.mrb[0].mxu0
        %v6013 = vpop.f32.mrb[0].mxu0
        %v6014 = vadd.f32 %v1069, %v6013
        %v6015 = vpop.f32.mrb[0].mxu0
        %6016 = vmatprep.mubr.bf16.mxu0 %v3484
        %6017 = vmatmul.mubr.bf16.gmra.mrb[0].mxu0 %v3483
        %v6018 = vpop.f32.mrb[0].mxu0
        %v6019 = vadd.f32 %v1069, %v6018
        %v6020 = vpop.f32.mrb[0].mxu0
        %v6021 = vpop.f32.mrb[0].mxu0
        %v6022 = vadd.f32 %v1069, %v6021
        %v6023 = vpop.f32.mrb[0].mxu0
        %6024 = vmatprep.mubr.bf16.mxu0 %v3487
        %6025 = vmatmul.mubr.bf16.gmra.mrb[0].mxu0 %v3486
        %v6026 = vpop.f32.mrb[0].mxu0
        %v6027 = vadd.f32 %v1069, %v6026
        %v6028 = vpop.f32.mrb[0].mxu0
        %v6029 = vpop.f32.mrb[0].mxu0
        %v6030 = vadd.f32 %v1069, %v6029
        %v6031 = vpop.f32.mrb[0].mxu0
        %6032 = vmatprep.mubr.bf16.mxu0 %v3490
        %6033 = vmatmul.mubr.bf16.gmra.mrb[0].mxu0 %v3489
        %v6034 = vpop.f32.mrb[0].mxu0
        %v6035 = vadd.f32 %v1069, %v6034
        %v6036 = vpop.f32.mrb[0].mxu0
        %v6037 = vpop.f32.mrb[0].mxu0
        %v6038 = vadd.f32 %v1069, %v6037
        %v6039 = vpop.f32.mrb[0].mxu0
        %6040 = vmatprep.mubr.bf16.mxu0 %v3493
        %6041 = vmatmul.mubr.bf16.gmra.mrb[0].mxu0 %v3492
        %v6042 = vpop.f32.mrb[0].mxu0
        %v6043 = vadd.f32 %v1069, %v6042
        %v6044 = vpop.f32.mrb[0].mxu0
        %v6045 = vpop.f32.mrb[0].mxu0
        %v6046 = vadd.f32 %v1069, %v6045
        %v6047 = vpop.f32.mrb[0].mxu0
        %6048 = vmatprep.mubr.bf16.mxu0 %v3496
        %6049 = vmatmul.mubr.bf16.gmra.mrb[0].mxu0 %v3495
        %v6050 = vpop.f32.mrb[0].mxu0
        %v6051 = vadd.f32 %v1069, %v6050
        %v6052 = vpop.f32.mrb[0].mxu0
        %v6053 = vpop.f32.mrb[0].mxu0
        %v6054 = vadd.f32 %v1069, %v6053
        %v6055 = vpop.f32.mrb[0].mxu0
        %6056 = vmatprep.mubr.bf16.mxu0 %v3499
        %6057 = vmatmul.mubr.bf16.gmra.mrb[0].mxu0 %v3498
        %v6058 = vpop.f32.mrb[0].mxu0
        %v6059 = vadd.f32 %v1069, %v6058
        %v6060 = vpop.f32.mrb[0].mxu0
        %v6061 = vpop.f32.mrb[0].mxu0
        %v6062 = vadd.f32 %v1069, %v6061
        %v6063 = vpop.f32.mrb[0].mxu0
        %6064 = vmatprep.mubr.bf16.mxu0 %v3502
        %6065 = vmatmul.mubr.bf16.gmra.mrb[0].mxu0 %v3501
        %v6066 = vpop.f32.mrb[0].mxu0
        %v6067 = vadd.f32 %v1069, %v6066
        %v6068 = vpop.f32.mrb[0].mxu0
        %v6069 = vpop.f32.mrb[0].mxu0
        %v6070 = vadd.f32 %v1069, %v6069
        %v6071 = vpop.f32.mrb[0].mxu0
        %6072 = vmatprep.mubr.bf16.mxu0 %v3505
        %6073 = vmatmul.mubr.bf16.gmra.mrb[0].mxu0 %v3504
        %v6074 = vpop.f32.mrb[0].mxu0
        %v6075 = vadd.f32 %v1069, %v6074
        %v6076 = vpop.f32.mrb[0].mxu0
        %v6077 = vpop.f32.mrb[0].mxu0
        %v6078 = vadd.f32 %v1069, %v6077
        %v6079 = vpop.f32.mrb[0].mxu0
        %6080 = vmatprep.mubr.bf16.mxu0 %v3508
        %6081 = vmatmul.mubr.bf16.gmra.mrb[0].mxu0 %v3507
        %v6082 = vpop.f32.mrb[0].mxu0
        %v6083 = vadd.f32 %v1069, %v6082
        %v6084 = vpop.f32.mrb[0].mxu0
        %v6085 = vpop.f32.mrb[0].mxu0
        %v6086 = vadd.f32 %v1069, %v6085
        %v6087 = vpop.f32.mrb[0].mxu0
        %6088 = vmatprep.mubr.bf16.mxu0 %v3511
        %6089 = vmatmul.mubr.bf16.gmra.mrb[0].mxu0 %v3510
        %v6090 = vpop.f32.mrb[0].mxu0
        %v6091 = vadd.f32 %v1069, %v6090
        %v6092 = vpop.f32.mrb[0].mxu0
        %v6093 = vpop.f32.mrb[0].mxu0
        %v6094 = vadd.f32 %v1069, %v6093
        %v6095 = vpop.f32.mrb[0].mxu0
        %6096 = vmatprep.mubr.bf16.mxu0 %v3514
        %6097 = vmatmul.mubr.bf16.gmra.mrb[0].mxu0 %v3513
        %v6098 = vpop.f32.mrb[0].mxu0
        %v6099 = vadd.f32 %v1069, %v6098
        %v6100 = vpop.f32.mrb[0].mxu0
        %v6101 = vpop.f32.mrb[0].mxu0
        %v6102 = vadd.f32 %v1069, %v6101
        %v6103 = vpop.f32.mrb[0].mxu0
        %6104 = vmatprep.mubr.bf16.mxu0 %v3517
        %6105 = vmatmul.mubr.bf16.gmra.mrb[0].mxu0 %v3516
        %v6106 = vpop.f32.mrb[0].mxu0
        %v6107 = vadd.f32 %v1069, %v6106
        %v6108 = vpop.f32.mrb[0].mxu0
        %v6109 = vpop.f32.mrb[0].mxu0
        %v6110 = vadd.f32 %v1069, %v6109
        %v6111 = vpop.f32.mrb[0].mxu0
        %6112 = vmatprep.mubr.bf16.mxu0 %v3520
        %6113 = vmatmul.mubr.bf16.gmra.mrb[0].mxu0 %v3519
        %v6114 = vpop.f32.mrb[0].mxu0
        %v6115 = vadd.f32 %v1069, %v6114
        %v6116 = vpop.f32.mrb[0].mxu0
        %v6117 = vpop.f32.mrb[0].mxu0
        %v6118 = vadd.f32 %v1069, %v6117
        %v6119 = vpop.f32.mrb[0].mxu0
        %6120 = vmatprep.mubr.bf16.mxu0 %v3523
        %6121 = vmatmul.mubr.bf16.gmra.mrb[0].mxu0 %v3522
        %v6122 = vpop.f32.mrb[0].mxu0
        %v6123 = vadd.f32 %v1069, %v6122
        %v6124 = vpop.f32.mrb[0].mxu0
        %v6125 = vpop.f32.mrb[0].mxu0
        %v6126 = vadd.f32 %v1069, %v6125
        %v6127 = vpop.f32.mrb[0].mxu0
        %6128 = vmatprep.mubr.bf16.mxu0 %v3526
        %6129 = vmatmul.mubr.bf16.gmra.mrb[0].mxu0 %v3525
        %v6130 = vpop.f32.mrb[0].mxu0
        %v6131 = vadd.f32 %v1069, %v6130
        %v6132 = vpop.f32.mrb[0].mxu0
        %v6133 = vpop.f32.mrb[0].mxu0
        %v6134 = vadd.f32 %v1069, %v6133
        %v6135 = vpop.f32.mrb[0].mxu0
        %6136 = vmatprep.mubr.bf16.mxu0 %v3529
        %6137 = vmatmul.mubr.bf16.gmra.mrb[0].mxu0 %v3528
        %v6138 = vpop.f32.mrb[0].mxu0
        %v6139 = vadd.f32 %v1069, %v6138
        %v6140 = vpop.f32.mrb[0].mxu0
        %v6141 = vpop.f32.mrb[0].mxu0
        %v6142 = vadd.f32 %v1069, %v6141
        %v6143 = vpop.f32.mrb[0].mxu0
        %6144 = vmatprep.mubr.bf16.mxu0 %v3532
        %6145 = vmatmul.mubr.bf16.gmra.mrb[0].mxu0 %v3531
        %v6146 = vpop.f32.mrb[0].mxu0
        %v6147 = vadd.f32 %v1069, %v6146
        %v6148 = vpop.f32.mrb[0].mxu0
        %v6149 = vpop.f32.mrb[0].mxu0
        %v6150 = vadd.f32 %v1069, %v6149
        %v6151 = vpop.f32.mrb[0].mxu0
        %6152 = vmatprep.mubr.bf16.mxu0 %v3535
        %6153 = vmatmul.mubr.bf16.gmra.mrb[0].mxu0 %v3534
        %v6154 = vpop.f32.mrb[0].mxu0
        %v6155 = vadd.f32 %v1069, %v6154
        %v6156 = vpop.f32.mrb[0].mxu0
        %v6157 = vpop.f32.mrb[0].mxu0
        %v6158 = vadd.f32 %v1069, %v6157
        %v6159 = vpop.f32.mrb[0].mxu0
        %6160 = vmatprep.mubr.bf16.mxu0 %v3538
        %6161 = vmatmul.mubr.bf16.gmra.mrb[0].mxu0 %v3537
        %v6162 = vpop.f32.mrb[0].mxu0
        %v6163 = vadd.f32 %v1069, %v6162
        %v6164 = vpop.f32.mrb[0].mxu0
        %v6165 = vpop.f32.mrb[0].mxu0
        %v6166 = vadd.f32 %v1069, %v6165
        %v6167 = vpop.f32.mrb[0].mxu0
        %6168 = vmatprep.mubr.bf16.mxu0 %v3541
        %6169 = vmatmul.mubr.bf16.gmra.mrb[0].mxu0 %v3540
        %v6170 = vpop.f32.mrb[0].mxu0
        %v6171 = vadd.f32 %v1069, %v6170
        %v6172 = vpop.f32.mrb[0].mxu0
        %v6173 = vpop.f32.mrb[0].mxu0
        %v6174 = vadd.f32 %v1069, %v6173
        %v6175 = vpop.f32.mrb[0].mxu0
        %6176 = vmatprep.mubr.bf16.mxu0 %v3544
        %6177 = vmatmul.mubr.bf16.gmra.mrb[0].mxu0 %v3543
        %v6178 = vpop.f32.mrb[0].mxu0
        %v6179 = vadd.f32 %v1069, %v6178
        %v6180 = vpop.f32.mrb[0].mxu0
        %v6181 = vpop.f32.mrb[0].mxu0
        %v6182 = vadd.f32 %v1069, %v6181
        %v6183 = vpop.f32.mrb[0].mxu0
        %6184 = vmatprep.mubr.bf16.mxu0 %v3547
        %6185 = vmatmul.mubr.bf16.gmra.mrb[0].mxu0 %v3546
        %v6186 = vpop.f32.mrb[0].mxu0
        %v6187 = vadd.f32 %v1069, %v6186
        %v6188 = vpop.f32.mrb[0].mxu0
        %v6189 = vpop.f32.mrb[0].mxu0
        %v6190 = vadd.f32 %v1069, %v6189
        %v6191 = vpop.f32.mrb[0].mxu0
        %6192 = vmatprep.mubr.bf16.mxu0 %v3550
        %6193 = vmatmul.mubr.bf16.gmra.mrb[0].mxu0 %v3549
        %v6194 = vpop.f32.mrb[0].mxu0
        %v6195 = vadd.f32 %v1069, %v6194
        %v6196 = vpop.f32.mrb[0].mxu0
        %v6197 = vpop.f32.mrb[0].mxu0
        %v6198 = vadd.f32 %v1069, %v6197
        %v6199 = vpop.f32.mrb[0].mxu0
        %6200 = vmatprep.mubr.bf16.mxu0 %v3553
        %6201 = vmatmul.mubr.bf16.gmra.mrb[0].mxu0 %v3552
        %v6202 = vpop.f32.mrb[0].mxu0
        %v6203 = vadd.f32 %v1069, %v6202
        %v6204 = vpop.f32.mrb[0].mxu0
        %v6205 = vpop.f32.mrb[0].mxu0
        %v6206 = vadd.f32 %v1069, %v6205
        %v6207 = vpop.f32.mrb[0].mxu0
        %6208 = vmatprep.mubr.bf16.mxu0 %v3556
        %6209 = vmatmul.mubr.bf16.gmra.mrb[0].mxu0 %v3555
        %v6210 = vpop.f32.mrb[0].mxu0
        %v6211 = vadd.f32 %v1069, %v6210
        %v6212 = vpop.f32.mrb[0].mxu0
        %v6213 = vpop.f32.mrb[0].mxu0
        %v6214 = vadd.f32 %v1069, %v6213
        %v6215 = vpop.f32.mrb[0].mxu0
        %6216 = vmatprep.mubr.bf16.mxu0 %v3559
        %6217 = vmatmul.mubr.bf16.gmra.mrb[0].mxu0 %v3558
        %v6218 = vpop.f32.mrb[0].mxu0
        %v6219 = vadd.f32 %v1069, %v6218
        %v6220 = vpop.f32.mrb[0].mxu0
        %v6221 = vpop.f32.mrb[0].mxu0
        %v6222 = vadd.f32 %v1069, %v6221
        %v6223 = vpop.f32.mrb[0].mxu0
        %6224 = vmatprep.mubr.bf16.mxu0 %v3562
        %6225 = vmatmul.mubr.bf16.gmra.mrb[0].mxu0 %v3561
        %v6226 = vpop.f32.mrb[0].mxu0
        %v6227 = vadd.f32 %v1069, %v6226
        %v6228 = vpop.f32.mrb[0].mxu0
        %v6229 = vpop.f32.mrb[0].mxu0
        %v6230 = vadd.f32 %v1069, %v6229
        %v6231 = vpop.f32.mrb[0].mxu0
        %6232 = vmatprep.mubr.bf16.mxu0 %v3565
        %6233 = vmatmul.mubr.bf16.gmra.mrb[0].mxu0 %v3564
        %v6234 = vpop.f32.mrb[0].mxu0
        %v6235 = vadd.f32 %v1069, %v6234
        %v6236 = vpop.f32.mrb[0].mxu0
        %v6237 = vpop.f32.mrb[0].mxu0
        %v6238 = vadd.f32 %v1069, %v6237
        %v6239 = vpop.f32.mrb[0].mxu0
        %6240 = vdwg.mxu0
        %6241 = vmatprep.subr.bf16.mxu0 0
        %6242 = vmatpush1.bf16.msra.mxu0 %v4059
        %6243 = vmatprep.subr.bf16.mxu0 0
        %6244 = vmatpush1.bf16.msra.mxu0 %v4060
        %6245 = vmatprep.subr.bf16.mxu0 0
        %6246 = vmatpush1.bf16.msra.mxu0 %v4061
        %6247 = vmatprep.subr.bf16.mxu0 0
        %6248 = vmatpush1.bf16.msra.mxu0 %v4062
        %6249 = vmatprep.subr.bf16.mxu0 0
        %6250 = vmatpush1.bf16.msra.mxu0 %v4063
        %6251 = vmatprep.subr.bf16.mxu0 0
        %6252 = vmatpush1.bf16.msra.mxu0 %v4064
        %6253 = vmatprep.subr.bf16.mxu0 0
        %6254 = vmatpush1.bf16.msra.mxu0 %v4670
        %6255 = vmatprep.subr.bf16.mxu0 0
        %6256 = vmatpush1.bf16.msra.mxu0 0
        %6257 = vmatprep.subr.bf16.mxu0 0
        %6258 = vmatpush1.bf16.msra.mxu0 0
        %6259 = vmatprep.subr.bf16.mxu0 0
        %6260 = vmatpush1.bf16.msra.mxu0 0
        %6261 = vmatprep.subr.bf16.mxu0 0
        %6262 = vmatpush1.bf16.msra.mxu0 0
        %6263 = vmatprep.subr.bf16.mxu0 0
        %6264 = vmatpush1.bf16.msra.mxu0 0
        %6265 = vmatprep.subr.bf16.mxu0 0
        %6266 = vmatpush1.bf16.msra.mxu0 0
        %6267 = vmatprep.subr.bf16.mxu0 0
        %6268 = vmatpush1.bf16.msra.mxu0 0
        %6269 = vmatprep.subr.bf16.mxu0 0
        %6270 = vmatpush1.bf16.msra.mxu0 0
        %6271 = vmatprep.subr.bf16.mxu0 0
        %6272 = vmatpush1.bf16.msra.mxu0 0
        %6273 = vmatprep.mubr.bf16.mxu0 0
        %6274 = vmatmul.mubr.bf16.gmra.mrb[0].mxu0 %v4090
        %v6275 = vpop.f32.mrb[0].mxu0
        %v6276 = vadd.f32 %v4707, %v6275
        %v6277 = vpop.f32.mrb[0].mxu0
        %v6278 = vpop.f32.mrb[0].mxu0
        %v6279 = vadd.f32 %v4710, %v6278
        %v6280 = vpop.f32.mrb[0].mxu0
        %6281 = vmatprep.mubr.bf16.mxu0 0
        %6282 = vmatmul.mubr.bf16.gmra.mrb[0].mxu0 %v4093
        %v6283 = vpop.f32.mrb[0].mxu0
        %v6284 = vadd.f32 %v4715, %v6283
        %v6285 = vpop.f32.mrb[0].mxu0
        %v6286 = vpop.f32.mrb[0].mxu0
        %v6287 = vadd.f32 %v4718, %v6286
        %v6288 = vpop.f32.mrb[0].mxu0
        %6289 = vmatprep.mubr.bf16.mxu0 0
        %6290 = vmatmul.mubr.bf16.gmra.mrb[0].mxu0 %v4096
        %v6291 = vpop.f32.mrb[0].mxu0
        %v6292 = vadd.f32 %v4723, %v6291
        %v6293 = vpop.f32.mrb[0].mxu0
        %v6294 = vpop.f32.mrb[0].mxu0
        %v6295 = vadd.f32 %v4726, %v6294
        %v6296 = vpop.f32.mrb[0].mxu0
        %6297 = vmatprep.mubr.bf16.mxu0 0
        %6298 = vmatmul.mubr.bf16.gmra.mrb[0].mxu0 %v4099
        %v6299 = vpop.f32.mrb[0].mxu0
        %v6300 = vadd.f32 %v4731, %v6299
        %v6301 = vpop.f32.mrb[0].mxu0
        %v6302 = vpop.f32.mrb[0].mxu0
        %v6303 = vadd.f32 %v4734, %v6302
        %v6304 = vpop.f32.mrb[0].mxu0
        %6305 = vmatprep.mubr.bf16.mxu0 0
        %6306 = vmatmul.mubr.bf16.gmra.mrb[0].mxu0 %v4102
        %v6307 = vpop.f32.mrb[0].mxu0
        %v6308 = vadd.f32 %v4739, %v6307
        %v6309 = vpop.f32.mrb[0].mxu0
        %v6310 = vpop.f32.mrb[0].mxu0
        %v6311 = vadd.f32 %v4742, %v6310
        %v6312 = vpop.f32.mrb[0].mxu0
        %6313 = vmatprep.mubr.bf16.mxu0 0
        %6314 = vmatmul.mubr.bf16.gmra.mrb[0].mxu0 %v4105
        %v6315 = vpop.f32.mrb[0].mxu0
        %v6316 = vadd.f32 %v4747, %v6315
        %v6317 = vpop.f32.mrb[0].mxu0
        %v6318 = vpop.f32.mrb[0].mxu0
        %v6319 = vadd.f32 %v4750, %v6318
        %v6320 = vpop.f32.mrb[0].mxu0
        %6321 = vmatprep.mubr.bf16.mxu0 0
        %6322 = vmatmul.mubr.bf16.gmra.mrb[0].mxu0 %v4108
        %v6323 = vpop.f32.mrb[0].mxu0
        %v6324 = vadd.f32 %v4755, %v6323
        %v6325 = vpop.f32.mrb[0].mxu0
        %v6326 = vpop.f32.mrb[0].mxu0
        %v6327 = vadd.f32 %v4758, %v6326
        %v6328 = vpop.f32.mrb[0].mxu0
        %6329 = vmatprep.mubr.bf16.mxu0 0
        %6330 = vmatmul.mubr.bf16.gmra.mrb[0].mxu0 %v4111
        %v6331 = vpop.f32.mrb[0].mxu0
        %v6332 = vadd.f32 %v4763, %v6331
        %v6333 = vpop.f32.mrb[0].mxu0
        %v6334 = vpop.f32.mrb[0].mxu0
        %v6335 = vadd.f32 %v4766, %v6334
        %v6336 = vpop.f32.mrb[0].mxu0
        %6337 = vmatprep.mubr.bf16.mxu0 0
        %6338 = vmatmul.mubr.bf16.gmra.mrb[0].mxu0 %v4114
        %v6339 = vpop.f32.mrb[0].mxu0
        %v6340 = vadd.f32 %v4771, %v6339
        %v6341 = vpop.f32.mrb[0].mxu0
        %v6342 = vpop.f32.mrb[0].mxu0
        %v6343 = vadd.f32 %v4774, %v6342
        %v6344 = vpop.f32.mrb[0].mxu0
        %6345 = vmatprep.mubr.bf16.mxu0 0
        %6346 = vmatmul.mubr.bf16.gmra.mrb[0].mxu0 %v4117
        %v6347 = vpop.f32.mrb[0].mxu0
        %v6348 = vadd.f32 %v4779, %v6347
        %v6349 = vpop.f32.mrb[0].mxu0
        %v6350 = vpop.f32.mrb[0].mxu0
        %v6351 = vadd.f32 %v4782, %v6350
        %v6352 = vpop.f32.mrb[0].mxu0
        %6353 = vmatprep.mubr.bf16.mxu0 0
        %6354 = vmatmul.mubr.bf16.gmra.mrb[0].mxu0 %v4120
        %v6355 = vpop.f32.mrb[0].mxu0
        %v6356 = vadd.f32 %v4787, %v6355
        %v6357 = vpop.f32.mrb[0].mxu0
        %v6358 = vpop.f32.mrb[0].mxu0
        %v6359 = vadd.f32 %v4790, %v6358
        %v6360 = vpop.f32.mrb[0].mxu0
        %6361 = vmatprep.mubr.bf16.mxu0 0
        %6362 = vmatmul.mubr.bf16.gmra.mrb[0].mxu0 %v4123
        %v6363 = vpop.f32.mrb[0].mxu0
        %v6364 = vadd.f32 %v4795, %v6363
        %v6365 = vpop.f32.mrb[0].mxu0
        %v6366 = vpop.f32.mrb[0].mxu0
        %v6367 = vadd.f32 %v4798, %v6366
        %v6368 = vpop.f32.mrb[0].mxu0
        %6369 = vmatprep.mubr.bf16.mxu0 0
        %6370 = vmatmul.mubr.bf16.gmra.mrb[0].mxu0 %v4126
        %v6371 = vpop.f32.mrb[0].mxu0
        %v6372 = vadd.f32 %v4803, %v6371
        %v6373 = vpop.f32.mrb[0].mxu0
        %v6374 = vpop.f32.mrb[0].mxu0
        %v6375 = vadd.f32 %v4806, %v6374
        %v6376 = vpop.f32.mrb[0].mxu0
        %6377 = vmatprep.mubr.bf16.mxu0 0
        %6378 = vmatmul.mubr.bf16.gmra.mrb[0].mxu0 %v4129
        %v6379 = vpop.f32.mrb[0].mxu0
        %v6380 = vadd.f32 %v4811, %v6379
        %v6381 = vpop.f32.mrb[0].mxu0
        %v6382 = vpop.f32.mrb[0].mxu0
        %v6383 = vadd.f32 %v4814, %v6382
        %v6384 = vpop.f32.mrb[0].mxu0
        %6385 = vmatprep.mubr.bf16.mxu0 0
        %6386 = vmatmul.mubr.bf16.gmra.mrb[0].mxu0 %v4132
        %v6387 = vpop.f32.mrb[0].mxu0
        %v6388 = vadd.f32 %v4819, %v6387
        %v6389 = vpop.f32.mrb[0].mxu0
        %v6390 = vpop.f32.mrb[0].mxu0
        %v6391 = vadd.f32 %v4822, %v6390
        %v6392 = vpop.f32.mrb[0].mxu0
        %6393 = vmatprep.mubr.bf16.mxu0 0
        %6394 = vmatmul.mubr.bf16.gmra.mrb[0].mxu0 %v4135
        %v6395 = vpop.f32.mrb[0].mxu0
        %v6396 = vadd.f32 %v4827, %v6395
        %v6397 = vpop.f32.mrb[0].mxu0
        %v6398 = vpop.f32.mrb[0].mxu0
        %v6399 = vadd.f32 %v4830, %v6398
        %v6400 = vpop.f32.mrb[0].mxu0
        %6401 = vmatprep.mubr.bf16.mxu0 0
        %6402 = vmatmul.mubr.bf16.gmra.mrb[0].mxu0 %v4138
        %v6403 = vpop.f32.mrb[0].mxu0
        %v6404 = vadd.f32 %v4835, %v6403
        %v6405 = vpop.f32.mrb[0].mxu0
        %v6406 = vpop.f32.mrb[0].mxu0
        %v6407 = vadd.f32 %v4838, %v6406
        %v6408 = vpop.f32.mrb[0].mxu0
        %6409 = vmatprep.mubr.bf16.mxu0 0
        %6410 = vmatmul.mubr.bf16.gmra.mrb[0].mxu0 %v4141
        %v6411 = vpop.f32.mrb[0].mxu0
        %v6412 = vadd.f32 %v4843, %v6411
        %v6413 = vpop.f32.mrb[0].mxu0
        %v6414 = vpop.f32.mrb[0].mxu0
        %v6415 = vadd.f32 %v4846, %v6414
        %v6416 = vpop.f32.mrb[0].mxu0
        %6417 = vmatprep.mubr.bf16.mxu0 0
        %6418 = vmatmul.mubr.bf16.gmra.mrb[0].mxu0 %v4144
        %v6419 = vpop.f32.mrb[0].mxu0
        %v6420 = vadd.f32 %v4851, %v6419
        %v6421 = vpop.f32.mrb[0].mxu0
        %v6422 = vpop.f32.mrb[0].mxu0
        %v6423 = vadd.f32 %v4854, %v6422
        %v6424 = vpop.f32.mrb[0].mxu0
        %6425 = vmatprep.mubr.bf16.mxu0 0
        %6426 = vmatmul.mubr.bf16.gmra.mrb[0].mxu0 %v4147
        %v6427 = vpop.f32.mrb[0].mxu0
        %v6428 = vadd.f32 %v4859, %v6427
        %v6429 = vpop.f32.mrb[0].mxu0
        %v6430 = vpop.f32.mrb[0].mxu0
        %v6431 = vadd.f32 %v4862, %v6430
        %v6432 = vpop.f32.mrb[0].mxu0
        %6433 = vmatprep.mubr.bf16.mxu0 0
        %6434 = vmatmul.mubr.bf16.gmra.mrb[0].mxu0 %v4150
        %v6435 = vpop.f32.mrb[0].mxu0
        %v6436 = vadd.f32 %v4867, %v6435
        %v6437 = vpop.f32.mrb[0].mxu0
        %v6438 = vpop.f32.mrb[0].mxu0
        %v6439 = vadd.f32 %v4870, %v6438
        %v6440 = vpop.f32.mrb[0].mxu0
        %6441 = vmatprep.mubr.bf16.mxu0 0
        %6442 = vmatmul.mubr.bf16.gmra.mrb[0].mxu0 %v4153
        %v6443 = vpop.f32.mrb[0].mxu0
        %v6444 = vadd.f32 %v4875, %v6443
        %v6445 = vpop.f32.mrb[0].mxu0
        %v6446 = vpop.f32.mrb[0].mxu0
        %v6447 = vadd.f32 %v4878, %v6446
        %v6448 = vpop.f32.mrb[0].mxu0
        %6449 = vmatprep.mubr.bf16.mxu0 0
        %6450 = vmatmul.mubr.bf16.gmra.mrb[0].mxu0 %v4156
        %v6451 = vpop.f32.mrb[0].mxu0
        %v6452 = vadd.f32 %v4883, %v6451
        %v6453 = vpop.f32.mrb[0].mxu0
        %v6454 = vpop.f32.mrb[0].mxu0
        %v6455 = vadd.f32 %v4886, %v6454
        %v6456 = vpop.f32.mrb[0].mxu0
        %6457 = vmatprep.mubr.bf16.mxu0 0
        %6458 = vmatmul.mubr.bf16.gmra.mrb[0].mxu0 %v4159
        %v6459 = vpop.f32.mrb[0].mxu0
        %v6460 = vadd.f32 %v4891, %v6459
        %v6461 = vpop.f32.mrb[0].mxu0
        %v6462 = vpop.f32.mrb[0].mxu0
        %v6463 = vadd.f32 %v4894, %v6462
        %v6464 = vpop.f32.mrb[0].mxu0
        %6465 = vmatprep.mubr.bf16.mxu0 0
        %6466 = vmatmul.mubr.bf16.gmra.mrb[0].mxu0 %v4162
        %v6467 = vpop.f32.mrb[0].mxu0
        %v6468 = vadd.f32 %v4899, %v6467
        %v6469 = vpop.f32.mrb[0].mxu0
        %v6470 = vpop.f32.mrb[0].mxu0
        %v6471 = vadd.f32 %v4902, %v6470
        %v6472 = vpop.f32.mrb[0].mxu0
        %6473 = vmatprep.mubr.bf16.mxu0 0
        %6474 = vmatmul.mubr.bf16.gmra.mrb[0].mxu0 %v4165
        %v6475 = vpop.f32.mrb[0].mxu0
        %v6476 = vadd.f32 %v4907, %v6475
        %v6477 = vpop.f32.mrb[0].mxu0
        %v6478 = vpop.f32.mrb[0].mxu0
        %v6479 = vadd.f32 %v4910, %v6478
        %v6480 = vpop.f32.mrb[0].mxu0
        %6481 = vmatprep.mubr.bf16.mxu0 0
        %6482 = vmatmul.mubr.bf16.gmra.mrb[0].mxu0 %v4168
        %v6483 = vpop.f32.mrb[0].mxu0
        %v6484 = vadd.f32 %v4915, %v6483
        %v6485 = vpop.f32.mrb[0].mxu0
        %v6486 = vpop.f32.mrb[0].mxu0
        %v6487 = vadd.f32 %v4918, %v6486
        %v6488 = vpop.f32.mrb[0].mxu0
        %6489 = vmatprep.mubr.bf16.mxu0 0
        %6490 = vmatmul.mubr.bf16.gmra.mrb[0].mxu0 %v4171
        %v6491 = vpop.f32.mrb[0].mxu0
        %v6492 = vadd.f32 %v4923, %v6491
        %v6493 = vpop.f32.mrb[0].mxu0
        %v6494 = vpop.f32.mrb[0].mxu0
        %v6495 = vadd.f32 %v4926, %v6494
        %v6496 = vpop.f32.mrb[0].mxu0
        %6497 = vmatprep.mubr.bf16.mxu0 0
        %6498 = vmatmul.mubr.bf16.gmra.mrb[0].mxu0 %v4174
        %v6499 = vpop.f32.mrb[0].mxu0
        %v6500 = vadd.f32 %v4931, %v6499
        %v6501 = vpop.f32.mrb[0].mxu0
        %v6502 = vpop.f32.mrb[0].mxu0
        %v6503 = vadd.f32 %v4934, %v6502
        %v6504 = vpop.f32.mrb[0].mxu0
        %6505 = vmatprep.mubr.bf16.mxu0 0
        %6506 = vmatmul.mubr.bf16.gmra.mrb[0].mxu0 %v4177
        %v6507 = vpop.f32.mrb[0].mxu0
        %v6508 = vadd.f32 %v4939, %v6507
        %v6509 = vpop.f32.mrb[0].mxu0
        %v6510 = vpop.f32.mrb[0].mxu0
        %v6511 = vadd.f32 %v4942, %v6510
        %v6512 = vpop.f32.mrb[0].mxu0
        %6513 = vmatprep.mubr.bf16.mxu0 0
        %6514 = vmatmul.mubr.bf16.gmra.mrb[0].mxu0 %v4180
        %v6515 = vpop.f32.mrb[0].mxu0
        %v6516 = vadd.f32 %v4947, %v6515
        %v6517 = vpop.f32.mrb[0].mxu0
        %v6518 = vpop.f32.mrb[0].mxu0
        %v6519 = vadd.f32 %v4950, %v6518
        %v6520 = vpop.f32.mrb[0].mxu0
        %6521 = vmatprep.mubr.bf16.mxu0 0
        %6522 = vmatmul.mubr.bf16.gmra.mrb[0].mxu0 %v4183
        %v6523 = vpop.f32.mrb[0].mxu0
        %v6524 = vadd.f32 %v4955, %v6523
        %v6525 = vpop.f32.mrb[0].mxu0
        %v6526 = vpop.f32.mrb[0].mxu0
        %v6527 = vadd.f32 %v4958, %v6526
        %v6528 = vpop.f32.mrb[0].mxu0
        %6529 = vmatprep.mubr.bf16.mxu0 0
        %6530 = vmatmul.mubr.bf16.gmra.mrb[0].mxu0 %v4186
        %v6531 = vpop.f32.mrb[0].mxu0
        %v6532 = vadd.f32 %v4963, %v6531
        %v6533 = vpop.f32.mrb[0].mxu0
        %v6534 = vpop.f32.mrb[0].mxu0
        %v6535 = vadd.f32 %v4966, %v6534
        %v6536 = vpop.f32.mrb[0].mxu0
        %6537 = vmatprep.mubr.bf16.mxu0 0
        %6538 = vmatmul.mubr.bf16.gmra.mrb[0].mxu0 %v4189
        %v6539 = vpop.f32.mrb[0].mxu0
        %v6540 = vadd.f32 %v4971, %v6539
        %v6541 = vpop.f32.mrb[0].mxu0
        %v6542 = vpop.f32.mrb[0].mxu0
        %v6543 = vadd.f32 %v4974, %v6542
        %v6544 = vpop.f32.mrb[0].mxu0
        %6545 = vmatprep.mubr.bf16.mxu0 0
        %6546 = vmatmul.mubr.bf16.gmra.mrb[0].mxu0 %v4192
        %v6547 = vpop.f32.mrb[0].mxu0
        %v6548 = vadd.f32 %v4979, %v6547
        %v6549 = vpop.f32.mrb[0].mxu0
        %v6550 = vpop.f32.mrb[0].mxu0
        %v6551 = vadd.f32 %v4982, %v6550
        %v6552 = vpop.f32.mrb[0].mxu0
        %6553 = vmatprep.mubr.bf16.mxu0 0
        %6554 = vmatmul.mubr.bf16.gmra.mrb[0].mxu0 %v4195
        %v6555 = vpop.f32.mrb[0].mxu0
        %v6556 = vadd.f32 %v4987, %v6555
        %v6557 = vpop.f32.mrb[0].mxu0
        %v6558 = vpop.f32.mrb[0].mxu0
        %v6559 = vadd.f32 %v4990, %v6558
        %v6560 = vpop.f32.mrb[0].mxu0
        %6561 = vmatprep.mubr.bf16.mxu0 0
        %6562 = vmatmul.mubr.bf16.gmra.mrb[0].mxu0 %v4198
        %v6563 = vpop.f32.mrb[0].mxu0
        %v6564 = vadd.f32 %v4995, %v6563
        %v6565 = vpop.f32.mrb[0].mxu0
        %v6566 = vpop.f32.mrb[0].mxu0
        %v6567 = vadd.f32 %v4998, %v6566
        %v6568 = vpop.f32.mrb[0].mxu0
        %6569 = vmatprep.mubr.bf16.mxu0 0
        %6570 = vmatmul.mubr.bf16.gmra.mrb[0].mxu0 %v4201
        %v6571 = vpop.f32.mrb[0].mxu0
        %v6572 = vadd.f32 %v5003, %v6571
        %v6573 = vpop.f32.mrb[0].mxu0
        %v6574 = vpop.f32.mrb[0].mxu0
        %v6575 = vadd.f32 %v5006, %v6574
        %v6576 = vpop.f32.mrb[0].mxu0
        %6577 = vmatprep.mubr.bf16.mxu0 0
        %6578 = vmatmul.mubr.bf16.gmra.mrb[0].mxu0 %v4204
        %v6579 = vpop.f32.mrb[0].mxu0
        %v6580 = vadd.f32 %v5011, %v6579
        %v6581 = vpop.f32.mrb[0].mxu0
        %v6582 = vpop.f32.mrb[0].mxu0
        %v6583 = vadd.f32 %v5014, %v6582
        %v6584 = vpop.f32.mrb[0].mxu0
        %6585 = vmatprep.mubr.bf16.mxu0 0
        %6586 = vmatmul.mubr.bf16.gmra.mrb[0].mxu0 %v4207
        %v6587 = vpop.f32.mrb[0].mxu0
        %v6588 = vadd.f32 %v5019, %v6587
        %v6589 = vpop.f32.mrb[0].mxu0
        %v6590 = vpop.f32.mrb[0].mxu0
        %v6591 = vadd.f32 %v5022, %v6590
        %v6592 = vpop.f32.mrb[0].mxu0
        %6593 = vmatprep.mubr.bf16.mxu0 0
        %6594 = vmatmul.mubr.bf16.gmra.mrb[0].mxu0 %v4210
        %v6595 = vpop.f32.mrb[0].mxu0
        %v6596 = vadd.f32 %v5027, %v6595
        %v6597 = vpop.f32.mrb[0].mxu0
        %v6598 = vpop.f32.mrb[0].mxu0
        %v6599 = vadd.f32 %v5030, %v6598
        %v6600 = vpop.f32.mrb[0].mxu0
        %6601 = vmatprep.mubr.bf16.mxu0 0
        %6602 = vmatmul.mubr.bf16.gmra.mrb[0].mxu0 %v4213
        %v6603 = vpop.f32.mrb[0].mxu0
        %v6604 = vadd.f32 %v5035, %v6603
        %v6605 = vpop.f32.mrb[0].mxu0
        %v6606 = vpop.f32.mrb[0].mxu0
        %v6607 = vadd.f32 %v5038, %v6606
        %v6608 = vpop.f32.mrb[0].mxu0
        %6609 = vmatprep.mubr.bf16.mxu0 0
        %6610 = vmatmul.mubr.bf16.gmra.mrb[0].mxu0 %v4216
        %v6611 = vpop.f32.mrb[0].mxu0
        %v6612 = vadd.f32 %v5043, %v6611
        %v6613 = vpop.f32.mrb[0].mxu0
        %v6614 = vpop.f32.mrb[0].mxu0
        %v6615 = vadd.f32 %v5046, %v6614
        %v6616 = vpop.f32.mrb[0].mxu0
        %6617 = vmatprep.mubr.bf16.mxu0 0
        %6618 = vmatmul.mubr.bf16.gmra.mrb[0].mxu0 %v4219
        %v6619 = vpop.f32.mrb[0].mxu0
        %v6620 = vadd.f32 %v5051, %v6619
        %v6621 = vpop.f32.mrb[0].mxu0
        %v6622 = vpop.f32.mrb[0].mxu0
        %v6623 = vadd.f32 %v5054, %v6622
        %v6624 = vpop.f32.mrb[0].mxu0
        %6625 = vmatprep.mubr.bf16.mxu0 0
        %6626 = vmatmul.mubr.bf16.gmra.mrb[0].mxu0 %v4222
        %v6627 = vpop.f32.mrb[0].mxu0
        %v6628 = vadd.f32 %v5059, %v6627
        %v6629 = vpop.f32.mrb[0].mxu0
        %v6630 = vpop.f32.mrb[0].mxu0
        %v6631 = vadd.f32 %v5062, %v6630
        %v6632 = vpop.f32.mrb[0].mxu0
        %6633 = vmatprep.mubr.bf16.mxu0 0
        %6634 = vmatmul.mubr.bf16.gmra.mrb[0].mxu0 %v4225
        %v6635 = vpop.f32.mrb[0].mxu0
        %v6636 = vadd.f32 %v5067, %v6635
        %v6637 = vpop.f32.mrb[0].mxu0
        %v6638 = vpop.f32.mrb[0].mxu0
        %v6639 = vadd.f32 %v5070, %v6638
        %v6640 = vpop.f32.mrb[0].mxu0
        %6641 = vmatprep.mubr.bf16.mxu0 0
        %6642 = vmatmul.mubr.bf16.gmra.mrb[0].mxu0 %v4228
        %v6643 = vpop.f32.mrb[0].mxu0
        %v6644 = vadd.f32 %v5075, %v6643
        %v6645 = vpop.f32.mrb[0].mxu0
        %v6646 = vpop.f32.mrb[0].mxu0
        %v6647 = vadd.f32 %v5078, %v6646
        %v6648 = vpop.f32.mrb[0].mxu0
        %6649 = vmatprep.mubr.bf16.mxu0 0
        %6650 = vmatmul.mubr.bf16.gmra.mrb[0].mxu0 %v4231
        %v6651 = vpop.f32.mrb[0].mxu0
        %v6652 = vadd.f32 %v5083, %v6651
        %v6653 = vpop.f32.mrb[0].mxu0
        %v6654 = vpop.f32.mrb[0].mxu0
        %v6655 = vadd.f32 %v5086, %v6654
        %v6656 = vpop.f32.mrb[0].mxu0
        %6657 = vmatprep.mubr.bf16.mxu0 0
        %6658 = vmatmul.mubr.bf16.gmra.mrb[0].mxu0 %v4234
        %v6659 = vpop.f32.mrb[0].mxu0
        %v6660 = vadd.f32 %v5091, %v6659
        %v6661 = vpop.f32.mrb[0].mxu0
        %v6662 = vpop.f32.mrb[0].mxu0
        %v6663 = vadd.f32 %v5094, %v6662
        %v6664 = vpop.f32.mrb[0].mxu0
        %6665 = vmatprep.mubr.bf16.mxu0 0
        %6666 = vmatmul.mubr.bf16.gmra.mrb[0].mxu0 %v4237
        %v6667 = vpop.f32.mrb[0].mxu0
        %v6668 = vadd.f32 %v5099, %v6667
        %v6669 = vpop.f32.mrb[0].mxu0
        %v6670 = vpop.f32.mrb[0].mxu0
        %v6671 = vadd.f32 %v5102, %v6670
        %v6672 = vpop.f32.mrb[0].mxu0
        %6673 = vmatprep.mubr.bf16.mxu0 0
        %6674 = vmatmul.mubr.bf16.gmra.mrb[0].mxu0 %v4240
        %v6675 = vpop.f32.mrb[0].mxu0
        %v6676 = vadd.f32 %v5107, %v6675
        %v6677 = vpop.f32.mrb[0].mxu0
        %v6678 = vpop.f32.mrb[0].mxu0
        %v6679 = vadd.f32 %v5110, %v6678
        %v6680 = vpop.f32.mrb[0].mxu0
        %6681 = vmatprep.mubr.bf16.mxu0 0
        %6682 = vmatmul.mubr.bf16.gmra.mrb[0].mxu0 %v4243
        %v6683 = vpop.f32.mrb[0].mxu0
        %v6684 = vadd.f32 %v5115, %v6683
        %v6685 = vpop.f32.mrb[0].mxu0
        %v6686 = vpop.f32.mrb[0].mxu0
        %v6687 = vadd.f32 %v5118, %v6686
        %v6688 = vpop.f32.mrb[0].mxu0
        %6689 = vmatprep.mubr.bf16.mxu0 0
        %6690 = vmatmul.mubr.bf16.gmra.mrb[0].mxu0 %v4246
        %v6691 = vpop.f32.mrb[0].mxu0
        %v6692 = vadd.f32 %v5123, %v6691
        %v6693 = vpop.f32.mrb[0].mxu0
        %v6694 = vpop.f32.mrb[0].mxu0
        %v6695 = vadd.f32 %v5126, %v6694
        %v6696 = vpop.f32.mrb[0].mxu0
        %6697 = vmatprep.mubr.bf16.mxu0 0
        %6698 = vmatmul.mubr.bf16.gmra.mrb[0].mxu0 %v4249
        %v6699 = vpop.f32.mrb[0].mxu0
        %v6700 = vadd.f32 %v5131, %v6699
        %v6701 = vpop.f32.mrb[0].mxu0
        %v6702 = vpop.f32.mrb[0].mxu0
        %v6703 = vadd.f32 %v5134, %v6702
        %v6704 = vpop.f32.mrb[0].mxu0
        %6705 = vmatprep.mubr.bf16.mxu0 0
        %6706 = vmatmul.mubr.bf16.gmra.mrb[0].mxu0 %v4252
        %v6707 = vpop.f32.mrb[0].mxu0
        %v6708 = vadd.f32 %v5139, %v6707
        %v6709 = vpop.f32.mrb[0].mxu0
        %v6710 = vpop.f32.mrb[0].mxu0
        %v6711 = vadd.f32 %v5142, %v6710
        %v6712 = vpop.f32.mrb[0].mxu0
        %6713 = vmatprep.mubr.bf16.mxu0 0
        %6714 = vmatmul.mubr.bf16.gmra.mrb[0].mxu0 %v4255
        %v6715 = vpop.f32.mrb[0].mxu0
        %v6716 = vadd.f32 %v5147, %v6715
        %v6717 = vpop.f32.mrb[0].mxu0
        %v6718 = vpop.f32.mrb[0].mxu0
        %v6719 = vadd.f32 %v5150, %v6718
        %v6720 = vpop.f32.mrb[0].mxu0
        %6721 = vmatprep.mubr.bf16.mxu0 0
        %6722 = vmatmul.mubr.bf16.gmra.mrb[0].mxu0 %v4258
        %v6723 = vpop.f32.mrb[0].mxu0
        %v6724 = vadd.f32 %v5155, %v6723
        %v6725 = vpop.f32.mrb[0].mxu0
        %v6726 = vpop.f32.mrb[0].mxu0
        %v6727 = vadd.f32 %v5158, %v6726
        %v6728 = vpop.f32.mrb[0].mxu0
        %6729 = vmatprep.mubr.bf16.mxu0 0
        %6730 = vmatmul.mubr.bf16.gmra.mrb[0].mxu0 %v4261
        %v6731 = vpop.f32.mrb[0].mxu0
        %v6732 = vadd.f32 %v5163, %v6731
        %v6733 = vpop.f32.mrb[0].mxu0
        %v6734 = vpop.f32.mrb[0].mxu0
        %v6735 = vadd.f32 %v5166, %v6734
        %v6736 = vpop.f32.mrb[0].mxu0
        %6737 = vmatprep.mubr.bf16.mxu0 0
        %6738 = vmatmul.mubr.bf16.gmra.mrb[0].mxu0 %v4264
        %v6739 = vpop.f32.mrb[0].mxu0
        %v6740 = vadd.f32 %v5171, %v6739
        %v6741 = vpop.f32.mrb[0].mxu0
        %v6742 = vpop.f32.mrb[0].mxu0
        %v6743 = vadd.f32 %v5174, %v6742
        %v6744 = vpop.f32.mrb[0].mxu0
        %6745 = vmatprep.mubr.bf16.mxu0 0
        %6746 = vmatmul.mubr.bf16.gmra.mrb[0].mxu0 %v4267
        %v6747 = vpop.f32.mrb[0].mxu0
        %v6748 = vadd.f32 %v5179, %v6747
        %v6749 = vpop.f32.mrb[0].mxu0
        %v6750 = vpop.f32.mrb[0].mxu0
        %v6751 = vadd.f32 %v5182, %v6750
        %v6752 = vpop.f32.mrb[0].mxu0
        %6753 = vmatprep.mubr.bf16.mxu0 0
        %6754 = vmatmul.mubr.bf16.gmra.mrb[0].mxu0 %v4270
        %v6755 = vpop.f32.mrb[0].mxu0
        %v6756 = vadd.f32 %v5187, %v6755
        %v6757 = vpop.f32.mrb[0].mxu0
        %v6758 = vpop.f32.mrb[0].mxu0
        %v6759 = vadd.f32 %v5190, %v6758
        %v6760 = vpop.f32.mrb[0].mxu0
        %6761 = vmatprep.mubr.bf16.mxu0 0
        %6762 = vmatmul.mubr.bf16.gmra.mrb[0].mxu0 %v4273
        %v6763 = vpop.f32.mrb[0].mxu0
        %v6764 = vadd.f32 %v5195, %v6763
        %v6765 = vpop.f32.mrb[0].mxu0
        %v6766 = vpop.f32.mrb[0].mxu0
        %v6767 = vadd.f32 %v5198, %v6766
        %v6768 = vpop.f32.mrb[0].mxu0
        %6769 = vmatprep.mubr.bf16.mxu0 0
        %6770 = vmatmul.mubr.bf16.gmra.mrb[0].mxu0 %v4276
        %v6771 = vpop.f32.mrb[0].mxu0
        %v6772 = vadd.f32 %v5203, %v6771
        %v6773 = vpop.f32.mrb[0].mxu0
        %v6774 = vpop.f32.mrb[0].mxu0
        %v6775 = vadd.f32 %v5206, %v6774
        %v6776 = vpop.f32.mrb[0].mxu0
        %6777 = vmatprep.mubr.bf16.mxu0 0
        %6778 = vmatmul.mubr.bf16.gmra.mrb[0].mxu0 %v4279
        %v6779 = vpop.f32.mrb[0].mxu0
        %v6780 = vadd.f32 %v5211, %v6779
        %v6781 = vpop.f32.mrb[0].mxu0
        %v6782 = vpop.f32.mrb[0].mxu0
        %v6783 = vadd.f32 %v5214, %v6782
        %v6784 = vpop.f32.mrb[0].mxu0
        %6785 = vmatprep.mubr.bf16.mxu0 0
        %6786 = vmatmul.mubr.bf16.gmra.mrb[0].mxu0 %v4282
        %v6787 = vpop.f32.mrb[0].mxu0
        %v6788 = vadd.f32 %v5219, %v6787
        %v6789 = vpop.f32.mrb[0].mxu0
        %v6790 = vpop.f32.mrb[0].mxu0
        %v6791 = vadd.f32 %v5222, %v6790
        %v6792 = vpop.f32.mrb[0].mxu0
        %6793 = vmatprep.mubr.bf16.mxu0 0
        %6794 = vmatmul.mubr.bf16.gmra.mrb[0].mxu0 %v4285
        %v6795 = vpop.f32.mrb[0].mxu0
        %v6796 = vadd.f32 %v5227, %v6795
        %v6797 = vpop.f32.mrb[0].mxu0
        %v6798 = vpop.f32.mrb[0].mxu0
        %v6799 = vadd.f32 %v5230, %v6798
        %v6800 = vpop.f32.mrb[0].mxu0
        %6801 = vmatprep.mubr.bf16.mxu0 0
        %6802 = vmatmul.mubr.bf16.gmra.mrb[0].mxu0 %v4288
        %v6803 = vpop.f32.mrb[0].mxu0
        %v6804 = vadd.f32 %v5235, %v6803
        %v6805 = vpop.f32.mrb[0].mxu0
        %v6806 = vpop.f32.mrb[0].mxu0
        %v6807 = vadd.f32 %v5238, %v6806
        %v6808 = vpop.f32.mrb[0].mxu0
        %6809 = vmatprep.mubr.bf16.mxu0 0
        %6810 = vmatmul.mubr.bf16.gmra.mrb[0].mxu0 %v4291
        %v6811 = vpop.f32.mrb[0].mxu0
        %v6812 = vadd.f32 %v5243, %v6811
        %v6813 = vpop.f32.mrb[0].mxu0
        %v6814 = vpop.f32.mrb[0].mxu0
        %v6815 = vadd.f32 %v5246, %v6814
        %v6816 = vpop.f32.mrb[0].mxu0
        %6817 = vmatprep.mubr.bf16.mxu0 0
        %6818 = vmatmul.mubr.bf16.gmra.mrb[0].mxu0 %v4294
        %v6819 = vpop.f32.mrb[0].mxu0
        %v6820 = vadd.f32 %v5251, %v6819
        %v6821 = vpop.f32.mrb[0].mxu0
        %v6822 = vpop.f32.mrb[0].mxu0
        %v6823 = vadd.f32 %v5254, %v6822
        %v6824 = vpop.f32.mrb[0].mxu0
        %6825 = vmatprep.mubr.bf16.mxu0 0
        %6826 = vmatmul.mubr.bf16.gmra.mrb[0].mxu0 %v4297
        %v6827 = vpop.f32.mrb[0].mxu0
        %v6828 = vadd.f32 %v5259, %v6827
        %v6829 = vpop.f32.mrb[0].mxu0
        %v6830 = vpop.f32.mrb[0].mxu0
        %v6831 = vadd.f32 %v5262, %v6830
        %v6832 = vpop.f32.mrb[0].mxu0
        %6833 = vmatprep.mubr.bf16.mxu0 0
        %6834 = vmatmul.mubr.bf16.gmra.mrb[0].mxu0 %v4300
        %v6835 = vpop.f32.mrb[0].mxu0
        %v6836 = vadd.f32 %v5267, %v6835
        %v6837 = vpop.f32.mrb[0].mxu0
        %v6838 = vpop.f32.mrb[0].mxu0
        %v6839 = vadd.f32 %v5270, %v6838
        %v6840 = vpop.f32.mrb[0].mxu0
        %6841 = vmatprep.mubr.bf16.mxu0 0
        %6842 = vmatmul.mubr.bf16.gmra.mrb[0].mxu0 %v4303
        %v6843 = vpop.f32.mrb[0].mxu0
        %v6844 = vadd.f32 %v5275, %v6843
        %v6845 = vpop.f32.mrb[0].mxu0
        %v6846 = vpop.f32.mrb[0].mxu0
        %v6847 = vadd.f32 %v5278, %v6846
        %v6848 = vpop.f32.mrb[0].mxu0
        %6849 = vmatprep.mubr.bf16.mxu0 0
        %6850 = vmatmul.mubr.bf16.gmra.mrb[0].mxu0 %v4306
        %v6851 = vpop.f32.mrb[0].mxu0
        %v6852 = vadd.f32 %v5283, %v6851
        %v6853 = vpop.f32.mrb[0].mxu0
        %v6854 = vpop.f32.mrb[0].mxu0
        %v6855 = vadd.f32 %v5286, %v6854
        %v6856 = vpop.f32.mrb[0].mxu0
        %6857 = vmatprep.mubr.bf16.mxu0 0
        %6858 = vmatmul.mubr.bf16.gmra.mrb[0].mxu0 %v4309
        %v6859 = vpop.f32.mrb[0].mxu0
        %v6860 = vadd.f32 %v5291, %v6859
        %v6861 = vpop.f32.mrb[0].mxu0
        %v6862 = vpop.f32.mrb[0].mxu0
        %v6863 = vadd.f32 %v5294, %v6862
        %v6864 = vpop.f32.mrb[0].mxu0
        %6865 = vmatprep.mubr.bf16.mxu0 0
        %6866 = vmatmul.mubr.bf16.gmra.mrb[0].mxu0 %v4312
        %v6867 = vpop.f32.mrb[0].mxu0
        %v6868 = vadd.f32 %v5299, %v6867
        %v6869 = vpop.f32.mrb[0].mxu0
        %v6870 = vpop.f32.mrb[0].mxu0
        %v6871 = vadd.f32 %v5302, %v6870
        %v6872 = vpop.f32.mrb[0].mxu0
        %6873 = vmatprep.mubr.bf16.mxu0 0
        %6874 = vmatmul.mubr.bf16.gmra.mrb[0].mxu0 %v4315
        %v6875 = vpop.f32.mrb[0].mxu0
        %v6876 = vadd.f32 %v5307, %v6875
        %v6877 = vpop.f32.mrb[0].mxu0
        %v6878 = vpop.f32.mrb[0].mxu0
        %v6879 = vadd.f32 %v5310, %v6878
        %v6880 = vpop.f32.mrb[0].mxu0
        %6881 = vmatprep.mubr.bf16.mxu0 0
        %6882 = vmatmul.mubr.bf16.gmra.mrb[0].mxu0 %v4318
        %v6883 = vpop.f32.mrb[0].mxu0
        %v6884 = vadd.f32 %v5315, %v6883
        %v6885 = vpop.f32.mrb[0].mxu0
        %v6886 = vpop.f32.mrb[0].mxu0
        %v6887 = vadd.f32 %v5318, %v6886
        %v6888 = vpop.f32.mrb[0].mxu0
        %6889 = vmatprep.mubr.bf16.mxu0 0
        %6890 = vmatmul.mubr.bf16.gmra.mrb[0].mxu0 %v4321
        %v6891 = vpop.f32.mrb[0].mxu0
        %v6892 = vadd.f32 %v5323, %v6891
        %v6893 = vpop.f32.mrb[0].mxu0
        %v6894 = vpop.f32.mrb[0].mxu0
        %v6895 = vadd.f32 %v5326, %v6894
        %v6896 = vpop.f32.mrb[0].mxu0
        %6897 = vmatprep.mubr.bf16.mxu0 0
        %6898 = vmatmul.mubr.bf16.gmra.mrb[0].mxu0 %v4324
        %v6899 = vpop.f32.mrb[0].mxu0
        %v6900 = vadd.f32 %v5331, %v6899
        %v6901 = vpop.f32.mrb[0].mxu0
        %v6902 = vpop.f32.mrb[0].mxu0
        %v6903 = vadd.f32 %v5334, %v6902
        %v6904 = vpop.f32.mrb[0].mxu0
        %6905 = vmatprep.mubr.bf16.mxu0 0
        %6906 = vmatmul.mubr.bf16.gmra.mrb[0].mxu0 %v4327
        %v6907 = vpop.f32.mrb[0].mxu0
        %v6908 = vadd.f32 %v5339, %v6907
        %v6909 = vpop.f32.mrb[0].mxu0
        %v6910 = vpop.f32.mrb[0].mxu0
        %v6911 = vadd.f32 %v5342, %v6910
        %v6912 = vpop.f32.mrb[0].mxu0
        %6913 = vmatprep.mubr.bf16.mxu0 0
        %6914 = vmatmul.mubr.bf16.gmra.mrb[0].mxu0 %v4330
        %v6915 = vpop.f32.mrb[0].mxu0
        %v6916 = vadd.f32 %v5347, %v6915
        %v6917 = vpop.f32.mrb[0].mxu0
        %v6918 = vpop.f32.mrb[0].mxu0
        %v6919 = vadd.f32 %v5350, %v6918
        %v6920 = vpop.f32.mrb[0].mxu0
        %6921 = vmatprep.mubr.bf16.mxu0 0
        %6922 = vmatmul.mubr.bf16.gmra.mrb[0].mxu0 %v4333
        %v6923 = vpop.f32.mrb[0].mxu0
        %v6924 = vadd.f32 %v5355, %v6923
        %v6925 = vpop.f32.mrb[0].mxu0
        %v6926 = vpop.f32.mrb[0].mxu0
        %v6927 = vadd.f32 %v5358, %v6926
        %v6928 = vpop.f32.mrb[0].mxu0
        %6929 = vmatprep.mubr.bf16.mxu0 0
        %6930 = vmatmul.mubr.bf16.gmra.mrb[0].mxu0 %v4336
        %v6931 = vpop.f32.mrb[0].mxu0
        %v6932 = vadd.f32 %v5363, %v6931
        %v6933 = vpop.f32.mrb[0].mxu0
        %v6934 = vpop.f32.mrb[0].mxu0
        %v6935 = vadd.f32 %v5366, %v6934
        %v6936 = vpop.f32.mrb[0].mxu0
        %6937 = vmatprep.mubr.bf16.mxu0 0
        %6938 = vmatmul.mubr.bf16.gmra.mrb[0].mxu0 %v4339
        %v6939 = vpop.f32.mrb[0].mxu0
        %v6940 = vadd.f32 %v5371, %v6939
        %v6941 = vpop.f32.mrb[0].mxu0
        %v6942 = vpop.f32.mrb[0].mxu0
        %v6943 = vadd.f32 %v5374, %v6942
        %v6944 = vpop.f32.mrb[0].mxu0
        %6945 = vmatprep.mubr.bf16.mxu0 0
        %6946 = vmatmul.mubr.bf16.gmra.mrb[0].mxu0 %v4342
        %v6947 = vpop.f32.mrb[0].mxu0
        %v6948 = vadd.f32 %v5379, %v6947
        %v6949 = vpop.f32.mrb[0].mxu0
        %v6950 = vpop.f32.mrb[0].mxu0
        %v6951 = vadd.f32 %v5382, %v6950
        %v6952 = vpop.f32.mrb[0].mxu0
        %6953 = vmatprep.mubr.bf16.mxu0 0
        %6954 = vmatmul.mubr.bf16.gmra.mrb[0].mxu0 %v4345
        %v6955 = vpop.f32.mrb[0].mxu0
        %v6956 = vadd.f32 %v5387, %v6955
        %v6957 = vpop.f32.mrb[0].mxu0
        %v6958 = vpop.f32.mrb[0].mxu0
        %v6959 = vadd.f32 %v5390, %v6958
        %v6960 = vpop.f32.mrb[0].mxu0
        %6961 = vmatprep.mubr.bf16.mxu0 0
        %6962 = vmatmul.mubr.bf16.gmra.mrb[0].mxu0 %v4348
        %v6963 = vpop.f32.mrb[0].mxu0
        %v6964 = vadd.f32 %v5395, %v6963
        %v6965 = vpop.f32.mrb[0].mxu0
        %v6966 = vpop.f32.mrb[0].mxu0
        %v6967 = vadd.f32 %v5398, %v6966
        %v6968 = vpop.f32.mrb[0].mxu0
        %6969 = vmatprep.mubr.bf16.mxu0 0
        %6970 = vmatmul.mubr.bf16.gmra.mrb[0].mxu0 %v4351
        %v6971 = vpop.f32.mrb[0].mxu0
        %v6972 = vadd.f32 %v5403, %v6971
        %v6973 = vpop.f32.mrb[0].mxu0
        %v6974 = vpop.f32.mrb[0].mxu0
        %v6975 = vadd.f32 %v5406, %v6974
        %v6976 = vpop.f32.mrb[0].mxu0
        %6977 = vmatprep.mubr.bf16.mxu0 0
        %6978 = vmatmul.mubr.bf16.gmra.mrb[0].mxu0 %v4354
        %v6979 = vpop.f32.mrb[0].mxu0
        %v6980 = vadd.f32 %v5411, %v6979
        %v6981 = vpop.f32.mrb[0].mxu0
        %v6982 = vpop.f32.mrb[0].mxu0
        %v6983 = vadd.f32 %v5414, %v6982
        %v6984 = vpop.f32.mrb[0].mxu0
        %6985 = vmatprep.mubr.bf16.mxu0 0
        %6986 = vmatmul.mubr.bf16.gmra.mrb[0].mxu0 %v4357
        %v6987 = vpop.f32.mrb[0].mxu0
        %v6988 = vadd.f32 %v5419, %v6987
        %v6989 = vpop.f32.mrb[0].mxu0
        %v6990 = vpop.f32.mrb[0].mxu0
        %v6991 = vadd.f32 %v5422, %v6990
        %v6992 = vpop.f32.mrb[0].mxu0
        %6993 = vmatprep.mubr.bf16.mxu0 0
        %6994 = vmatmul.mubr.bf16.gmra.mrb[0].mxu0 %v4360
        %v6995 = vpop.f32.mrb[0].mxu0
        %v6996 = vadd.f32 %v5427, %v6995
        %v6997 = vpop.f32.mrb[0].mxu0
        %v6998 = vpop.f32.mrb[0].mxu0
        %v6999 = vadd.f32 %v5430, %v6998
        %v7000 = vpop.f32.mrb[0].mxu0
        %7001 = vmatprep.mubr.bf16.mxu0 0
        %7002 = vmatmul.mubr.bf16.gmra.mrb[0].mxu0 %v4363
        %v7003 = vpop.f32.mrb[0].mxu0
        %v7004 = vadd.f32 %v5435, %v7003
        %v7005 = vpop.f32.mrb[0].mxu0
        %v7006 = vpop.f32.mrb[0].mxu0
        %v7007 = vadd.f32 %v5438, %v7006
        %v7008 = vpop.f32.mrb[0].mxu0
        %7009 = vmatprep.mubr.bf16.mxu0 0
        %7010 = vmatmul.mubr.bf16.gmra.mrb[0].mxu0 %v4366
        %v7011 = vpop.f32.mrb[0].mxu0
        %v7012 = vadd.f32 %v5443, %v7011
        %v7013 = vpop.f32.mrb[0].mxu0
        %v7014 = vpop.f32.mrb[0].mxu0
        %v7015 = vadd.f32 %v5446, %v7014
        %v7016 = vpop.f32.mrb[0].mxu0
        %7017 = vmatprep.mubr.bf16.mxu0 0
        %7018 = vmatmul.mubr.bf16.gmra.mrb[0].mxu0 %v4369
        %v7019 = vpop.f32.mrb[0].mxu0
        %v7020 = vadd.f32 %v5451, %v7019
        %v7021 = vpop.f32.mrb[0].mxu0
        %v7022 = vpop.f32.mrb[0].mxu0
        %v7023 = vadd.f32 %v5454, %v7022
        %v7024 = vpop.f32.mrb[0].mxu0
        %7025 = vmatprep.mubr.bf16.mxu0 0
        %7026 = vmatmul.mubr.bf16.gmra.mrb[0].mxu0 %v4372
        %v7027 = vpop.f32.mrb[0].mxu0
        %v7028 = vadd.f32 %v5459, %v7027
        %v7029 = vpop.f32.mrb[0].mxu0
        %v7030 = vpop.f32.mrb[0].mxu0
        %v7031 = vadd.f32 %v5462, %v7030
        %v7032 = vpop.f32.mrb[0].mxu0
        %7033 = vmatprep.mubr.bf16.mxu0 0
        %7034 = vmatmul.mubr.bf16.gmra.mrb[0].mxu0 %v4375
        %v7035 = vpop.f32.mrb[0].mxu0
        %v7036 = vadd.f32 %v5467, %v7035
        %v7037 = vpop.f32.mrb[0].mxu0
        %v7038 = vpop.f32.mrb[0].mxu0
        %v7039 = vadd.f32 %v5470, %v7038
        %v7040 = vpop.f32.mrb[0].mxu0
        %7041 = vmatprep.mubr.bf16.mxu0 0
        %7042 = vmatmul.mubr.bf16.gmra.mrb[0].mxu0 %v4378
        %v7043 = vpop.f32.mrb[0].mxu0
        %v7044 = vadd.f32 %v5475, %v7043
        %v7045 = vpop.f32.mrb[0].mxu0
        %v7046 = vpop.f32.mrb[0].mxu0
        %v7047 = vadd.f32 %v5478, %v7046
        %v7048 = vpop.f32.mrb[0].mxu0
        %7049 = vmatprep.mubr.bf16.mxu0 0
        %7050 = vmatmul.mubr.bf16.gmra.mrb[0].mxu0 %v4381
        %v7051 = vpop.f32.mrb[0].mxu0
        %v7052 = vadd.f32 %v5483, %v7051
        %v7053 = vpop.f32.mrb[0].mxu0
        %v7054 = vpop.f32.mrb[0].mxu0
        %v7055 = vadd.f32 %v5486, %v7054
        %v7056 = vpop.f32.mrb[0].mxu0
        %7057 = vmatprep.mubr.bf16.mxu0 0
        %7058 = vmatmul.mubr.bf16.gmra.mrb[0].mxu0 %v4384
        %v7059 = vpop.f32.mrb[0].mxu0
        %v7060 = vadd.f32 %v5491, %v7059
        %v7061 = vpop.f32.mrb[0].mxu0
        %v7062 = vpop.f32.mrb[0].mxu0
        %v7063 = vadd.f32 %v5494, %v7062
        %v7064 = vpop.f32.mrb[0].mxu0
        %7065 = vmatprep.mubr.bf16.mxu0 0
        %7066 = vmatmul.mubr.bf16.gmra.mrb[0].mxu0 %v4387
        %v7067 = vpop.f32.mrb[0].mxu0
        %v7068 = vadd.f32 %v5499, %v7067
        %v7069 = vpop.f32.mrb[0].mxu0
        %v7070 = vpop.f32.mrb[0].mxu0
        %v7071 = vadd.f32 %v5502, %v7070
        %v7072 = vpop.f32.mrb[0].mxu0
        %7073 = vmatprep.mubr.bf16.mxu0 0
        %7074 = vmatmul.mubr.bf16.gmra.mrb[0].mxu0 %v4390
        %v7075 = vpop.f32.mrb[0].mxu0
        %v7076 = vadd.f32 %v5507, %v7075
        %v7077 = vpop.f32.mrb[0].mxu0
        %v7078 = vpop.f32.mrb[0].mxu0
        %v7079 = vadd.f32 %v5510, %v7078
        %v7080 = vpop.f32.mrb[0].mxu0
        %7081 = vmatprep.mubr.bf16.mxu0 0
        %7082 = vmatmul.mubr.bf16.gmra.mrb[0].mxu0 %v4393
        %v7083 = vpop.f32.mrb[0].mxu0
        %v7084 = vadd.f32 %v5515, %v7083
        %v7085 = vpop.f32.mrb[0].mxu0
        %v7086 = vpop.f32.mrb[0].mxu0
        %v7087 = vadd.f32 %v5518, %v7086
        %v7088 = vpop.f32.mrb[0].mxu0
        %7089 = vmatprep.mubr.bf16.mxu0 0
        %7090 = vmatmul.mubr.bf16.gmra.mrb[0].mxu0 %v4396
        %v7091 = vpop.f32.mrb[0].mxu0
        %v7092 = vadd.f32 %v5523, %v7091
        %v7093 = vpop.f32.mrb[0].mxu0
        %v7094 = vpop.f32.mrb[0].mxu0
        %v7095 = vadd.f32 %v5526, %v7094
        %v7096 = vpop.f32.mrb[0].mxu0
        %7097 = vmatprep.mubr.bf16.mxu0 0
        %7098 = vmatmul.mubr.bf16.gmra.mrb[0].mxu0 %v4399
        %v7099 = vpop.f32.mrb[0].mxu0
        %v7100 = vadd.f32 %v5531, %v7099
        %v7101 = vpop.f32.mrb[0].mxu0
        %v7102 = vpop.f32.mrb[0].mxu0
        %v7103 = vadd.f32 %v5534, %v7102
        %v7104 = vpop.f32.mrb[0].mxu0
        %7105 = vmatprep.mubr.bf16.mxu0 0
        %7106 = vmatmul.mubr.bf16.gmra.mrb[0].mxu0 %v4402
        %v7107 = vpop.f32.mrb[0].mxu0
        %v7108 = vadd.f32 %v5539, %v7107
        %v7109 = vpop.f32.mrb[0].mxu0
        %v7110 = vpop.f32.mrb[0].mxu0
        %v7111 = vadd.f32 %v5542, %v7110
        %v7112 = vpop.f32.mrb[0].mxu0
        %7113 = vmatprep.mubr.bf16.mxu0 0
        %7114 = vmatmul.mubr.bf16.gmra.mrb[0].mxu0 %v4405
        %v7115 = vpop.f32.mrb[0].mxu0
        %v7116 = vadd.f32 %v5547, %v7115
        %v7117 = vpop.f32.mrb[0].mxu0
        %v7118 = vpop.f32.mrb[0].mxu0
        %v7119 = vadd.f32 %v5550, %v7118
        %v7120 = vpop.f32.mrb[0].mxu0
        %7121 = vmatprep.mubr.bf16.mxu0 0
        %7122 = vmatmul.mubr.bf16.gmra.mrb[0].mxu0 %v4408
        %v7123 = vpop.f32.mrb[0].mxu0
        %v7124 = vadd.f32 %v5555, %v7123
        %v7125 = vpop.f32.mrb[0].mxu0
        %v7126 = vpop.f32.mrb[0].mxu0
        %v7127 = vadd.f32 %v5558, %v7126
        %v7128 = vpop.f32.mrb[0].mxu0
        %7129 = vmatprep.mubr.bf16.mxu0 0
        %7130 = vmatmul.mubr.bf16.gmra.mrb[0].mxu0 %v4411
        %v7131 = vpop.f32.mrb[0].mxu0
        %v7132 = vadd.f32 %v5563, %v7131
        %v7133 = vpop.f32.mrb[0].mxu0
        %v7134 = vpop.f32.mrb[0].mxu0
        %v7135 = vadd.f32 %v5566, %v7134
        %v7136 = vpop.f32.mrb[0].mxu0
        %7137 = vmatprep.mubr.bf16.mxu0 0
        %7138 = vmatmul.mubr.bf16.gmra.mrb[0].mxu0 %v4414
        %v7139 = vpop.f32.mrb[0].mxu0
        %v7140 = vadd.f32 %v5571, %v7139
        %v7141 = vpop.f32.mrb[0].mxu0
        %v7142 = vpop.f32.mrb[0].mxu0
        %v7143 = vadd.f32 %v5574, %v7142
        %v7144 = vpop.f32.mrb[0].mxu0
        %7145 = vmatprep.mubr.bf16.mxu0 0
        %7146 = vmatmul.mubr.bf16.gmra.mrb[0].mxu0 %v4417
        %v7147 = vpop.f32.mrb[0].mxu0
        %v7148 = vadd.f32 %v5579, %v7147
        %v7149 = vpop.f32.mrb[0].mxu0
        %v7150 = vpop.f32.mrb[0].mxu0
        %v7151 = vadd.f32 %v5582, %v7150
        %v7152 = vpop.f32.mrb[0].mxu0
        %7153 = vmatprep.mubr.bf16.mxu0 0
        %7154 = vmatmul.mubr.bf16.gmra.mrb[0].mxu0 %v4420
        %v7155 = vpop.f32.mrb[0].mxu0
        %v7156 = vadd.f32 %v5587, %v7155
        %v7157 = vpop.f32.mrb[0].mxu0
        %v7158 = vpop.f32.mrb[0].mxu0
        %v7159 = vadd.f32 %v5590, %v7158
        %v7160 = vpop.f32.mrb[0].mxu0
        %7161 = vmatprep.mubr.bf16.mxu0 0
        %7162 = vmatmul.mubr.bf16.gmra.mrb[0].mxu0 %v4423
        %v7163 = vpop.f32.mrb[0].mxu0
        %v7164 = vadd.f32 %v5595, %v7163
        %v7165 = vpop.f32.mrb[0].mxu0
        %v7166 = vpop.f32.mrb[0].mxu0
        %v7167 = vadd.f32 %v5598, %v7166
        %v7168 = vpop.f32.mrb[0].mxu0
        %7169 = vmatprep.mubr.bf16.mxu0 0
        %7170 = vmatmul.mubr.bf16.gmra.mrb[0].mxu0 %v4426
        %v7171 = vpop.f32.mrb[0].mxu0
        %v7172 = vadd.f32 %v5603, %v7171
        %v7173 = vpop.f32.mrb[0].mxu0
        %v7174 = vpop.f32.mrb[0].mxu0
        %v7175 = vadd.f32 %v5606, %v7174
        %v7176 = vpop.f32.mrb[0].mxu0
        %7177 = vmatprep.mubr.bf16.mxu0 0
        %7178 = vmatmul.mubr.bf16.gmra.mrb[0].mxu0 %v4429
        %v7179 = vpop.f32.mrb[0].mxu0
        %v7180 = vadd.f32 %v5611, %v7179
        %v7181 = vpop.f32.mrb[0].mxu0
        %v7182 = vpop.f32.mrb[0].mxu0
        %v7183 = vadd.f32 %v5614, %v7182
        %v7184 = vpop.f32.mrb[0].mxu0
        %7185 = vmatprep.mubr.bf16.mxu0 0
        %7186 = vmatmul.mubr.bf16.gmra.mrb[0].mxu0 %v4432
        %v7187 = vpop.f32.mrb[0].mxu0
        %v7188 = vadd.f32 %v5619, %v7187
        %v7189 = vpop.f32.mrb[0].mxu0
        %v7190 = vpop.f32.mrb[0].mxu0
        %v7191 = vadd.f32 %v5622, %v7190
        %v7192 = vpop.f32.mrb[0].mxu0
        %7193 = vmatprep.mubr.bf16.mxu0 0
        %7194 = vmatmul.mubr.bf16.gmra.mrb[0].mxu0 %v4435
        %v7195 = vpop.f32.mrb[0].mxu0
        %v7196 = vadd.f32 %v5627, %v7195
        %v7197 = vpop.f32.mrb[0].mxu0
        %v7198 = vpop.f32.mrb[0].mxu0
        %v7199 = vadd.f32 %v5630, %v7198
        %v7200 = vpop.f32.mrb[0].mxu0
        %7201 = vmatprep.mubr.bf16.mxu0 0
        %7202 = vmatmul.mubr.bf16.gmra.mrb[0].mxu0 %v4438
        %v7203 = vpop.f32.mrb[0].mxu0
        %v7204 = vadd.f32 %v5635, %v7203
        %v7205 = vpop.f32.mrb[0].mxu0
        %v7206 = vpop.f32.mrb[0].mxu0
        %v7207 = vadd.f32 %v5638, %v7206
        %v7208 = vpop.f32.mrb[0].mxu0
        %7209 = vmatprep.mubr.bf16.mxu0 0
        %7210 = vmatmul.mubr.bf16.gmra.mrb[0].mxu0 %v4441
        %v7211 = vpop.f32.mrb[0].mxu0
        %v7212 = vadd.f32 %v5643, %v7211
        %v7213 = vpop.f32.mrb[0].mxu0
        %v7214 = vpop.f32.mrb[0].mxu0
        %v7215 = vadd.f32 %v5646, %v7214
        %v7216 = vpop.f32.mrb[0].mxu0
        %7217 = vmatprep.mubr.bf16.mxu0 0
        %7218 = vmatmul.mubr.bf16.gmra.mrb[0].mxu0 %v4444
        %v7219 = vpop.f32.mrb[0].mxu0
        %v7220 = vadd.f32 %v5651, %v7219
        %v7221 = vpop.f32.mrb[0].mxu0
        %v7222 = vpop.f32.mrb[0].mxu0
        %v7223 = vadd.f32 %v5654, %v7222
        %v7224 = vpop.f32.mrb[0].mxu0
        %7225 = vmatprep.mubr.bf16.mxu0 0
        %7226 = vmatmul.mubr.bf16.gmra.mrb[0].mxu0 %v4447
        %v7227 = vpop.f32.mrb[0].mxu0
        %v7228 = vadd.f32 %v5659, %v7227
        %v7229 = vpop.f32.mrb[0].mxu0
        %v7230 = vpop.f32.mrb[0].mxu0
        %v7231 = vadd.f32 %v5662, %v7230
        %v7232 = vpop.f32.mrb[0].mxu0
        %7233 = vmatprep.mubr.bf16.mxu0 0
        %7234 = vmatmul.mubr.bf16.gmra.mrb[0].mxu0 %v4450
        %v7235 = vpop.f32.mrb[0].mxu0
        %v7236 = vadd.f32 %v5667, %v7235
        %v7237 = vpop.f32.mrb[0].mxu0
        %v7238 = vpop.f32.mrb[0].mxu0
        %v7239 = vadd.f32 %v5670, %v7238
        %v7240 = vpop.f32.mrb[0].mxu0
        %7241 = vmatprep.mubr.bf16.mxu0 0
        %7242 = vmatmul.mubr.bf16.gmra.mrb[0].mxu0 %v4453
        %v7243 = vpop.f32.mrb[0].mxu0
        %v7244 = vadd.f32 %v5675, %v7243
        %v7245 = vpop.f32.mrb[0].mxu0
        %v7246 = vpop.f32.mrb[0].mxu0
        %v7247 = vadd.f32 %v5678, %v7246
        %v7248 = vpop.f32.mrb[0].mxu0
        %7249 = vmatprep.mubr.bf16.mxu0 0
        %7250 = vmatmul.mubr.bf16.gmra.mrb[0].mxu0 %v4456
        %v7251 = vpop.f32.mrb[0].mxu0
        %v7252 = vadd.f32 %v5683, %v7251
        %v7253 = vpop.f32.mrb[0].mxu0
        %v7254 = vpop.f32.mrb[0].mxu0
        %v7255 = vadd.f32 %v5686, %v7254
        %v7256 = vpop.f32.mrb[0].mxu0
        %7257 = vmatprep.mubr.bf16.mxu0 0
        %7258 = vmatmul.mubr.bf16.gmra.mrb[0].mxu0 %v4459
        %v7259 = vpop.f32.mrb[0].mxu0
        %v7260 = vadd.f32 %v5691, %v7259
        %v7261 = vpop.f32.mrb[0].mxu0
        %v7262 = vpop.f32.mrb[0].mxu0
        %v7263 = vadd.f32 %v5694, %v7262
        %v7264 = vpop.f32.mrb[0].mxu0
        %7265 = vmatprep.mubr.bf16.mxu0 0
        %7266 = vmatmul.mubr.bf16.gmra.mrb[0].mxu0 %v4462
        %v7267 = vpop.f32.mrb[0].mxu0
        %v7268 = vadd.f32 %v5699, %v7267
        %v7269 = vpop.f32.mrb[0].mxu0
        %v7270 = vpop.f32.mrb[0].mxu0
        %v7271 = vadd.f32 %v5702, %v7270
        %v7272 = vpop.f32.mrb[0].mxu0
        %7273 = vmatprep.mubr.bf16.mxu0 0
        %7274 = vmatmul.mubr.bf16.gmra.mrb[0].mxu0 %v4465
        %v7275 = vpop.f32.mrb[0].mxu0
        %v7276 = vadd.f32 %v5707, %v7275
        %v7277 = vpop.f32.mrb[0].mxu0
        %v7278 = vpop.f32.mrb[0].mxu0
        %v7279 = vadd.f32 %v5710, %v7278
        %v7280 = vpop.f32.mrb[0].mxu0
        %7281 = vmatprep.mubr.bf16.mxu0 0
        %7282 = vmatmul.mubr.bf16.gmra.mrb[0].mxu0 %v4468
        %v7283 = vpop.f32.mrb[0].mxu0
        %v7284 = vadd.f32 %v5715, %v7283
        %v7285 = vpop.f32.mrb[0].mxu0
        %v7286 = vpop.f32.mrb[0].mxu0
        %v7287 = vadd.f32 %v5718, %v7286
        %v7288 = vpop.f32.mrb[0].mxu0
        %7289 = vmatprep.mubr.bf16.mxu0 0
        %7290 = vmatmul.mubr.bf16.gmra.mrb[0].mxu0 %v4471
        %v7291 = vpop.f32.mrb[0].mxu0
        %v7292 = vadd.f32 %v5723, %v7291
        %v7293 = vpop.f32.mrb[0].mxu0
        %v7294 = vpop.f32.mrb[0].mxu0
        %v7295 = vadd.f32 %v5726, %v7294
        %v7296 = vpop.f32.mrb[0].mxu0
        %7297 = vmatprep.mubr.bf16.mxu0 0
        %7298 = vmatmul.mubr.bf16.gmra.mrb[0].mxu0 %v4474
        %v7299 = vpop.f32.mrb[0].mxu0
        %v7300 = vadd.f32 %v5731, %v7299
        %v7301 = vpop.f32.mrb[0].mxu0
        %v7302 = vpop.f32.mrb[0].mxu0
        %v7303 = vadd.f32 %v5734, %v7302
        %v7304 = vpop.f32.mrb[0].mxu0
        %7305 = vmatprep.mubr.bf16.mxu0 0
        %7306 = vmatmul.mubr.bf16.gmra.mrb[0].mxu0 %v4477
        %v7307 = vpop.f32.mrb[0].mxu0
        %v7308 = vadd.f32 %v5739, %v7307
        %v7309 = vpop.f32.mrb[0].mxu0
        %v7310 = vpop.f32.mrb[0].mxu0
        %v7311 = vadd.f32 %v5742, %v7310
        %v7312 = vpop.f32.mrb[0].mxu0
        %7313 = vmatprep.mubr.bf16.mxu0 0
        %7314 = vmatmul.mubr.bf16.gmra.mrb[0].mxu0 %v4480
        %v7315 = vpop.f32.mrb[0].mxu0
        %v7316 = vadd.f32 %v5747, %v7315
        %v7317 = vpop.f32.mrb[0].mxu0
        %v7318 = vpop.f32.mrb[0].mxu0
        %v7319 = vadd.f32 %v5750, %v7318
        %v7320 = vpop.f32.mrb[0].mxu0
        %7321 = vmatprep.mubr.bf16.mxu0 0
        %7322 = vmatmul.mubr.bf16.gmra.mrb[0].mxu0 %v4483
        %v7323 = vpop.f32.mrb[0].mxu0
        %v7324 = vadd.f32 %v5755, %v7323
        %v7325 = vpop.f32.mrb[0].mxu0
        %v7326 = vpop.f32.mrb[0].mxu0
        %v7327 = vadd.f32 %v5758, %v7326
        %v7328 = vpop.f32.mrb[0].mxu0
        %7329 = vmatprep.mubr.bf16.mxu0 0
        %7330 = vmatmul.mubr.bf16.gmra.mrb[0].mxu0 %v4486
        %v7331 = vpop.f32.mrb[0].mxu0
        %v7332 = vadd.f32 %v5763, %v7331
        %v7333 = vpop.f32.mrb[0].mxu0
        %v7334 = vpop.f32.mrb[0].mxu0
        %v7335 = vadd.f32 %v5766, %v7334
        %v7336 = vpop.f32.mrb[0].mxu0
        %7337 = vmatprep.mubr.bf16.mxu0 0
        %7338 = vmatmul.mubr.bf16.gmra.mrb[0].mxu0 %v4489
        %v7339 = vpop.f32.mrb[0].mxu0
        %v7340 = vadd.f32 %v5771, %v7339
        %v7341 = vpop.f32.mrb[0].mxu0
        %v7342 = vpop.f32.mrb[0].mxu0
        %v7343 = vadd.f32 %v5774, %v7342
        %v7344 = vpop.f32.mrb[0].mxu0
        %7345 = vmatprep.mubr.bf16.mxu0 0
        %7346 = vmatmul.mubr.bf16.gmra.mrb[0].mxu0 %v4492
        %v7347 = vpop.f32.mrb[0].mxu0
        %v7348 = vadd.f32 %v5779, %v7347
        %v7349 = vpop.f32.mrb[0].mxu0
        %v7350 = vpop.f32.mrb[0].mxu0
        %v7351 = vadd.f32 %v5782, %v7350
        %v7352 = vpop.f32.mrb[0].mxu0
        %7353 = vmatprep.mubr.bf16.mxu0 0
        %7354 = vmatmul.mubr.bf16.gmra.mrb[0].mxu0 %v4495
        %v7355 = vpop.f32.mrb[0].mxu0
        %v7356 = vadd.f32 %v5787, %v7355
        %v7357 = vpop.f32.mrb[0].mxu0
        %v7358 = vpop.f32.mrb[0].mxu0
        %v7359 = vadd.f32 %v5790, %v7358
        %v7360 = vpop.f32.mrb[0].mxu0
        %7361 = vmatprep.mubr.bf16.mxu0 0
        %7362 = vmatmul.mubr.bf16.gmra.mrb[0].mxu0 %v4498
        %v7363 = vpop.f32.mrb[0].mxu0
        %v7364 = vadd.f32 %v5795, %v7363
        %v7365 = vpop.f32.mrb[0].mxu0
        %v7366 = vpop.f32.mrb[0].mxu0
        %v7367 = vadd.f32 %v5798, %v7366
        %v7368 = vpop.f32.mrb[0].mxu0
        %7369 = vmatprep.mubr.bf16.mxu0 0
        %7370 = vmatmul.mubr.bf16.gmra.mrb[0].mxu0 %v4501
        %v7371 = vpop.f32.mrb[0].mxu0
        %v7372 = vadd.f32 %v5803, %v7371
        %v7373 = vpop.f32.mrb[0].mxu0
        %v7374 = vpop.f32.mrb[0].mxu0
        %v7375 = vadd.f32 %v5806, %v7374
        %v7376 = vpop.f32.mrb[0].mxu0
        %7377 = vmatprep.mubr.bf16.mxu0 0
        %7378 = vmatmul.mubr.bf16.gmra.mrb[0].mxu0 %v4504
        %v7379 = vpop.f32.mrb[0].mxu0
        %v7380 = vadd.f32 %v5811, %v7379
        %v7381 = vpop.f32.mrb[0].mxu0
        %v7382 = vpop.f32.mrb[0].mxu0
        %v7383 = vadd.f32 %v5814, %v7382
        %v7384 = vpop.f32.mrb[0].mxu0
        %7385 = vmatprep.mubr.bf16.mxu0 0
        %7386 = vmatmul.mubr.bf16.gmra.mrb[0].mxu0 %v4507
        %v7387 = vpop.f32.mrb[0].mxu0
        %v7388 = vadd.f32 %v5819, %v7387
        %v7389 = vpop.f32.mrb[0].mxu0
        %v7390 = vpop.f32.mrb[0].mxu0
        %v7391 = vadd.f32 %v5822, %v7390
        %v7392 = vpop.f32.mrb[0].mxu0
        %7393 = vmatprep.mubr.bf16.mxu0 0
        %7394 = vmatmul.mubr.bf16.gmra.mrb[0].mxu0 %v4510
        %v7395 = vpop.f32.mrb[0].mxu0
        %v7396 = vadd.f32 %v5827, %v7395
        %v7397 = vpop.f32.mrb[0].mxu0
        %v7398 = vpop.f32.mrb[0].mxu0
        %v7399 = vadd.f32 %v5830, %v7398
        %v7400 = vpop.f32.mrb[0].mxu0
        %7401 = vmatprep.mubr.bf16.mxu0 0
        %7402 = vmatmul.mubr.bf16.gmra.mrb[0].mxu0 %v4513
        %v7403 = vpop.f32.mrb[0].mxu0
        %v7404 = vadd.f32 %v5835, %v7403
        %v7405 = vpop.f32.mrb[0].mxu0
        %v7406 = vpop.f32.mrb[0].mxu0
        %v7407 = vadd.f32 %v5838, %v7406
        %v7408 = vpop.f32.mrb[0].mxu0
        %7409 = vmatprep.mubr.bf16.mxu0 0
        %7410 = vmatmul.mubr.bf16.gmra.mrb[0].mxu0 %v4516
        %v7411 = vpop.f32.mrb[0].mxu0
        %v7412 = vadd.f32 %v5843, %v7411
        %v7413 = vpop.f32.mrb[0].mxu0
        %v7414 = vpop.f32.mrb[0].mxu0
        %v7415 = vadd.f32 %v5846, %v7414
        %v7416 = vpop.f32.mrb[0].mxu0
        %7417 = vmatprep.mubr.bf16.mxu0 0
        %7418 = vmatmul.mubr.bf16.gmra.mrb[0].mxu0 %v4519
        %v7419 = vpop.f32.mrb[0].mxu0
        %v7420 = vadd.f32 %v5851, %v7419
        %v7421 = vpop.f32.mrb[0].mxu0
        %v7422 = vpop.f32.mrb[0].mxu0
        %v7423 = vadd.f32 %v5854, %v7422
        %v7424 = vpop.f32.mrb[0].mxu0
        %7425 = vmatprep.mubr.bf16.mxu0 0
        %7426 = vmatmul.mubr.bf16.gmra.mrb[0].mxu0 %v4522
        %v7427 = vpop.f32.mrb[0].mxu0
        %v7428 = vadd.f32 %v5859, %v7427
        %v7429 = vpop.f32.mrb[0].mxu0
        %v7430 = vpop.f32.mrb[0].mxu0
        %v7431 = vadd.f32 %v5862, %v7430
        %v7432 = vpop.f32.mrb[0].mxu0
        %7433 = vmatprep.mubr.bf16.mxu0 0
        %7434 = vmatmul.mubr.bf16.gmra.mrb[0].mxu0 %v4525
        %v7435 = vpop.f32.mrb[0].mxu0
        %v7436 = vadd.f32 %v5867, %v7435
        %v7437 = vpop.f32.mrb[0].mxu0
        %v7438 = vpop.f32.mrb[0].mxu0
        %v7439 = vadd.f32 %v5870, %v7438
        %v7440 = vpop.f32.mrb[0].mxu0
        %7441 = vmatprep.mubr.bf16.mxu0 0
        %7442 = vmatmul.mubr.bf16.gmra.mrb[0].mxu0 %v4528
        %v7443 = vpop.f32.mrb[0].mxu0
        %v7444 = vadd.f32 %v5875, %v7443
        %v7445 = vpop.f32.mrb[0].mxu0
        %v7446 = vpop.f32.mrb[0].mxu0
        %v7447 = vadd.f32 %v5878, %v7446
        %v7448 = vpop.f32.mrb[0].mxu0
        %7449 = vmatprep.mubr.bf16.mxu0 0
        %7450 = vmatmul.mubr.bf16.gmra.mrb[0].mxu0 %v4531
        %v7451 = vpop.f32.mrb[0].mxu0
        %v7452 = vadd.f32 %v5883, %v7451
        %v7453 = vpop.f32.mrb[0].mxu0
        %v7454 = vpop.f32.mrb[0].mxu0
        %v7455 = vadd.f32 %v5886, %v7454
        %v7456 = vpop.f32.mrb[0].mxu0
        %7457 = vmatprep.mubr.bf16.mxu0 0
        %7458 = vmatmul.mubr.bf16.gmra.mrb[0].mxu0 %v4534
        %v7459 = vpop.f32.mrb[0].mxu0
        %v7460 = vadd.f32 %v5891, %v7459
        %v7461 = vpop.f32.mrb[0].mxu0
        %v7462 = vpop.f32.mrb[0].mxu0
        %v7463 = vadd.f32 %v5894, %v7462
        %v7464 = vpop.f32.mrb[0].mxu0
        %7465 = vmatprep.mubr.bf16.mxu0 0
        %7466 = vmatmul.mubr.bf16.gmra.mrb[0].mxu0 %v4537
        %v7467 = vpop.f32.mrb[0].mxu0
        %v7468 = vadd.f32 %v5899, %v7467
        %v7469 = vpop.f32.mrb[0].mxu0
        %v7470 = vpop.f32.mrb[0].mxu0
        %v7471 = vadd.f32 %v5902, %v7470
        %v7472 = vpop.f32.mrb[0].mxu0
        %7473 = vmatprep.mubr.bf16.mxu0 0
        %7474 = vmatmul.mubr.bf16.gmra.mrb[0].mxu0 %v4540
        %v7475 = vpop.f32.mrb[0].mxu0
        %v7476 = vadd.f32 %v5907, %v7475
        %v7477 = vpop.f32.mrb[0].mxu0
        %v7478 = vpop.f32.mrb[0].mxu0
        %v7479 = vadd.f32 %v5910, %v7478
        %v7480 = vpop.f32.mrb[0].mxu0
        %7481 = vmatprep.mubr.bf16.mxu0 0
        %7482 = vmatmul.mubr.bf16.gmra.mrb[0].mxu0 %v4543
        %v7483 = vpop.f32.mrb[0].mxu0
        %v7484 = vadd.f32 %v5915, %v7483
        %v7485 = vpop.f32.mrb[0].mxu0
        %v7486 = vpop.f32.mrb[0].mxu0
        %v7487 = vadd.f32 %v5918, %v7486
        %v7488 = vpop.f32.mrb[0].mxu0
        %7489 = vmatprep.mubr.bf16.mxu0 0
        %7490 = vmatmul.mubr.bf16.gmra.mrb[0].mxu0 %v4546
        %v7491 = vpop.f32.mrb[0].mxu0
        %v7492 = vadd.f32 %v5923, %v7491
        %v7493 = vpop.f32.mrb[0].mxu0
        %v7494 = vpop.f32.mrb[0].mxu0
        %v7495 = vadd.f32 %v5926, %v7494
        %v7496 = vpop.f32.mrb[0].mxu0
        %7497 = vmatprep.mubr.bf16.mxu0 0
        %7498 = vmatmul.mubr.bf16.gmra.mrb[0].mxu0 %v4549
        %v7499 = vpop.f32.mrb[0].mxu0
        %v7500 = vadd.f32 %v5931, %v7499
        %v7501 = vpop.f32.mrb[0].mxu0
        %v7502 = vpop.f32.mrb[0].mxu0
        %v7503 = vadd.f32 %v5934, %v7502
        %v7504 = vpop.f32.mrb[0].mxu0
        %7505 = vmatprep.mubr.bf16.mxu0 0
        %7506 = vmatmul.mubr.bf16.gmra.mrb[0].mxu0 %v4552
        %v7507 = vpop.f32.mrb[0].mxu0
        %v7508 = vadd.f32 %v5939, %v7507
        %v7509 = vpop.f32.mrb[0].mxu0
        %v7510 = vpop.f32.mrb[0].mxu0
        %v7511 = vadd.f32 %v5942, %v7510
        %v7512 = vpop.f32.mrb[0].mxu0
        %7513 = vmatprep.mubr.bf16.mxu0 0
        %7514 = vmatmul.mubr.bf16.gmra.mrb[0].mxu0 %v4555
        %v7515 = vpop.f32.mrb[0].mxu0
        %v7516 = vadd.f32 %v5947, %v7515
        %v7517 = vpop.f32.mrb[0].mxu0
        %v7518 = vpop.f32.mrb[0].mxu0
        %v7519 = vadd.f32 %v5950, %v7518
        %v7520 = vpop.f32.mrb[0].mxu0
        %7521 = vmatprep.mubr.bf16.mxu0 0
        %7522 = vmatmul.mubr.bf16.gmra.mrb[0].mxu0 %v4558
        %v7523 = vpop.f32.mrb[0].mxu0
        %v7524 = vadd.f32 %v5955, %v7523
        %v7525 = vpop.f32.mrb[0].mxu0
        %v7526 = vpop.f32.mrb[0].mxu0
        %v7527 = vadd.f32 %v5958, %v7526
        %v7528 = vpop.f32.mrb[0].mxu0
        %7529 = vmatprep.mubr.bf16.mxu0 0
        %7530 = vmatmul.mubr.bf16.gmra.mrb[0].mxu0 %v4561
        %v7531 = vpop.f32.mrb[0].mxu0
        %v7532 = vadd.f32 %v5963, %v7531
        %v7533 = vpop.f32.mrb[0].mxu0
        %v7534 = vpop.f32.mrb[0].mxu0
        %v7535 = vadd.f32 %v5966, %v7534
        %v7536 = vpop.f32.mrb[0].mxu0
        %7537 = vmatprep.mubr.bf16.mxu0 0
        %7538 = vmatmul.mubr.bf16.gmra.mrb[0].mxu0 %v4564
        %v7539 = vpop.f32.mrb[0].mxu0
        %v7540 = vadd.f32 %v5971, %v7539
        %v7541 = vpop.f32.mrb[0].mxu0
        %v7542 = vpop.f32.mrb[0].mxu0
        %v7543 = vadd.f32 %v5974, %v7542
        %v7544 = vpop.f32.mrb[0].mxu0
        %7545 = vmatprep.mubr.bf16.mxu0 0
        %7546 = vmatmul.mubr.bf16.gmra.mrb[0].mxu0 %v4567
        %v7547 = vpop.f32.mrb[0].mxu0
        %v7548 = vadd.f32 %v5979, %v7547
        %v7549 = vpop.f32.mrb[0].mxu0
        %v7550 = vpop.f32.mrb[0].mxu0
        %v7551 = vadd.f32 %v5982, %v7550
        %v7552 = vpop.f32.mrb[0].mxu0
        %7553 = vmatprep.mubr.bf16.mxu0 0
        %7554 = vmatmul.mubr.bf16.gmra.mrb[0].mxu0 %v4570
        %v7555 = vpop.f32.mrb[0].mxu0
        %v7556 = vadd.f32 %v5987, %v7555
        %v7557 = vpop.f32.mrb[0].mxu0
        %v7558 = vpop.f32.mrb[0].mxu0
        %v7559 = vadd.f32 %v5990, %v7558
        %v7560 = vpop.f32.mrb[0].mxu0
        %7561 = vmatprep.mubr.bf16.mxu0 0
        %7562 = vmatmul.mubr.bf16.gmra.mrb[0].mxu0 %v4573
        %v7563 = vpop.f32.mrb[0].mxu0
        %v7564 = vadd.f32 %v5995, %v7563
        %v7565 = vpop.f32.mrb[0].mxu0
        %v7566 = vpop.f32.mrb[0].mxu0
        %v7567 = vadd.f32 %v5998, %v7566
        %v7568 = vpop.f32.mrb[0].mxu0
        %7569 = vmatprep.mubr.bf16.mxu0 0
        %7570 = vmatmul.mubr.bf16.gmra.mrb[0].mxu0 %v4576
        %v7571 = vpop.f32.mrb[0].mxu0
        %v7572 = vadd.f32 %v6003, %v7571
        %v7573 = vpop.f32.mrb[0].mxu0
        %v7574 = vpop.f32.mrb[0].mxu0
        %v7575 = vadd.f32 %v6006, %v7574
        %v7576 = vpop.f32.mrb[0].mxu0
        %7577 = vmatprep.mubr.bf16.mxu0 0
        %7578 = vmatmul.mubr.bf16.gmra.mrb[0].mxu0 %v4579
        %v7579 = vpop.f32.mrb[0].mxu0
        %v7580 = vadd.f32 %v6011, %v7579
        %v7581 = vpop.f32.mrb[0].mxu0
        %v7582 = vpop.f32.mrb[0].mxu0
        %v7583 = vadd.f32 %v6014, %v7582
        %v7584 = vpop.f32.mrb[0].mxu0
        %7585 = vmatprep.mubr.bf16.mxu0 0
        %7586 = vmatmul.mubr.bf16.gmra.mrb[0].mxu0 %v4582
        %v7587 = vpop.f32.mrb[0].mxu0
        %v7588 = vadd.f32 %v6019, %v7587
        %v7589 = vpop.f32.mrb[0].mxu0
        %v7590 = vpop.f32.mrb[0].mxu0
        %v7591 = vadd.f32 %v6022, %v7590
        %v7592 = vpop.f32.mrb[0].mxu0
        %7593 = vmatprep.mubr.bf16.mxu0 0
        %7594 = vmatmul.mubr.bf16.gmra.mrb[0].mxu0 %v4585
        %v7595 = vpop.f32.mrb[0].mxu0
        %v7596 = vadd.f32 %v6027, %v7595
        %v7597 = vpop.f32.mrb[0].mxu0
        %v7598 = vpop.f32.mrb[0].mxu0
        %v7599 = vadd.f32 %v6030, %v7598
        %v7600 = vpop.f32.mrb[0].mxu0
        %7601 = vmatprep.mubr.bf16.mxu0 0
        %7602 = vmatmul.mubr.bf16.gmra.mrb[0].mxu0 %v4588
        %v7603 = vpop.f32.mrb[0].mxu0
        %v7604 = vadd.f32 %v6035, %v7603
        %v7605 = vpop.f32.mrb[0].mxu0
        %v7606 = vpop.f32.mrb[0].mxu0
        %v7607 = vadd.f32 %v6038, %v7606
        %v7608 = vpop.f32.mrb[0].mxu0
        %7609 = vmatprep.mubr.bf16.mxu0 0
        %7610 = vmatmul.mubr.bf16.gmra.mrb[0].mxu0 %v4591
        %v7611 = vpop.f32.mrb[0].mxu0
        %v7612 = vadd.f32 %v6043, %v7611
        %v7613 = vpop.f32.mrb[0].mxu0
        %v7614 = vpop.f32.mrb[0].mxu0
        %v7615 = vadd.f32 %v6046, %v7614
        %v7616 = vpop.f32.mrb[0].mxu0
        %7617 = vmatprep.mubr.bf16.mxu0 0
        %7618 = vmatmul.mubr.bf16.gmra.mrb[0].mxu0 %v4594
        %v7619 = vpop.f32.mrb[0].mxu0
        %v7620 = vadd.f32 %v6051, %v7619
        %v7621 = vpop.f32.mrb[0].mxu0
        %v7622 = vpop.f32.mrb[0].mxu0
        %v7623 = vadd.f32 %v6054, %v7622
        %v7624 = vpop.f32.mrb[0].mxu0
        %7625 = vmatprep.mubr.bf16.mxu0 0
        %7626 = vmatmul.mubr.bf16.gmra.mrb[0].mxu0 %v4597
        %v7627 = vpop.f32.mrb[0].mxu0
        %v7628 = vadd.f32 %v6059, %v7627
        %v7629 = vpop.f32.mrb[0].mxu0
        %v7630 = vpop.f32.mrb[0].mxu0
        %v7631 = vadd.f32 %v6062, %v7630
        %v7632 = vpop.f32.mrb[0].mxu0
        %7633 = vmatprep.mubr.bf16.mxu0 0
        %7634 = vmatmul.mubr.bf16.gmra.mrb[0].mxu0 %v4600
        %v7635 = vpop.f32.mrb[0].mxu0
        %v7636 = vadd.f32 %v6067, %v7635
        %v7637 = vpop.f32.mrb[0].mxu0
        %v7638 = vpop.f32.mrb[0].mxu0
        %v7639 = vadd.f32 %v6070, %v7638
        %v7640 = vpop.f32.mrb[0].mxu0
        %7641 = vmatprep.mubr.bf16.mxu0 0
        %7642 = vmatmul.mubr.bf16.gmra.mrb[0].mxu0 %v4603
        %v7643 = vpop.f32.mrb[0].mxu0
        %v7644 = vadd.f32 %v6075, %v7643
        %v7645 = vpop.f32.mrb[0].mxu0
        %v7646 = vpop.f32.mrb[0].mxu0
        %v7647 = vadd.f32 %v6078, %v7646
        %v7648 = vpop.f32.mrb[0].mxu0
        %7649 = vmatprep.mubr.bf16.mxu0 0
        %7650 = vmatmul.mubr.bf16.gmra.mrb[0].mxu0 %v4606
        %v7651 = vpop.f32.mrb[0].mxu0
        %v7652 = vadd.f32 %v6083, %v7651
        %v7653 = vpop.f32.mrb[0].mxu0
        %v7654 = vpop.f32.mrb[0].mxu0
        %v7655 = vadd.f32 %v6086, %v7654
        %v7656 = vpop.f32.mrb[0].mxu0
        %7657 = vmatprep.mubr.bf16.mxu0 0
        %7658 = vmatmul.mubr.bf16.gmra.mrb[0].mxu0 %v4609
        %v7659 = vpop.f32.mrb[0].mxu0
        %v7660 = vadd.f32 %v6091, %v7659
        %v7661 = vpop.f32.mrb[0].mxu0
        %v7662 = vpop.f32.mrb[0].mxu0
        %v7663 = vadd.f32 %v6094, %v7662
        %v7664 = vpop.f32.mrb[0].mxu0
        %7665 = vmatprep.mubr.bf16.mxu0 0
        %7666 = vmatmul.mubr.bf16.gmra.mrb[0].mxu0 %v4612
        %v7667 = vpop.f32.mrb[0].mxu0
        %v7668 = vadd.f32 %v6099, %v7667
        %v7669 = vpop.f32.mrb[0].mxu0
        %v7670 = vpop.f32.mrb[0].mxu0
        %v7671 = vadd.f32 %v6102, %v7670
        %v7672 = vpop.f32.mrb[0].mxu0
        %7673 = vmatprep.mubr.bf16.mxu0 0
        %7674 = vmatmul.mubr.bf16.gmra.mrb[0].mxu0 %v4615
        %v7675 = vpop.f32.mrb[0].mxu0
        %v7676 = vadd.f32 %v6107, %v7675
        %v7677 = vpop.f32.mrb[0].mxu0
        %v7678 = vpop.f32.mrb[0].mxu0
        %v7679 = vadd.f32 %v6110, %v7678
        %v7680 = vpop.f32.mrb[0].mxu0
        %7681 = vmatprep.mubr.bf16.mxu0 0
        %7682 = vmatmul.mubr.bf16.gmra.mrb[0].mxu0 %v4618
        %v7683 = vpop.f32.mrb[0].mxu0
        %v7684 = vadd.f32 %v6115, %v7683
        %v7685 = vpop.f32.mrb[0].mxu0
        %v7686 = vpop.f32.mrb[0].mxu0
        %v7687 = vadd.f32 %v6118, %v7686
        %v7688 = vpop.f32.mrb[0].mxu0
        %7689 = vmatprep.mubr.bf16.mxu0 0
        %7690 = vmatmul.mubr.bf16.gmra.mrb[0].mxu0 %v4621
        %v7691 = vpop.f32.mrb[0].mxu0
        %v7692 = vadd.f32 %v6123, %v7691
        %v7693 = vpop.f32.mrb[0].mxu0
        %v7694 = vpop.f32.mrb[0].mxu0
        %v7695 = vadd.f32 %v6126, %v7694
        %v7696 = vpop.f32.mrb[0].mxu0
        %7697 = vmatprep.mubr.bf16.mxu0 0
        %7698 = vmatmul.mubr.bf16.gmra.mrb[0].mxu0 %v4624
        %v7699 = vpop.f32.mrb[0].mxu0
        %v7700 = vadd.f32 %v6131, %v7699
        %v7701 = vpop.f32.mrb[0].mxu0
        %v7702 = vpop.f32.mrb[0].mxu0
        %v7703 = vadd.f32 %v6134, %v7702
        %v7704 = vpop.f32.mrb[0].mxu0
        %7705 = vmatprep.mubr.bf16.mxu0 0
        %7706 = vmatmul.mubr.bf16.gmra.mrb[0].mxu0 %v4627
        %v7707 = vpop.f32.mrb[0].mxu0
        %v7708 = vadd.f32 %v6139, %v7707
        %v7709 = vpop.f32.mrb[0].mxu0
        %v7710 = vpop.f32.mrb[0].mxu0
        %v7711 = vadd.f32 %v6142, %v7710
        %v7712 = vpop.f32.mrb[0].mxu0
        %7713 = vmatprep.mubr.bf16.mxu0 0
        %7714 = vmatmul.mubr.bf16.gmra.mrb[0].mxu0 %v4630
        %v7715 = vpop.f32.mrb[0].mxu0
        %v7716 = vadd.f32 %v6147, %v7715
        %v7717 = vpop.f32.mrb[0].mxu0
        %v7718 = vpop.f32.mrb[0].mxu0
        %v7719 = vadd.f32 %v6150, %v7718
        %v7720 = vpop.f32.mrb[0].mxu0
        %7721 = vmatprep.mubr.bf16.mxu0 0
        %7722 = vmatmul.mubr.bf16.gmra.mrb[0].mxu0 %v4633
        %v7723 = vpop.f32.mrb[0].mxu0
        %v7724 = vadd.f32 %v6155, %v7723
        %v7725 = vpop.f32.mrb[0].mxu0
        %v7726 = vpop.f32.mrb[0].mxu0
        %v7727 = vadd.f32 %v6158, %v7726
        %v7728 = vpop.f32.mrb[0].mxu0
        %7729 = vmatprep.mubr.bf16.mxu0 0
        %7730 = vmatmul.mubr.bf16.gmra.mrb[0].mxu0 %v4636
        %v7731 = vpop.f32.mrb[0].mxu0
        %v7732 = vadd.f32 %v6163, %v7731
        %v7733 = vpop.f32.mrb[0].mxu0
        %v7734 = vpop.f32.mrb[0].mxu0
        %v7735 = vadd.f32 %v6166, %v7734
        %v7736 = vpop.f32.mrb[0].mxu0
        %7737 = vmatprep.mubr.bf16.mxu0 0
        %7738 = vmatmul.mubr.bf16.gmra.mrb[0].mxu0 %v4639
        %v7739 = vpop.f32.mrb[0].mxu0
        %v7740 = vadd.f32 %v6171, %v7739
        %v7741 = vpop.f32.mrb[0].mxu0
        %v7742 = vpop.f32.mrb[0].mxu0
        %v7743 = vadd.f32 %v6174, %v7742
        %v7744 = vpop.f32.mrb[0].mxu0
        %7745 = vmatprep.mubr.bf16.mxu0 0
        %7746 = vmatmul.mubr.bf16.gmra.mrb[0].mxu0 %v4642
        %v7747 = vpop.f32.mrb[0].mxu0
        %v7748 = vadd.f32 %v6179, %v7747
        %v7749 = vpop.f32.mrb[0].mxu0
        %v7750 = vpop.f32.mrb[0].mxu0
        %v7751 = vadd.f32 %v6182, %v7750
        %v7752 = vpop.f32.mrb[0].mxu0
        %7753 = vmatprep.mubr.bf16.mxu0 0
        %7754 = vmatmul.mubr.bf16.gmra.mrb[0].mxu0 %v4645
        %v7755 = vpop.f32.mrb[0].mxu0
        %v7756 = vadd.f32 %v6187, %v7755
        %v7757 = vpop.f32.mrb[0].mxu0
        %v7758 = vpop.f32.mrb[0].mxu0
        %v7759 = vadd.f32 %v6190, %v7758
        %v7760 = vpop.f32.mrb[0].mxu0
        %7761 = vmatprep.mubr.bf16.mxu0 0
        %7762 = vmatmul.mubr.bf16.gmra.mrb[0].mxu0 %v4648
        %v7763 = vpop.f32.mrb[0].mxu0
        %v7764 = vadd.f32 %v6195, %v7763
        %v7765 = vpop.f32.mrb[0].mxu0
        %v7766 = vpop.f32.mrb[0].mxu0
        %v7767 = vadd.f32 %v6198, %v7766
        %v7768 = vpop.f32.mrb[0].mxu0
        %7769 = vmatprep.mubr.bf16.mxu0 0
        %7770 = vmatmul.mubr.bf16.gmra.mrb[0].mxu0 %v4651
        %v7771 = vpop.f32.mrb[0].mxu0
        %v7772 = vadd.f32 %v6203, %v7771
        %v7773 = vpop.f32.mrb[0].mxu0
        %v7774 = vpop.f32.mrb[0].mxu0
        %v7775 = vadd.f32 %v6206, %v7774
        %v7776 = vpop.f32.mrb[0].mxu0
        %7777 = vmatprep.mubr.bf16.mxu0 0
        %7778 = vmatmul.mubr.bf16.gmra.mrb[0].mxu0 %v4654
        %v7779 = vpop.f32.mrb[0].mxu0
        %v7780 = vadd.f32 %v6211, %v7779
        %v7781 = vpop.f32.mrb[0].mxu0
        %v7782 = vpop.f32.mrb[0].mxu0
        %v7783 = vadd.f32 %v6214, %v7782
        %v7784 = vpop.f32.mrb[0].mxu0
        %7785 = vmatprep.mubr.bf16.mxu0 0
        %7786 = vmatmul.mubr.bf16.gmra.mrb[0].mxu0 %v4657
        %v7787 = vpop.f32.mrb[0].mxu0
        %v7788 = vadd.f32 %v6219, %v7787
        %v7789 = vpop.f32.mrb[0].mxu0
        %v7790 = vpop.f32.mrb[0].mxu0
        %v7791 = vadd.f32 %v6222, %v7790
        %v7792 = vpop.f32.mrb[0].mxu0
        %7793 = vmatprep.mubr.bf16.mxu0 0
        %7794 = vmatmul.mubr.bf16.gmra.mrb[0].mxu0 %v4660
        %v7795 = vpop.f32.mrb[0].mxu0
        %v7796 = vadd.f32 %v6227, %v7795
        %v7797 = vpop.f32.mrb[0].mxu0
        %v7798 = vpop.f32.mrb[0].mxu0
        %v7799 = vadd.f32 %v6230, %v7798
        %v7800 = vpop.f32.mrb[0].mxu0
        %7801 = vmatprep.mubr.bf16.mxu0 0
        %7802 = vmatmul.mubr.bf16.gmra.mrb[0].mxu0 %v4663
        %v7803 = vpop.f32.mrb[0].mxu0
        %v7804 = vadd.f32 %v6235, %v7803
        %v7805 = vpop.f32.mrb[0].mxu0
        %v7806 = vpop.f32.mrb[0].mxu0
        %v7807 = vadd.f32 %v6238, %v7806
        %v7808 = vpop.f32.mrb[0].mxu0
        %7809 = vdwg.mxu0
        %v7810 = vmax.f32 %v6276, 0.0
        %v7811 = vmax.f32 %v6279, 0.0
        %v7812 = vmax.f32 %v6284, 0.0
        %v7813 = vmax.f32 %v6287, 0.0
        %v7814 = vmax.f32 %v6292, 0.0
        %v7815 = vmax.f32 %v6295, 0.0
        %v7816 = vmax.f32 %v6300, 0.0
        %v7817 = vmax.f32 %v6303, 0.0
        %v7818 = vmax.f32 %v6308, 0.0
        %v7819 = vmax.f32 %v6311, 0.0
        %v7820 = vmax.f32 %v6316, 0.0
        %v7821 = vmax.f32 %v6319, 0.0
        %v7822 = vmax.f32 %v6324, 0.0
        %v7823 = vmax.f32 %v6327, 0.0
        %v7824 = vmax.f32 %v6332, 0.0
        %v7825 = vmax.f32 %v6335, 0.0
        %v7826 = vmax.f32 %v6340, 0.0
        %v7827 = vmax.f32 %v6343, 0.0
        %v7828 = vmax.f32 %v6348, 0.0
        %v7829 = vmax.f32 %v6351, 0.0
        %v7830 = vmax.f32 %v6356, 0.0
        %v7831 = vmax.f32 %v6359, 0.0
        %v7832 = vmax.f32 %v6364, 0.0
        %v7833 = vmax.f32 %v6367, 0.0
        %v7834 = vmax.f32 %v6372, 0.0
        %v7835 = vmax.f32 %v6375, 0.0
        %v7836 = vmax.f32 %v6380, 0.0
        %v7837 = vmax.f32 %v6383, 0.0
        %v7838 = vmax.f32 %v6388, 0.0
        %v7839 = vmax.f32 %v6391, 0.0
        %v7840 = vmax.f32 %v6396, 0.0
        %v7841 = vmax.f32 %v6399, 0.0
        %v7842 = vmax.f32 %v6404, 0.0
        %v7843 = vmax.f32 %v6407, 0.0
        %v7844 = vmax.f32 %v6412, 0.0
        %v7845 = vmax.f32 %v6415, 0.0
        %v7846 = vmax.f32 %v6420, 0.0
        %v7847 = vmax.f32 %v6423, 0.0
        %v7848 = vmax.f32 %v6428, 0.0
        %v7849 = vmax.f32 %v6431, 0.0
        %v7850 = vmax.f32 %v6436, 0.0
        %v7851 = vmax.f32 %v6439, 0.0
        %v7852 = vmax.f32 %v6444, 0.0
        %v7853 = vmax.f32 %v6447, 0.0
        %v7854 = vmax.f32 %v6452, 0.0
        %v7855 = vmax.f32 %v6455, 0.0
        %v7856 = vmax.f32 %v6460, 0.0
        %v7857 = vmax.f32 %v6463, 0.0
        %v7858 = vmax.f32 %v6468, 0.0
        %v7859 = vmax.f32 %v6471, 0.0
        %v7860 = vmax.f32 %v6476, 0.0
        %v7861 = vmax.f32 %v6479, 0.0
        %v7862 = vmax.f32 %v6484, 0.0
        %v7863 = vmax.f32 %v6487, 0.0
        %v7864 = vmax.f32 %v6492, 0.0
        %v7865 = vmax.f32 %v6495, 0.0
        %v7866 = vmax.f32 %v6500, 0.0
        %v7867 = vmax.f32 %v6503, 0.0
        %v7868 = vmax.f32 %v6508, 0.0
        %v7869 = vmax.f32 %v6511, 0.0
        %v7870 = vmax.f32 %v6516, 0.0
        %v7871 = vmax.f32 %v6519, 0.0
        %v7872 = vmax.f32 %v6524, 0.0
        %v7873 = vmax.f32 %v6527, 0.0
        %v7874 = vmax.f32 %v6532, 0.0
        %v7875 = vmax.f32 %v6535, 0.0
        %v7876 = vmax.f32 %v6540, 0.0
        %v7877 = vmax.f32 %v6543, 0.0
        %v7878 = vmax.f32 %v6548, 0.0
        %v7879 = vmax.f32 %v6551, 0.0
        %v7880 = vmax.f32 %v6556, 0.0
        %v7881 = vmax.f32 %v6559, 0.0
        %v7882 = vmax.f32 %v6564, 0.0
        %v7883 = vmax.f32 %v6567, 0.0
        %v7884 = vmax.f32 %v6572, 0.0
        %v7885 = vmax.f32 %v6575, 0.0
        %v7886 = vmax.f32 %v6580, 0.0
        %v7887 = vmax.f32 %v6583, 0.0
        %v7888 = vmax.f32 %v6588, 0.0
        %v7889 = vmax.f32 %v6591, 0.0
        %v7890 = vmax.f32 %v6596, 0.0
        %v7891 = vmax.f32 %v6599, 0.0
        %v7892 = vmax.f32 %v6604, 0.0
        %v7893 = vmax.f32 %v6607, 0.0
        %v7894 = vmax.f32 %v6612, 0.0
        %v7895 = vmax.f32 %v6615, 0.0
        %v7896 = vmax.f32 %v6620, 0.0
        %v7897 = vmax.f32 %v6623, 0.0
        %v7898 = vmax.f32 %v6628, 0.0
        %v7899 = vmax.f32 %v6631, 0.0
        %v7900 = vmax.f32 %v6636, 0.0
        %v7901 = vmax.f32 %v6639, 0.0
        %v7902 = vmax.f32 %v6644, 0.0
        %v7903 = vmax.f32 %v6647, 0.0
        %v7904 = vmax.f32 %v6652, 0.0
        %v7905 = vmax.f32 %v6655, 0.0
        %v7906 = vmax.f32 %v6660, 0.0
        %v7907 = vmax.f32 %v6663, 0.0
        %v7908 = vmax.f32 %v6668, 0.0
        %v7909 = vmax.f32 %v6671, 0.0
        %v7910 = vmax.f32 %v6676, 0.0
        %v7911 = vmax.f32 %v6679, 0.0
        %v7912 = vmax.f32 %v6684, 0.0
        %v7913 = vmax.f32 %v6687, 0.0
        %v7914 = vmax.f32 %v6692, 0.0
        %v7915 = vmax.f32 %v6695, 0.0
        %v7916 = vmax.f32 %v6700, 0.0
        %v7917 = vmax.f32 %v6703, 0.0
        %v7918 = vmax.f32 %v6708, 0.0
        %v7919 = vmax.f32 %v6711, 0.0
        %v7920 = vmax.f32 %v6716, 0.0
        %v7921 = vmax.f32 %v6719, 0.0
        %v7922 = vmax.f32 %v6724, 0.0
        %v7923 = vmax.f32 %v6727, 0.0
        %v7924 = vmax.f32 %v6732, 0.0
        %v7925 = vmax.f32 %v6735, 0.0
        %v7926 = vmax.f32 %v6740, 0.0
        %v7927 = vmax.f32 %v6743, 0.0
        %v7928 = vmax.f32 %v6748, 0.0
        %v7929 = vmax.f32 %v6751, 0.0
        %v7930 = vmax.f32 %v6756, 0.0
        %v7931 = vmax.f32 %v6759, 0.0
        %v7932 = vmax.f32 %v6764, 0.0
        %v7933 = vmax.f32 %v6767, 0.0
        %v7934 = vmax.f32 %v6772, 0.0
        %v7935 = vmax.f32 %v6775, 0.0
        %v7936 = vmax.f32 %v6780, 0.0
        %v7937 = vmax.f32 %v6783, 0.0
        %v7938 = vmax.f32 %v6788, 0.0
        %v7939 = vmax.f32 %v6791, 0.0
        %v7940 = vmax.f32 %v6796, 0.0
        %v7941 = vmax.f32 %v6799, 0.0
        %v7942 = vmax.f32 %v6804, 0.0
        %v7943 = vmax.f32 %v6807, 0.0
        %v7944 = vmax.f32 %v6812, 0.0
        %v7945 = vmax.f32 %v6815, 0.0
        %v7946 = vmax.f32 %v6820, 0.0
        %v7947 = vmax.f32 %v6823, 0.0
        %v7948 = vmax.f32 %v6828, 0.0
        %v7949 = vmax.f32 %v6831, 0.0
        %v7950 = vmax.f32 %v6836, 0.0
        %v7951 = vmax.f32 %v6839, 0.0
        %v7952 = vmax.f32 %v6844, 0.0
        %v7953 = vmax.f32 %v6847, 0.0
        %v7954 = vmax.f32 %v6852, 0.0
        %v7955 = vmax.f32 %v6855, 0.0
        %v7956 = vmax.f32 %v6860, 0.0
        %v7957 = vmax.f32 %v6863, 0.0
        %v7958 = vmax.f32 %v6868, 0.0
        %v7959 = vmax.f32 %v6871, 0.0
        %v7960 = vmax.f32 %v6876, 0.0
        %v7961 = vmax.f32 %v6879, 0.0
        %v7962 = vmax.f32 %v6884, 0.0
        %v7963 = vmax.f32 %v6887, 0.0
        %v7964 = vmax.f32 %v6892, 0.0
        %v7965 = vmax.f32 %v6895, 0.0
        %v7966 = vmax.f32 %v6900, 0.0
        %v7967 = vmax.f32 %v6903, 0.0
        %v7968 = vmax.f32 %v6908, 0.0
        %v7969 = vmax.f32 %v6911, 0.0
        %v7970 = vmax.f32 %v6916, 0.0
        %v7971 = vmax.f32 %v6919, 0.0
        %v7972 = vmax.f32 %v6924, 0.0
        %v7973 = vmax.f32 %v6927, 0.0
        %v7974 = vmax.f32 %v6932, 0.0
        %v7975 = vmax.f32 %v6935, 0.0
        %v7976 = vmax.f32 %v6940, 0.0
        %v7977 = vmax.f32 %v6943, 0.0
        %v7978 = vmax.f32 %v6948, 0.0
        %v7979 = vmax.f32 %v6951, 0.0
        %v7980 = vmax.f32 %v6956, 0.0
        %v7981 = vmax.f32 %v6959, 0.0
        %v7982 = vmax.f32 %v6964, 0.0
        %v7983 = vmax.f32 %v6967, 0.0
        %v7984 = vmax.f32 %v6972, 0.0
        %v7985 = vmax.f32 %v6975, 0.0
        %v7986 = vmax.f32 %v6980, 0.0
        %v7987 = vmax.f32 %v6983, 0.0
        %v7988 = vmax.f32 %v6988, 0.0
        %v7989 = vmax.f32 %v6991, 0.0
        %v7990 = vmax.f32 %v6996, 0.0
        %v7991 = vmax.f32 %v6999, 0.0
        %v7992 = vmax.f32 %v7004, 0.0
        %v7993 = vmax.f32 %v7007, 0.0
        %v7994 = vmax.f32 %v7012, 0.0
        %v7995 = vmax.f32 %v7015, 0.0
        %v7996 = vmax.f32 %v7020, 0.0
        %v7997 = vmax.f32 %v7023, 0.0
        %v7998 = vmax.f32 %v7028, 0.0
        %v7999 = vmax.f32 %v7031, 0.0
        %v8000 = vmax.f32 %v7036, 0.0
        %v8001 = vmax.f32 %v7039, 0.0
        %v8002 = vmax.f32 %v7044, 0.0
        %v8003 = vmax.f32 %v7047, 0.0
        %v8004 = vmax.f32 %v7052, 0.0
        %v8005 = vmax.f32 %v7055, 0.0
        %v8006 = vmax.f32 %v7060, 0.0
        %v8007 = vmax.f32 %v7063, 0.0
        %v8008 = vmax.f32 %v7068, 0.0
        %v8009 = vmax.f32 %v7071, 0.0
        %v8010 = vmax.f32 %v7076, 0.0
        %v8011 = vmax.f32 %v7079, 0.0
        %v8012 = vmax.f32 %v7084, 0.0
        %v8013 = vmax.f32 %v7087, 0.0
        %v8014 = vmax.f32 %v7092, 0.0
        %v8015 = vmax.f32 %v7095, 0.0
        %v8016 = vmax.f32 %v7100, 0.0
        %v8017 = vmax.f32 %v7103, 0.0
        %v8018 = vmax.f32 %v7108, 0.0
        %v8019 = vmax.f32 %v7111, 0.0
        %v8020 = vmax.f32 %v7116, 0.0
        %v8021 = vmax.f32 %v7119, 0.0
        %v8022 = vmax.f32 %v7124, 0.0
        %v8023 = vmax.f32 %v7127, 0.0
        %v8024 = vmax.f32 %v7132, 0.0
        %v8025 = vmax.f32 %v7135, 0.0
        %v8026 = vmax.f32 %v7140, 0.0
        %v8027 = vmax.f32 %v7143, 0.0
        %v8028 = vmax.f32 %v7148, 0.0
        %v8029 = vmax.f32 %v7151, 0.0
        %v8030 = vmax.f32 %v7156, 0.0
        %v8031 = vmax.f32 %v7159, 0.0
        %v8032 = vmax.f32 %v7164, 0.0
        %v8033 = vmax.f32 %v7167, 0.0
        %v8034 = vmax.f32 %v7172, 0.0
        %v8035 = vmax.f32 %v7175, 0.0
        %v8036 = vmax.f32 %v7180, 0.0
        %v8037 = vmax.f32 %v7183, 0.0
        %v8038 = vmax.f32 %v7188, 0.0
        %v8039 = vmax.f32 %v7191, 0.0
        %v8040 = vmax.f32 %v7196, 0.0
        %v8041 = vmax.f32 %v7199, 0.0
        %v8042 = vmax.f32 %v7204, 0.0
        %v8043 = vmax.f32 %v7207, 0.0
        %v8044 = vmax.f32 %v7212, 0.0
        %v8045 = vmax.f32 %v7215, 0.0
        %v8046 = vmax.f32 %v7220, 0.0
        %v8047 = vmax.f32 %v7223, 0.0
        %v8048 = vmax.f32 %v7228, 0.0
        %v8049 = vmax.f32 %v7231, 0.0
        %v8050 = vmax.f32 %v7236, 0.0
        %v8051 = vmax.f32 %v7239, 0.0
        %v8052 = vmax.f32 %v7244, 0.0
        %v8053 = vmax.f32 %v7247, 0.0
        %v8054 = vmax.f32 %v7252, 0.0
        %v8055 = vmax.f32 %v7255, 0.0
        %v8056 = vmax.f32 %v7260, 0.0
        %v8057 = vmax.f32 %v7263, 0.0
        %v8058 = vmax.f32 %v7268, 0.0
        %v8059 = vmax.f32 %v7271, 0.0
        %v8060 = vmax.f32 %v7276, 0.0
        %v8061 = vmax.f32 %v7279, 0.0
        %v8062 = vmax.f32 %v7284, 0.0
        %v8063 = vmax.f32 %v7287, 0.0
        %v8064 = vmax.f32 %v7292, 0.0
        %v8065 = vmax.f32 %v7295, 0.0
        %v8066 = vmax.f32 %v7300, 0.0
        %v8067 = vmax.f32 %v7303, 0.0
        %v8068 = vmax.f32 %v7308, 0.0
        %v8069 = vmax.f32 %v7311, 0.0
        %v8070 = vmax.f32 %v7316, 0.0
        %v8071 = vmax.f32 %v7319, 0.0
        %v8072 = vmax.f32 %v7324, 0.0
        %v8073 = vmax.f32 %v7327, 0.0
        %v8074 = vmax.f32 %v7332, 0.0
        %v8075 = vmax.f32 %v7335, 0.0
        %v8076 = vmax.f32 %v7340, 0.0
        %v8077 = vmax.f32 %v7343, 0.0
        %v8078 = vmax.f32 %v7348, 0.0
        %v8079 = vmax.f32 %v7351, 0.0
        %v8080 = vmax.f32 %v7356, 0.0
        %v8081 = vmax.f32 %v7359, 0.0
        %v8082 = vmax.f32 %v7364, 0.0
        %v8083 = vmax.f32 %v7367, 0.0
        %v8084 = vmax.f32 %v7372, 0.0
        %v8085 = vmax.f32 %v7375, 0.0
        %v8086 = vmax.f32 %v7380, 0.0
        %v8087 = vmax.f32 %v7383, 0.0
        %v8088 = vmax.f32 %v7388, 0.0
        %v8089 = vmax.f32 %v7391, 0.0
        %v8090 = vmax.f32 %v7396, 0.0
        %v8091 = vmax.f32 %v7399, 0.0
        %v8092 = vmax.f32 %v7404, 0.0
        %v8093 = vmax.f32 %v7407, 0.0
        %v8094 = vmax.f32 %v7412, 0.0
        %v8095 = vmax.f32 %v7415, 0.0
        %v8096 = vmax.f32 %v7420, 0.0
        %v8097 = vmax.f32 %v7423, 0.0
        %v8098 = vmax.f32 %v7428, 0.0
        %v8099 = vmax.f32 %v7431, 0.0
        %v8100 = vmax.f32 %v7436, 0.0
        %v8101 = vmax.f32 %v7439, 0.0
        %v8102 = vmax.f32 %v7444, 0.0
        %v8103 = vmax.f32 %v7447, 0.0
        %v8104 = vmax.f32 %v7452, 0.0
        %v8105 = vmax.f32 %v7455, 0.0
        %v8106 = vmax.f32 %v7460, 0.0
        %v8107 = vmax.f32 %v7463, 0.0
        %v8108 = vmax.f32 %v7468, 0.0
        %v8109 = vmax.f32 %v7471, 0.0
        %v8110 = vmax.f32 %v7476, 0.0
        %v8111 = vmax.f32 %v7479, 0.0
        %v8112 = vmax.f32 %v7484, 0.0
        %v8113 = vmax.f32 %v7487, 0.0
        %v8114 = vmax.f32 %v7492, 0.0
        %v8115 = vmax.f32 %v7495, 0.0
        %v8116 = vmax.f32 %v7500, 0.0
        %v8117 = vmax.f32 %v7503, 0.0
        %v8118 = vmax.f32 %v7508, 0.0
        %v8119 = vmax.f32 %v7511, 0.0
        %v8120 = vmax.f32 %v7516, 0.0
        %v8121 = vmax.f32 %v7519, 0.0
        %v8122 = vmax.f32 %v7524, 0.0
        %v8123 = vmax.f32 %v7527, 0.0
        %v8124 = vmax.f32 %v7532, 0.0
        %v8125 = vmax.f32 %v7535, 0.0
        %v8126 = vmax.f32 %v7540, 0.0
        %v8127 = vmax.f32 %v7543, 0.0
        %v8128 = vmax.f32 %v7548, 0.0
        %v8129 = vmax.f32 %v7551, 0.0
        %v8130 = vmax.f32 %v7556, 0.0
        %v8131 = vmax.f32 %v7559, 0.0
        %v8132 = vmax.f32 %v7564, 0.0
        %v8133 = vmax.f32 %v7567, 0.0
        %v8134 = vmax.f32 %v7572, 0.0
        %v8135 = vmax.f32 %v7575, 0.0
        %v8136 = vmax.f32 %v7580, 0.0
        %v8137 = vmax.f32 %v7583, 0.0
        %v8138 = vmax.f32 %v7588, 0.0
        %v8139 = vmax.f32 %v7591, 0.0
        %v8140 = vmax.f32 %v7596, 0.0
        %v8141 = vmax.f32 %v7599, 0.0
        %v8142 = vmax.f32 %v7604, 0.0
        %v8143 = vmax.f32 %v7607, 0.0
        %v8144 = vmax.f32 %v7612, 0.0
        %v8145 = vmax.f32 %v7615, 0.0
        %v8146 = vmax.f32 %v7620, 0.0
        %v8147 = vmax.f32 %v7623, 0.0
        %v8148 = vmax.f32 %v7628, 0.0
        %v8149 = vmax.f32 %v7631, 0.0
        %v8150 = vmax.f32 %v7636, 0.0
        %v8151 = vmax.f32 %v7639, 0.0
        %v8152 = vmax.f32 %v7644, 0.0
        %v8153 = vmax.f32 %v7647, 0.0
        %v8154 = vmax.f32 %v7652, 0.0
        %v8155 = vmax.f32 %v7655, 0.0
        %v8156 = vmax.f32 %v7660, 0.0
        %v8157 = vmax.f32 %v7663, 0.0
        %v8158 = vmax.f32 %v7668, 0.0
        %v8159 = vmax.f32 %v7671, 0.0
        %v8160 = vmax.f32 %v7676, 0.0
        %v8161 = vmax.f32 %v7679, 0.0
        %v8162 = vmax.f32 %v7684, 0.0
        %v8163 = vmax.f32 %v7687, 0.0
        %v8164 = vmax.f32 %v7692, 0.0
        %v8165 = vmax.f32 %v7695, 0.0
        %v8166 = vmax.f32 %v7700, 0.0
        %v8167 = vmax.f32 %v7703, 0.0
        %v8168 = vmax.f32 %v7708, 0.0
        %v8169 = vmax.f32 %v7711, 0.0
        %v8170 = vmax.f32 %v7716, 0.0
        %v8171 = vmax.f32 %v7719, 0.0
        %v8172 = vmax.f32 %v7724, 0.0
        %v8173 = vmax.f32 %v7727, 0.0
        %v8174 = vmax.f32 %v7732, 0.0
        %v8175 = vmax.f32 %v7735, 0.0
        %v8176 = vmax.f32 %v7740, 0.0
        %v8177 = vmax.f32 %v7743, 0.0
        %v8178 = vmax.f32 %v7748, 0.0
        %v8179 = vmax.f32 %v7751, 0.0
        %v8180 = vmax.f32 %v7756, 0.0
        %v8181 = vmax.f32 %v7759, 0.0
        %v8182 = vmax.f32 %v7764, 0.0
        %v8183 = vmax.f32 %v7767, 0.0
        %v8184 = vmax.f32 %v7772, 0.0
        %v8185 = vmax.f32 %v7775, 0.0
        %v8186 = vmax.f32 %v7780, 0.0
        %v8187 = vmax.f32 %v7783, 0.0
        %v8188 = vmax.f32 %v7788, 0.0
        %v8189 = vmax.f32 %v7791, 0.0
        %v8190 = vmax.f32 %v7796, 0.0
        %v8191 = vmax.f32 %v7799, 0.0
        %v8192 = vmax.f32 %v7804, 0.0
        %v8193 = vmax.f32 %v7807, 0.0
        %v8194 = vpack.c.bf16 %v7811, %v7810
        %v8195 = vpack.c.bf16 %v7813, %v7812
        %v8196 = vpack.c.bf16 %v7815, %v7814
        %v8197 = vpack.c.bf16 %v7817, %v7816
        %v8198 = vpack.c.bf16 %v7819, %v7818
        %v8199 = vpack.c.bf16 %v7821, %v7820
        %v8200 = vpack.c.bf16 %v7823, %v7822
        %v8201 = vpack.c.bf16 %v7825, %v7824
        %v8202 = vpack.c.bf16 %v7827, %v7826
        %v8203 = vpack.c.bf16 %v7829, %v7828
        %v8204 = vpack.c.bf16 %v7831, %v7830
        %v8205 = vpack.c.bf16 %v7833, %v7832
        %v8206 = vpack.c.bf16 %v7835, %v7834
        %v8207 = vpack.c.bf16 %v7837, %v7836
        %v8208 = vpack.c.bf16 %v7839, %v7838
        %v8209 = vpack.c.bf16 %v7841, %v7840
        %v8210 = vpack.c.bf16 %v7843, %v7842
        %v8211 = vpack.c.bf16 %v7845, %v7844
        %v8212 = vpack.c.bf16 %v7847, %v7846
        %v8213 = vpack.c.bf16 %v7849, %v7848
        %v8214 = vpack.c.bf16 %v7851, %v7850
        %v8215 = vpack.c.bf16 %v7853, %v7852
        %v8216 = vpack.c.bf16 %v7855, %v7854
        %v8217 = vpack.c.bf16 %v7857, %v7856
        %v8218 = vpack.c.bf16 %v7859, %v7858
        %v8219 = vpack.c.bf16 %v7861, %v7860
        %v8220 = vpack.c.bf16 %v7863, %v7862
        %v8221 = vpack.c.bf16 %v7865, %v7864
        %v8222 = vpack.c.bf16 %v7867, %v7866
        %v8223 = vpack.c.bf16 %v7869, %v7868
        %v8224 = vpack.c.bf16 %v7871, %v7870
        %v8225 = vpack.c.bf16 %v7873, %v7872
        %v8226 = vpack.c.bf16 %v7875, %v7874
        %v8227 = vpack.c.bf16 %v7877, %v7876
        %v8228 = vpack.c.bf16 %v7879, %v7878
        %v8229 = vpack.c.bf16 %v7881, %v7880
        %v8230 = vpack.c.bf16 %v7883, %v7882
        %v8231 = vpack.c.bf16 %v7885, %v7884
        %v8232 = vpack.c.bf16 %v7887, %v7886
        %v8233 = vpack.c.bf16 %v7889, %v7888
        %v8234 = vpack.c.bf16 %v7891, %v7890
        %v8235 = vpack.c.bf16 %v7893, %v7892
        %v8236 = vpack.c.bf16 %v7895, %v7894
        %v8237 = vpack.c.bf16 %v7897, %v7896
        %v8238 = vpack.c.bf16 %v7899, %v7898
        %v8239 = vpack.c.bf16 %v7901, %v7900
        %v8240 = vpack.c.bf16 %v7903, %v7902
        %v8241 = vpack.c.bf16 %v7905, %v7904
        %v8242 = vpack.c.bf16 %v7907, %v7906
        %v8243 = vpack.c.bf16 %v7909, %v7908
        %v8244 = vpack.c.bf16 %v7911, %v7910
        %v8245 = vpack.c.bf16 %v7913, %v7912
        %v8246 = vpack.c.bf16 %v7915, %v7914
        %v8247 = vpack.c.bf16 %v7917, %v7916
        %v8248 = vpack.c.bf16 %v7919, %v7918
        %v8249 = vpack.c.bf16 %v7921, %v7920
        %v8250 = vpack.c.bf16 %v7923, %v7922
        %v8251 = vpack.c.bf16 %v7925, %v7924
        %v8252 = vpack.c.bf16 %v7927, %v7926
        %v8253 = vpack.c.bf16 %v7929, %v7928
        %v8254 = vpack.c.bf16 %v7931, %v7930
        %v8255 = vpack.c.bf16 %v7933, %v7932
        %v8256 = vpack.c.bf16 %v7935, %v7934
        %v8257 = vpack.c.bf16 %v7937, %v7936
        %v8258 = vpack.c.bf16 %v7939, %v7938
        %v8259 = vpack.c.bf16 %v7941, %v7940
        %v8260 = vpack.c.bf16 %v7943, %v7942
        %v8261 = vpack.c.bf16 %v7945, %v7944
        %v8262 = vpack.c.bf16 %v7947, %v7946
        %v8263 = vpack.c.bf16 %v7949, %v7948
        %v8264 = vpack.c.bf16 %v7951, %v7950
        %v8265 = vpack.c.bf16 %v7953, %v7952
        %v8266 = vpack.c.bf16 %v7955, %v7954
        %v8267 = vpack.c.bf16 %v7957, %v7956
        %v8268 = vpack.c.bf16 %v7959, %v7958
        %v8269 = vpack.c.bf16 %v7961, %v7960
        %v8270 = vpack.c.bf16 %v7963, %v7962
        %v8271 = vpack.c.bf16 %v7965, %v7964
        %v8272 = vpack.c.bf16 %v7967, %v7966
        %v8273 = vpack.c.bf16 %v7969, %v7968
        %v8274 = vpack.c.bf16 %v7971, %v7970
        %v8275 = vpack.c.bf16 %v7973, %v7972
        %v8276 = vpack.c.bf16 %v7975, %v7974
        %v8277 = vpack.c.bf16 %v7977, %v7976
        %v8278 = vpack.c.bf16 %v7979, %v7978
        %v8279 = vpack.c.bf16 %v7981, %v7980
        %v8280 = vpack.c.bf16 %v7983, %v7982
        %v8281 = vpack.c.bf16 %v7985, %v7984
        %v8282 = vpack.c.bf16 %v7987, %v7986
        %v8283 = vpack.c.bf16 %v7989, %v7988
        %v8284 = vpack.c.bf16 %v7991, %v7990
        %v8285 = vpack.c.bf16 %v7993, %v7992
        %v8286 = vpack.c.bf16 %v7995, %v7994
        %v8287 = vpack.c.bf16 %v7997, %v7996
        %v8288 = vpack.c.bf16 %v7999, %v7998
        %v8289 = vpack.c.bf16 %v8001, %v8000
        %v8290 = vpack.c.bf16 %v8003, %v8002
        %v8291 = vpack.c.bf16 %v8005, %v8004
        %v8292 = vpack.c.bf16 %v8007, %v8006
        %v8293 = vpack.c.bf16 %v8009, %v8008
        %v8294 = vpack.c.bf16 %v8011, %v8010
        %v8295 = vpack.c.bf16 %v8013, %v8012
        %v8296 = vpack.c.bf16 %v8015, %v8014
        %v8297 = vpack.c.bf16 %v8017, %v8016
        %v8298 = vpack.c.bf16 %v8019, %v8018
        %v8299 = vpack.c.bf16 %v8021, %v8020
        %v8300 = vpack.c.bf16 %v8023, %v8022
        %v8301 = vpack.c.bf16 %v8025, %v8024
        %v8302 = vpack.c.bf16 %v8027, %v8026
        %v8303 = vpack.c.bf16 %v8029, %v8028
        %v8304 = vpack.c.bf16 %v8031, %v8030
        %v8305 = vpack.c.bf16 %v8033, %v8032
        %v8306 = vpack.c.bf16 %v8035, %v8034
        %v8307 = vpack.c.bf16 %v8037, %v8036
        %v8308 = vpack.c.bf16 %v8039, %v8038
        %v8309 = vpack.c.bf16 %v8041, %v8040
        %v8310 = vpack.c.bf16 %v8043, %v8042
        %v8311 = vpack.c.bf16 %v8045, %v8044
        %v8312 = vpack.c.bf16 %v8047, %v8046
        %v8313 = vpack.c.bf16 %v8049, %v8048
        %v8314 = vpack.c.bf16 %v8051, %v8050
        %v8315 = vpack.c.bf16 %v8053, %v8052
        %v8316 = vpack.c.bf16 %v8055, %v8054
        %v8317 = vpack.c.bf16 %v8057, %v8056
        %v8318 = vpack.c.bf16 %v8059, %v8058
        %v8319 = vpack.c.bf16 %v8061, %v8060
        %v8320 = vpack.c.bf16 %v8063, %v8062
        %v8321 = vpack.c.bf16 %v8065, %v8064
        %v8322 = vpack.c.bf16 %v8067, %v8066
        %v8323 = vpack.c.bf16 %v8069, %v8068
        %v8324 = vpack.c.bf16 %v8071, %v8070
        %v8325 = vpack.c.bf16 %v8073, %v8072
        %v8326 = vpack.c.bf16 %v8075, %v8074
        %v8327 = vpack.c.bf16 %v8077, %v8076
        %v8328 = vpack.c.bf16 %v8079, %v8078
        %v8329 = vpack.c.bf16 %v8081, %v8080
        %v8330 = vpack.c.bf16 %v8083, %v8082
        %v8331 = vpack.c.bf16 %v8085, %v8084
        %v8332 = vpack.c.bf16 %v8087, %v8086
        %v8333 = vpack.c.bf16 %v8089, %v8088
        %v8334 = vpack.c.bf16 %v8091, %v8090
        %v8335 = vpack.c.bf16 %v8093, %v8092
        %v8336 = vpack.c.bf16 %v8095, %v8094
        %v8337 = vpack.c.bf16 %v8097, %v8096
        %v8338 = vpack.c.bf16 %v8099, %v8098
        %v8339 = vpack.c.bf16 %v8101, %v8100
        %v8340 = vpack.c.bf16 %v8103, %v8102
        %v8341 = vpack.c.bf16 %v8105, %v8104
        %v8342 = vpack.c.bf16 %v8107, %v8106
        %v8343 = vpack.c.bf16 %v8109, %v8108
        %v8344 = vpack.c.bf16 %v8111, %v8110
        %v8345 = vpack.c.bf16 %v8113, %v8112
        %v8346 = vpack.c.bf16 %v8115, %v8114
        %v8347 = vpack.c.bf16 %v8117, %v8116
        %v8348 = vpack.c.bf16 %v8119, %v8118
        %v8349 = vpack.c.bf16 %v8121, %v8120
        %v8350 = vpack.c.bf16 %v8123, %v8122
        %v8351 = vpack.c.bf16 %v8125, %v8124
        %v8352 = vpack.c.bf16 %v8127, %v8126
        %v8353 = vpack.c.bf16 %v8129, %v8128
        %v8354 = vpack.c.bf16 %v8131, %v8130
        %v8355 = vpack.c.bf16 %v8133, %v8132
        %v8356 = vpack.c.bf16 %v8135, %v8134
        %v8357 = vpack.c.bf16 %v8137, %v8136
        %v8358 = vpack.c.bf16 %v8139, %v8138
        %v8359 = vpack.c.bf16 %v8141, %v8140
        %v8360 = vpack.c.bf16 %v8143, %v8142
        %v8361 = vpack.c.bf16 %v8145, %v8144
        %v8362 = vpack.c.bf16 %v8147, %v8146
        %v8363 = vpack.c.bf16 %v8149, %v8148
        %v8364 = vpack.c.bf16 %v8151, %v8150
        %v8365 = vpack.c.bf16 %v8153, %v8152
        %v8366 = vpack.c.bf16 %v8155, %v8154
        %v8367 = vpack.c.bf16 %v8157, %v8156
        %v8368 = vpack.c.bf16 %v8159, %v8158
        %v8369 = vpack.c.bf16 %v8161, %v8160
        %v8370 = vpack.c.bf16 %v8163, %v8162
        %v8371 = vpack.c.bf16 %v8165, %v8164
        %v8372 = vpack.c.bf16 %v8167, %v8166
        %v8373 = vpack.c.bf16 %v8169, %v8168
        %v8374 = vpack.c.bf16 %v8171, %v8170
        %v8375 = vpack.c.bf16 %v8173, %v8172
        %v8376 = vpack.c.bf16 %v8175, %v8174
        %v8377 = vpack.c.bf16 %v8177, %v8176
        %v8378 = vpack.c.bf16 %v8179, %v8178
        %v8379 = vpack.c.bf16 %v8181, %v8180
        %v8380 = vpack.c.bf16 %v8183, %v8182
        %v8381 = vpack.c.bf16 %v8185, %v8184
        %v8382 = vpack.c.bf16 %v8187, %v8186
        %v8383 = vpack.c.bf16 %v8189, %v8188
        %v8384 = vpack.c.bf16 %v8191, %v8190
        %v8385 = vpack.c.bf16 %v8193, %v8192
        %v8578 = vunpack.c.l.b16 %v8194
        %v8579 = vunpack.c.h.b16 %v8194
        %v8580 = vunpack.c.l.b16 %v8195
        %v8581 = vunpack.c.h.b16 %v8195
        %v8582 = vunpack.c.l.b16 %v8196
        %v8583 = vunpack.c.h.b16 %v8196
        %v8584 = vunpack.c.l.b16 %v8197
        %v8585 = vunpack.c.h.b16 %v8197
        %v8586 = vunpack.c.l.b16 %v8198
        %v8587 = vunpack.c.h.b16 %v8198
        %v8588 = vunpack.c.l.b16 %v8199
        %v8589 = vunpack.c.h.b16 %v8199
        %v8590 = vunpack.c.l.b16 %v8200
        %v8591 = vunpack.c.h.b16 %v8200
        %v8592 = vunpack.c.l.b16 %v8201
        %v8593 = vunpack.c.h.b16 %v8201
        %v8594 = vunpack.c.l.b16 %v8202
        %v8595 = vunpack.c.h.b16 %v8202
        %v8596 = vunpack.c.l.b16 %v8203
        %v8597 = vunpack.c.h.b16 %v8203
        %v8598 = vunpack.c.l.b16 %v8204
        %v8599 = vunpack.c.h.b16 %v8204
        %v8600 = vunpack.c.l.b16 %v8205
        %v8601 = vunpack.c.h.b16 %v8205
        %v8602 = vunpack.c.l.b16 %v8206
        %v8603 = vunpack.c.h.b16 %v8206
        %v8604 = vunpack.c.l.b16 %v8207
        %v8605 = vunpack.c.h.b16 %v8207
        %v8606 = vunpack.c.l.b16 %v8208
        %v8607 = vunpack.c.h.b16 %v8208
        %v8608 = vunpack.c.l.b16 %v8209
        %v8609 = vunpack.c.h.b16 %v8209
        %v8610 = vunpack.c.l.b16 %v8210
        %v8611 = vunpack.c.h.b16 %v8210
        %v8612 = vunpack.c.l.b16 %v8211
        %v8613 = vunpack.c.h.b16 %v8211
        %v8614 = vunpack.c.l.b16 %v8212
        %v8615 = vunpack.c.h.b16 %v8212
        %v8616 = vunpack.c.l.b16 %v8213
        %v8617 = vunpack.c.h.b16 %v8213
        %v8618 = vunpack.c.l.b16 %v8214
        %v8619 = vunpack.c.h.b16 %v8214
        %v8620 = vunpack.c.l.b16 %v8215
        %v8621 = vunpack.c.h.b16 %v8215
        %v8622 = vunpack.c.l.b16 %v8216
        %v8623 = vunpack.c.h.b16 %v8216
        %v8624 = vunpack.c.l.b16 %v8217
        %v8625 = vunpack.c.h.b16 %v8217
        %v8626 = vunpack.c.l.b16 %v8218
        %v8627 = vunpack.c.h.b16 %v8218
        %v8628 = vunpack.c.l.b16 %v8219
        %v8629 = vunpack.c.h.b16 %v8219
        %v8630 = vunpack.c.l.b16 %v8220
        %v8631 = vunpack.c.h.b16 %v8220
        %v8632 = vunpack.c.l.b16 %v8221
        %v8633 = vunpack.c.h.b16 %v8221
        %v8634 = vunpack.c.l.b16 %v8222
        %v8635 = vunpack.c.h.b16 %v8222
        %v8636 = vunpack.c.l.b16 %v8223
        %v8637 = vunpack.c.h.b16 %v8223
        %v8638 = vunpack.c.l.b16 %v8224
        %v8639 = vunpack.c.h.b16 %v8224
        %v8640 = vunpack.c.l.b16 %v8225
        %v8641 = vunpack.c.h.b16 %v8225
        %v8642 = vunpack.c.l.b16 %v8226
        %v8643 = vunpack.c.h.b16 %v8226
        %v8644 = vunpack.c.l.b16 %v8227
        %v8645 = vunpack.c.h.b16 %v8227
        %v8646 = vunpack.c.l.b16 %v8228
        %v8647 = vunpack.c.h.b16 %v8228
        %v8648 = vunpack.c.l.b16 %v8229
        %v8649 = vunpack.c.h.b16 %v8229
        %v8650 = vunpack.c.l.b16 %v8230
        %v8651 = vunpack.c.h.b16 %v8230
        %v8652 = vunpack.c.l.b16 %v8231
        %v8653 = vunpack.c.h.b16 %v8231
        %v8654 = vunpack.c.l.b16 %v8232
        %v8655 = vunpack.c.h.b16 %v8232
        %v8656 = vunpack.c.l.b16 %v8233
        %v8657 = vunpack.c.h.b16 %v8233
        %v8658 = vunpack.c.l.b16 %v8234
        %v8659 = vunpack.c.h.b16 %v8234
        %v8660 = vunpack.c.l.b16 %v8235
        %v8661 = vunpack.c.h.b16 %v8235
        %v8662 = vunpack.c.l.b16 %v8236
        %v8663 = vunpack.c.h.b16 %v8236
        %v8664 = vunpack.c.l.b16 %v8237
        %v8665 = vunpack.c.h.b16 %v8237
        %v8666 = vunpack.c.l.b16 %v8238
        %v8667 = vunpack.c.h.b16 %v8238
        %v8668 = vunpack.c.l.b16 %v8239
        %v8669 = vunpack.c.h.b16 %v8239
        %v8670 = vunpack.c.l.b16 %v8240
        %v8671 = vunpack.c.h.b16 %v8240
        %v8672 = vunpack.c.l.b16 %v8241
        %v8673 = vunpack.c.h.b16 %v8241
        %v8674 = vunpack.c.l.b16 %v8242
        %v8675 = vunpack.c.h.b16 %v8242
        %v8676 = vunpack.c.l.b16 %v8243
        %v8677 = vunpack.c.h.b16 %v8243
        %v8678 = vunpack.c.l.b16 %v8244
        %v8679 = vunpack.c.h.b16 %v8244
        %v8680 = vunpack.c.l.b16 %v8245
        %v8681 = vunpack.c.h.b16 %v8245
        %v8682 = vunpack.c.l.b16 %v8246
        %v8683 = vunpack.c.h.b16 %v8246
        %v8684 = vunpack.c.l.b16 %v8247
        %v8685 = vunpack.c.h.b16 %v8247
        %v8686 = vunpack.c.l.b16 %v8248
        %v8687 = vunpack.c.h.b16 %v8248
        %v8688 = vunpack.c.l.b16 %v8249
        %v8689 = vunpack.c.h.b16 %v8249
        %v8690 = vunpack.c.l.b16 %v8250
        %v8691 = vunpack.c.h.b16 %v8250
        %v8692 = vunpack.c.l.b16 %v8251
        %v8693 = vunpack.c.h.b16 %v8251
        %v8694 = vunpack.c.l.b16 %v8252
        %v8695 = vunpack.c.h.b16 %v8252
        %v8696 = vunpack.c.l.b16 %v8253
        %v8697 = vunpack.c.h.b16 %v8253
        %v8698 = vunpack.c.l.b16 %v8254
        %v8699 = vunpack.c.h.b16 %v8254
        %v8700 = vunpack.c.l.b16 %v8255
        %v8701 = vunpack.c.h.b16 %v8255
        %v8702 = vunpack.c.l.b16 %v8256
        %v8703 = vunpack.c.h.b16 %v8256
        %v8704 = vunpack.c.l.b16 %v8257
        %v8705 = vunpack.c.h.b16 %v8257
        %v8706 = vunpack.c.l.b16 %v8258
        %v8707 = vunpack.c.h.b16 %v8258
        %v8708 = vunpack.c.l.b16 %v8259
        %v8709 = vunpack.c.h.b16 %v8259
        %v8710 = vunpack.c.l.b16 %v8260
        %v8711 = vunpack.c.h.b16 %v8260
        %v8712 = vunpack.c.l.b16 %v8261
        %v8713 = vunpack.c.h.b16 %v8261
        %v8714 = vunpack.c.l.b16 %v8262
        %v8715 = vunpack.c.h.b16 %v8262
        %v8716 = vunpack.c.l.b16 %v8263
        %v8717 = vunpack.c.h.b16 %v8263
        %v8718 = vunpack.c.l.b16 %v8264
        %v8719 = vunpack.c.h.b16 %v8264
        %v8720 = vunpack.c.l.b16 %v8265
        %v8721 = vunpack.c.h.b16 %v8265
        %v8722 = vunpack.c.l.b16 %v8266
        %v8723 = vunpack.c.h.b16 %v8266
        %v8724 = vunpack.c.l.b16 %v8267
        %v8725 = vunpack.c.h.b16 %v8267
        %v8726 = vunpack.c.l.b16 %v8268
        %v8727 = vunpack.c.h.b16 %v8268
        %v8728 = vunpack.c.l.b16 %v8269
        %v8729 = vunpack.c.h.b16 %v8269
        %v8730 = vunpack.c.l.b16 %v8270
        %v8731 = vunpack.c.h.b16 %v8270
        %v8732 = vunpack.c.l.b16 %v8271
        %v8733 = vunpack.c.h.b16 %v8271
        %v8734 = vunpack.c.l.b16 %v8272
        %v8735 = vunpack.c.h.b16 %v8272
        %v8736 = vunpack.c.l.b16 %v8273
        %v8737 = vunpack.c.h.b16 %v8273
        %v8738 = vunpack.c.l.b16 %v8274
        %v8739 = vunpack.c.h.b16 %v8274
        %v8740 = vunpack.c.l.b16 %v8275
        %v8741 = vunpack.c.h.b16 %v8275
        %v8742 = vunpack.c.l.b16 %v8276
        %v8743 = vunpack.c.h.b16 %v8276
        %v8744 = vunpack.c.l.b16 %v8277
        %v8745 = vunpack.c.h.b16 %v8277
        %v8746 = vunpack.c.l.b16 %v8278
        %v8747 = vunpack.c.h.b16 %v8278
        %v8748 = vunpack.c.l.b16 %v8279
        %v8749 = vunpack.c.h.b16 %v8279
        %v8750 = vunpack.c.l.b16 %v8280
        %v8751 = vunpack.c.h.b16 %v8280
        %v8752 = vunpack.c.l.b16 %v8281
        %v8753 = vunpack.c.h.b16 %v8281
        %v8754 = vunpack.c.l.b16 %v8282
        %v8755 = vunpack.c.h.b16 %v8282
        %v8756 = vunpack.c.l.b16 %v8283
        %v8757 = vunpack.c.h.b16 %v8283
        %v8758 = vunpack.c.l.b16 %v8284
        %v8759 = vunpack.c.h.b16 %v8284
        %v8760 = vunpack.c.l.b16 %v8285
        %v8761 = vunpack.c.h.b16 %v8285
        %v8762 = vunpack.c.l.b16 %v8286
        %v8763 = vunpack.c.h.b16 %v8286
        %v8764 = vunpack.c.l.b16 %v8287
        %v8765 = vunpack.c.h.b16 %v8287
        %v8766 = vunpack.c.l.b16 %v8288
        %v8767 = vunpack.c.h.b16 %v8288
        %v8768 = vunpack.c.l.b16 %v8289
        %v8769 = vunpack.c.h.b16 %v8289
        %v8770 = vunpack.c.l.b16 %v8290
        %v8771 = vunpack.c.h.b16 %v8290
        %v8772 = vunpack.c.l.b16 %v8291
        %v8773 = vunpack.c.h.b16 %v8291
        %v8774 = vunpack.c.l.b16 %v8292
        %v8775 = vunpack.c.h.b16 %v8292
        %v8776 = vunpack.c.l.b16 %v8293
        %v8777 = vunpack.c.h.b16 %v8293
        %v8778 = vunpack.c.l.b16 %v8294
        %v8779 = vunpack.c.h.b16 %v8294
        %v8780 = vunpack.c.l.b16 %v8295
        %v8781 = vunpack.c.h.b16 %v8295
        %v8782 = vunpack.c.l.b16 %v8296
        %v8783 = vunpack.c.h.b16 %v8296
        %v8784 = vunpack.c.l.b16 %v8297
        %v8785 = vunpack.c.h.b16 %v8297
        %v8786 = vunpack.c.l.b16 %v8298
        %v8787 = vunpack.c.h.b16 %v8298
        %v8788 = vunpack.c.l.b16 %v8299
        %v8789 = vunpack.c.h.b16 %v8299
        %v8790 = vunpack.c.l.b16 %v8300
        %v8791 = vunpack.c.h.b16 %v8300
        %v8792 = vunpack.c.l.b16 %v8301
        %v8793 = vunpack.c.h.b16 %v8301
        %v8794 = vunpack.c.l.b16 %v8302
        %v8795 = vunpack.c.h.b16 %v8302
        %v8796 = vunpack.c.l.b16 %v8303
        %v8797 = vunpack.c.h.b16 %v8303
        %v8798 = vunpack.c.l.b16 %v8304
        %v8799 = vunpack.c.h.b16 %v8304
        %v8800 = vunpack.c.l.b16 %v8305
        %v8801 = vunpack.c.h.b16 %v8305
        %v8802 = vunpack.c.l.b16 %v8306
        %v8803 = vunpack.c.h.b16 %v8306
        %v8804 = vunpack.c.l.b16 %v8307
        %v8805 = vunpack.c.h.b16 %v8307
        %v8806 = vunpack.c.l.b16 %v8308
        %v8807 = vunpack.c.h.b16 %v8308
        %v8808 = vunpack.c.l.b16 %v8309
        %v8809 = vunpack.c.h.b16 %v8309
        %v8810 = vunpack.c.l.b16 %v8310
        %v8811 = vunpack.c.h.b16 %v8310
        %v8812 = vunpack.c.l.b16 %v8311
        %v8813 = vunpack.c.h.b16 %v8311
        %v8814 = vunpack.c.l.b16 %v8312
        %v8815 = vunpack.c.h.b16 %v8312
        %v8816 = vunpack.c.l.b16 %v8313
        %v8817 = vunpack.c.h.b16 %v8313
        %v8818 = vunpack.c.l.b16 %v8314
        %v8819 = vunpack.c.h.b16 %v8314
        %v8820 = vunpack.c.l.b16 %v8315
        %v8821 = vunpack.c.h.b16 %v8315
        %v8822 = vunpack.c.l.b16 %v8316
        %v8823 = vunpack.c.h.b16 %v8316
        %v8824 = vunpack.c.l.b16 %v8317
        %v8825 = vunpack.c.h.b16 %v8317
        %v8826 = vunpack.c.l.b16 %v8318
        %v8827 = vunpack.c.h.b16 %v8318
        %v8828 = vunpack.c.l.b16 %v8319
        %v8829 = vunpack.c.h.b16 %v8319
        %v8830 = vunpack.c.l.b16 %v8320
        %v8831 = vunpack.c.h.b16 %v8320
        %v8832 = vunpack.c.l.b16 %v8321
        %v8833 = vunpack.c.h.b16 %v8321
        %v8834 = vunpack.c.l.b16 %v8322
        %v8835 = vunpack.c.h.b16 %v8322
        %v8836 = vunpack.c.l.b16 %v8323
        %v8837 = vunpack.c.h.b16 %v8323
        %v8838 = vunpack.c.l.b16 %v8324
        %v8839 = vunpack.c.h.b16 %v8324
        %v8840 = vunpack.c.l.b16 %v8325
        %v8841 = vunpack.c.h.b16 %v8325
        %v8842 = vunpack.c.l.b16 %v8326
        %v8843 = vunpack.c.h.b16 %v8326
        %v8844 = vunpack.c.l.b16 %v8327
        %v8845 = vunpack.c.h.b16 %v8327
        %v8846 = vunpack.c.l.b16 %v8328
        %v8847 = vunpack.c.h.b16 %v8328
        %v8848 = vunpack.c.l.b16 %v8329
        %v8849 = vunpack.c.h.b16 %v8329
        %v8850 = vunpack.c.l.b16 %v8330
        %v8851 = vunpack.c.h.b16 %v8330
        %v8852 = vunpack.c.l.b16 %v8331
        %v8853 = vunpack.c.h.b16 %v8331
        %v8854 = vunpack.c.l.b16 %v8332
        %v8855 = vunpack.c.h.b16 %v8332
        %v8856 = vunpack.c.l.b16 %v8333
        %v8857 = vunpack.c.h.b16 %v8333
        %v8858 = vunpack.c.l.b16 %v8334
        %v8859 = vunpack.c.h.b16 %v8334
        %v8860 = vunpack.c.l.b16 %v8335
        %v8861 = vunpack.c.h.b16 %v8335
        %v8862 = vunpack.c.l.b16 %v8336
        %v8863 = vunpack.c.h.b16 %v8336
        %v8864 = vunpack.c.l.b16 %v8337
        %v8865 = vunpack.c.h.b16 %v8337
        %v8866 = vunpack.c.l.b16 %v8338
        %v8867 = vunpack.c.h.b16 %v8338
        %v8868 = vunpack.c.l.b16 %v8339
        %v8869 = vunpack.c.h.b16 %v8339
        %v8870 = vunpack.c.l.b16 %v8340
        %v8871 = vunpack.c.h.b16 %v8340
        %v8872 = vunpack.c.l.b16 %v8341
        %v8873 = vunpack.c.h.b16 %v8341
        %v8874 = vunpack.c.l.b16 %v8342
        %v8875 = vunpack.c.h.b16 %v8342
        %v8876 = vunpack.c.l.b16 %v8343
        %v8877 = vunpack.c.h.b16 %v8343
        %v8878 = vunpack.c.l.b16 %v8344
        %v8879 = vunpack.c.h.b16 %v8344
        %v8880 = vunpack.c.l.b16 %v8345
        %v8881 = vunpack.c.h.b16 %v8345
        %v8882 = vunpack.c.l.b16 %v8346
        %v8883 = vunpack.c.h.b16 %v8346
        %v8884 = vunpack.c.l.b16 %v8347
        %v8885 = vunpack.c.h.b16 %v8347
        %v8886 = vunpack.c.l.b16 %v8348
        %v8887 = vunpack.c.h.b16 %v8348
        %v8888 = vunpack.c.l.b16 %v8349
        %v8889 = vunpack.c.h.b16 %v8349
        %v8890 = vunpack.c.l.b16 %v8350
        %v8891 = vunpack.c.h.b16 %v8350
        %v8892 = vunpack.c.l.b16 %v8351
        %v8893 = vunpack.c.h.b16 %v8351
        %v8894 = vunpack.c.l.b16 %v8352
        %v8895 = vunpack.c.h.b16 %v8352
        %v8896 = vunpack.c.l.b16 %v8353
        %v8897 = vunpack.c.h.b16 %v8353
        %v8898 = vunpack.c.l.b16 %v8354
        %v8899 = vunpack.c.h.b16 %v8354
        %v8900 = vunpack.c.l.b16 %v8355
        %v8901 = vunpack.c.h.b16 %v8355
        %v8902 = vunpack.c.l.b16 %v8356
        %v8903 = vunpack.c.h.b16 %v8356
        %v8904 = vunpack.c.l.b16 %v8357
        %v8905 = vunpack.c.h.b16 %v8357
        %v8906 = vunpack.c.l.b16 %v8358
        %v8907 = vunpack.c.h.b16 %v8358
        %v8908 = vunpack.c.l.b16 %v8359
        %v8909 = vunpack.c.h.b16 %v8359
        %v8910 = vunpack.c.l.b16 %v8360
        %v8911 = vunpack.c.h.b16 %v8360
        %v8912 = vunpack.c.l.b16 %v8361
        %v8913 = vunpack.c.h.b16 %v8361
        %v8914 = vunpack.c.l.b16 %v8362
        %v8915 = vunpack.c.h.b16 %v8362
        %v8916 = vunpack.c.l.b16 %v8363
        %v8917 = vunpack.c.h.b16 %v8363
        %v8918 = vunpack.c.l.b16 %v8364
        %v8919 = vunpack.c.h.b16 %v8364
        %v8920 = vunpack.c.l.b16 %v8365
        %v8921 = vunpack.c.h.b16 %v8365
        %v8922 = vunpack.c.l.b16 %v8366
        %v8923 = vunpack.c.h.b16 %v8366
        %v8924 = vunpack.c.l.b16 %v8367
        %v8925 = vunpack.c.h.b16 %v8367
        %v8926 = vunpack.c.l.b16 %v8368
        %v8927 = vunpack.c.h.b16 %v8368
        %v8928 = vunpack.c.l.b16 %v8369
        %v8929 = vunpack.c.h.b16 %v8369
        %v8930 = vunpack.c.l.b16 %v8370
        %v8931 = vunpack.c.h.b16 %v8370
        %v8932 = vunpack.c.l.b16 %v8371
        %v8933 = vunpack.c.h.b16 %v8371
        %v8934 = vunpack.c.l.b16 %v8372
        %v8935 = vunpack.c.h.b16 %v8372
        %v8936 = vunpack.c.l.b16 %v8373
        %v8937 = vunpack.c.h.b16 %v8373
        %v8938 = vunpack.c.l.b16 %v8374
        %v8939 = vunpack.c.h.b16 %v8374
        %v8940 = vunpack.c.l.b16 %v8375
        %v8941 = vunpack.c.h.b16 %v8375
        %v8942 = vunpack.c.l.b16 %v8376
        %v8943 = vunpack.c.h.b16 %v8376
        %v8944 = vunpack.c.l.b16 %v8377
        %v8945 = vunpack.c.h.b16 %v8377
        %v8946 = vunpack.c.l.b16 %v8378
        %v8947 = vunpack.c.h.b16 %v8378
        %v8948 = vunpack.c.l.b16 %v8379
        %v8949 = vunpack.c.h.b16 %v8379
        %v8950 = vunpack.c.l.b16 %v8380
        %v8951 = vunpack.c.h.b16 %v8380
        %v8952 = vunpack.c.l.b16 %v8381
        %v8953 = vunpack.c.h.b16 %v8381
        %v8954 = vunpack.c.l.b16 %v8382
        %v8955 = vunpack.c.h.b16 %v8382
        %v8956 = vunpack.c.l.b16 %v8383
        %v8957 = vunpack.c.h.b16 %v8383
        %v8958 = vunpack.c.l.b16 %v8384
        %v8959 = vunpack.c.h.b16 %v8384
        %v8960 = vunpack.c.l.b16 %v8385
        %v8961 = vunpack.c.h.b16 %v8385
        %v8962 = vpack.c.b16 %v8578, %v8578
        %v8963 = vpack.c.b16 %v8579, %v8579
        %v8964 = vpack.c.b16 %v8580, %v8580
        %v8965 = vpack.c.b16 %v8581, %v8581
        %v8966 = vpack.c.b16 %v8582, %v8582
        %v8967 = vpack.c.b16 %v8583, %v8583
        %v8968 = vpack.c.b16 %v8584, %v8584
        %v8969 = vpack.c.b16 %v8585, %v8585
        %v8970 = vpack.c.b16 %v8586, %v8586
        %v8971 = vpack.c.b16 %v8587, %v8587
        %v8972 = vpack.c.b16 %v8588, %v8588
        %v8973 = vpack.c.b16 %v8589, %v8589
        %v8974 = vpack.c.b16 %v8590, %v8590
        %v8975 = vpack.c.b16 %v8591, %v8591
        %v8976 = vpack.c.b16 %v8592, %v8592
        %v8977 = vpack.c.b16 %v8593, %v8593
        %v8978 = vpack.c.b16 %v8594, %v8594
        %v8979 = vpack.c.b16 %v8595, %v8595
        %v8980 = vpack.c.b16 %v8596, %v8596
        %v8981 = vpack.c.b16 %v8597, %v8597
        %v8982 = vpack.c.b16 %v8598, %v8598
        %v8983 = vpack.c.b16 %v8599, %v8599
        %v8984 = vpack.c.b16 %v8600, %v8600
        %v8985 = vpack.c.b16 %v8601, %v8601
        %v8986 = vpack.c.b16 %v8602, %v8602
        %v8987 = vpack.c.b16 %v8603, %v8603
        %v8988 = vpack.c.b16 %v8604, %v8604
        %v8989 = vpack.c.b16 %v8605, %v8605
        %v8990 = vpack.c.b16 %v8606, %v8606
        %v8991 = vpack.c.b16 %v8607, %v8607
        %v8992 = vpack.c.b16 %v8608, %v8608
        %v8993 = vpack.c.b16 %v8609, %v8609
        %v8994 = vpack.c.b16 %v8610, %v8610
        %v8995 = vpack.c.b16 %v8611, %v8611
        %v8996 = vpack.c.b16 %v8612, %v8612
        %v8997 = vpack.c.b16 %v8613, %v8613
        %v8998 = vpack.c.b16 %v8614, %v8614
        %v8999 = vpack.c.b16 %v8615, %v8615
        %v9000 = vpack.c.b16 %v8616, %v8616
        %v9001 = vpack.c.b16 %v8617, %v8617
        %v9002 = vpack.c.b16 %v8618, %v8618
        %v9003 = vpack.c.b16 %v8619, %v8619
        %v9004 = vpack.c.b16 %v8620, %v8620
        %v9005 = vpack.c.b16 %v8621, %v8621
        %v9006 = vpack.c.b16 %v8622, %v8622
        %v9007 = vpack.c.b16 %v8623, %v8623
        %v9008 = vpack.c.b16 %v8624, %v8624
        %v9009 = vpack.c.b16 %v8625, %v8625
        %v9010 = vpack.c.b16 %v8626, %v8626
        %v9011 = vpack.c.b16 %v8627, %v8627
        %v9012 = vpack.c.b16 %v8628, %v8628
        %v9013 = vpack.c.b16 %v8629, %v8629
        %v9014 = vpack.c.b16 %v8630, %v8630
        %v9015 = vpack.c.b16 %v8631, %v8631
        %v9016 = vpack.c.b16 %v8632, %v8632
        %v9017 = vpack.c.b16 %v8633, %v8633
        %v9018 = vpack.c.b16 %v8634, %v8634
        %v9019 = vpack.c.b16 %v8635, %v8635
        %v9020 = vpack.c.b16 %v8636, %v8636
        %v9021 = vpack.c.b16 %v8637, %v8637
        %v9022 = vpack.c.b16 %v8638, %v8638
        %v9023 = vpack.c.b16 %v8639, %v8639
        %v9024 = vpack.c.b16 %v8640, %v8640
        %v9025 = vpack.c.b16 %v8641, %v8641
        %v9026 = vpack.c.b16 %v8642, %v8642
        %v9027 = vpack.c.b16 %v8643, %v8643
        %v9028 = vpack.c.b16 %v8644, %v8644
        %v9029 = vpack.c.b16 %v8645, %v8645
        %v9030 = vpack.c.b16 %v8646, %v8646
        %v9031 = vpack.c.b16 %v8647, %v8647
        %v9032 = vpack.c.b16 %v8648, %v8648
        %v9033 = vpack.c.b16 %v8649, %v8649
        %v9034 = vpack.c.b16 %v8650, %v8650
        %v9035 = vpack.c.b16 %v8651, %v8651
        %v9036 = vpack.c.b16 %v8652, %v8652
        %v9037 = vpack.c.b16 %v8653, %v8653
        %v9038 = vpack.c.b16 %v8654, %v8654
        %v9039 = vpack.c.b16 %v8655, %v8655
        %v9040 = vpack.c.b16 %v8656, %v8656
        %v9041 = vpack.c.b16 %v8657, %v8657
        %v9042 = vpack.c.b16 %v8658, %v8658
        %v9043 = vpack.c.b16 %v8659, %v8659
        %v9044 = vpack.c.b16 %v8660, %v8660
        %v9045 = vpack.c.b16 %v8661, %v8661
        %v9046 = vpack.c.b16 %v8662, %v8662
        %v9047 = vpack.c.b16 %v8663, %v8663
        %v9048 = vpack.c.b16 %v8664, %v8664
        %v9049 = vpack.c.b16 %v8665, %v8665
        %v9050 = vpack.c.b16 %v8666, %v8666
        %v9051 = vpack.c.b16 %v8667, %v8667
        %v9052 = vpack.c.b16 %v8668, %v8668
        %v9053 = vpack.c.b16 %v8669, %v8669
        %v9054 = vpack.c.b16 %v8670, %v8670
        %v9055 = vpack.c.b16 %v8671, %v8671
        %v9056 = vpack.c.b16 %v8672, %v8672
        %v9057 = vpack.c.b16 %v8673, %v8673
        %v9058 = vpack.c.b16 %v8674, %v8674
        %v9059 = vpack.c.b16 %v8675, %v8675
        %v9060 = vpack.c.b16 %v8676, %v8676
        %v9061 = vpack.c.b16 %v8677, %v8677
        %v9062 = vpack.c.b16 %v8678, %v8678
        %v9063 = vpack.c.b16 %v8679, %v8679
        %v9064 = vpack.c.b16 %v8680, %v8680
        %v9065 = vpack.c.b16 %v8681, %v8681
        %v9066 = vpack.c.b16 %v8682, %v8682
        %v9067 = vpack.c.b16 %v8683, %v8683
        %v9068 = vpack.c.b16 %v8684, %v8684
        %v9069 = vpack.c.b16 %v8685, %v8685
        %v9070 = vpack.c.b16 %v8686, %v8686
        %v9071 = vpack.c.b16 %v8687, %v8687
        %v9072 = vpack.c.b16 %v8688, %v8688
        %v9073 = vpack.c.b16 %v8689, %v8689
        %v9074 = vpack.c.b16 %v8690, %v8690
        %v9075 = vpack.c.b16 %v8691, %v8691
        %v9076 = vpack.c.b16 %v8692, %v8692
        %v9077 = vpack.c.b16 %v8693, %v8693
        %v9078 = vpack.c.b16 %v8694, %v8694
        %v9079 = vpack.c.b16 %v8695, %v8695
        %v9080 = vpack.c.b16 %v8696, %v8696
        %v9081 = vpack.c.b16 %v8697, %v8697
        %v9082 = vpack.c.b16 %v8698, %v8698
        %v9083 = vpack.c.b16 %v8699, %v8699
        %v9084 = vpack.c.b16 %v8700, %v8700
        %v9085 = vpack.c.b16 %v8701, %v8701
        %v9086 = vpack.c.b16 %v8702, %v8702
        %v9087 = vpack.c.b16 %v8703, %v8703
        %v9088 = vpack.c.b16 %v8704, %v8704
        %v9089 = vpack.c.b16 %v8705, %v8705
        %v9090 = vpack.c.b16 %v8706, %v8706
        %v9091 = vpack.c.b16 %v8707, %v8707
        %v9092 = vpack.c.b16 %v8708, %v8708
        %v9093 = vpack.c.b16 %v8709, %v8709
        %v9094 = vpack.c.b16 %v8710, %v8710
        %v9095 = vpack.c.b16 %v8711, %v8711
        %v9096 = vpack.c.b16 %v8712, %v8712
        %v9097 = vpack.c.b16 %v8713, %v8713
        %v9098 = vpack.c.b16 %v8714, %v8714
        %v9099 = vpack.c.b16 %v8715, %v8715
        %v9100 = vpack.c.b16 %v8716, %v8716
        %v9101 = vpack.c.b16 %v8717, %v8717
        %v9102 = vpack.c.b16 %v8718, %v8718
        %v9103 = vpack.c.b16 %v8719, %v8719
        %v9104 = vpack.c.b16 %v8720, %v8720
        %v9105 = vpack.c.b16 %v8721, %v8721
        %v9106 = vpack.c.b16 %v8722, %v8722
        %v9107 = vpack.c.b16 %v8723, %v8723
        %v9108 = vpack.c.b16 %v8724, %v8724
        %v9109 = vpack.c.b16 %v8725, %v8725
        %v9110 = vpack.c.b16 %v8726, %v8726
        %v9111 = vpack.c.b16 %v8727, %v8727
        %v9112 = vpack.c.b16 %v8728, %v8728
        %v9113 = vpack.c.b16 %v8729, %v8729
        %v9114 = vpack.c.b16 %v8730, %v8730
        %v9115 = vpack.c.b16 %v8731, %v8731
        %v9116 = vpack.c.b16 %v8732, %v8732
        %v9117 = vpack.c.b16 %v8733, %v8733
        %v9118 = vpack.c.b16 %v8734, %v8734
        %v9119 = vpack.c.b16 %v8735, %v8735
        %v9120 = vpack.c.b16 %v8736, %v8736
        %v9121 = vpack.c.b16 %v8737, %v8737
        %v9122 = vpack.c.b16 %v8738, %v8738
        %v9123 = vpack.c.b16 %v8739, %v8739
        %v9124 = vpack.c.b16 %v8740, %v8740
        %v9125 = vpack.c.b16 %v8741, %v8741
        %v9126 = vpack.c.b16 %v8742, %v8742
        %v9127 = vpack.c.b16 %v8743, %v8743
        %v9128 = vpack.c.b16 %v8744, %v8744
        %v9129 = vpack.c.b16 %v8745, %v8745
        %v9130 = vpack.c.b16 %v8746, %v8746
        %v9131 = vpack.c.b16 %v8747, %v8747
        %v9132 = vpack.c.b16 %v8748, %v8748
        %v9133 = vpack.c.b16 %v8749, %v8749
        %v9134 = vpack.c.b16 %v8750, %v8750
        %v9135 = vpack.c.b16 %v8751, %v8751
        %v9136 = vpack.c.b16 %v8752, %v8752
        %v9137 = vpack.c.b16 %v8753, %v8753
        %v9138 = vpack.c.b16 %v8754, %v8754
        %v9139 = vpack.c.b16 %v8755, %v8755
        %v9140 = vpack.c.b16 %v8756, %v8756
        %v9141 = vpack.c.b16 %v8757, %v8757
        %v9142 = vpack.c.b16 %v8758, %v8758
        %v9143 = vpack.c.b16 %v8759, %v8759
        %v9144 = vpack.c.b16 %v8760, %v8760
        %v9145 = vpack.c.b16 %v8761, %v8761
        %v9146 = vpack.c.b16 %v8762, %v8762
        %v9147 = vpack.c.b16 %v8763, %v8763
        %v9148 = vpack.c.b16 %v8764, %v8764
        %v9149 = vpack.c.b16 %v8765, %v8765
        %v9150 = vpack.c.b16 %v8766, %v8766
        %v9151 = vpack.c.b16 %v8767, %v8767
        %v9152 = vpack.c.b16 %v8768, %v8768
        %v9153 = vpack.c.b16 %v8769, %v8769
        %v9154 = vpack.c.b16 %v8770, %v8770
        %v9155 = vpack.c.b16 %v8771, %v8771
        %v9156 = vpack.c.b16 %v8772, %v8772
        %v9157 = vpack.c.b16 %v8773, %v8773
        %v9158 = vpack.c.b16 %v8774, %v8774
        %v9159 = vpack.c.b16 %v8775, %v8775
        %v9160 = vpack.c.b16 %v8776, %v8776
        %v9161 = vpack.c.b16 %v8777, %v8777
        %v9162 = vpack.c.b16 %v8778, %v8778
        %v9163 = vpack.c.b16 %v8779, %v8779
        %v9164 = vpack.c.b16 %v8780, %v8780
        %v9165 = vpack.c.b16 %v8781, %v8781
        %v9166 = vpack.c.b16 %v8782, %v8782
        %v9167 = vpack.c.b16 %v8783, %v8783
        %v9168 = vpack.c.b16 %v8784, %v8784
        %v9169 = vpack.c.b16 %v8785, %v8785
        %v9170 = vpack.c.b16 %v8786, %v8786
        %v9171 = vpack.c.b16 %v8787, %v8787
        %v9172 = vpack.c.b16 %v8788, %v8788
        %v9173 = vpack.c.b16 %v8789, %v8789
        %v9174 = vpack.c.b16 %v8790, %v8790
        %v9175 = vpack.c.b16 %v8791, %v8791
        %v9176 = vpack.c.b16 %v8792, %v8792
        %v9177 = vpack.c.b16 %v8793, %v8793
        %v9178 = vpack.c.b16 %v8794, %v8794
        %v9179 = vpack.c.b16 %v8795, %v8795
        %v9180 = vpack.c.b16 %v8796, %v8796
        %v9181 = vpack.c.b16 %v8797, %v8797
        %v9182 = vpack.c.b16 %v8798, %v8798
        %v9183 = vpack.c.b16 %v8799, %v8799
        %v9184 = vpack.c.b16 %v8800, %v8800
        %v9185 = vpack.c.b16 %v8801, %v8801
        %v9186 = vpack.c.b16 %v8802, %v8802
        %v9187 = vpack.c.b16 %v8803, %v8803
        %v9188 = vpack.c.b16 %v8804, %v8804
        %v9189 = vpack.c.b16 %v8805, %v8805
        %v9190 = vpack.c.b16 %v8806, %v8806
        %v9191 = vpack.c.b16 %v8807, %v8807
        %v9192 = vpack.c.b16 %v8808, %v8808
        %v9193 = vpack.c.b16 %v8809, %v8809
        %v9194 = vpack.c.b16 %v8810, %v8810
        %v9195 = vpack.c.b16 %v8811, %v8811
        %v9196 = vpack.c.b16 %v8812, %v8812
        %v9197 = vpack.c.b16 %v8813, %v8813
        %v9198 = vpack.c.b16 %v8814, %v8814
        %v9199 = vpack.c.b16 %v8815, %v8815
        %v9200 = vpack.c.b16 %v8816, %v8816
        %v9201 = vpack.c.b16 %v8817, %v8817
        %v9202 = vpack.c.b16 %v8818, %v8818
        %v9203 = vpack.c.b16 %v8819, %v8819
        %v9204 = vpack.c.b16 %v8820, %v8820
        %v9205 = vpack.c.b16 %v8821, %v8821
        %v9206 = vpack.c.b16 %v8822, %v8822
        %v9207 = vpack.c.b16 %v8823, %v8823
        %v9208 = vpack.c.b16 %v8824, %v8824
        %v9209 = vpack.c.b16 %v8825, %v8825
        %v9210 = vpack.c.b16 %v8826, %v8826
        %v9211 = vpack.c.b16 %v8827, %v8827
        %v9212 = vpack.c.b16 %v8828, %v8828
        %v9213 = vpack.c.b16 %v8829, %v8829
        %v9214 = vpack.c.b16 %v8830, %v8830
        %v9215 = vpack.c.b16 %v8831, %v8831
        %v9216 = vpack.c.b16 %v8832, %v8832
        %v9217 = vpack.c.b16 %v8833, %v8833
        %v9218 = vpack.c.b16 %v8834, %v8834
        %v9219 = vpack.c.b16 %v8835, %v8835
        %v9220 = vpack.c.b16 %v8836, %v8836
        %v9221 = vpack.c.b16 %v8837, %v8837
        %v9222 = vpack.c.b16 %v8838, %v8838
        %v9223 = vpack.c.b16 %v8839, %v8839
        %v9224 = vpack.c.b16 %v8840, %v8840
        %v9225 = vpack.c.b16 %v8841, %v8841
        %v9226 = vpack.c.b16 %v8842, %v8842
        %v9227 = vpack.c.b16 %v8843, %v8843
        %v9228 = vpack.c.b16 %v8844, %v8844
        %v9229 = vpack.c.b16 %v8845, %v8845
        %v9230 = vpack.c.b16 %v8846, %v8846
        %v9231 = vpack.c.b16 %v8847, %v8847
        %v9232 = vpack.c.b16 %v8848, %v8848
        %v9233 = vpack.c.b16 %v8849, %v8849
        %v9234 = vpack.c.b16 %v8850, %v8850
        %v9235 = vpack.c.b16 %v8851, %v8851
        %v9236 = vpack.c.b16 %v8852, %v8852
        %v9237 = vpack.c.b16 %v8853, %v8853
        %v9238 = vpack.c.b16 %v8854, %v8854
        %v9239 = vpack.c.b16 %v8855, %v8855
        %v9240 = vpack.c.b16 %v8856, %v8856
        %v9241 = vpack.c.b16 %v8857, %v8857
        %v9242 = vpack.c.b16 %v8858, %v8858
        %v9243 = vpack.c.b16 %v8859, %v8859
        %v9244 = vpack.c.b16 %v8860, %v8860
        %v9245 = vpack.c.b16 %v8861, %v8861
        %v9246 = vpack.c.b16 %v8862, %v8862
        %v9247 = vpack.c.b16 %v8863, %v8863
        %v9248 = vpack.c.b16 %v8864, %v8864
        %v9249 = vpack.c.b16 %v8865, %v8865
        %v9250 = vpack.c.b16 %v8866, %v8866
        %v9251 = vpack.c.b16 %v8867, %v8867
        %v9252 = vpack.c.b16 %v8868, %v8868
        %v9253 = vpack.c.b16 %v8869, %v8869
        %v9254 = vpack.c.b16 %v8870, %v8870
        %v9255 = vpack.c.b16 %v8871, %v8871
        %v9256 = vpack.c.b16 %v8872, %v8872
        %v9257 = vpack.c.b16 %v8873, %v8873
        %v9258 = vpack.c.b16 %v8874, %v8874
        %v9259 = vpack.c.b16 %v8875, %v8875
        %v9260 = vpack.c.b16 %v8876, %v8876
        %v9261 = vpack.c.b16 %v8877, %v8877
        %v9262 = vpack.c.b16 %v8878, %v8878
        %v9263 = vpack.c.b16 %v8879, %v8879
        %v9264 = vpack.c.b16 %v8880, %v8880
        %v9265 = vpack.c.b16 %v8881, %v8881
        %v9266 = vpack.c.b16 %v8882, %v8882
        %v9267 = vpack.c.b16 %v8883, %v8883
        %v9268 = vpack.c.b16 %v8884, %v8884
        %v9269 = vpack.c.b16 %v8885, %v8885
        %v9270 = vpack.c.b16 %v8886, %v8886
        %v9271 = vpack.c.b16 %v8887, %v8887
        %v9272 = vpack.c.b16 %v8888, %v8888
        %v9273 = vpack.c.b16 %v8889, %v8889
        %v9274 = vpack.c.b16 %v8890, %v8890
        %v9275 = vpack.c.b16 %v8891, %v8891
        %v9276 = vpack.c.b16 %v8892, %v8892
        %v9277 = vpack.c.b16 %v8893, %v8893
        %v9278 = vpack.c.b16 %v8894, %v8894
        %v9279 = vpack.c.b16 %v8895, %v8895
        %v9280 = vpack.c.b16 %v8896, %v8896
        %v9281 = vpack.c.b16 %v8897, %v8897
        %v9282 = vpack.c.b16 %v8898, %v8898
        %v9283 = vpack.c.b16 %v8899, %v8899
        %v9284 = vpack.c.b16 %v8900, %v8900
        %v9285 = vpack.c.b16 %v8901, %v8901
        %v9286 = vpack.c.b16 %v8902, %v8902
        %v9287 = vpack.c.b16 %v8903, %v8903
        %v9288 = vpack.c.b16 %v8904, %v8904
        %v9289 = vpack.c.b16 %v8905, %v8905
        %v9290 = vpack.c.b16 %v8906, %v8906
        %v9291 = vpack.c.b16 %v8907, %v8907
        %v9292 = vpack.c.b16 %v8908, %v8908
        %v9293 = vpack.c.b16 %v8909, %v8909
        %v9294 = vpack.c.b16 %v8910, %v8910
        %v9295 = vpack.c.b16 %v8911, %v8911
        %v9296 = vpack.c.b16 %v8912, %v8912
        %v9297 = vpack.c.b16 %v8913, %v8913
        %v9298 = vpack.c.b16 %v8914, %v8914
        %v9299 = vpack.c.b16 %v8915, %v8915
        %v9300 = vpack.c.b16 %v8916, %v8916
        %v9301 = vpack.c.b16 %v8917, %v8917
        %v9302 = vpack.c.b16 %v8918, %v8918
        %v9303 = vpack.c.b16 %v8919, %v8919
        %v9304 = vpack.c.b16 %v8920, %v8920
        %v9305 = vpack.c.b16 %v8921, %v8921
        %v9306 = vpack.c.b16 %v8922, %v8922
        %v9307 = vpack.c.b16 %v8923, %v8923
        %v9308 = vpack.c.b16 %v8924, %v8924
        %v9309 = vpack.c.b16 %v8925, %v8925
        %v9310 = vpack.c.b16 %v8926, %v8926
        %v9311 = vpack.c.b16 %v8927, %v8927
        %v9312 = vpack.c.b16 %v8928, %v8928
        %v9313 = vpack.c.b16 %v8929, %v8929
        %v9314 = vpack.c.b16 %v8930, %v8930
        %v9315 = vpack.c.b16 %v8931, %v8931
        %v9316 = vpack.c.b16 %v8932, %v8932
        %v9317 = vpack.c.b16 %v8933, %v8933
        %v9318 = vpack.c.b16 %v8934, %v8934
        %v9319 = vpack.c.b16 %v8935, %v8935
        %v9320 = vpack.c.b16 %v8936, %v8936
        %v9321 = vpack.c.b16 %v8937, %v8937
        %v9322 = vpack.c.b16 %v8938, %v8938
        %v9323 = vpack.c.b16 %v8939, %v8939
        %v9324 = vpack.c.b16 %v8940, %v8940
        %v9325 = vpack.c.b16 %v8941, %v8941
        %v9326 = vpack.c.b16 %v8942, %v8942
        %v9327 = vpack.c.b16 %v8943, %v8943
        %v9328 = vpack.c.b16 %v8944, %v8944
        %v9329 = vpack.c.b16 %v8945, %v8945
        %v9330 = vpack.c.b16 %v8946, %v8946
        %v9331 = vpack.c.b16 %v8947, %v8947
        %v9332 = vpack.c.b16 %v8948, %v8948
        %v9333 = vpack.c.b16 %v8949, %v8949
        %v9334 = vpack.c.b16 %v8950, %v8950
        %v9335 = vpack.c.b16 %v8951, %v8951
        %v9336 = vpack.c.b16 %v8952, %v8952
        %v9337 = vpack.c.b16 %v8953, %v8953
        %v9338 = vpack.c.b16 %v8954, %v8954
        %v9339 = vpack.c.b16 %v8955, %v8955
        %v9340 = vpack.c.b16 %v8956, %v8956
        %v9341 = vpack.c.b16 %v8957, %v8957
        %v9342 = vpack.c.b16 %v8958, %v8958
        %v9343 = vpack.c.b16 %v8959, %v8959
        %v9344 = vpack.c.b16 %v8960, %v8960
        %v9345 = vpack.c.b16 %v8961, %v8961
        %9730 = vst [vmem:[%s219] sm:$0xf] %v8962
        %9731 = vst [vmem:[%s219 + $0x4] sm:$0xf] %v8963
        %9732 = vst [vmem:[%s219 + $0x8] sm:$0xf] %v8964
        %9733 = vst [vmem:[%s219 + $0xc] sm:$0xf] %v8965
        %9734 = vst [vmem:[%s219 + $0x10] sm:$0xf] %v8966
        %9735 = vst [vmem:[%s219 + $0x14] sm:$0xf] %v8967
        %9736 = vst [vmem:[%s219 + $0x18] sm:$0xf] %v8968
        %9737 = vst [vmem:[%s219 + $0x1c] sm:$0xf] %v8969
        %9738 = vst [vmem:[%s219 + $0x20] sm:$0xf] %v8970
        %9739 = vst [vmem:[%s219 + $0x24] sm:$0xf] %v8971
        %9740 = vst [vmem:[%s219 + $0x28] sm:$0xf] %v8972
        %9741 = vst [vmem:[%s219 + $0x2c] sm:$0xf] %v8973
        %9742 = vst [vmem:[%s219 + $0x30] sm:$0xf] %v8974
        %9743 = vst [vmem:[%s219 + $0x34] sm:$0xf] %v8975
        %9744 = vst [vmem:[%s219 + $0x38] sm:$0xf] %v8976
        %9745 = vst [vmem:[%s219 + $0x3c] sm:$0xf] %v8977
        %9746 = vst [vmem:[%s219 + $0x40] sm:$0xf] %v8978
        %9747 = vst [vmem:[%s219 + $0x44] sm:$0xf] %v8979
        %9748 = vst [vmem:[%s219 + $0x48] sm:$0xf] %v8980
        %9749 = vst [vmem:[%s219 + $0x4c] sm:$0xf] %v8981
        %9750 = vst [vmem:[%s219 + $0x50] sm:$0xf] %v8982
        %9751 = vst [vmem:[%s219 + $0x54] sm:$0xf] %v8983
        %9752 = vst [vmem:[%s219 + $0x58] sm:$0xf] %v8984
        %9753 = vst [vmem:[%s219 + $0x5c] sm:$0xf] %v8985
        %9754 = vst [vmem:[%s219 + $0x60] sm:$0xf] %v8986
        %9755 = vst [vmem:[%s219 + $0x64] sm:$0xf] %v8987
        %9756 = vst [vmem:[%s219 + $0x68] sm:$0xf] %v8988
        %9757 = vst [vmem:[%s219 + $0x6c] sm:$0xf] %v8989
        %9758 = vst [vmem:[%s219 + $0x70] sm:$0xf] %v8990
        %9759 = vst [vmem:[%s219 + $0x74] sm:$0xf] %v8991
        %9760 = vst [vmem:[%s219 + $0x78] sm:$0xf] %v8992
        %9761 = vst [vmem:[%s219 + $0x7c] sm:$0xf] %v8993
        %9762 = vst [vmem:[%s219 + $0x80] sm:$0xf] %v8994
        %9763 = vst [vmem:[%s219 + $0x84] sm:$0xf] %v8995
        %9764 = vst [vmem:[%s219 + $0x88] sm:$0xf] %v8996
        %9765 = vst [vmem:[%s219 + $0x8c] sm:$0xf] %v8997
        %9766 = vst [vmem:[%s219 + $0x90] sm:$0xf] %v8998
        %9767 = vst [vmem:[%s219 + $0x94] sm:$0xf] %v8999
        %9768 = vst [vmem:[%s219 + $0x98] sm:$0xf] %v9000
        %9769 = vst [vmem:[%s219 + $0x9c] sm:$0xf] %v9001
        %9770 = vst [vmem:[%s219 + $0xa0] sm:$0xf] %v9002
        %9771 = vst [vmem:[%s219 + $0xa4] sm:$0xf] %v9003
        %9772 = vst [vmem:[%s219 + $0xa8] sm:$0xf] %v9004
        %9773 = vst [vmem:[%s219 + $0xac] sm:$0xf] %v9005
        %9774 = vst [vmem:[%s219 + $0xb0] sm:$0xf] %v9006
        %9775 = vst [vmem:[%s219 + $0xb4] sm:$0xf] %v9007
        %9776 = vst [vmem:[%s219 + $0xb8] sm:$0xf] %v9008
        %9777 = vst [vmem:[%s219 + $0xbc] sm:$0xf] %v9009
        %9778 = vst [vmem:[%s219 + $0xc0] sm:$0xf] %v9010
        %9779 = vst [vmem:[%s219 + $0xc4] sm:$0xf] %v9011
        %9780 = vst [vmem:[%s219 + $0xc8] sm:$0xf] %v9012
        %9781 = vst [vmem:[%s219 + $0xcc] sm:$0xf] %v9013
        %9782 = vst [vmem:[%s219 + $0xd0] sm:$0xf] %v9014
        %9783 = vst [vmem:[%s219 + $0xd4] sm:$0xf] %v9015
        %9784 = vst [vmem:[%s219 + $0xd8] sm:$0xf] %v9016
        %9785 = vst [vmem:[%s219 + $0xdc] sm:$0xf] %v9017
        %9786 = vst [vmem:[%s219 + $0xe0] sm:$0xf] %v9018
        %9787 = vst [vmem:[%s219 + $0xe4] sm:$0xf] %v9019
        %9788 = vst [vmem:[%s219 + $0xe8] sm:$0xf] %v9020
        %9789 = vst [vmem:[%s219 + $0xec] sm:$0xf] %v9021
        %9790 = vst [vmem:[%s219 + $0xf0] sm:$0xf] %v9022
        %9791 = vst [vmem:[%s219 + $0xf4] sm:$0xf] %v9023
        %9792 = vst [vmem:[%s219 + $0xf8] sm:$0xf] %v9024
        %9793 = vst [vmem:[%s219 + $0xfc] sm:$0xf] %v9025
        %9794 = vst [vmem:[%s219 + $0x100] sm:$0xf] %v9026
        %9795 = vst [vmem:[%s219 + $0x104] sm:$0xf] %v9027
        %9796 = vst [vmem:[%s219 + $0x108] sm:$0xf] %v9028
        %9797 = vst [vmem:[%s219 + $0x10c] sm:$0xf] %v9029
        %9798 = vst [vmem:[%s219 + $0x110] sm:$0xf] %v9030
        %9799 = vst [vmem:[%s219 + $0x114] sm:$0xf] %v9031
        %9800 = vst [vmem:[%s219 + $0x118] sm:$0xf] %v9032
        %9801 = vst [vmem:[%s219 + $0x11c] sm:$0xf] %v9033
        %9802 = vst [vmem:[%s219 + $0x120] sm:$0xf] %v9034
        %9803 = vst [vmem:[%s219 + $0x124] sm:$0xf] %v9035
        %9804 = vst [vmem:[%s219 + $0x128] sm:$0xf] %v9036
        %9805 = vst [vmem:[%s219 + $0x12c] sm:$0xf] %v9037
        %9806 = vst [vmem:[%s219 + $0x130] sm:$0xf] %v9038
        %9807 = vst [vmem:[%s219 + $0x134] sm:$0xf] %v9039
        %9808 = vst [vmem:[%s219 + $0x138] sm:$0xf] %v9040
        %9809 = vst [vmem:[%s219 + $0x13c] sm:$0xf] %v9041
        %9810 = vst [vmem:[%s219 + $0x140] sm:$0xf] %v9042
        %9811 = vst [vmem:[%s219 + $0x144] sm:$0xf] %v9043
        %9812 = vst [vmem:[%s219 + $0x148] sm:$0xf] %v9044
        %9813 = vst [vmem:[%s219 + $0x14c] sm:$0xf] %v9045
        %9814 = vst [vmem:[%s219 + $0x150] sm:$0xf] %v9046
        %9815 = vst [vmem:[%s219 + $0x154] sm:$0xf] %v9047
        %9816 = vst [vmem:[%s219 + $0x158] sm:$0xf] %v9048
        %9817 = vst [vmem:[%s219 + $0x15c] sm:$0xf] %v9049
        %9818 = vst [vmem:[%s219 + $0x160] sm:$0xf] %v9050
        %9819 = vst [vmem:[%s219 + $0x164] sm:$0xf] %v9051
        %9820 = vst [vmem:[%s219 + $0x168] sm:$0xf] %v9052
        %9821 = vst [vmem:[%s219 + $0x16c] sm:$0xf] %v9053
        %9822 = vst [vmem:[%s219 + $0x170] sm:$0xf] %v9054
        %9823 = vst [vmem:[%s219 + $0x174] sm:$0xf] %v9055
        %9824 = vst [vmem:[%s219 + $0x178] sm:$0xf] %v9056
        %9825 = vst [vmem:[%s219 + $0x17c] sm:$0xf] %v9057
        %9826 = vst [vmem:[%s219 + $0x180] sm:$0xf] %v9058
        %9827 = vst [vmem:[%s219 + $0x184] sm:$0xf] %v9059
        %9828 = vst [vmem:[%s219 + $0x188] sm:$0xf] %v9060
        %9829 = vst [vmem:[%s219 + $0x18c] sm:$0xf] %v9061
        %9830 = vst [vmem:[%s219 + $0x190] sm:$0xf] %v9062
        %9831 = vst [vmem:[%s219 + $0x194] sm:$0xf] %v9063
        %9832 = vst [vmem:[%s219 + $0x198] sm:$0xf] %v9064
        %9833 = vst [vmem:[%s219 + $0x19c] sm:$0xf] %v9065
        %9834 = vst [vmem:[%s219 + $0x1a0] sm:$0xf] %v9066
        %9835 = vst [vmem:[%s219 + $0x1a4] sm:$0xf] %v9067
        %9836 = vst [vmem:[%s219 + $0x1a8] sm:$0xf] %v9068
        %9837 = vst [vmem:[%s219 + $0x1ac] sm:$0xf] %v9069
        %9838 = vst [vmem:[%s219 + $0x1b0] sm:$0xf] %v9070
        %9839 = vst [vmem:[%s219 + $0x1b4] sm:$0xf] %v9071
        %9840 = vst [vmem:[%s219 + $0x1b8] sm:$0xf] %v9072
        %9841 = vst [vmem:[%s219 + $0x1bc] sm:$0xf] %v9073
        %9842 = vst [vmem:[%s219 + $0x1c0] sm:$0xf] %v9074
        %9843 = vst [vmem:[%s219 + $0x1c4] sm:$0xf] %v9075
        %9844 = vst [vmem:[%s219 + $0x1c8] sm:$0xf] %v9076
        %9845 = vst [vmem:[%s219 + $0x1cc] sm:$0xf] %v9077
        %9846 = vst [vmem:[%s219 + $0x1d0] sm:$0xf] %v9078
        %9847 = vst [vmem:[%s219 + $0x1d4] sm:$0xf] %v9079
        %9848 = vst [vmem:[%s219 + $0x1d8] sm:$0xf] %v9080
        %9849 = vst [vmem:[%s219 + $0x1dc] sm:$0xf] %v9081
        %9850 = vst [vmem:[%s219 + $0x1e0] sm:$0xf] %v9082
        %9851 = vst [vmem:[%s219 + $0x1e4] sm:$0xf] %v9083
        %9852 = vst [vmem:[%s219 + $0x1e8] sm:$0xf] %v9084
        %9853 = vst [vmem:[%s219 + $0x1ec] sm:$0xf] %v9085
        %9854 = vst [vmem:[%s219 + $0x1f0] sm:$0xf] %v9086
        %9855 = vst [vmem:[%s219 + $0x1f4] sm:$0xf] %v9087
        %9856 = vst [vmem:[%s219 + $0x1f8] sm:$0xf] %v9088
        %9857 = vst [vmem:[%s219 + $0x1fc] sm:$0xf] %v9089
        %9858 = vst [vmem:[%s219 + $0x200] sm:$0xf] %v9090
        %9859 = vst [vmem:[%s219 + $0x204] sm:$0xf] %v9091
        %9860 = vst [vmem:[%s219 + $0x208] sm:$0xf] %v9092
        %9861 = vst [vmem:[%s219 + $0x20c] sm:$0xf] %v9093
        %9862 = vst [vmem:[%s219 + $0x210] sm:$0xf] %v9094
        %9863 = vst [vmem:[%s219 + $0x214] sm:$0xf] %v9095
        %9864 = vst [vmem:[%s219 + $0x218] sm:$0xf] %v9096
        %9865 = vst [vmem:[%s219 + $0x21c] sm:$0xf] %v9097
        %9866 = vst [vmem:[%s219 + $0x220] sm:$0xf] %v9098
        %9867 = vst [vmem:[%s219 + $0x224] sm:$0xf] %v9099
        %9868 = vst [vmem:[%s219 + $0x228] sm:$0xf] %v9100
        %9869 = vst [vmem:[%s219 + $0x22c] sm:$0xf] %v9101
        %9870 = vst [vmem:[%s219 + $0x230] sm:$0xf] %v9102
        %9871 = vst [vmem:[%s219 + $0x234] sm:$0xf] %v9103
        %9872 = vst [vmem:[%s219 + $0x238] sm:$0xf] %v9104
        %9873 = vst [vmem:[%s219 + $0x23c] sm:$0xf] %v9105
        %9874 = vst [vmem:[%s219 + $0x240] sm:$0xf] %v9106
        %9875 = vst [vmem:[%s219 + $0x244] sm:$0xf] %v9107
        %9876 = vst [vmem:[%s219 + $0x248] sm:$0xf] %v9108
        %9877 = vst [vmem:[%s219 + $0x24c] sm:$0xf] %v9109
        %9878 = vst [vmem:[%s219 + $0x250] sm:$0xf] %v9110
        %9879 = vst [vmem:[%s219 + $0x254] sm:$0xf] %v9111
        %9880 = vst [vmem:[%s219 + $0x258] sm:$0xf] %v9112
        %9881 = vst [vmem:[%s219 + $0x25c] sm:$0xf] %v9113
        %9882 = vst [vmem:[%s219 + $0x260] sm:$0xf] %v9114
        %9883 = vst [vmem:[%s219 + $0x264] sm:$0xf] %v9115
        %9884 = vst [vmem:[%s219 + $0x268] sm:$0xf] %v9116
        %9885 = vst [vmem:[%s219 + $0x26c] sm:$0xf] %v9117
        %9886 = vst [vmem:[%s219 + $0x270] sm:$0xf] %v9118
        %9887 = vst [vmem:[%s219 + $0x274] sm:$0xf] %v9119
        %9888 = vst [vmem:[%s219 + $0x278] sm:$0xf] %v9120
        %9889 = vst [vmem:[%s219 + $0x27c] sm:$0xf] %v9121
        %9890 = vst [vmem:[%s219 + $0x280] sm:$0xf] %v9122
        %9891 = vst [vmem:[%s219 + $0x284] sm:$0xf] %v9123
        %9892 = vst [vmem:[%s219 + $0x288] sm:$0xf] %v9124
        %9893 = vst [vmem:[%s219 + $0x28c] sm:$0xf] %v9125
        %9894 = vst [vmem:[%s219 + $0x290] sm:$0xf] %v9126
        %9895 = vst [vmem:[%s219 + $0x294] sm:$0xf] %v9127
        %9896 = vst [vmem:[%s219 + $0x298] sm:$0xf] %v9128
        %9897 = vst [vmem:[%s219 + $0x29c] sm:$0xf] %v9129
        %9898 = vst [vmem:[%s219 + $0x2a0] sm:$0xf] %v9130
        %9899 = vst [vmem:[%s219 + $0x2a4] sm:$0xf] %v9131
        %9900 = vst [vmem:[%s219 + $0x2a8] sm:$0xf] %v9132
        %9901 = vst [vmem:[%s219 + $0x2ac] sm:$0xf] %v9133
        %9902 = vst [vmem:[%s219 + $0x2b0] sm:$0xf] %v9134
        %9903 = vst [vmem:[%s219 + $0x2b4] sm:$0xf] %v9135
        %9904 = vst [vmem:[%s219 + $0x2b8] sm:$0xf] %v9136
        %9905 = vst [vmem:[%s219 + $0x2bc] sm:$0xf] %v9137
        %9906 = vst [vmem:[%s219 + $0x2c0] sm:$0xf] %v9138
        %9907 = vst [vmem:[%s219 + $0x2c4] sm:$0xf] %v9139
        %9908 = vst [vmem:[%s219 + $0x2c8] sm:$0xf] %v9140
        %9909 = vst [vmem:[%s219 + $0x2cc] sm:$0xf] %v9141
        %9910 = vst [vmem:[%s219 + $0x2d0] sm:$0xf] %v9142
        %9911 = vst [vmem:[%s219 + $0x2d4] sm:$0xf] %v9143
        %9912 = vst [vmem:[%s219 + $0x2d8] sm:$0xf] %v9144
        %9913 = vst [vmem:[%s219 + $0x2dc] sm:$0xf] %v9145
        %9914 = vst [vmem:[%s219 + $0x2e0] sm:$0xf] %v9146
        %9915 = vst [vmem:[%s219 + $0x2e4] sm:$0xf] %v9147
        %9916 = vst [vmem:[%s219 + $0x2e8] sm:$0xf] %v9148
        %9917 = vst [vmem:[%s219 + $0x2ec] sm:$0xf] %v9149
        %9918 = vst [vmem:[%s219 + $0x2f0] sm:$0xf] %v9150
        %9919 = vst [vmem:[%s219 + $0x2f4] sm:$0xf] %v9151
        %9920 = vst [vmem:[%s219 + $0x2f8] sm:$0xf] %v9152
        %9921 = vst [vmem:[%s219 + $0x2fc] sm:$0xf] %v9153
        %9922 = vst [vmem:[%s219 + $0x300] sm:$0xf] %v9154
        %9923 = vst [vmem:[%s219 + $0x304] sm:$0xf] %v9155
        %9924 = vst [vmem:[%s219 + $0x308] sm:$0xf] %v9156
        %9925 = vst [vmem:[%s219 + $0x30c] sm:$0xf] %v9157
        %9926 = vst [vmem:[%s219 + $0x310] sm:$0xf] %v9158
        %9927 = vst [vmem:[%s219 + $0x314] sm:$0xf] %v9159
        %9928 = vst [vmem:[%s219 + $0x318] sm:$0xf] %v9160
        %9929 = vst [vmem:[%s219 + $0x31c] sm:$0xf] %v9161
        %9930 = vst [vmem:[%s219 + $0x320] sm:$0xf] %v9162
        %9931 = vst [vmem:[%s219 + $0x324] sm:$0xf] %v9163
        %9932 = vst [vmem:[%s219 + $0x328] sm:$0xf] %v9164
        %9933 = vst [vmem:[%s219 + $0x32c] sm:$0xf] %v9165
        %9934 = vst [vmem:[%s219 + $0x330] sm:$0xf] %v9166
        %9935 = vst [vmem:[%s219 + $0x334] sm:$0xf] %v9167
        %9936 = vst [vmem:[%s219 + $0x338] sm:$0xf] %v9168
        %9937 = vst [vmem:[%s219 + $0x33c] sm:$0xf] %v9169
        %9938 = vst [vmem:[%s219 + $0x340] sm:$0xf] %v9170
        %9939 = vst [vmem:[%s219 + $0x344] sm:$0xf] %v9171
        %9940 = vst [vmem:[%s219 + $0x348] sm:$0xf] %v9172
        %9941 = vst [vmem:[%s219 + $0x34c] sm:$0xf] %v9173
        %9942 = vst [vmem:[%s219 + $0x350] sm:$0xf] %v9174
        %9943 = vst [vmem:[%s219 + $0x354] sm:$0xf] %v9175
        %9944 = vst [vmem:[%s219 + $0x358] sm:$0xf] %v9176
        %9945 = vst [vmem:[%s219 + $0x35c] sm:$0xf] %v9177
        %9946 = vst [vmem:[%s219 + $0x360] sm:$0xf] %v9178
        %9947 = vst [vmem:[%s219 + $0x364] sm:$0xf] %v9179
        %9948 = vst [vmem:[%s219 + $0x368] sm:$0xf] %v9180
        %9949 = vst [vmem:[%s219 + $0x36c] sm:$0xf] %v9181
        %9950 = vst [vmem:[%s219 + $0x370] sm:$0xf] %v9182
        %9951 = vst [vmem:[%s219 + $0x374] sm:$0xf] %v9183
        %9952 = vst [vmem:[%s219 + $0x378] sm:$0xf] %v9184
        %9953 = vst [vmem:[%s219 + $0x37c] sm:$0xf] %v9185
        %9954 = vst [vmem:[%s219 + $0x380] sm:$0xf] %v9186
        %9955 = vst [vmem:[%s219 + $0x384] sm:$0xf] %v9187
        %9956 = vst [vmem:[%s219 + $0x388] sm:$0xf] %v9188
        %9957 = vst [vmem:[%s219 + $0x38c] sm:$0xf] %v9189
        %9958 = vst [vmem:[%s219 + $0x390] sm:$0xf] %v9190
        %9959 = vst [vmem:[%s219 + $0x394] sm:$0xf] %v9191
        %9960 = vst [vmem:[%s219 + $0x398] sm:$0xf] %v9192
        %9961 = vst [vmem:[%s219 + $0x39c] sm:$0xf] %v9193
        %9962 = vst [vmem:[%s219 + $0x3a0] sm:$0xf] %v9194
        %9963 = vst [vmem:[%s219 + $0x3a4] sm:$0xf] %v9195
        %9964 = vst [vmem:[%s219 + $0x3a8] sm:$0xf] %v9196
        %9965 = vst [vmem:[%s219 + $0x3ac] sm:$0xf] %v9197
        %9966 = vst [vmem:[%s219 + $0x3b0] sm:$0xf] %v9198
        %9967 = vst [vmem:[%s219 + $0x3b4] sm:$0xf] %v9199
        %9968 = vst [vmem:[%s219 + $0x3b8] sm:$0xf] %v9200
        %9969 = vst [vmem:[%s219 + $0x3bc] sm:$0xf] %v9201
        %9970 = vst [vmem:[%s219 + $0x3c0] sm:$0xf] %v9202
        %9971 = vst [vmem:[%s219 + $0x3c4] sm:$0xf] %v9203
        %9972 = vst [vmem:[%s219 + $0x3c8] sm:$0xf] %v9204
        %9973 = vst [vmem:[%s219 + $0x3cc] sm:$0xf] %v9205
        %9974 = vst [vmem:[%s219 + $0x3d0] sm:$0xf] %v9206
        %9975 = vst [vmem:[%s219 + $0x3d4] sm:$0xf] %v9207
        %9976 = vst [vmem:[%s219 + $0x3d8] sm:$0xf] %v9208
        %9977 = vst [vmem:[%s219 + $0x3dc] sm:$0xf] %v9209
        %9978 = vst [vmem:[%s219 + $0x3e0] sm:$0xf] %v9210
        %9979 = vst [vmem:[%s219 + $0x3e4] sm:$0xf] %v9211
        %9980 = vst [vmem:[%s219 + $0x3e8] sm:$0xf] %v9212
        %9981 = vst [vmem:[%s219 + $0x3ec] sm:$0xf] %v9213
        %9982 = vst [vmem:[%s219 + $0x3f0] sm:$0xf] %v9214
        %9983 = vst [vmem:[%s219 + $0x3f4] sm:$0xf] %v9215
        %9984 = vst [vmem:[%s219 + $0x3f8] sm:$0xf] %v9216
        %9985 = vst [vmem:[%s219 + $0x3fc] sm:$0xf] %v9217
        %9986 = vst [vmem:[%s219 + $0x400] sm:$0xf] %v9218
        %9987 = vst [vmem:[%s219 + $0x404] sm:$0xf] %v9219
        %9988 = vst [vmem:[%s219 + $0x408] sm:$0xf] %v9220
        %9989 = vst [vmem:[%s219 + $0x40c] sm:$0xf] %v9221
        %9990 = vst [vmem:[%s219 + $0x410] sm:$0xf] %v9222
        %9991 = vst [vmem:[%s219 + $0x414] sm:$0xf] %v9223
        %9992 = vst [vmem:[%s219 + $0x418] sm:$0xf] %v9224
        %9993 = vst [vmem:[%s219 + $0x41c] sm:$0xf] %v9225
        %9994 = vst [vmem:[%s219 + $0x420] sm:$0xf] %v9226
        %9995 = vst [vmem:[%s219 + $0x424] sm:$0xf] %v9227
        %9996 = vst [vmem:[%s219 + $0x428] sm:$0xf] %v9228
        %9997 = vst [vmem:[%s219 + $0x42c] sm:$0xf] %v9229
        %9998 = vst [vmem:[%s219 + $0x430] sm:$0xf] %v9230
        %9999 = vst [vmem:[%s219 + $0x434] sm:$0xf] %v9231
        %10000 = vst [vmem:[%s219 + $0x438] sm:$0xf] %v9232
        %10001 = vst [vmem:[%s219 + $0x43c] sm:$0xf] %v9233
        %10002 = vst [vmem:[%s219 + $0x440] sm:$0xf] %v9234
        %10003 = vst [vmem:[%s219 + $0x444] sm:$0xf] %v9235
        %10004 = vst [vmem:[%s219 + $0x448] sm:$0xf] %v9236
        %10005 = vst [vmem:[%s219 + $0x44c] sm:$0xf] %v9237
        %10006 = vst [vmem:[%s219 + $0x450] sm:$0xf] %v9238
        %10007 = vst [vmem:[%s219 + $0x454] sm:$0xf] %v9239
        %10008 = vst [vmem:[%s219 + $0x458] sm:$0xf] %v9240
        %10009 = vst [vmem:[%s219 + $0x45c] sm:$0xf] %v9241
        %10010 = vst [vmem:[%s219 + $0x460] sm:$0xf] %v9242
        %10011 = vst [vmem:[%s219 + $0x464] sm:$0xf] %v9243
        %10012 = vst [vmem:[%s219 + $0x468] sm:$0xf] %v9244
        %10013 = vst [vmem:[%s219 + $0x46c] sm:$0xf] %v9245
        %10014 = vst [vmem:[%s219 + $0x470] sm:$0xf] %v9246
        %10015 = vst [vmem:[%s219 + $0x474] sm:$0xf] %v9247
        %10016 = vst [vmem:[%s219 + $0x478] sm:$0xf] %v9248
        %10017 = vst [vmem:[%s219 + $0x47c] sm:$0xf] %v9249
        %10018 = vst [vmem:[%s219 + $0x480] sm:$0xf] %v9250
        %10019 = vst [vmem:[%s219 + $0x484] sm:$0xf] %v9251
        %10020 = vst [vmem:[%s219 + $0x488] sm:$0xf] %v9252
        %10021 = vst [vmem:[%s219 + $0x48c] sm:$0xf] %v9253
        %10022 = vst [vmem:[%s219 + $0x490] sm:$0xf] %v9254
        %10023 = vst [vmem:[%s219 + $0x494] sm:$0xf] %v9255
        %10024 = vst [vmem:[%s219 + $0x498] sm:$0xf] %v9256
        %10025 = vst [vmem:[%s219 + $0x49c] sm:$0xf] %v9257
        %10026 = vst [vmem:[%s219 + $0x4a0] sm:$0xf] %v9258
        %10027 = vst [vmem:[%s219 + $0x4a4] sm:$0xf] %v9259
        %10028 = vst [vmem:[%s219 + $0x4a8] sm:$0xf] %v9260
        %10029 = vst [vmem:[%s219 + $0x4ac] sm:$0xf] %v9261
        %10030 = vst [vmem:[%s219 + $0x4b0] sm:$0xf] %v9262
        %10031 = vst [vmem:[%s219 + $0x4b4] sm:$0xf] %v9263
        %10032 = vst [vmem:[%s219 + $0x4b8] sm:$0xf] %v9264
        %10033 = vst [vmem:[%s219 + $0x4bc] sm:$0xf] %v9265
        %10034 = vst [vmem:[%s219 + $0x4c0] sm:$0xf] %v9266
        %10035 = vst [vmem:[%s219 + $0x4c4] sm:$0xf] %v9267
        %10036 = vst [vmem:[%s219 + $0x4c8] sm:$0xf] %v9268
        %10037 = vst [vmem:[%s219 + $0x4cc] sm:$0xf] %v9269
        %10038 = vst [vmem:[%s219 + $0x4d0] sm:$0xf] %v9270
        %10039 = vst [vmem:[%s219 + $0x4d4] sm:$0xf] %v9271
        %10040 = vst [vmem:[%s219 + $0x4d8] sm:$0xf] %v9272
        %10041 = vst [vmem:[%s219 + $0x4dc] sm:$0xf] %v9273
        %10042 = vst [vmem:[%s219 + $0x4e0] sm:$0xf] %v9274
        %10043 = vst [vmem:[%s219 + $0x4e4] sm:$0xf] %v9275
        %10044 = vst [vmem:[%s219 + $0x4e8] sm:$0xf] %v9276
        %10045 = vst [vmem:[%s219 + $0x4ec] sm:$0xf] %v9277
        %10046 = vst [vmem:[%s219 + $0x4f0] sm:$0xf] %v9278
        %10047 = vst [vmem:[%s219 + $0x4f4] sm:$0xf] %v9279
        %10048 = vst [vmem:[%s219 + $0x4f8] sm:$0xf] %v9280
        %10049 = vst [vmem:[%s219 + $0x4fc] sm:$0xf] %v9281
        %10050 = vst [vmem:[%s219 + $0x500] sm:$0xf] %v9282
        %10051 = vst [vmem:[%s219 + $0x504] sm:$0xf] %v9283
        %10052 = vst [vmem:[%s219 + $0x508] sm:$0xf] %v9284
        %10053 = vst [vmem:[%s219 + $0x50c] sm:$0xf] %v9285
        %10054 = vst [vmem:[%s219 + $0x510] sm:$0xf] %v9286
        %10055 = vst [vmem:[%s219 + $0x514] sm:$0xf] %v9287
        %10056 = vst [vmem:[%s219 + $0x518] sm:$0xf] %v9288
        %10057 = vst [vmem:[%s219 + $0x51c] sm:$0xf] %v9289
        %10058 = vst [vmem:[%s219 + $0x520] sm:$0xf] %v9290
        %10059 = vst [vmem:[%s219 + $0x524] sm:$0xf] %v9291
        %10060 = vst [vmem:[%s219 + $0x528] sm:$0xf] %v9292
        %10061 = vst [vmem:[%s219 + $0x52c] sm:$0xf] %v9293
        %10062 = vst [vmem:[%s219 + $0x530] sm:$0xf] %v9294
        %10063 = vst [vmem:[%s219 + $0x534] sm:$0xf] %v9295
        %10064 = vst [vmem:[%s219 + $0x538] sm:$0xf] %v9296
        %10065 = vst [vmem:[%s219 + $0x53c] sm:$0xf] %v9297
        %10066 = vst [vmem:[%s219 + $0x540] sm:$0xf] %v9298
        %10067 = vst [vmem:[%s219 + $0x544] sm:$0xf] %v9299
        %10068 = vst [vmem:[%s219 + $0x548] sm:$0xf] %v9300
        %10069 = vst [vmem:[%s219 + $0x54c] sm:$0xf] %v9301
        %10070 = vst [vmem:[%s219 + $0x550] sm:$0xf] %v9302
        %10071 = vst [vmem:[%s219 + $0x554] sm:$0xf] %v9303
        %10072 = vst [vmem:[%s219 + $0x558] sm:$0xf] %v9304
        %10073 = vst [vmem:[%s219 + $0x55c] sm:$0xf] %v9305
        %10074 = vst [vmem:[%s219 + $0x560] sm:$0xf] %v9306
        %10075 = vst [vmem:[%s219 + $0x564] sm:$0xf] %v9307
        %10076 = vst [vmem:[%s219 + $0x568] sm:$0xf] %v9308
        %10077 = vst [vmem:[%s219 + $0x56c] sm:$0xf] %v9309
        %10078 = vst [vmem:[%s219 + $0x570] sm:$0xf] %v9310
        %10079 = vst [vmem:[%s219 + $0x574] sm:$0xf] %v9311
        %10080 = vst [vmem:[%s219 + $0x578] sm:$0xf] %v9312
        %10081 = vst [vmem:[%s219 + $0x57c] sm:$0xf] %v9313
        %10082 = vst [vmem:[%s219 + $0x580] sm:$0xf] %v9314
        %10083 = vst [vmem:[%s219 + $0x584] sm:$0xf] %v9315
        %10084 = vst [vmem:[%s219 + $0x588] sm:$0xf] %v9316
        %10085 = vst [vmem:[%s219 + $0x58c] sm:$0xf] %v9317
        %10086 = vst [vmem:[%s219 + $0x590] sm:$0xf] %v9318
        %10087 = vst [vmem:[%s219 + $0x594] sm:$0xf] %v9319
        %10088 = vst [vmem:[%s219 + $0x598] sm:$0xf] %v9320
        %10089 = vst [vmem:[%s219 + $0x59c] sm:$0xf] %v9321
        %10090 = vst [vmem:[%s219 + $0x5a0] sm:$0xf] %v9322
        %10091 = vst [vmem:[%s219 + $0x5a4] sm:$0xf] %v9323
        %10092 = vst [vmem:[%s219 + $0x5a8] sm:$0xf] %v9324
        %10093 = vst [vmem:[%s219 + $0x5ac] sm:$0xf] %v9325
        %10094 = vst [vmem:[%s219 + $0x5b0] sm:$0xf] %v9326
        %10095 = vst [vmem:[%s219 + $0x5b4] sm:$0xf] %v9327
        %10096 = vst [vmem:[%s219 + $0x5b8] sm:$0xf] %v9328
        %10097 = vst [vmem:[%s219 + $0x5bc] sm:$0xf] %v9329
        %10098 = vst [vmem:[%s219 + $0x5c0] sm:$0xf] %v9330
        %10099 = vst [vmem:[%s219 + $0x5c4] sm:$0xf] %v9331
        %10100 = vst [vmem:[%s219 + $0x5c8] sm:$0xf] %v9332
        %10101 = vst [vmem:[%s219 + $0x5cc] sm:$0xf] %v9333
        %10102 = vst [vmem:[%s219 + $0x5d0] sm:$0xf] %v9334
        %10103 = vst [vmem:[%s219 + $0x5d4] sm:$0xf] %v9335
        %10104 = vst [vmem:[%s219 + $0x5d8] sm:$0xf] %v9336
        %10105 = vst [vmem:[%s219 + $0x5dc] sm:$0xf] %v9337
        %10106 = vst [vmem:[%s219 + $0x5e0] sm:$0xf] %v9338
        %10107 = vst [vmem:[%s219 + $0x5e4] sm:$0xf] %v9339
        %10108 = vst [vmem:[%s219 + $0x5e8] sm:$0xf] %v9340
        %10109 = vst [vmem:[%s219 + $0x5ec] sm:$0xf] %v9341
        %10110 = vst [vmem:[%s219 + $0x5f0] sm:$0xf] %v9342
        %10111 = vst [vmem:[%s219 + $0x5f4] sm:$0xf] %v9343
        %10112 = vst [vmem:[%s219 + $0x5f8] sm:$0xf] %v9344
        %10113 = vst [vmem:[%s219 + $0x5fc] sm:$0xf] %v9345
        %s10114 = sand.u32 %s117, 1
        %s10115 = scalar_lea.sflag [#allocation3], %s10114
        %s10116 = sand.u32 %s117, 1
        %s10117 = smul.addr %s10116, 1536
        %s10118 = scalar_lea.vmem [#allocation2], %s10117
        // Predicated region
        $region33: #{tpu_custom_call.1} parent=31 // pred_check
          %p10119 = pneg %p127
        $region34: #{tpu_custom_call.1} parent=31 // pred_check_branch
          %10121 = sbr.rel (%p10119) target = $region36
        $region35: #{tpu_custom_call.1} parent=31 // pred_region
          %s10122 = smul.u32 384, %s21
          %s10123 = ssub.s32 757, %s10122
          %p10124 = scmp.lt.s32.totalorder %s10123, 384
          %s10125 = scalar_select %p10124, %s10123, 384
          %s10126 = smul.u32 64, %s10125
          %s10128 = ssub.s32 24576, %s10126
          %10129 = vsyncadd %s10115, %s10128
          %p10130 = scmp.ne.s32.totalorder 0, %s10126
          %s10131 = sadd.s32 %s22, %s10122
          %s10132 = smul.addr %s10131, 64
          %s10133 = scalar_lea.hbm %s3, %s10132
          %s10134 = smul.u32 4, %s10125
          %s10135 = sshll.u32 %s10118, 4
          %s10136 = int_to_ptr.vmem [resolvable:$true] %s10135
          %s10137 = sshll.u32 %s10134, 4
          %10141 = dma.vmem_to_hbm [thread:$0]  (%p10130), %s10136, %s10137, %s10133, %s10115, 64, 64, 4
        $region36: #{tpu_custom_call.1} parent=31 // pred_fallthru
          _
      $region32: #{tpu_custom_call.1} parent=5 // pred_fallthru
        _
      %p10142 = scmp.le.s32.totalorder 2, %s12
      // Predicated region
      $region37: #{tpu_custom_call.1} parent=5 // pred_check
        %p10143 = pneg %p10142
      $region38: #{tpu_custom_call.1} parent=5 // pred_check_branch
        %10145 = sbr.rel (%p10143) target = $region40
      $region39: #{tpu_custom_call.1} parent=5 // pred_region
        %s10146 = ssub.s32 %s12, 2
        // Predicated region
        $region41: #{tpu_custom_call.1} parent=39 // pred_check
          %p10147 = pneg %p133
        $region42: #{tpu_custom_call.1} parent=39 // pred_check_branch
          %10149 = sbr.rel (%p10147) target = $region44
        $region43: #{tpu_custom_call.1} parent=39 // pred_region
          %s10150 = sand.u32 %s118, 1
          %s10151 = scalar_lea.sflag [#allocation3], %s10150
          %s10152 = sand.u32 %s118, 1
          %s10153 = smul.addr %s10152, 1536
          %s10154 = scalar_lea.vmem [#allocation2], %s10153
          %10155 = dma.done %s10151, 24576
        $region44: #{tpu_custom_call.1} parent=39 // pred_fallthru
          _
      $region40: #{tpu_custom_call.1} parent=5 // pred_fallthru
        _
    $region6: #{tpu_custom_call.1} parent=1 // loop_footer
      %s16 = sadd.s32 1, %s12
    $region7: #{tpu_custom_call.1} parent=1 // loop_footer_branch
      %11 = sbr.rel target = $region3
    $region8: #{tpu_custom_call.1} parent=1 // loop_exit
      _
    %10156 = vsyncpa [#allocation3], 1
    %s10157 = scalar_lea.sflag [#allocation3], 1
    %10158 = vsyncpa %s10157, 1

</llo_original>
